<compile_context>
chip_gen: v5e
topology: v5e:2x2
jax: 0.10.0
libtpu: 0.0.40
codegen_flags: <defaults>
</compile_context>

<pallas_src>
import numpy as np
import jax
import jax.numpy as jnp
from jax import lax
from jax.experimental import pallas as pl
from jax.experimental.pallas import tpu as pltpu

HIDDEN = 256
OUT = 160


def lstm_encoder_kernel(x_ref, wih0_ref, whh0_ref, b0_ref,
                        w1_ref, b1_ref, wlin_ref, blin_ref, out_ref,
                        g0pre_ref):
    H = HIDDEN
    L, Bp, _ = x_ref.shape

    # Resident weights / bias broadcasts, hoisted out of the time loop
    # (JAX does not CSE broadcast_in_dim inside the loop body).
    whh0 = whh0_ref[...]                                    # (H, 4H)  bf16
    w1_ih = w1_ref[:H, :]                                   # (H, 4H)  bf16, static tile-aligned slice
    w1_hh = w1_ref[H:, :]                                   # (H, 4H)  bf16
    b1 = jnp.broadcast_to(b1_ref[...], (Bp, 4 * H))         # (Bp, 4H) f32

    # Bulk precompute of layer-0 input pre-activation for every timestep:
    # x:(L,Bp,1) * wih0:(1,4H) + b0:(1,4H)  ->  (L, Bp, 4H) in VMEM scratch.
    g0pre_ref[...] = x_ref[...] * wih0_ref[...] + b0_ref[...]

    def gates_to_hc(gates, c_prev):
        # gate layout [i | f | o | g]; logistic via tanh = single EUP pass over 3H lanes.
        sig = 0.5 * jnp.tanh(0.5 * gates[:, :3 * H]) + 0.5
        i = sig[:, 0 * H:1 * H]
        f = sig[:, 1 * H:2 * H]
        o = sig[:, 2 * H:3 * H]
        g = jnp.tanh(gates[:, 3 * H:])
        c_new = f * c_prev + i * g
        h_new = (o * jnp.tanh(c_new)).astype(jnp.bfloat16)   # carry h in bf16 (MXU-ready)
        return h_new, c_new

    def step(t, carry):
        h0, c0, h1, c1 = carry                               # h0,h1: bf16 ; c0,c1: f32
        # Layer-1 recurrent half first: depends only on the previous step's h1, so its
        # weight stream overlaps layer-0's matmul + gate math instead of serializing behind it.
        r1 = jnp.dot(h1, w1_hh, preferred_element_type=jnp.float32)
        # Layer 0: precomputed input pre-activation + recurrent matmul.
        g0 = g0pre_ref[t] + jnp.dot(h0, whh0, preferred_element_type=jnp.float32)
        h0n, c0n = gates_to_hc(g0, c0)
        # Layer 1: input half + hoisted recurrent half.
        g1 = jnp.dot(h0n, w1_ih, preferred_element_type=jnp.float32) + r1 + b1
        h1n, c1n = gates_to_hc(g1, c1)
        return (h0n, c0n, h1n, c1n)

    zeros_h = jnp.zeros((Bp, H), jnp.bfloat16)
    zeros_c = jnp.zeros((Bp, H), jnp.float32)
    unroll = True if L <= 16 else 4                          # full unroll for short sequences
    _, _, h1, _ = lax.fori_loop(0, L, step, (zeros_h, zeros_c, zeros_h, zeros_c),
                                unroll=unroll)

    out_ref[...] = (jnp.dot(h1, wlin_ref[...], preferred_element_type=jnp.float32)
                    + blin_ref[...]).astype(out_ref.dtype)


def lstm_encoder(x, kparams):
    """x: (B, C=1, L) float32; kparams from pack_params. Returns (B, 160) float32."""
    B, C, L = x.shape
    assert C == 1, "LSTMEncoder only works for one-dimensional time series"

    Bp = max(16, ((B + 15) // 16) * 16)                      # bf16 LHS packs 16 sublanes per vreg
    x_tm = jnp.transpose(x, (2, 0, 1)).astype(jnp.float32)   # (L, B, 1) time-major
    x_tm = jnp.pad(x_tm, ((0, 0), (0, Bp - B), (0, 0)))      # (L, Bp, 1)

    wih0, whh0, b0, w1, b1, wlin, blin = kparams
    vmem = pl.BlockSpec(memory_space=pltpu.MemorySpace.VMEM)  # whole array resident in VMEM

    out = pl.pallas_call(
        lstm_encoder_kernel,
        out_shape=jax.ShapeDtypeStruct((Bp, OUT), jnp.float32),
        in_specs=[vmem] * 8,
        out_specs=vmem,
        scratch_shapes=[pltpu.VMEM((L, Bp, 4 * HIDDEN), jnp.float32)],  # precomputed g0 pre-acts
    )(x_tm, wih0, whh0, b0, w1, b1, wlin, blin)
    return out[:B]


def init_params(key):
    """PyTorch-default-style init (uniform +-1/sqrt(H)), torch layout / gate order [i|f|g|o]."""
    H = HIDDEN
    bound = 1.0 / np.sqrt(H)
    ks = jax.random.split(key, 10)

    def u(k, shape):
        return jax.random.uniform(k, shape, jnp.float32, -bound, bound)

    return dict(
        wih0=u(ks[0], (4 * H, 1)), whh0=u(ks[1], (4 * H, H)),
        bih0=u(ks[2], (4 * H,)), bhh0=u(ks[3], (4 * H,)),
        wih1=u(ks[4], (4 * H, H)), whh1=u(ks[5], (4 * H, H)),
        bih1=u(ks[6], (4 * H,)), bhh1=u(ks[7], (4 * H,)),
        wlin=u(ks[8], (OUT, H)), blin=u(ks[9], (OUT,)),
    )


def pack_params(p):
    """Kernel-ready params: transpose to (in,out), reorder gates [i|f|g|o]->[i|f|o|g],
    fold the two LSTM bias vectors, stack layer-1's W_ih/W_hh into one (2H,4H) matrix
    (sliced statically in-kernel), and quantize the large recurrent weights to bf16."""
    H = HIDDEN

    def reorder(w):   # rows: [i | f | g | o] -> [i | f | o | g]
        return jnp.concatenate([w[:2 * H], w[3 * H:], w[2 * H:3 * H]], axis=0)

    wih0 = reorder(p["wih0"]).T                                       # (1, 4H)  f32
    whh0 = reorder(p["whh0"]).T.astype(jnp.bfloat16)                  # (H, 4H)
    b0 = reorder(p["bih0"] + p["bhh0"])[None, :]                      # (1, 4H)  f32
    w1 = jnp.concatenate([reorder(p["wih1"]).T,
                          reorder(p["whh1"]).T],
                         axis=0).astype(jnp.bfloat16)                 # (2H, 4H) = [W1_ih ; W1_hh]
    b1 = reorder(p["bih1"] + p["bhh1"])[None, :]                      # (1, 4H)  f32
    wlin = p["wlin"].T.astype(jnp.bfloat16)                           # (H, OUT)
    blin = p["blin"][None, :]                                         # (1, OUT) f32
    return (wih0, whh0, b0, w1, b1, wlin, blin)


def reference_matched(x, kparams):
    """Pure-JAX reference mirroring the kernel's exact numerics (bf16 weights, bf16 h carry,
    tanh-form sigmoid, split layer-1 matmul) so the comparison isolates kernel correctness."""
    wih0, whh0, b0, w1, b1, wlin, blin = kparams
    H = HIDDEN
    B = x.shape[0]
    x_tm = jnp.transpose(x, (2, 0, 1)).astype(jnp.float32)   # (L, B, 1)
    w1_ih, w1_hh = w1[:H], w1[H:]

    def gates_to_hc(gates, c_prev):
        sig = 0.5 * jnp.tanh(0.5 * gates[:, :3 * H]) + 0.5
        i, f, o = sig[:, :H], sig[:, H:2 * H], sig[:, 2 * H:]
        g = jnp.tanh(gates[:, 3 * H:])
        c_new = f * c_prev + i * g
        return (o * jnp.tanh(c_new)).astype(jnp.bfloat16), c_new

    def step(carry, x_t):
        h0, c0, h1, c1 = carry
        r1 = jnp.dot(h1, w1_hh, preferred_element_type=jnp.float32)
        g0 = (x_t * wih0 + b0
              + jnp.dot(h0, whh0, preferred_element_type=jnp.float32))
        h0n, c0n = gates_to_hc(g0, c0)
        g1 = jnp.dot(h0n, w1_ih, preferred_element_type=jnp.float32) + r1 + b1
        h1n, c1n = gates_to_hc(g1, c1)
        return (h0n, c0n, h1n, c1n), None

    zeros_h = jnp.zeros((B, H), jnp.bfloat16)
    zeros_c = jnp.zeros((B, H), jnp.float32)
    (_, _, h1, _), _ = jax.lax.scan(step, (zeros_h, zeros_c, zeros_h, zeros_c), x_tm)
    return jnp.dot(h1, wlin, preferred_element_type=jnp.float32) + blin


def reference_fp32(x, p):
    """Full-f32 reference implementing the exact PyTorch LSTM(1,256,2)+Linear(256,160) forward
    (torch gate order [i|f|g|o], logistic sigmoid) to bound bf16 quantization drift."""
    H = HIDDEN
    B = x.shape[0]
    x_tm = jnp.transpose(x, (2, 0, 1)).astype(jnp.float32)   # (L, B, 1)

    def cell(x_t, h, c, wih, whh, bih, bhh):
        g = x_t @ wih.T + h @ whh.T + bih + bhh              # (B, 4H), [i|f|g|o]
        i = jax.nn.sigmoid(g[:, :H])
        f = jax.nn.sigmoid(g[:, H:2 * H])
        gg = jnp.tanh(g[:, 2 * H:3 * H])
        o = jax.nn.sigmoid(g[:, 3 * H:])
        c_new = f * c + i * gg
        return o * jnp.tanh(c_new), c_new

    def step(carry, x_t):
        h0, c0, h1, c1 = carry
        h0, c0 = cell(x_t, h0, c0, p["wih0"], p["whh0"], p["bih0"], p["bhh0"])
        h1, c1 = cell(h0, h1, c1, p["wih1"], p["whh1"], p["bih1"], p["bhh1"])
        return (h0, c0, h1, c1), None

    init = tuple(jnp.zeros((B, H), jnp.float32) for _ in range(4))
    (_, _, h1, _), _ = jax.lax.scan(step, init, x_tm)
    return h1 @ p["wlin"].T + p["blin"]


if __name__ == "__main__":
    key = jax.random.PRNGKey(0)
    kx, kp = jax.random.split(key)

    B, C, L = 2, 1, 8           # (batch, channels=1, sequence length)
    x = jax.random.normal(kx, (B, C, L), jnp.float32)
    params = init_params(kp)
    kparams = pack_params(params)

    out = jax.block_until_ready(lstm_encoder(x, kparams))
    assert out.shape == (B, OUT), out.shape

    # 1) tight check against the bf16-matched reference (isolates kernel correctness)
    ref_m = reference_matched(x, kparams)
    np.testing.assert_allclose(np.asarray(out), np.asarray(ref_m), rtol=5e-3, atol=5e-3)

    # 2) looser check against the true fp32 module math (bounds bf16 quantization drift)
    ref_f = reference_fp32(x, params)
    np.testing.assert_allclose(np.asarray(out), np.asarray(ref_f), rtol=2e-2, atol=2e-2)

    print("KERNEL_OK")
</pallas_src>

<mosaic_0001>
module attributes {stable_mosaic.version = 11 : i64} {
  func.func @lstm_encoder_kernel(%arg0: memref<8x16x1xf32, #tpu.memory_space<vmem>>, %arg1: memref<1x1024xf32, #tpu.memory_space<vmem>>, %arg2: memref<256x1024xbf16, #tpu.memory_space<vmem>>, %arg3: memref<1x1024xf32, #tpu.memory_space<vmem>>, %arg4: memref<512x1024xbf16, #tpu.memory_space<vmem>>, %arg5: memref<1x1024xf32, #tpu.memory_space<vmem>>, %arg6: memref<256x160xbf16, #tpu.memory_space<vmem>>, %arg7: memref<1x160xf32, #tpu.memory_space<vmem>>, %arg8: memref<16x160xf32, #tpu.memory_space<vmem>>, %arg9: memref<8x16x1024xf32, #tpu.memory_space<vmem>>) attributes {dimension_semantics = [], scalar_prefetch = 0 : i64, scratch_operands = 1 : i64, tpu.core_type = #tpu.core_type<tc>} {
    %c0 = arith.constant 0 : index
    %c0_0 = arith.constant 0 : index
    %0 = vector.load %arg2[%c0, %c0_0] : memref<256x1024xbf16, #tpu.memory_space<vmem>>, vector<256x1024xbf16>
    %c0_1 = arith.constant 0 : index
    %c0_2 = arith.constant 0 : index
    %1 = vector.load %arg4[%c0_1, %c0_2] : memref<512x1024xbf16, #tpu.memory_space<vmem>>, vector<256x1024xbf16>
    %c256 = arith.constant 256 : index
    %c0_3 = arith.constant 0 : index
    %2 = vector.load %arg4[%c256, %c0_3] : memref<512x1024xbf16, #tpu.memory_space<vmem>>, vector<256x1024xbf16>
    %c0_4 = arith.constant 0 : index
    %c0_5 = arith.constant 0 : index
    %3 = vector.load %arg5[%c0_4, %c0_5] : memref<1x1024xf32, #tpu.memory_space<vmem>>, vector<1x1024xf32>
    %4 = vector.shape_cast %3 : vector<1x1024xf32> to vector<1x1024xf32>
    %5 = vector.broadcast %4 : vector<1x1024xf32> to vector<16x1024xf32>
    %c0_6 = arith.constant 0 : index
    %c0_7 = arith.constant 0 : index
    %c0_8 = arith.constant 0 : index
    %6 = vector.load %arg0[%c0_6, %c0_7, %c0_8] : memref<8x16x1xf32, #tpu.memory_space<vmem>>, vector<8x16x1xf32>
    %c0_9 = arith.constant 0 : index
    %c0_10 = arith.constant 0 : index
    %7 = vector.load %arg1[%c0_9, %c0_10] : memref<1x1024xf32, #tpu.memory_space<vmem>>, vector<1x1024xf32>
    %8 = vector.shape_cast %7 : vector<1x1024xf32> to vector<1x1x1024xf32>
    %9 = vector.broadcast %6 : vector<8x16x1xf32> to vector<8x16x1024xf32>
    %10 = vector.broadcast %8 : vector<1x1x1024xf32> to vector<8x16x1024xf32>
    %11 = arith.mulf %9, %10 : vector<8x16x1024xf32>
    %c0_11 = arith.constant 0 : index
    %c0_12 = arith.constant 0 : index
    %12 = vector.load %arg3[%c0_11, %c0_12] : memref<1x1024xf32, #tpu.memory_space<vmem>>, vector<1x1024xf32>
    %13 = vector.shape_cast %12 : vector<1x1024xf32> to vector<1x1x1024xf32>
    %14 = vector.broadcast %13 : vector<1x1x1024xf32> to vector<8x16x1024xf32>
    %15 = arith.addf %11, %14 : vector<8x16x1024xf32>
    %c0_13 = arith.constant 0 : index
    %c0_14 = arith.constant 0 : index
    %c0_15 = arith.constant 0 : index
    %16 = vector.load %arg9[%c0_13, %c0_14, %c0_15] : memref<8x16x1024xf32, #tpu.memory_space<vmem>>, vector<8x16x1024xf32>
    tpu.vector_store %arg9[%c0_13, %c0_14, %c0_15], %15 {strides = array<i32>} : memref<8x16x1024xf32, #tpu.memory_space<vmem>>, vector<8x16x1024xf32>,
    %cst = arith.constant 0.000000e+00 : bf16
    %17 = vector.broadcast %cst : bf16 to vector<16x256xbf16>
    %cst_16 = arith.constant 0.000000e+00 : f32
    %18 = vector.broadcast %cst_16 : f32 to vector<16x256xf32>
    %c0_i32 = arith.constant 0 : i32
    %cst_17 = arith.constant dense<0.000000e+00> : vector<16x1024xf32>
    %19 = tpu.matmul %17, %2, %cst_17 {dimension_numbers = #tpu.dot_dimension_numbers<[1], [0], [0], [1], [0, 0, 1, 1], [], []>} : vector<16x256xbf16>, vector<256x1024xbf16>, vector<16x1024xf32> -> vector<16x1024xf32>
    %20 = arith.index_cast %c0_i32 : i32 to index
    %c0_18 = arith.constant 0 : index
    %c0_19 = arith.constant 0 : index
    %21 = vector.load %arg9[%20, %c0_18, %c0_19] : memref<8x16x1024xf32, #tpu.memory_space<vmem>>, vector<1x16x1024xf32>
    %22 = vector.shape_cast %21 : vector<1x16x1024xf32> to vector<16x1024xf32>
    %cst_20 = arith.constant dense<0.000000e+00> : vector<16x1024xf32>
    %23 = tpu.matmul %17, %0, %cst_20 {dimension_numbers = #tpu.dot_dimension_numbers<[1], [0], [0], [1], [0, 0, 1, 1], [], []>} : vector<16x256xbf16>, vector<256x1024xbf16>, vector<16x1024xf32> -> vector<16x1024xf32>
    %24 = arith.addf %22, %23 : vector<16x1024xf32>
    %25 = vector.extract_strided_slice %24 {offsets = [0, 0], sizes = [16, 768], strides = [1, 1]} : vector<16x1024xf32> to vector<16x768xf32>
    %cst_21 = arith.constant 5.000000e-01 : f32
    %26 = vector.broadcast %cst_21 : f32 to vector<16x768xf32>
    %27 = arith.mulf %26, %25 : vector<16x768xf32>
    %28 = math.tanh %27 : vector<16x768xf32>
    %cst_22 = arith.constant 5.000000e-01 : f32
    %29 = vector.broadcast %cst_22 : f32 to vector<16x768xf32>
    %30 = arith.mulf %29, %28 : vector<16x768xf32>
    %cst_23 = arith.constant 5.000000e-01 : f32
    %31 = vector.broadcast %cst_23 : f32 to vector<16x768xf32>
    %32 = arith.addf %30, %31 : vector<16x768xf32>
    %33 = vector.extract_strided_slice %32 {offsets = [0, 0], sizes = [16, 256], strides = [1, 1]} : vector<16x768xf32> to vector<16x256xf32>
    %34 = vector.extract_strided_slice %32 {offsets = [0, 256], sizes = [16, 256], strides = [1, 1]} : vector<16x768xf32> to vector<16x256xf32>
    %35 = vector.extract_strided_slice %32 {offsets = [0, 512], sizes = [16, 256], strides = [1, 1]} : vector<16x768xf32> to vector<16x256xf32>
    %36 = vector.extract_strided_slice %24 {offsets = [0, 768], sizes = [16, 256], strides = [1, 1]} : vector<16x1024xf32> to vector<16x256xf32>
    %37 = math.tanh %36 : vector<16x256xf32>
    %38 = arith.mulf %34, %18 : vector<16x256xf32>
    %39 = arith.mulf %33, %37 : vector<16x256xf32>
    %40 = arith.addf %38, %39 : vector<16x256xf32>
    %41 = math.tanh %40 : vector<16x256xf32>
    %42 = arith.mulf %35, %41 : vector<16x256xf32>
    %43 = arith.truncf %42 : vector<16x256xf32> to vector<16x256xbf16>
    %cst_24 = arith.constant dense<0.000000e+00> : vector<16x1024xf32>
    %44 = tpu.matmul %43, %1, %cst_24 {dimension_numbers = #tpu.dot_dimension_numbers<[1], [0], [0], [1], [0, 0, 1, 1], [], []>} : vector<16x256xbf16>, vector<256x1024xbf16>, vector<16x1024xf32> -> vector<16x1024xf32>
    %45 = arith.addf %44, %19 : vector<16x1024xf32>
    %46 = arith.addf %45, %5 : vector<16x1024xf32>
    %47 = vector.extract_strided_slice %46 {offsets = [0, 0], sizes = [16, 768], strides = [1, 1]} : vector<16x1024xf32> to vector<16x768xf32>
    %cst_25 = arith.constant 5.000000e-01 : f32
    %48 = vector.broadcast %cst_25 : f32 to vector<16x768xf32>
    %49 = arith.mulf %48, %47 : vector<16x768xf32>
    %50 = math.tanh %49 : vector<16x768xf32>
    %cst_26 = arith.constant 5.000000e-01 : f32
    %51 = vector.broadcast %cst_26 : f32 to vector<16x768xf32>
    %52 = arith.mulf %51, %50 : vector<16x768xf32>
    %cst_27 = arith.constant 5.000000e-01 : f32
    %53 = vector.broadcast %cst_27 : f32 to vector<16x768xf32>
    %54 = arith.addf %52, %53 : vector<16x768xf32>
    %55 = vector.extract_strided_slice %54 {offsets = [0, 0], sizes = [16, 256], strides = [1, 1]} : vector<16x768xf32> to vector<16x256xf32>
    %56 = vector.extract_strided_slice %54 {offsets = [0, 256], sizes = [16, 256], strides = [1, 1]} : vector<16x768xf32> to vector<16x256xf32>
    %57 = vector.extract_strided_slice %54 {offsets = [0, 512], sizes = [16, 256], strides = [1, 1]} : vector<16x768xf32> to vector<16x256xf32>
    %58 = vector.extract_strided_slice %46 {offsets = [0, 768], sizes = [16, 256], strides = [1, 1]} : vector<16x1024xf32> to vector<16x256xf32>
    %59 = math.tanh %58 : vector<16x256xf32>
    %60 = arith.mulf %56, %18 : vector<16x256xf32>
    %61 = arith.mulf %55, %59 : vector<16x256xf32>
    %62 = arith.addf %60, %61 : vector<16x256xf32>
    %63 = math.tanh %62 : vector<16x256xf32>
    %64 = arith.mulf %57, %63 : vector<16x256xf32>
    %65 = arith.truncf %64 : vector<16x256xf32> to vector<16x256xbf16>
    %c1_i32 = arith.constant 1 : i32
    %cst_28 = arith.constant dense<0.000000e+00> : vector<16x1024xf32>
    %66 = tpu.matmul %65, %2, %cst_28 {dimension_numbers = #tpu.dot_dimension_numbers<[1], [0], [0], [1], [0, 0, 1, 1], [], []>} : vector<16x256xbf16>, vector<256x1024xbf16>, vector<16x1024xf32> -> vector<16x1024xf32>
    %67 = arith.index_cast %c1_i32 : i32 to index
    %c0_29 = arith.constant 0 : index
    %c0_30 = arith.constant 0 : index
    %68 = vector.load %arg9[%67, %c0_29, %c0_30] : memref<8x16x1024xf32, #tpu.memory_space<vmem>>, vector<1x16x1024xf32>
    %69 = vector.shape_cast %68 : vector<1x16x1024xf32> to vector<16x1024xf32>
    %cst_31 = arith.constant dense<0.000000e+00> : vector<16x1024xf32>
    %70 = tpu.matmul %43, %0, %cst_31 {dimension_numbers = #tpu.dot_dimension_numbers<[1], [0], [0], [1], [0, 0, 1, 1], [], []>} : vector<16x256xbf16>, vector<256x1024xbf16>, vector<16x1024xf32> -> vector<16x1024xf32>
    %71 = arith.addf %69, %70 : vector<16x1024xf32>
    %72 = vector.extract_strided_slice %71 {offsets = [0, 0], sizes = [16, 768], strides = [1, 1]} : vector<16x1024xf32> to vector<16x768xf32>
    %cst_32 = arith.constant 5.000000e-01 : f32
    %73 = vector.broadcast %cst_32 : f32 to vector<16x768xf32>
    %74 = arith.mulf %73, %72 : vector<16x768xf32>
    %75 = math.tanh %74 : vector<16x768xf32>
    %cst_33 = arith.constant 5.000000e-01 : f32
    %76 = vector.broadcast %cst_33 : f32 to vector<16x768xf32>
    %77 = arith.mulf %76, %75 : vector<16x768xf32>
    %cst_34 = arith.constant 5.000000e-01 : f32
    %78 = vector.broadcast %cst_34 : f32 to vector<16x768xf32>
    %79 = arith.addf %77, %78 : vector<16x768xf32>
    %80 = vector.extract_strided_slice %79 {offsets = [0, 0], sizes = [16, 256], strides = [1, 1]} : vector<16x768xf32> to vector<16x256xf32>
    %81 = vector.extract_strided_slice %79 {offsets = [0, 256], sizes = [16, 256], strides = [1, 1]} : vector<16x768xf32> to vector<16x256xf32>
    %82 = vector.extract_strided_slice %79 {offsets = [0, 512], sizes = [16, 256], strides = [1, 1]} : vector<16x768xf32> to vector<16x256xf32>
    %83 = vector.extract_strided_slice %71 {offsets = [0, 768], sizes = [16, 256], strides = [1, 1]} : vector<16x1024xf32> to vector<16x256xf32>
    %84 = math.tanh %83 : vector<16x256xf32>
    %85 = arith.mulf %81, %40 : vector<16x256xf32>
    %86 = arith.mulf %80, %84 : vector<16x256xf32>
    %87 = arith.addf %85, %86 : vector<16x256xf32>
    %88 = math.tanh %87 : vector<16x256xf32>
    %89 = arith.mulf %82, %88 : vector<16x256xf32>
    %90 = arith.truncf %89 : vector<16x256xf32> to vector<16x256xbf16>
    %cst_35 = arith.constant dense<0.000000e+00> : vector<16x1024xf32>
    %91 = tpu.matmul %90, %1, %cst_35 {dimension_numbers = #tpu.dot_dimension_numbers<[1], [0], [0], [1], [0, 0, 1, 1], [], []>} : vector<16x256xbf16>, vector<256x1024xbf16>, vector<16x1024xf32> -> vector<16x1024xf32>
    %92 = arith.addf %91, %66 : vector<16x1024xf32>
    %93 = arith.addf %92, %5 : vector<16x1024xf32>
    %94 = vector.extract_strided_slice %93 {offsets = [0, 0], sizes = [16, 768], strides = [1, 1]} : vector<16x1024xf32> to vector<16x768xf32>
    %cst_36 = arith.constant 5.000000e-01 : f32
    %95 = vector.broadcast %cst_36 : f32 to vector<16x768xf32>
    %96 = arith.mulf %95, %94 : vector<16x768xf32>
    %97 = math.tanh %96 : vector<16x768xf32>
    %cst_37 = arith.constant 5.000000e-01 : f32
    %98 = vector.broadcast %cst_37 : f32 to vector<16x768xf32>
    %99 = arith.mulf %98, %97 : vector<16x768xf32>
    %cst_38 = arith.constant 5.000000e-01 : f32
    %100 = vector.broadcast %cst_38 : f32 to vector<16x768xf32>
    %101 = arith.addf %99, %100 : vector<16x768xf32>
    %102 = vector.extract_strided_slice %101 {offsets = [0, 0], sizes = [16, 256], strides = [1, 1]} : vector<16x768xf32> to vector<16x256xf32>
    %103 = vector.extract_strided_slice %101 {offsets = [0, 256], sizes = [16, 256], strides = [1, 1]} : vector<16x768xf32> to vector<16x256xf32>
    %104 = vector.extract_strided_slice %101 {offsets = [0, 512], sizes = [16, 256], strides = [1, 1]} : vector<16x768xf32> to vector<16x256xf32>
    %105 = vector.extract_strided_slice %93 {offsets = [0, 768], sizes = [16, 256], strides = [1, 1]} : vector<16x1024xf32> to vector<16x256xf32>
    %106 = math.tanh %105 : vector<16x256xf32>
    %107 = arith.mulf %103, %62 : vector<16x256xf32>
    %108 = arith.mulf %102, %106 : vector<16x256xf32>
    %109 = arith.addf %107, %108 : vector<16x256xf32>
    %110 = math.tanh %109 : vector<16x256xf32>
    %111 = arith.mulf %104, %110 : vector<16x256xf32>
    %112 = arith.truncf %111 : vector<16x256xf32> to vector<16x256xbf16>
    %c2_i32 = arith.constant 2 : i32
    %cst_39 = arith.constant dense<0.000000e+00> : vector<16x1024xf32>
    %113 = tpu.matmul %112, %2, %cst_39 {dimension_numbers = #tpu.dot_dimension_numbers<[1], [0], [0], [1], [0, 0, 1, 1], [], []>} : vector<16x256xbf16>, vector<256x1024xbf16>, vector<16x1024xf32> -> vector<16x1024xf32>
    %114 = arith.index_cast %c2_i32 : i32 to index
    %c0_40 = arith.constant 0 : index
    %c0_41 = arith.constant 0 : index
    %115 = vector.load %arg9[%114, %c0_40, %c0_41] : memref<8x16x1024xf32, #tpu.memory_space<vmem>>, vector<1x16x1024xf32>
    %116 = vector.shape_cast %115 : vector<1x16x1024xf32> to vector<16x1024xf32>
    %cst_42 = arith.constant dense<0.000000e+00> : vector<16x1024xf32>
    %117 = tpu.matmul %90, %0, %cst_42 {dimension_numbers = #tpu.dot_dimension_numbers<[1], [0], [0], [1], [0, 0, 1, 1], [], []>} : vector<16x256xbf16>, vector<256x1024xbf16>, vector<16x1024xf32> -> vector<16x1024xf32>
    %118 = arith.addf %116, %117 : vector<16x1024xf32>
    %119 = vector.extract_strided_slice %118 {offsets = [0, 0], sizes = [16, 768], strides = [1, 1]} : vector<16x1024xf32> to vector<16x768xf32>
    %cst_43 = arith.constant 5.000000e-01 : f32
    %120 = vector.broadcast %cst_43 : f32 to vector<16x768xf32>
    %121 = arith.mulf %120, %119 : vector<16x768xf32>
    %122 = math.tanh %121 : vector<16x768xf32>
    %cst_44 = arith.constant 5.000000e-01 : f32
    %123 = vector.broadcast %cst_44 : f32 to vector<16x768xf32>
    %124 = arith.mulf %123, %122 : vector<16x768xf32>
    %cst_45 = arith.constant 5.000000e-01 : f32
    %125 = vector.broadcast %cst_45 : f32 to vector<16x768xf32>
    %126 = arith.addf %124, %125 : vector<16x768xf32>
    %127 = vector.extract_strided_slice %126 {offsets = [0, 0], sizes = [16, 256], strides = [1, 1]} : vector<16x768xf32> to vector<16x256xf32>
    %128 = vector.extract_strided_slice %126 {offsets = [0, 256], sizes = [16, 256], strides = [1, 1]} : vector<16x768xf32> to vector<16x256xf32>
    %129 = vector.extract_strided_slice %126 {offsets = [0, 512], sizes = [16, 256], strides = [1, 1]} : vector<16x768xf32> to vector<16x256xf32>
    %130 = vector.extract_strided_slice %118 {offsets = [0, 768], sizes = [16, 256], strides = [1, 1]} : vector<16x1024xf32> to vector<16x256xf32>
    %131 = math.tanh %130 : vector<16x256xf32>
    %132 = arith.mulf %128, %87 : vector<16x256xf32>
    %133 = arith.mulf %127, %131 : vector<16x256xf32>
    %134 = arith.addf %132, %133 : vector<16x256xf32>
    %135 = math.tanh %134 : vector<16x256xf32>
    %136 = arith.mulf %129, %135 : vector<16x256xf32>
    %137 = arith.truncf %136 : vector<16x256xf32> to vector<16x256xbf16>
    %cst_46 = arith.constant dense<0.000000e+00> : vector<16x1024xf32>
    %138 = tpu.matmul %137, %1, %cst_46 {dimension_numbers = #tpu.dot_dimension_numbers<[1], [0], [0], [1], [0, 0, 1, 1], [], []>} : vector<16x256xbf16>, vector<256x1024xbf16>, vector<16x1024xf32> -> vector<16x1024xf32>
    %139 = arith.addf %138, %113 : vector<16x1024xf32>
    %140 = arith.addf %139, %5 : vector<16x1024xf32>
    %141 = vector.extract_strided_slice %140 {offsets = [0, 0], sizes = [16, 768], strides = [1, 1]} : vector<16x1024xf32> to vector<16x768xf32>
    %cst_47 = arith.constant 5.000000e-01 : f32
    %142 = vector.broadcast %cst_47 : f32 to vector<16x768xf32>
    %143 = arith.mulf %142, %141 : vector<16x768xf32>
    %144 = math.tanh %143 : vector<16x768xf32>
    %cst_48 = arith.constant 5.000000e-01 : f32
    %145 = vector.broadcast %cst_48 : f32 to vector<16x768xf32>
    %146 = arith.mulf %145, %144 : vector<16x768xf32>
    %cst_49 = arith.constant 5.000000e-01 : f32
    %147 = vector.broadcast %cst_49 : f32 to vector<16x768xf32>
    %148 = arith.addf %146, %147 : vector<16x768xf32>
    %149 = vector.extract_strided_slice %148 {offsets = [0, 0], sizes = [16, 256], strides = [1, 1]} : vector<16x768xf32> to vector<16x256xf32>
    %150 = vector.extract_strided_slice %148 {offsets = [0, 256], sizes = [16, 256], strides = [1, 1]} : vector<16x768xf32> to vector<16x256xf32>
    %151 = vector.extract_strided_slice %148 {offsets = [0, 512], sizes = [16, 256], strides = [1, 1]} : vector<16x768xf32> to vector<16x256xf32>
    %152 = vector.extract_strided_slice %140 {offsets = [0, 768], sizes = [16, 256], strides = [1, 1]} : vector<16x1024xf32> to vector<16x256xf32>
    %153 = math.tanh %152 : vector<16x256xf32>
    %154 = arith.mulf %150, %109 : vector<16x256xf32>
    %155 = arith.mulf %149, %153 : vector<16x256xf32>
    %156 = arith.addf %154, %155 : vector<16x256xf32>
    %157 = math.tanh %156 : vector<16x256xf32>
    %158 = arith.mulf %151, %157 : vector<16x256xf32>
    %159 = arith.truncf %158 : vector<16x256xf32> to vector<16x256xbf16>
    %c3_i32 = arith.constant 3 : i32
    %cst_50 = arith.constant dense<0.000000e+00> : vector<16x1024xf32>
    %160 = tpu.matmul %159, %2, %cst_50 {dimension_numbers = #tpu.dot_dimension_numbers<[1], [0], [0], [1], [0, 0, 1, 1], [], []>} : vector<16x256xbf16>, vector<256x1024xbf16>, vector<16x1024xf32> -> vector<16x1024xf32>
    %161 = arith.index_cast %c3_i32 : i32 to index
    %c0_51 = arith.constant 0 : index
    %c0_52 = arith.constant 0 : index
    %162 = vector.load %arg9[%161, %c0_51, %c0_52] : memref<8x16x1024xf32, #tpu.memory_space<vmem>>, vector<1x16x1024xf32>
    %163 = vector.shape_cast %162 : vector<1x16x1024xf32> to vector<16x1024xf32>
    %cst_53 = arith.constant dense<0.000000e+00> : vector<16x1024xf32>
    %164 = tpu.matmul %137, %0, %cst_53 {dimension_numbers = #tpu.dot_dimension_numbers<[1], [0], [0], [1], [0, 0, 1, 1], [], []>} : vector<16x256xbf16>, vector<256x1024xbf16>, vector<16x1024xf32> -> vector<16x1024xf32>
    %165 = arith.addf %163, %164 : vector<16x1024xf32>
    %166 = vector.extract_strided_slice %165 {offsets = [0, 0], sizes = [16, 768], strides = [1, 1]} : vector<16x1024xf32> to vector<16x768xf32>
    %cst_54 = arith.constant 5.000000e-01 : f32
    %167 = vector.broadcast %cst_54 : f32 to vector<16x768xf32>
    %168 = arith.mulf %167, %166 : vector<16x768xf32>
    %169 = math.tanh %168 : vector<16x768xf32>
    %cst_55 = arith.constant 5.000000e-01 : f32
    %170 = vector.broadcast %cst_55 : f32 to vector<16x768xf32>
    %171 = arith.mulf %170, %169 : vector<16x768xf32>
    %cst_56 = arith.constant 5.000000e-01 : f32
    %172 = vector.broadcast %cst_56 : f32 to vector<16x768xf32>
    %173 = arith.addf %171, %172 : vector<16x768xf32>
    %174 = vector.extract_strided_slice %173 {offsets = [0, 0], sizes = [16, 256], strides = [1, 1]} : vector<16x768xf32> to vector<16x256xf32>
    %175 = vector.extract_strided_slice %173 {offsets = [0, 256], sizes = [16, 256], strides = [1, 1]} : vector<16x768xf32> to vector<16x256xf32>
    %176 = vector.extract_strided_slice %173 {offsets = [0, 512], sizes = [16, 256], strides = [1, 1]} : vector<16x768xf32> to vector<16x256xf32>
    %177 = vector.extract_strided_slice %165 {offsets = [0, 768], sizes = [16, 256], strides = [1, 1]} : vector<16x1024xf32> to vector<16x256xf32>
    %178 = math.tanh %177 : vector<16x256xf32>
    %179 = arith.mulf %175, %134 : vector<16x256xf32>
    %180 = arith.mulf %174, %178 : vector<16x256xf32>
    %181 = arith.addf %179, %180 : vector<16x256xf32>
    %182 = math.tanh %181 : vector<16x256xf32>
    %183 = arith.mulf %176, %182 : vector<16x256xf32>
    %184 = arith.truncf %183 : vector<16x256xf32> to vector<16x256xbf16>
    %cst_57 = arith.constant dense<0.000000e+00> : vector<16x1024xf32>
    %185 = tpu.matmul %184, %1, %cst_57 {dimension_numbers = #tpu.dot_dimension_numbers<[1], [0], [0], [1], [0, 0, 1, 1], [], []>} : vector<16x256xbf16>, vector<256x1024xbf16>, vector<16x1024xf32> -> vector<16x1024xf32>
    %186 = arith.addf %185, %160 : vector<16x1024xf32>
    %187 = arith.addf %186, %5 : vector<16x1024xf32>
    %188 = vector.extract_strided_slice %187 {offsets = [0, 0], sizes = [16, 768], strides = [1, 1]} : vector<16x1024xf32> to vector<16x768xf32>
    %cst_58 = arith.constant 5.000000e-01 : f32
    %189 = vector.broadcast %cst_58 : f32 to vector<16x768xf32>
    %190 = arith.mulf %189, %188 : vector<16x768xf32>
    %191 = math.tanh %190 : vector<16x768xf32>
    %cst_59 = arith.constant 5.000000e-01 : f32
    %192 = vector.broadcast %cst_59 : f32 to vector<16x768xf32>
    %193 = arith.mulf %192, %191 : vector<16x768xf32>
    %cst_60 = arith.constant 5.000000e-01 : f32
    %194 = vector.broadcast %cst_60 : f32 to vector<16x768xf32>
    %195 = arith.addf %193, %194 : vector<16x768xf32>
    %196 = vector.extract_strided_slice %195 {offsets = [0, 0], sizes = [16, 256], strides = [1, 1]} : vector<16x768xf32> to vector<16x256xf32>
    %197 = vector.extract_strided_slice %195 {offsets = [0, 256], sizes = [16, 256], strides = [1, 1]} : vector<16x768xf32> to vector<16x256xf32>
    %198 = vector.extract_strided_slice %195 {offsets = [0, 512], sizes = [16, 256], strides = [1, 1]} : vector<16x768xf32> to vector<16x256xf32>
    %199 = vector.extract_strided_slice %187 {offsets = [0, 768], sizes = [16, 256], strides = [1, 1]} : vector<16x1024xf32> to vector<16x256xf32>
    %200 = math.tanh %199 : vector<16x256xf32>
    %201 = arith.mulf %197, %156 : vector<16x256xf32>
    %202 = arith.mulf %196, %200 : vector<16x256xf32>
    %203 = arith.addf %201, %202 : vector<16x256xf32>
    %204 = math.tanh %203 : vector<16x256xf32>
    %205 = arith.mulf %198, %204 : vector<16x256xf32>
    %206 = arith.truncf %205 : vector<16x256xf32> to vector<16x256xbf16>
    %c4_i32 = arith.constant 4 : i32
    %cst_61 = arith.constant dense<0.000000e+00> : vector<16x1024xf32>
    %207 = tpu.matmul %206, %2, %cst_61 {dimension_numbers = #tpu.dot_dimension_numbers<[1], [0], [0], [1], [0, 0, 1, 1], [], []>} : vector<16x256xbf16>, vector<256x1024xbf16>, vector<16x1024xf32> -> vector<16x1024xf32>
    %208 = arith.index_cast %c4_i32 : i32 to index
    %c0_62 = arith.constant 0 : index
    %c0_63 = arith.constant 0 : index
    %209 = vector.load %arg9[%208, %c0_62, %c0_63] : memref<8x16x1024xf32, #tpu.memory_space<vmem>>, vector<1x16x1024xf32>
    %210 = vector.shape_cast %209 : vector<1x16x1024xf32> to vector<16x1024xf32>
    %cst_64 = arith.constant dense<0.000000e+00> : vector<16x1024xf32>
    %211 = tpu.matmul %184, %0, %cst_64 {dimension_numbers = #tpu.dot_dimension_numbers<[1], [0], [0], [1], [0, 0, 1, 1], [], []>} : vector<16x256xbf16>, vector<256x1024xbf16>, vector<16x1024xf32> -> vector<16x1024xf32>
    %212 = arith.addf %210, %211 : vector<16x1024xf32>
    %213 = vector.extract_strided_slice %212 {offsets = [0, 0], sizes = [16, 768], strides = [1, 1]} : vector<16x1024xf32> to vector<16x768xf32>
    %cst_65 = arith.constant 5.000000e-01 : f32
    %214 = vector.broadcast %cst_65 : f32 to vector<16x768xf32>
    %215 = arith.mulf %214, %213 : vector<16x768xf32>
    %216 = math.tanh %215 : vector<16x768xf32>
    %cst_66 = arith.constant 5.000000e-01 : f32
    %217 = vector.broadcast %cst_66 : f32 to vector<16x768xf32>
    %218 = arith.mulf %217, %216 : vector<16x768xf32>
    %cst_67 = arith.constant 5.000000e-01 : f32
    %219 = vector.broadcast %cst_67 : f32 to vector<16x768xf32>
    %220 = arith.addf %218, %219 : vector<16x768xf32>
    %221 = vector.extract_strided_slice %220 {offsets = [0, 0], sizes = [16, 256], strides = [1, 1]} : vector<16x768xf32> to vector<16x256xf32>
    %222 = vector.extract_strided_slice %220 {offsets = [0, 256], sizes = [16, 256], strides = [1, 1]} : vector<16x768xf32> to vector<16x256xf32>
    %223 = vector.extract_strided_slice %220 {offsets = [0, 512], sizes = [16, 256], strides = [1, 1]} : vector<16x768xf32> to vector<16x256xf32>
    %224 = vector.extract_strided_slice %212 {offsets = [0, 768], sizes = [16, 256], strides = [1, 1]} : vector<16x1024xf32> to vector<16x256xf32>
    %225 = math.tanh %224 : vector<16x256xf32>
    %226 = arith.mulf %222, %181 : vector<16x256xf32>
    %227 = arith.mulf %221, %225 : vector<16x256xf32>
    %228 = arith.addf %226, %227 : vector<16x256xf32>
    %229 = math.tanh %228 : vector<16x256xf32>
    %230 = arith.mulf %223, %229 : vector<16x256xf32>
    %231 = arith.truncf %230 : vector<16x256xf32> to vector<16x256xbf16>
    %cst_68 = arith.constant dense<0.000000e+00> : vector<16x1024xf32>
    %232 = tpu.matmul %231, %1, %cst_68 {dimension_numbers = #tpu.dot_dimension_numbers<[1], [0], [0], [1], [0, 0, 1, 1], [], []>} : vector<16x256xbf16>, vector<256x1024xbf16>, vector<16x1024xf32> -> vector<16x1024xf32>
    %233 = arith.addf %232, %207 : vector<16x1024xf32>
    %234 = arith.addf %233, %5 : vector<16x1024xf32>
    %235 = vector.extract_strided_slice %234 {offsets = [0, 0], sizes = [16, 768], strides = [1, 1]} : vector<16x1024xf32> to vector<16x768xf32>
    %cst_69 = arith.constant 5.000000e-01 : f32
    %236 = vector.broadcast %cst_69 : f32 to vector<16x768xf32>
    %237 = arith.mulf %236, %235 : vector<16x768xf32>
    %238 = math.tanh %237 : vector<16x768xf32>
    %cst_70 = arith.constant 5.000000e-01 : f32
    %239 = vector.broadcast %cst_70 : f32 to vector<16x768xf32>
    %240 = arith.mulf %239, %238 : vector<16x768xf32>
    %cst_71 = arith.constant 5.000000e-01 : f32
    %241 = vector.broadcast %cst_71 : f32 to vector<16x768xf32>
    %242 = arith.addf %240, %241 : vector<16x768xf32>
    %243 = vector.extract_strided_slice %242 {offsets = [0, 0], sizes = [16, 256], strides = [1, 1]} : vector<16x768xf32> to vector<16x256xf32>
    %244 = vector.extract_strided_slice %242 {offsets = [0, 256], sizes = [16, 256], strides = [1, 1]} : vector<16x768xf32> to vector<16x256xf32>
    %245 = vector.extract_strided_slice %242 {offsets = [0, 512], sizes = [16, 256], strides = [1, 1]} : vector<16x768xf32> to vector<16x256xf32>
    %246 = vector.extract_strided_slice %234 {offsets = [0, 768], sizes = [16, 256], strides = [1, 1]} : vector<16x1024xf32> to vector<16x256xf32>
    %247 = math.tanh %246 : vector<16x256xf32>
    %248 = arith.mulf %244, %203 : vector<16x256xf32>
    %249 = arith.mulf %243, %247 : vector<16x256xf32>
    %250 = arith.addf %248, %249 : vector<16x256xf32>
    %251 = math.tanh %250 : vector<16x256xf32>
    %252 = arith.mulf %245, %251 : vector<16x256xf32>
    %253 = arith.truncf %252 : vector<16x256xf32> to vector<16x256xbf16>
    %c5_i32 = arith.constant 5 : i32
    %cst_72 = arith.constant dense<0.000000e+00> : vector<16x1024xf32>
    %254 = tpu.matmul %253, %2, %cst_72 {dimension_numbers = #tpu.dot_dimension_numbers<[1], [0], [0], [1], [0, 0, 1, 1], [], []>} : vector<16x256xbf16>, vector<256x1024xbf16>, vector<16x1024xf32> -> vector<16x1024xf32>
    %255 = arith.index_cast %c5_i32 : i32 to index
    %c0_73 = arith.constant 0 : index
    %c0_74 = arith.constant 0 : index
    %256 = vector.load %arg9[%255, %c0_73, %c0_74] : memref<8x16x1024xf32, #tpu.memory_space<vmem>>, vector<1x16x1024xf32>
    %257 = vector.shape_cast %256 : vector<1x16x1024xf32> to vector<16x1024xf32>
    %cst_75 = arith.constant dense<0.000000e+00> : vector<16x1024xf32>
    %258 = tpu.matmul %231, %0, %cst_75 {dimension_numbers = #tpu.dot_dimension_numbers<[1], [0], [0], [1], [0, 0, 1, 1], [], []>} : vector<16x256xbf16>, vector<256x1024xbf16>, vector<16x1024xf32> -> vector<16x1024xf32>
    %259 = arith.addf %257, %258 : vector<16x1024xf32>
    %260 = vector.extract_strided_slice %259 {offsets = [0, 0], sizes = [16, 768], strides = [1, 1]} : vector<16x1024xf32> to vector<16x768xf32>
    %cst_76 = arith.constant 5.000000e-01 : f32
    %261 = vector.broadcast %cst_76 : f32 to vector<16x768xf32>
    %262 = arith.mulf %261, %260 : vector<16x768xf32>
    %263 = math.tanh %262 : vector<16x768xf32>
    %cst_77 = arith.constant 5.000000e-01 : f32
    %264 = vector.broadcast %cst_77 : f32 to vector<16x768xf32>
    %265 = arith.mulf %264, %263 : vector<16x768xf32>
    %cst_78 = arith.constant 5.000000e-01 : f32
    %266 = vector.broadcast %cst_78 : f32 to vector<16x768xf32>
    %267 = arith.addf %265, %266 : vector<16x768xf32>
    %268 = vector.extract_strided_slice %267 {offsets = [0, 0], sizes = [16, 256], strides = [1, 1]} : vector<16x768xf32> to vector<16x256xf32>
    %269 = vector.extract_strided_slice %267 {offsets = [0, 256], sizes = [16, 256], strides = [1, 1]} : vector<16x768xf32> to vector<16x256xf32>
    %270 = vector.extract_strided_slice %267 {offsets = [0, 512], sizes = [16, 256], strides = [1, 1]} : vector<16x768xf32> to vector<16x256xf32>
    %271 = vector.extract_strided_slice %259 {offsets = [0, 768], sizes = [16, 256], strides = [1, 1]} : vector<16x1024xf32> to vector<16x256xf32>
    %272 = math.tanh %271 : vector<16x256xf32>
    %273 = arith.mulf %269, %228 : vector<16x256xf32>
    %274 = arith.mulf %268, %272 : vector<16x256xf32>
    %275 = arith.addf %273, %274 : vector<16x256xf32>
    %276 = math.tanh %275 : vector<16x256xf32>
    %277 = arith.mulf %270, %276 : vector<16x256xf32>
    %278 = arith.truncf %277 : vector<16x256xf32> to vector<16x256xbf16>
    %cst_79 = arith.constant dense<0.000000e+00> : vector<16x1024xf32>
    %279 = tpu.matmul %278, %1, %cst_79 {dimension_numbers = #tpu.dot_dimension_numbers<[1], [0], [0], [1], [0, 0, 1, 1], [], []>} : vector<16x256xbf16>, vector<256x1024xbf16>, vector<16x1024xf32> -> vector<16x1024xf32>
    %280 = arith.addf %279, %254 : vector<16x1024xf32>
    %281 = arith.addf %280, %5 : vector<16x1024xf32>
    %282 = vector.extract_strided_slice %281 {offsets = [0, 0], sizes = [16, 768], strides = [1, 1]} : vector<16x1024xf32> to vector<16x768xf32>
    %cst_80 = arith.constant 5.000000e-01 : f32
    %283 = vector.broadcast %cst_80 : f32 to vector<16x768xf32>
    %284 = arith.mulf %283, %282 : vector<16x768xf32>
    %285 = math.tanh %284 : vector<16x768xf32>
    %cst_81 = arith.constant 5.000000e-01 : f32
    %286 = vector.broadcast %cst_81 : f32 to vector<16x768xf32>
    %287 = arith.mulf %286, %285 : vector<16x768xf32>
    %cst_82 = arith.constant 5.000000e-01 : f32
    %288 = vector.broadcast %cst_82 : f32 to vector<16x768xf32>
    %289 = arith.addf %287, %288 : vector<16x768xf32>
    %290 = vector.extract_strided_slice %289 {offsets = [0, 0], sizes = [16, 256], strides = [1, 1]} : vector<16x768xf32> to vector<16x256xf32>
    %291 = vector.extract_strided_slice %289 {offsets = [0, 256], sizes = [16, 256], strides = [1, 1]} : vector<16x768xf32> to vector<16x256xf32>
    %292 = vector.extract_strided_slice %289 {offsets = [0, 512], sizes = [16, 256], strides = [1, 1]} : vector<16x768xf32> to vector<16x256xf32>
    %293 = vector.extract_strided_slice %281 {offsets = [0, 768], sizes = [16, 256], strides = [1, 1]} : vector<16x1024xf32> to vector<16x256xf32>
    %294 = math.tanh %293 : vector<16x256xf32>
    %295 = arith.mulf %291, %250 : vector<16x256xf32>
    %296 = arith.mulf %290, %294 : vector<16x256xf32>
    %297 = arith.addf %295, %296 : vector<16x256xf32>
    %298 = math.tanh %297 : vector<16x256xf32>
    %299 = arith.mulf %292, %298 : vector<16x256xf32>
    %300 = arith.truncf %299 : vector<16x256xf32> to vector<16x256xbf16>
    %c6_i32 = arith.constant 6 : i32
    %cst_83 = arith.constant dense<0.000000e+00> : vector<16x1024xf32>
    %301 = tpu.matmul %300, %2, %cst_83 {dimension_numbers = #tpu.dot_dimension_numbers<[1], [0], [0], [1], [0, 0, 1, 1], [], []>} : vector<16x256xbf16>, vector<256x1024xbf16>, vector<16x1024xf32> -> vector<16x1024xf32>
    %302 = arith.index_cast %c6_i32 : i32 to index
    %c0_84 = arith.constant 0 : index
    %c0_85 = arith.constant 0 : index
    %303 = vector.load %arg9[%302, %c0_84, %c0_85] : memref<8x16x1024xf32, #tpu.memory_space<vmem>>, vector<1x16x1024xf32>
    %304 = vector.shape_cast %303 : vector<1x16x1024xf32> to vector<16x1024xf32>
    %cst_86 = arith.constant dense<0.000000e+00> : vector<16x1024xf32>
    %305 = tpu.matmul %278, %0, %cst_86 {dimension_numbers = #tpu.dot_dimension_numbers<[1], [0], [0], [1], [0, 0, 1, 1], [], []>} : vector<16x256xbf16>, vector<256x1024xbf16>, vector<16x1024xf32> -> vector<16x1024xf32>
    %306 = arith.addf %304, %305 : vector<16x1024xf32>
    %307 = vector.extract_strided_slice %306 {offsets = [0, 0], sizes = [16, 768], strides = [1, 1]} : vector<16x1024xf32> to vector<16x768xf32>
    %cst_87 = arith.constant 5.000000e-01 : f32
    %308 = vector.broadcast %cst_87 : f32 to vector<16x768xf32>
    %309 = arith.mulf %308, %307 : vector<16x768xf32>
    %310 = math.tanh %309 : vector<16x768xf32>
    %cst_88 = arith.constant 5.000000e-01 : f32
    %311 = vector.broadcast %cst_88 : f32 to vector<16x768xf32>
    %312 = arith.mulf %311, %310 : vector<16x768xf32>
    %cst_89 = arith.constant 5.000000e-01 : f32
    %313 = vector.broadcast %cst_89 : f32 to vector<16x768xf32>
    %314 = arith.addf %312, %313 : vector<16x768xf32>
    %315 = vector.extract_strided_slice %314 {offsets = [0, 0], sizes = [16, 256], strides = [1, 1]} : vector<16x768xf32> to vector<16x256xf32>
    %316 = vector.extract_strided_slice %314 {offsets = [0, 256], sizes = [16, 256], strides = [1, 1]} : vector<16x768xf32> to vector<16x256xf32>
    %317 = vector.extract_strided_slice %314 {offsets = [0, 512], sizes = [16, 256], strides = [1, 1]} : vector<16x768xf32> to vector<16x256xf32>
    %318 = vector.extract_strided_slice %306 {offsets = [0, 768], sizes = [16, 256], strides = [1, 1]} : vector<16x1024xf32> to vector<16x256xf32>
    %319 = math.tanh %318 : vector<16x256xf32>
    %320 = arith.mulf %316, %275 : vector<16x256xf32>
    %321 = arith.mulf %315, %319 : vector<16x256xf32>
    %322 = arith.addf %320, %321 : vector<16x256xf32>
    %323 = math.tanh %322 : vector<16x256xf32>
    %324 = arith.mulf %317, %323 : vector<16x256xf32>
    %325 = arith.truncf %324 : vector<16x256xf32> to vector<16x256xbf16>
    %cst_90 = arith.constant dense<0.000000e+00> : vector<16x1024xf32>
    %326 = tpu.matmul %325, %1, %cst_90 {dimension_numbers = #tpu.dot_dimension_numbers<[1], [0], [0], [1], [0, 0, 1, 1], [], []>} : vector<16x256xbf16>, vector<256x1024xbf16>, vector<16x1024xf32> -> vector<16x1024xf32>
    %327 = arith.addf %326, %301 : vector<16x1024xf32>
    %328 = arith.addf %327, %5 : vector<16x1024xf32>
    %329 = vector.extract_strided_slice %328 {offsets = [0, 0], sizes = [16, 768], strides = [1, 1]} : vector<16x1024xf32> to vector<16x768xf32>
    %cst_91 = arith.constant 5.000000e-01 : f32
    %330 = vector.broadcast %cst_91 : f32 to vector<16x768xf32>
    %331 = arith.mulf %330, %329 : vector<16x768xf32>
    %332 = math.tanh %331 : vector<16x768xf32>
    %cst_92 = arith.constant 5.000000e-01 : f32
    %333 = vector.broadcast %cst_92 : f32 to vector<16x768xf32>
    %334 = arith.mulf %333, %332 : vector<16x768xf32>
    %cst_93 = arith.constant 5.000000e-01 : f32
    %335 = vector.broadcast %cst_93 : f32 to vector<16x768xf32>
    %336 = arith.addf %334, %335 : vector<16x768xf32>
    %337 = vector.extract_strided_slice %336 {offsets = [0, 0], sizes = [16, 256], strides = [1, 1]} : vector<16x768xf32> to vector<16x256xf32>
    %338 = vector.extract_strided_slice %336 {offsets = [0, 256], sizes = [16, 256], strides = [1, 1]} : vector<16x768xf32> to vector<16x256xf32>
    %339 = vector.extract_strided_slice %336 {offsets = [0, 512], sizes = [16, 256], strides = [1, 1]} : vector<16x768xf32> to vector<16x256xf32>
    %340 = vector.extract_strided_slice %328 {offsets = [0, 768], sizes = [16, 256], strides = [1, 1]} : vector<16x1024xf32> to vector<16x256xf32>
    %341 = math.tanh %340 : vector<16x256xf32>
    %342 = arith.mulf %338, %297 : vector<16x256xf32>
    %343 = arith.mulf %337, %341 : vector<16x256xf32>
    %344 = arith.addf %342, %343 : vector<16x256xf32>
    %345 = math.tanh %344 : vector<16x256xf32>
    %346 = arith.mulf %339, %345 : vector<16x256xf32>
    %347 = arith.truncf %346 : vector<16x256xf32> to vector<16x256xbf16>
    %c7_i32 = arith.constant 7 : i32
    %cst_94 = arith.constant dense<0.000000e+00> : vector<16x1024xf32>
    %348 = tpu.matmul %347, %2, %cst_94 {dimension_numbers = #tpu.dot_dimension_numbers<[1], [0], [0], [1], [0, 0, 1, 1], [], []>} : vector<16x256xbf16>, vector<256x1024xbf16>, vector<16x1024xf32> -> vector<16x1024xf32>
    %349 = arith.index_cast %c7_i32 : i32 to index
    %c0_95 = arith.constant 0 : index
    %c0_96 = arith.constant 0 : index
    %350 = vector.load %arg9[%349, %c0_95, %c0_96] : memref<8x16x1024xf32, #tpu.memory_space<vmem>>, vector<1x16x1024xf32>
    %351 = vector.shape_cast %350 : vector<1x16x1024xf32> to vector<16x1024xf32>
    %cst_97 = arith.constant dense<0.000000e+00> : vector<16x1024xf32>
    %352 = tpu.matmul %325, %0, %cst_97 {dimension_numbers = #tpu.dot_dimension_numbers<[1], [0], [0], [1], [0, 0, 1, 1], [], []>} : vector<16x256xbf16>, vector<256x1024xbf16>, vector<16x1024xf32> -> vector<16x1024xf32>
    %353 = arith.addf %351, %352 : vector<16x1024xf32>
    %354 = vector.extract_strided_slice %353 {offsets = [0, 0], sizes = [16, 768], strides = [1, 1]} : vector<16x1024xf32> to vector<16x768xf32>
    %cst_98 = arith.constant 5.000000e-01 : f32
    %355 = vector.broadcast %cst_98 : f32 to vector<16x768xf32>
    %356 = arith.mulf %355, %354 : vector<16x768xf32>
    %357 = math.tanh %356 : vector<16x768xf32>
    %cst_99 = arith.constant 5.000000e-01 : f32
    %358 = vector.broadcast %cst_99 : f32 to vector<16x768xf32>
    %359 = arith.mulf %358, %357 : vector<16x768xf32>
    %cst_100 = arith.constant 5.000000e-01 : f32
    %360 = vector.broadcast %cst_100 : f32 to vector<16x768xf32>
    %361 = arith.addf %359, %360 : vector<16x768xf32>
    %362 = vector.extract_strided_slice %361 {offsets = [0, 0], sizes = [16, 256], strides = [1, 1]} : vector<16x768xf32> to vector<16x256xf32>
    %363 = vector.extract_strided_slice %361 {offsets = [0, 256], sizes = [16, 256], strides = [1, 1]} : vector<16x768xf32> to vector<16x256xf32>
    %364 = vector.extract_strided_slice %361 {offsets = [0, 512], sizes = [16, 256], strides = [1, 1]} : vector<16x768xf32> to vector<16x256xf32>
    %365 = vector.extract_strided_slice %353 {offsets = [0, 768], sizes = [16, 256], strides = [1, 1]} : vector<16x1024xf32> to vector<16x256xf32>
    %366 = math.tanh %365 : vector<16x256xf32>
    %367 = arith.mulf %363, %322 : vector<16x256xf32>
    %368 = arith.mulf %362, %366 : vector<16x256xf32>
    %369 = arith.addf %367, %368 : vector<16x256xf32>
    %370 = math.tanh %369 : vector<16x256xf32>
    %371 = arith.mulf %364, %370 : vector<16x256xf32>
    %372 = arith.truncf %371 : vector<16x256xf32> to vector<16x256xbf16>
    %cst_101 = arith.constant dense<0.000000e+00> : vector<16x1024xf32>
    %373 = tpu.matmul %372, %1, %cst_101 {dimension_numbers = #tpu.dot_dimension_numbers<[1], [0], [0], [1], [0, 0, 1, 1], [], []>} : vector<16x256xbf16>, vector<256x1024xbf16>, vector<16x1024xf32> -> vector<16x1024xf32>
    %374 = arith.addf %373, %348 : vector<16x1024xf32>
    %375 = arith.addf %374, %5 : vector<16x1024xf32>
    %376 = vector.extract_strided_slice %375 {offsets = [0, 0], sizes = [16, 768], strides = [1, 1]} : vector<16x1024xf32> to vector<16x768xf32>
    %cst_102 = arith.constant 5.000000e-01 : f32
    %377 = vector.broadcast %cst_102 : f32 to vector<16x768xf32>
    %378 = arith.mulf %377, %376 : vector<16x768xf32>
    %379 = math.tanh %378 : vector<16x768xf32>
    %cst_103 = arith.constant 5.000000e-01 : f32
    %380 = vector.broadcast %cst_103 : f32 to vector<16x768xf32>
    %381 = arith.mulf %380, %379 : vector<16x768xf32>
    %cst_104 = arith.constant 5.000000e-01 : f32
    %382 = vector.broadcast %cst_104 : f32 to vector<16x768xf32>
    %383 = arith.addf %381, %382 : vector<16x768xf32>
    %384 = vector.extract_strided_slice %383 {offsets = [0, 0], sizes = [16, 256], strides = [1, 1]} : vector<16x768xf32> to vector<16x256xf32>
    %385 = vector.extract_strided_slice %383 {offsets = [0, 256], sizes = [16, 256], strides = [1, 1]} : vector<16x768xf32> to vector<16x256xf32>
    %386 = vector.extract_strided_slice %383 {offsets = [0, 512], sizes = [16, 256], strides = [1, 1]} : vector<16x768xf32> to vector<16x256xf32>
    %387 = vector.extract_strided_slice %375 {offsets = [0, 768], sizes = [16, 256], strides = [1, 1]} : vector<16x1024xf32> to vector<16x256xf32>
    %388 = math.tanh %387 : vector<16x256xf32>
    %389 = arith.mulf %385, %344 : vector<16x256xf32>
    %390 = arith.mulf %384, %388 : vector<16x256xf32>
    %391 = arith.addf %389, %390 : vector<16x256xf32>
    %392 = math.tanh %391 : vector<16x256xf32>
    %393 = arith.mulf %386, %392 : vector<16x256xf32>
    %394 = arith.truncf %393 : vector<16x256xf32> to vector<16x256xbf16>
    %c8_i32 = arith.constant 8 : i32
    %c0_105 = arith.constant 0 : index
    %c0_106 = arith.constant 0 : index
    %395 = vector.load %arg6[%c0_105, %c0_106] : memref<256x160xbf16, #tpu.memory_space<vmem>>, vector<256x160xbf16>
    %cst_107 = arith.constant dense<0.000000e+00> : vector<16x160xf32>
    %396 = tpu.matmul %394, %395, %cst_107 {dimension_numbers = #tpu.dot_dimension_numbers<[1], [0], [0], [1], [0, 0, 1, 1], [], []>} : vector<16x256xbf16>, vector<256x160xbf16>, vector<16x160xf32> -> vector<16x160xf32>
    %c0_108 = arith.constant 0 : index
    %c0_109 = arith.constant 0 : index
    %397 = vector.load %arg7[%c0_108, %c0_109] : memref<1x160xf32, #tpu.memory_space<vmem>>, vector<1x160xf32>
    %398 = vector.broadcast %397 : vector<1x160xf32> to vector<16x160xf32>
    %399 = arith.addf %396, %398 : vector<16x160xf32>
    %c0_110 = arith.constant 0 : index
    %c0_111 = arith.constant 0 : index
    %400 = vector.load %arg8[%c0_110, %c0_111] : memref<16x160xf32, #tpu.memory_space<vmem>>, vector<16x160xf32>
    tpu.vector_store %arg8[%c0_110, %c0_111], %399 {strides = array<i32>} : memref<16x160xf32, #tpu.memory_space<vmem>>, vector<16x160xf32>,
    return
  }
}

</mosaic_0001>

<llo_original>
// kernel: tpu_custom_call.1
$region0: #{tpu_custom_call.1}
  #allocation0 [shape = 'u32[]', space=smem, size = 0x4, offset = 0x4, fixed_abs, tag = 'smem constant byte address 0x4 - core index']
  #allocation1 [shape = 'u32[72,128]{1,0:T(1,128)}', space=vmem, size = 0x9000, scoped, tag = 'internal scratch']
  #allocation2 [shape = 'f32[8,16,1024]{2,1,0:T(8,128)}', space=vmem, size = 0x80000, scoped, tag = 'scratch operand']
  %s0 = inlined_call_operand.vmem [shape: f32[8,16,1], index: 0, kind: input, shape index: {}]
  %s1 = inlined_call_operand.vmem [shape: f32[1,1024], index: 1, kind: input, shape index: {}]
  %s2 = inlined_call_operand.hbm [shape: bf16[256,1024], index: 2, kind: input, shape index: {}]
  %s3 = inlined_call_operand.vmem [shape: f32[1,1024], index: 3, kind: input, shape index: {}]
  %s4 = inlined_call_operand.hbm [shape: bf16[512,1024], index: 4, kind: input, shape index: {}]
  %s5 = inlined_call_operand.vmem [shape: f32[1,1024], index: 5, kind: input, shape index: {}]
  %s6 = inlined_call_operand.vmem [shape: bf16[256,160], index: 6, kind: input, shape index: {}]
  %s7 = inlined_call_operand.vmem [shape: f32[1,160], index: 7, kind: input, shape index: {}]
  %s8 = inlined_call_operand.hbm [shape: f32[16,160], index: 8, kind: output, shape index: {}]
  %s9 = sld [smem:[#allocation0]]
  $region50: #{tpu_custom_call.1} parent=0
    _
  %s11 = ssub.s32 1, %s9
  %s12 = scalar_select 0, %s11, %s9
  $region1: #{tpu_custom_call.1} parent=0
    #allocation3 [shape = 'u8[524288]{0}', space=vmem, size = 0x80000, scoped, tag = 'input window, operand 2, single buffered']
    #allocation4 [shape = 's32[1]{0}', space=sflag, size = 0x4, scoped, tag = 'scoped memory for tpu_custom_call.1']
    #allocation5 [shape = 's32[1]{0}', space=sflag, size = 0x4, scoped, tag = 'scoped memory for tpu_custom_call.1']
    #allocation6 [shape = 'u8[1048576]{0}', space=vmem, size = 0x100000, scoped, tag = 'input window, operand 4, single buffered']
    #allocation7 [shape = 's32[1]{0}', space=sflag, size = 0x4, scoped, tag = 'scoped memory for tpu_custom_call.1']
    #allocation8 [shape = 'u8[16384]{0}', space=vmem, size = 0x4000, scoped, tag = 'output window, operand 0, single buffered']
    %13 = vsyncpa [#allocation4], 0
    %14 = vsyncpa [#allocation7], 0
    %15 = vsyncpa [#allocation5], 0
    // Predicated region
    $region2: #{tpu_custom_call.1} parent=1 // pred_check
      _
    $region3: #{tpu_custom_call.1} parent=1 // pred_check_branch
      %17 = sbr.rel (0) target = $region5
    $region4: #{tpu_custom_call.1} parent=1 // pred_region
      _
    $region5: #{tpu_custom_call.1} parent=1 // pred_fallthru
      _
    // Predicated region
    $region6: #{tpu_custom_call.1} parent=1 // pred_check
      _
    $region7: #{tpu_custom_call.1} parent=1 // pred_check_branch
      %19 = sbr.rel (0) target = $region9
    $region8: #{tpu_custom_call.1} parent=1 // pred_region
      _
    $region9: #{tpu_custom_call.1} parent=1 // pred_fallthru
      _
    // Predicated region
    $region10: #{tpu_custom_call.1} parent=1 // pred_check
      _
    $region11: #{tpu_custom_call.1} parent=1 // pred_check_branch
      %21 = sbr.rel (0) target = $region13
    $region12: #{tpu_custom_call.1} parent=1 // pred_region
      %23 = vsyncadd [#allocation4], 0
      %s24 = sshll.u32 %s2, 4
      %s25 = int_to_ptr.hbm [resolvable:$true] %s24
      %s26 = sshll.u32 [#allocation3], 4
      %s27 = int_to_ptr.vmem [resolvable:$true] %s26
      %32 = dma.hbm_to_vmem [thread:$0]  %s25, 16384, %s27, [#allocation4], 512, 512, 32
    $region13: #{tpu_custom_call.1} parent=1 // pred_fallthru
      _
    // Predicated region
    $region14: #{tpu_custom_call.1} parent=1 // pred_check
      _
    $region15: #{tpu_custom_call.1} parent=1 // pred_check_branch
      %34 = sbr.rel (0) target = $region17
    $region16: #{tpu_custom_call.1} parent=1 // pred_region
      _
    $region17: #{tpu_custom_call.1} parent=1 // pred_fallthru
      _
    // Predicated region
    $region18: #{tpu_custom_call.1} parent=1 // pred_check
      _
    $region19: #{tpu_custom_call.1} parent=1 // pred_check_branch
      %36 = sbr.rel (0) target = $region21
    $region20: #{tpu_custom_call.1} parent=1 // pred_region
      %38 = vsyncadd [#allocation7], 0
      %s39 = sshll.u32 %s4, 4
      %s40 = int_to_ptr.hbm [resolvable:$true] %s39
      %s41 = sshll.u32 [#allocation6], 4
      %s42 = int_to_ptr.vmem [resolvable:$true] %s41
      %47 = dma.hbm_to_vmem [thread:$0]  %s40, 32768, %s42, [#allocation7], 512, 512, 32
    $region21: #{tpu_custom_call.1} parent=1 // pred_fallthru
      _
    // Predicated region
    $region22: #{tpu_custom_call.1} parent=1 // pred_check
      _
    $region23: #{tpu_custom_call.1} parent=1 // pred_check_branch
      %49 = sbr.rel (0) target = $region25
    $region24: #{tpu_custom_call.1} parent=1 // pred_region
      _
    $region25: #{tpu_custom_call.1} parent=1 // pred_fallthru
      _
    // Predicated region
    $region26: #{tpu_custom_call.1} parent=1 // pred_check
      _
    $region27: #{tpu_custom_call.1} parent=1 // pred_check_branch
      %51 = sbr.rel (0) target = $region29
    $region28: #{tpu_custom_call.1} parent=1 // pred_region
      _
    $region29: #{tpu_custom_call.1} parent=1 // pred_fallthru
      _
    // Predicated region
    $region30: #{tpu_custom_call.1} parent=1 // pred_check
      _
    $region31: #{tpu_custom_call.1} parent=1 // pred_check_branch
      %53 = sbr.rel (0) target = $region33
    $region32: #{tpu_custom_call.1} parent=1 // pred_region
      _
    $region33: #{tpu_custom_call.1} parent=1 // pred_fallthru
      _
    // Predicated region
    $region34: #{tpu_custom_call.1} parent=1 // pred_check
      _
    $region35: #{tpu_custom_call.1} parent=1 // pred_check_branch
      %55 = sbr.rel (0) target = $region37
    $region36: #{tpu_custom_call.1} parent=1 // pred_region
      %57 = dma.done [#allocation4], 16384
    $region37: #{tpu_custom_call.1} parent=1 // pred_fallthru
      _
    // Predicated region
    $region38: #{tpu_custom_call.1} parent=1 // pred_check
      _
    $region39: #{tpu_custom_call.1} parent=1 // pred_check_branch
      %59 = sbr.rel (0) target = $region41
    $region40: #{tpu_custom_call.1} parent=1 // pred_region
      %61 = dma.done [#allocation7], 32768
    $region41: #{tpu_custom_call.1} parent=1 // pred_fallthru
      _
    %v63 = vld [vmem:[#allocation3] sm:$0xff]
    %v64 = vld [vmem:[#allocation3 + $0x8] sm:$0xff]
    %v65 = vld [vmem:[#allocation3 + $0x10] sm:$0xff]
    %v66 = vld [vmem:[#allocation3 + $0x18] sm:$0xff]
    %v67 = vld [vmem:[#allocation3 + $0x20] sm:$0xff]
    %v68 = vld [vmem:[#allocation3 + $0x28] sm:$0xff]
    %v69 = vld [vmem:[#allocation3 + $0x30] sm:$0xff]
    %v70 = vld [vmem:[#allocation3 + $0x38] sm:$0xff]
    %v71 = vld [vmem:[#allocation3 + $0x40] sm:$0xff]
    %v72 = vld [vmem:[#allocation3 + $0x48] sm:$0xff]
    %v73 = vld [vmem:[#allocation3 + $0x50] sm:$0xff]
    %v74 = vld [vmem:[#allocation3 + $0x58] sm:$0xff]
    %v75 = vld [vmem:[#allocation3 + $0x60] sm:$0xff]
    %v76 = vld [vmem:[#allocation3 + $0x68] sm:$0xff]
    %v77 = vld [vmem:[#allocation3 + $0x70] sm:$0xff]
    %v78 = vld [vmem:[#allocation3 + $0x78] sm:$0xff]
    %v79 = vld [vmem:[#allocation3 + $0x80] sm:$0xff]
    %v80 = vld [vmem:[#allocation3 + $0x88] sm:$0xff]
    %v81 = vld [vmem:[#allocation3 + $0x90] sm:$0xff]
    %v82 = vld [vmem:[#allocation3 + $0x98] sm:$0xff]
    %v83 = vld [vmem:[#allocation3 + $0xa0] sm:$0xff]
    %v84 = vld [vmem:[#allocation3 + $0xa8] sm:$0xff]
    %v85 = vld [vmem:[#allocation3 + $0xb0] sm:$0xff]
    %v86 = vld [vmem:[#allocation3 + $0xb8] sm:$0xff]
    %v87 = vld [vmem:[#allocation3 + $0xc0] sm:$0xff]
    %v88 = vld [vmem:[#allocation3 + $0xc8] sm:$0xff]
    %v89 = vld [vmem:[#allocation3 + $0xd0] sm:$0xff]
    %v90 = vld [vmem:[#allocation3 + $0xd8] sm:$0xff]
    %v91 = vld [vmem:[#allocation3 + $0xe0] sm:$0xff]
    %v92 = vld [vmem:[#allocation3 + $0xe8] sm:$0xff]
    %v93 = vld [vmem:[#allocation3 + $0xf0] sm:$0xff]
    %v94 = vld [vmem:[#allocation3 + $0xf8] sm:$0xff]
    %v95 = vld [vmem:[#allocation3 + $0x100] sm:$0xff]
    %v96 = vld [vmem:[#allocation3 + $0x108] sm:$0xff]
    %v97 = vld [vmem:[#allocation3 + $0x110] sm:$0xff]
    %v98 = vld [vmem:[#allocation3 + $0x118] sm:$0xff]
    %v99 = vld [vmem:[#allocation3 + $0x120] sm:$0xff]
    %v100 = vld [vmem:[#allocation3 + $0x128] sm:$0xff]
    %v101 = vld [vmem:[#allocation3 + $0x130] sm:$0xff]
    %v102 = vld [vmem:[#allocation3 + $0x138] sm:$0xff]
    %v103 = vld [vmem:[#allocation3 + $0x140] sm:$0xff]
    %v104 = vld [vmem:[#allocation3 + $0x148] sm:$0xff]
    %v105 = vld [vmem:[#allocation3 + $0x150] sm:$0xff]
    %v106 = vld [vmem:[#allocation3 + $0x158] sm:$0xff]
    %v107 = vld [vmem:[#allocation3 + $0x160] sm:$0xff]
    %v108 = vld [vmem:[#allocation3 + $0x168] sm:$0xff]
    %v109 = vld [vmem:[#allocation3 + $0x170] sm:$0xff]
    %v110 = vld [vmem:[#allocation3 + $0x178] sm:$0xff]
    %v111 = vld [vmem:[#allocation3 + $0x180] sm:$0xff]
    %v112 = vld [vmem:[#allocation3 + $0x188] sm:$0xff]
    %v113 = vld [vmem:[#allocation3 + $0x190] sm:$0xff]
    %v114 = vld [vmem:[#allocation3 + $0x198] sm:$0xff]
    %v115 = vld [vmem:[#allocation3 + $0x1a0] sm:$0xff]
    %v116 = vld [vmem:[#allocation3 + $0x1a8] sm:$0xff]
    %v117 = vld [vmem:[#allocation3 + $0x1b0] sm:$0xff]
    %v118 = vld [vmem:[#allocation3 + $0x1b8] sm:$0xff]
    %v119 = vld [vmem:[#allocation3 + $0x1c0] sm:$0xff]
    %v120 = vld [vmem:[#allocation3 + $0x1c8] sm:$0xff]
    %v121 = vld [vmem:[#allocation3 + $0x1d0] sm:$0xff]
    %v122 = vld [vmem:[#allocation3 + $0x1d8] sm:$0xff]
    %v123 = vld [vmem:[#allocation3 + $0x1e0] sm:$0xff]
    %v124 = vld [vmem:[#allocation3 + $0x1e8] sm:$0xff]
    %v125 = vld [vmem:[#allocation3 + $0x1f0] sm:$0xff]
    %v126 = vld [vmem:[#allocation3 + $0x1f8] sm:$0xff]
    %v127 = vld [vmem:[#allocation3 + $0x200] sm:$0xff]
    %v128 = vld [vmem:[#allocation3 + $0x208] sm:$0xff]
    %v129 = vld [vmem:[#allocation3 + $0x210] sm:$0xff]
    %v130 = vld [vmem:[#allocation3 + $0x218] sm:$0xff]
    %v131 = vld [vmem:[#allocation3 + $0x220] sm:$0xff]
    %v132 = vld [vmem:[#allocation3 + $0x228] sm:$0xff]
    %v133 = vld [vmem:[#allocation3 + $0x230] sm:$0xff]
    %v134 = vld [vmem:[#allocation3 + $0x238] sm:$0xff]
    %v135 = vld [vmem:[#allocation3 + $0x240] sm:$0xff]
    %v136 = vld [vmem:[#allocation3 + $0x248] sm:$0xff]
    %v137 = vld [vmem:[#allocation3 + $0x250] sm:$0xff]
    %v138 = vld [vmem:[#allocation3 + $0x258] sm:$0xff]
    %v139 = vld [vmem:[#allocation3 + $0x260] sm:$0xff]
    %v140 = vld [vmem:[#allocation3 + $0x268] sm:$0xff]
    %v141 = vld [vmem:[#allocation3 + $0x270] sm:$0xff]
    %v142 = vld [vmem:[#allocation3 + $0x278] sm:$0xff]
    %v143 = vld [vmem:[#allocation3 + $0x280] sm:$0xff]
    %v144 = vld [vmem:[#allocation3 + $0x288] sm:$0xff]
    %v145 = vld [vmem:[#allocation3 + $0x290] sm:$0xff]
    %v146 = vld [vmem:[#allocation3 + $0x298] sm:$0xff]
    %v147 = vld [vmem:[#allocation3 + $0x2a0] sm:$0xff]
    %v148 = vld [vmem:[#allocation3 + $0x2a8] sm:$0xff]
    %v149 = vld [vmem:[#allocation3 + $0x2b0] sm:$0xff]
    %v150 = vld [vmem:[#allocation3 + $0x2b8] sm:$0xff]
    %v151 = vld [vmem:[#allocation3 + $0x2c0] sm:$0xff]
    %v152 = vld [vmem:[#allocation3 + $0x2c8] sm:$0xff]
    %v153 = vld [vmem:[#allocation3 + $0x2d0] sm:$0xff]
    %v154 = vld [vmem:[#allocation3 + $0x2d8] sm:$0xff]
    %v155 = vld [vmem:[#allocation3 + $0x2e0] sm:$0xff]
    %v156 = vld [vmem:[#allocation3 + $0x2e8] sm:$0xff]
    %v157 = vld [vmem:[#allocation3 + $0x2f0] sm:$0xff]
    %v158 = vld [vmem:[#allocation3 + $0x2f8] sm:$0xff]
    %v159 = vld [vmem:[#allocation3 + $0x300] sm:$0xff]
    %v160 = vld [vmem:[#allocation3 + $0x308] sm:$0xff]
    %v161 = vld [vmem:[#allocation3 + $0x310] sm:$0xff]
    %v162 = vld [vmem:[#allocation3 + $0x318] sm:$0xff]
    %v163 = vld [vmem:[#allocation3 + $0x320] sm:$0xff]
    %v164 = vld [vmem:[#allocation3 + $0x328] sm:$0xff]
    %v165 = vld [vmem:[#allocation3 + $0x330] sm:$0xff]
    %v166 = vld [vmem:[#allocation3 + $0x338] sm:$0xff]
    %v167 = vld [vmem:[#allocation3 + $0x340] sm:$0xff]
    %v168 = vld [vmem:[#allocation3 + $0x348] sm:$0xff]
    %v169 = vld [vmem:[#allocation3 + $0x350] sm:$0xff]
    %v170 = vld [vmem:[#allocation3 + $0x358] sm:$0xff]
    %v171 = vld [vmem:[#allocation3 + $0x360] sm:$0xff]
    %v172 = vld [vmem:[#allocation3 + $0x368] sm:$0xff]
    %v173 = vld [vmem:[#allocation3 + $0x370] sm:$0xff]
    %v174 = vld [vmem:[#allocation3 + $0x378] sm:$0xff]
    %v175 = vld [vmem:[#allocation3 + $0x380] sm:$0xff]
    %v176 = vld [vmem:[#allocation3 + $0x388] sm:$0xff]
    %v177 = vld [vmem:[#allocation3 + $0x390] sm:$0xff]
    %v178 = vld [vmem:[#allocation3 + $0x398] sm:$0xff]
    %v179 = vld [vmem:[#allocation3 + $0x3a0] sm:$0xff]
    %v180 = vld [vmem:[#allocation3 + $0x3a8] sm:$0xff]
    %v181 = vld [vmem:[#allocation3 + $0x3b0] sm:$0xff]
    %v182 = vld [vmem:[#allocation3 + $0x3b8] sm:$0xff]
    %v183 = vld [vmem:[#allocation3 + $0x3c0] sm:$0xff]
    %v184 = vld [vmem:[#allocation3 + $0x3c8] sm:$0xff]
    %v185 = vld [vmem:[#allocation3 + $0x3d0] sm:$0xff]
    %v186 = vld [vmem:[#allocation3 + $0x3d8] sm:$0xff]
    %v187 = vld [vmem:[#allocation3 + $0x3e0] sm:$0xff]
    %v188 = vld [vmem:[#allocation3 + $0x3e8] sm:$0xff]
    %v189 = vld [vmem:[#allocation3 + $0x3f0] sm:$0xff]
    %v190 = vld [vmem:[#allocation3 + $0x3f8] sm:$0xff]
    %v191 = vld [vmem:[#allocation6] sm:$0xff]
    %v192 = vld [vmem:[#allocation6 + $0x8] sm:$0xff]
    %v193 = vld [vmem:[#allocation6 + $0x10] sm:$0xff]
    %v194 = vld [vmem:[#allocation6 + $0x18] sm:$0xff]
    %v195 = vld [vmem:[#allocation6 + $0x20] sm:$0xff]
    %v196 = vld [vmem:[#allocation6 + $0x28] sm:$0xff]
    %v197 = vld [vmem:[#allocation6 + $0x30] sm:$0xff]
    %v198 = vld [vmem:[#allocation6 + $0x38] sm:$0xff]
    %v199 = vld [vmem:[#allocation6 + $0x40] sm:$0xff]
    %v200 = vld [vmem:[#allocation6 + $0x48] sm:$0xff]
    %v201 = vld [vmem:[#allocation6 + $0x50] sm:$0xff]
    %v202 = vld [vmem:[#allocation6 + $0x58] sm:$0xff]
    %v203 = vld [vmem:[#allocation6 + $0x60] sm:$0xff]
    %v204 = vld [vmem:[#allocation6 + $0x68] sm:$0xff]
    %v205 = vld [vmem:[#allocation6 + $0x70] sm:$0xff]
    %v206 = vld [vmem:[#allocation6 + $0x78] sm:$0xff]
    %v207 = vld [vmem:[#allocation6 + $0x80] sm:$0xff]
    %v208 = vld [vmem:[#allocation6 + $0x88] sm:$0xff]
    %v209 = vld [vmem:[#allocation6 + $0x90] sm:$0xff]
    %v210 = vld [vmem:[#allocation6 + $0x98] sm:$0xff]
    %v211 = vld [vmem:[#allocation6 + $0xa0] sm:$0xff]
    %v212 = vld [vmem:[#allocation6 + $0xa8] sm:$0xff]
    %v213 = vld [vmem:[#allocation6 + $0xb0] sm:$0xff]
    %v214 = vld [vmem:[#allocation6 + $0xb8] sm:$0xff]
    %v215 = vld [vmem:[#allocation6 + $0xc0] sm:$0xff]
    %v216 = vld [vmem:[#allocation6 + $0xc8] sm:$0xff]
    %v217 = vld [vmem:[#allocation6 + $0xd0] sm:$0xff]
    %v218 = vld [vmem:[#allocation6 + $0xd8] sm:$0xff]
    %v219 = vld [vmem:[#allocation6 + $0xe0] sm:$0xff]
    %v220 = vld [vmem:[#allocation6 + $0xe8] sm:$0xff]
    %v221 = vld [vmem:[#allocation6 + $0xf0] sm:$0xff]
    %v222 = vld [vmem:[#allocation6 + $0xf8] sm:$0xff]
    %v223 = vld [vmem:[#allocation6 + $0x100] sm:$0xff]
    %v224 = vld [vmem:[#allocation6 + $0x108] sm:$0xff]
    %v225 = vld [vmem:[#allocation6 + $0x110] sm:$0xff]
    %v226 = vld [vmem:[#allocation6 + $0x118] sm:$0xff]
    %v227 = vld [vmem:[#allocation6 + $0x120] sm:$0xff]
    %v228 = vld [vmem:[#allocation6 + $0x128] sm:$0xff]
    %v229 = vld [vmem:[#allocation6 + $0x130] sm:$0xff]
    %v230 = vld [vmem:[#allocation6 + $0x138] sm:$0xff]
    %v231 = vld [vmem:[#allocation6 + $0x140] sm:$0xff]
    %v232 = vld [vmem:[#allocation6 + $0x148] sm:$0xff]
    %v233 = vld [vmem:[#allocation6 + $0x150] sm:$0xff]
    %v234 = vld [vmem:[#allocation6 + $0x158] sm:$0xff]
    %v235 = vld [vmem:[#allocation6 + $0x160] sm:$0xff]
    %v236 = vld [vmem:[#allocation6 + $0x168] sm:$0xff]
    %v237 = vld [vmem:[#allocation6 + $0x170] sm:$0xff]
    %v238 = vld [vmem:[#allocation6 + $0x178] sm:$0xff]
    %v239 = vld [vmem:[#allocation6 + $0x180] sm:$0xff]
    %v240 = vld [vmem:[#allocation6 + $0x188] sm:$0xff]
    %v241 = vld [vmem:[#allocation6 + $0x190] sm:$0xff]
    %v242 = vld [vmem:[#allocation6 + $0x198] sm:$0xff]
    %v243 = vld [vmem:[#allocation6 + $0x1a0] sm:$0xff]
    %v244 = vld [vmem:[#allocation6 + $0x1a8] sm:$0xff]
    %v245 = vld [vmem:[#allocation6 + $0x1b0] sm:$0xff]
    %v246 = vld [vmem:[#allocation6 + $0x1b8] sm:$0xff]
    %v247 = vld [vmem:[#allocation6 + $0x1c0] sm:$0xff]
    %v248 = vld [vmem:[#allocation6 + $0x1c8] sm:$0xff]
    %v249 = vld [vmem:[#allocation6 + $0x1d0] sm:$0xff]
    %v250 = vld [vmem:[#allocation6 + $0x1d8] sm:$0xff]
    %v251 = vld [vmem:[#allocation6 + $0x1e0] sm:$0xff]
    %v252 = vld [vmem:[#allocation6 + $0x1e8] sm:$0xff]
    %v253 = vld [vmem:[#allocation6 + $0x1f0] sm:$0xff]
    %v254 = vld [vmem:[#allocation6 + $0x1f8] sm:$0xff]
    %v255 = vld [vmem:[#allocation6 + $0x200] sm:$0xff]
    %v256 = vld [vmem:[#allocation6 + $0x208] sm:$0xff]
    %v257 = vld [vmem:[#allocation6 + $0x210] sm:$0xff]
    %v258 = vld [vmem:[#allocation6 + $0x218] sm:$0xff]
    %v259 = vld [vmem:[#allocation6 + $0x220] sm:$0xff]
    %v260 = vld [vmem:[#allocation6 + $0x228] sm:$0xff]
    %v261 = vld [vmem:[#allocation6 + $0x230] sm:$0xff]
    %v262 = vld [vmem:[#allocation6 + $0x238] sm:$0xff]
    %v263 = vld [vmem:[#allocation6 + $0x240] sm:$0xff]
    %v264 = vld [vmem:[#allocation6 + $0x248] sm:$0xff]
    %v265 = vld [vmem:[#allocation6 + $0x250] sm:$0xff]
    %v266 = vld [vmem:[#allocation6 + $0x258] sm:$0xff]
    %v267 = vld [vmem:[#allocation6 + $0x260] sm:$0xff]
    %v268 = vld [vmem:[#allocation6 + $0x268] sm:$0xff]
    %v269 = vld [vmem:[#allocation6 + $0x270] sm:$0xff]
    %v270 = vld [vmem:[#allocation6 + $0x278] sm:$0xff]
    %v271 = vld [vmem:[#allocation6 + $0x280] sm:$0xff]
    %v272 = vld [vmem:[#allocation6 + $0x288] sm:$0xff]
    %v273 = vld [vmem:[#allocation6 + $0x290] sm:$0xff]
    %v274 = vld [vmem:[#allocation6 + $0x298] sm:$0xff]
    %v275 = vld [vmem:[#allocation6 + $0x2a0] sm:$0xff]
    %v276 = vld [vmem:[#allocation6 + $0x2a8] sm:$0xff]
    %v277 = vld [vmem:[#allocation6 + $0x2b0] sm:$0xff]
    %v278 = vld [vmem:[#allocation6 + $0x2b8] sm:$0xff]
    %v279 = vld [vmem:[#allocation6 + $0x2c0] sm:$0xff]
    %v280 = vld [vmem:[#allocation6 + $0x2c8] sm:$0xff]
    %v281 = vld [vmem:[#allocation6 + $0x2d0] sm:$0xff]
    %v282 = vld [vmem:[#allocation6 + $0x2d8] sm:$0xff]
    %v283 = vld [vmem:[#allocation6 + $0x2e0] sm:$0xff]
    %v284 = vld [vmem:[#allocation6 + $0x2e8] sm:$0xff]
    %v285 = vld [vmem:[#allocation6 + $0x2f0] sm:$0xff]
    %v286 = vld [vmem:[#allocation6 + $0x2f8] sm:$0xff]
    %v287 = vld [vmem:[#allocation6 + $0x300] sm:$0xff]
    %v288 = vld [vmem:[#allocation6 + $0x308] sm:$0xff]
    %v289 = vld [vmem:[#allocation6 + $0x310] sm:$0xff]
    %v290 = vld [vmem:[#allocation6 + $0x318] sm:$0xff]
    %v291 = vld [vmem:[#allocation6 + $0x320] sm:$0xff]
    %v292 = vld [vmem:[#allocation6 + $0x328] sm:$0xff]
    %v293 = vld [vmem:[#allocation6 + $0x330] sm:$0xff]
    %v294 = vld [vmem:[#allocation6 + $0x338] sm:$0xff]
    %v295 = vld [vmem:[#allocation6 + $0x340] sm:$0xff]
    %v296 = vld [vmem:[#allocation6 + $0x348] sm:$0xff]
    %v297 = vld [vmem:[#allocation6 + $0x350] sm:$0xff]
    %v298 = vld [vmem:[#allocation6 + $0x358] sm:$0xff]
    %v299 = vld [vmem:[#allocation6 + $0x360] sm:$0xff]
    %v300 = vld [vmem:[#allocation6 + $0x368] sm:$0xff]
    %v301 = vld [vmem:[#allocation6 + $0x370] sm:$0xff]
    %v302 = vld [vmem:[#allocation6 + $0x378] sm:$0xff]
    %v303 = vld [vmem:[#allocation6 + $0x380] sm:$0xff]
    %v304 = vld [vmem:[#allocation6 + $0x388] sm:$0xff]
    %v305 = vld [vmem:[#allocation6 + $0x390] sm:$0xff]
    %v306 = vld [vmem:[#allocation6 + $0x398] sm:$0xff]
    %v307 = vld [vmem:[#allocation6 + $0x3a0] sm:$0xff]
    %v308 = vld [vmem:[#allocation6 + $0x3a8] sm:$0xff]
    %v309 = vld [vmem:[#allocation6 + $0x3b0] sm:$0xff]
    %v310 = vld [vmem:[#allocation6 + $0x3b8] sm:$0xff]
    %v311 = vld [vmem:[#allocation6 + $0x3c0] sm:$0xff]
    %v312 = vld [vmem:[#allocation6 + $0x3c8] sm:$0xff]
    %v313 = vld [vmem:[#allocation6 + $0x3d0] sm:$0xff]
    %v314 = vld [vmem:[#allocation6 + $0x3d8] sm:$0xff]
    %v315 = vld [vmem:[#allocation6 + $0x3e0] sm:$0xff]
    %v316 = vld [vmem:[#allocation6 + $0x3e8] sm:$0xff]
    %v317 = vld [vmem:[#allocation6 + $0x3f0] sm:$0xff]
    %v318 = vld [vmem:[#allocation6 + $0x3f8] sm:$0xff]
    %v319 = vld [vmem:[#allocation6 + $0x400] sm:$0xff]
    %v320 = vld [vmem:[#allocation6 + $0x408] sm:$0xff]
    %v321 = vld [vmem:[#allocation6 + $0x410] sm:$0xff]
    %v322 = vld [vmem:[#allocation6 + $0x418] sm:$0xff]
    %v323 = vld [vmem:[#allocation6 + $0x420] sm:$0xff]
    %v324 = vld [vmem:[#allocation6 + $0x428] sm:$0xff]
    %v325 = vld [vmem:[#allocation6 + $0x430] sm:$0xff]
    %v326 = vld [vmem:[#allocation6 + $0x438] sm:$0xff]
    %v327 = vld [vmem:[#allocation6 + $0x440] sm:$0xff]
    %v328 = vld [vmem:[#allocation6 + $0x448] sm:$0xff]
    %v329 = vld [vmem:[#allocation6 + $0x450] sm:$0xff]
    %v330 = vld [vmem:[#allocation6 + $0x458] sm:$0xff]
    %v331 = vld [vmem:[#allocation6 + $0x460] sm:$0xff]
    %v332 = vld [vmem:[#allocation6 + $0x468] sm:$0xff]
    %v333 = vld [vmem:[#allocation6 + $0x470] sm:$0xff]
    %v334 = vld [vmem:[#allocation6 + $0x478] sm:$0xff]
    %v335 = vld [vmem:[#allocation6 + $0x480] sm:$0xff]
    %v336 = vld [vmem:[#allocation6 + $0x488] sm:$0xff]
    %v337 = vld [vmem:[#allocation6 + $0x490] sm:$0xff]
    %v338 = vld [vmem:[#allocation6 + $0x498] sm:$0xff]
    %v339 = vld [vmem:[#allocation6 + $0x4a0] sm:$0xff]
    %v340 = vld [vmem:[#allocation6 + $0x4a8] sm:$0xff]
    %v341 = vld [vmem:[#allocation6 + $0x4b0] sm:$0xff]
    %v342 = vld [vmem:[#allocation6 + $0x4b8] sm:$0xff]
    %v343 = vld [vmem:[#allocation6 + $0x4c0] sm:$0xff]
    %v344 = vld [vmem:[#allocation6 + $0x4c8] sm:$0xff]
    %v345 = vld [vmem:[#allocation6 + $0x4d0] sm:$0xff]
    %v346 = vld [vmem:[#allocation6 + $0x4d8] sm:$0xff]
    %v347 = vld [vmem:[#allocation6 + $0x4e0] sm:$0xff]
    %v348 = vld [vmem:[#allocation6 + $0x4e8] sm:$0xff]
    %v349 = vld [vmem:[#allocation6 + $0x4f0] sm:$0xff]
    %v350 = vld [vmem:[#allocation6 + $0x4f8] sm:$0xff]
    %v351 = vld [vmem:[#allocation6 + $0x500] sm:$0xff]
    %v352 = vld [vmem:[#allocation6 + $0x508] sm:$0xff]
    %v353 = vld [vmem:[#allocation6 + $0x510] sm:$0xff]
    %v354 = vld [vmem:[#allocation6 + $0x518] sm:$0xff]
    %v355 = vld [vmem:[#allocation6 + $0x520] sm:$0xff]
    %v356 = vld [vmem:[#allocation6 + $0x528] sm:$0xff]
    %v357 = vld [vmem:[#allocation6 + $0x530] sm:$0xff]
    %v358 = vld [vmem:[#allocation6 + $0x538] sm:$0xff]
    %v359 = vld [vmem:[#allocation6 + $0x540] sm:$0xff]
    %v360 = vld [vmem:[#allocation6 + $0x548] sm:$0xff]
    %v361 = vld [vmem:[#allocation6 + $0x550] sm:$0xff]
    %v362 = vld [vmem:[#allocation6 + $0x558] sm:$0xff]
    %v363 = vld [vmem:[#allocation6 + $0x560] sm:$0xff]
    %v364 = vld [vmem:[#allocation6 + $0x568] sm:$0xff]
    %v365 = vld [vmem:[#allocation6 + $0x570] sm:$0xff]
    %v366 = vld [vmem:[#allocation6 + $0x578] sm:$0xff]
    %v367 = vld [vmem:[#allocation6 + $0x580] sm:$0xff]
    %v368 = vld [vmem:[#allocation6 + $0x588] sm:$0xff]
    %v369 = vld [vmem:[#allocation6 + $0x590] sm:$0xff]
    %v370 = vld [vmem:[#allocation6 + $0x598] sm:$0xff]
    %v371 = vld [vmem:[#allocation6 + $0x5a0] sm:$0xff]
    %v372 = vld [vmem:[#allocation6 + $0x5a8] sm:$0xff]
    %v373 = vld [vmem:[#allocation6 + $0x5b0] sm:$0xff]
    %v374 = vld [vmem:[#allocation6 + $0x5b8] sm:$0xff]
    %v375 = vld [vmem:[#allocation6 + $0x5c0] sm:$0xff]
    %v376 = vld [vmem:[#allocation6 + $0x5c8] sm:$0xff]
    %v377 = vld [vmem:[#allocation6 + $0x5d0] sm:$0xff]
    %v378 = vld [vmem:[#allocation6 + $0x5d8] sm:$0xff]
    %v379 = vld [vmem:[#allocation6 + $0x5e0] sm:$0xff]
    %v380 = vld [vmem:[#allocation6 + $0x5e8] sm:$0xff]
    %v381 = vld [vmem:[#allocation6 + $0x5f0] sm:$0xff]
    %v382 = vld [vmem:[#allocation6 + $0x5f8] sm:$0xff]
    %v383 = vld [vmem:[#allocation6 + $0x600] sm:$0xff]
    %v384 = vld [vmem:[#allocation6 + $0x608] sm:$0xff]
    %v385 = vld [vmem:[#allocation6 + $0x610] sm:$0xff]
    %v386 = vld [vmem:[#allocation6 + $0x618] sm:$0xff]
    %v387 = vld [vmem:[#allocation6 + $0x620] sm:$0xff]
    %v388 = vld [vmem:[#allocation6 + $0x628] sm:$0xff]
    %v389 = vld [vmem:[#allocation6 + $0x630] sm:$0xff]
    %v390 = vld [vmem:[#allocation6 + $0x638] sm:$0xff]
    %v391 = vld [vmem:[#allocation6 + $0x640] sm:$0xff]
    %v392 = vld [vmem:[#allocation6 + $0x648] sm:$0xff]
    %v393 = vld [vmem:[#allocation6 + $0x650] sm:$0xff]
    %v394 = vld [vmem:[#allocation6 + $0x658] sm:$0xff]
    %v395 = vld [vmem:[#allocation6 + $0x660] sm:$0xff]
    %v396 = vld [vmem:[#allocation6 + $0x668] sm:$0xff]
    %v397 = vld [vmem:[#allocation6 + $0x670] sm:$0xff]
    %v398 = vld [vmem:[#allocation6 + $0x678] sm:$0xff]
    %v399 = vld [vmem:[#allocation6 + $0x680] sm:$0xff]
    %v400 = vld [vmem:[#allocation6 + $0x688] sm:$0xff]
    %v401 = vld [vmem:[#allocation6 + $0x690] sm:$0xff]
    %v402 = vld [vmem:[#allocation6 + $0x698] sm:$0xff]
    %v403 = vld [vmem:[#allocation6 + $0x6a0] sm:$0xff]
    %v404 = vld [vmem:[#allocation6 + $0x6a8] sm:$0xff]
    %v405 = vld [vmem:[#allocation6 + $0x6b0] sm:$0xff]
    %v406 = vld [vmem:[#allocation6 + $0x6b8] sm:$0xff]
    %v407 = vld [vmem:[#allocation6 + $0x6c0] sm:$0xff]
    %v408 = vld [vmem:[#allocation6 + $0x6c8] sm:$0xff]
    %v409 = vld [vmem:[#allocation6 + $0x6d0] sm:$0xff]
    %v410 = vld [vmem:[#allocation6 + $0x6d8] sm:$0xff]
    %v411 = vld [vmem:[#allocation6 + $0x6e0] sm:$0xff]
    %v412 = vld [vmem:[#allocation6 + $0x6e8] sm:$0xff]
    %v413 = vld [vmem:[#allocation6 + $0x6f0] sm:$0xff]
    %v414 = vld [vmem:[#allocation6 + $0x6f8] sm:$0xff]
    %v415 = vld [vmem:[#allocation6 + $0x700] sm:$0xff]
    %v416 = vld [vmem:[#allocation6 + $0x708] sm:$0xff]
    %v417 = vld [vmem:[#allocation6 + $0x710] sm:$0xff]
    %v418 = vld [vmem:[#allocation6 + $0x718] sm:$0xff]
    %v419 = vld [vmem:[#allocation6 + $0x720] sm:$0xff]
    %v420 = vld [vmem:[#allocation6 + $0x728] sm:$0xff]
    %v421 = vld [vmem:[#allocation6 + $0x730] sm:$0xff]
    %v422 = vld [vmem:[#allocation6 + $0x738] sm:$0xff]
    %v423 = vld [vmem:[#allocation6 + $0x740] sm:$0xff]
    %v424 = vld [vmem:[#allocation6 + $0x748] sm:$0xff]
    %v425 = vld [vmem:[#allocation6 + $0x750] sm:$0xff]
    %v426 = vld [vmem:[#allocation6 + $0x758] sm:$0xff]
    %v427 = vld [vmem:[#allocation6 + $0x760] sm:$0xff]
    %v428 = vld [vmem:[#allocation6 + $0x768] sm:$0xff]
    %v429 = vld [vmem:[#allocation6 + $0x770] sm:$0xff]
    %v430 = vld [vmem:[#allocation6 + $0x778] sm:$0xff]
    %v431 = vld [vmem:[#allocation6 + $0x780] sm:$0xff]
    %v432 = vld [vmem:[#allocation6 + $0x788] sm:$0xff]
    %v433 = vld [vmem:[#allocation6 + $0x790] sm:$0xff]
    %v434 = vld [vmem:[#allocation6 + $0x798] sm:$0xff]
    %v435 = vld [vmem:[#allocation6 + $0x7a0] sm:$0xff]
    %v436 = vld [vmem:[#allocation6 + $0x7a8] sm:$0xff]
    %v437 = vld [vmem:[#allocation6 + $0x7b0] sm:$0xff]
    %v438 = vld [vmem:[#allocation6 + $0x7b8] sm:$0xff]
    %v439 = vld [vmem:[#allocation6 + $0x7c0] sm:$0xff]
    %v440 = vld [vmem:[#allocation6 + $0x7c8] sm:$0xff]
    %v441 = vld [vmem:[#allocation6 + $0x7d0] sm:$0xff]
    %v442 = vld [vmem:[#allocation6 + $0x7d8] sm:$0xff]
    %v443 = vld [vmem:[#allocation6 + $0x7e0] sm:$0xff]
    %v444 = vld [vmem:[#allocation6 + $0x7e8] sm:$0xff]
    %v445 = vld [vmem:[#allocation6 + $0x7f0] sm:$0xff]
    %v446 = vld [vmem:[#allocation6 + $0x7f8] sm:$0xff]
    %v447 = vld [vmem:[%s5] sm:$0xff]
    %v449 = vperm.slane %v447, 0
    %v450 = vperm.slane %v447, 1
    %v451 = vperm.slane %v447, 2
    %v452 = vperm.slane %v447, 3
    %v453 = vperm.slane %v447, 4
    %v454 = vperm.slane %v447, 5
    %v455 = vperm.slane %v447, 6
    %v456 = vperm.slane %v447, 7
    %v465 = vld [vmem:[%s0] sm:$0xff]
    %v466 = vld [vmem:[%s0 + $0x8] sm:$0xff]
    %v467 = vld [vmem:[%s0 + $0x10] sm:$0xff]
    %v468 = vld [vmem:[%s0 + $0x18] sm:$0xff]
    %v469 = vld [vmem:[%s0 + $0x20] sm:$0xff]
    %v470 = vld [vmem:[%s0 + $0x28] sm:$0xff]
    %v471 = vld [vmem:[%s0 + $0x30] sm:$0xff]
    %v472 = vld [vmem:[%s0 + $0x38] sm:$0xff]
    %v473 = vld [vmem:[%s0 + $0x40] sm:$0xff]
    %v474 = vld [vmem:[%s0 + $0x48] sm:$0xff]
    %v475 = vld [vmem:[%s0 + $0x50] sm:$0xff]
    %v476 = vld [vmem:[%s0 + $0x58] sm:$0xff]
    %v477 = vld [vmem:[%s0 + $0x60] sm:$0xff]
    %v478 = vld [vmem:[%s0 + $0x68] sm:$0xff]
    %v479 = vld [vmem:[%s0 + $0x70] sm:$0xff]
    %v480 = vld [vmem:[%s0 + $0x78] sm:$0xff]
    %v481 = vld [vmem:[%s1] sm:$0xff]
    %483 = vset.pattern.permute.xlu0 0
    %484 = vperm.xlu0 %483, %v465
    %v485 = vpop.permute.xlu0 %484
    %488 = vset.pattern.permute.xlu0 0
    %489 = vperm.xlu0 %488, %v466
    %v490 = vpop.permute.xlu0 %489
    %493 = vset.pattern.permute.xlu0 0
    %494 = vperm.xlu0 %493, %v467
    %v495 = vpop.permute.xlu0 %494
    %498 = vset.pattern.permute.xlu0 0
    %499 = vperm.xlu0 %498, %v468
    %v500 = vpop.permute.xlu0 %499
    %503 = vset.pattern.permute.xlu0 0
    %504 = vperm.xlu0 %503, %v469
    %v505 = vpop.permute.xlu0 %504
    %508 = vset.pattern.permute.xlu0 0
    %509 = vperm.xlu0 %508, %v470
    %v510 = vpop.permute.xlu0 %509
    %513 = vset.pattern.permute.xlu0 0
    %514 = vperm.xlu0 %513, %v471
    %v515 = vpop.permute.xlu0 %514
    %518 = vset.pattern.permute.xlu0 0
    %519 = vperm.xlu0 %518, %v472
    %v520 = vpop.permute.xlu0 %519
    %523 = vset.pattern.permute.xlu0 0
    %524 = vperm.xlu0 %523, %v473
    %v525 = vpop.permute.xlu0 %524
    %528 = vset.pattern.permute.xlu0 0
    %529 = vperm.xlu0 %528, %v474
    %v530 = vpop.permute.xlu0 %529
    %533 = vset.pattern.permute.xlu0 0
    %534 = vperm.xlu0 %533, %v475
    %v535 = vpop.permute.xlu0 %534
    %538 = vset.pattern.permute.xlu0 0
    %539 = vperm.xlu0 %538, %v476
    %v540 = vpop.permute.xlu0 %539
    %543 = vset.pattern.permute.xlu0 0
    %544 = vperm.xlu0 %543, %v477
    %v545 = vpop.permute.xlu0 %544
    %548 = vset.pattern.permute.xlu0 0
    %549 = vperm.xlu0 %548, %v478
    %v550 = vpop.permute.xlu0 %549
    %553 = vset.pattern.permute.xlu0 0
    %554 = vperm.xlu0 %553, %v479
    %v555 = vpop.permute.xlu0 %554
    %558 = vset.pattern.permute.xlu0 0
    %559 = vperm.xlu0 %558, %v480
    %v560 = vpop.permute.xlu0 %559
    %v563 = vperm.slane %v481, 0
    %v564 = vperm.slane %v481, 1
    %v565 = vperm.slane %v481, 2
    %v566 = vperm.slane %v481, 3
    %v567 = vperm.slane %v481, 4
    %v568 = vperm.slane %v481, 5
    %v569 = vperm.slane %v481, 6
    %v570 = vperm.slane %v481, 7
    %v579 = vmul.f32 %v485, %v563
    %v580 = vmul.f32 %v485, %v564
    %v581 = vmul.f32 %v485, %v565
    %v582 = vmul.f32 %v485, %v566
    %v583 = vmul.f32 %v485, %v567
    %v584 = vmul.f32 %v485, %v568
    %v585 = vmul.f32 %v485, %v569
    %v586 = vmul.f32 %v485, %v570
    %v587 = vmul.f32 %v490, %v563
    %v588 = vmul.f32 %v490, %v564
    %v589 = vmul.f32 %v490, %v565
    %v590 = vmul.f32 %v490, %v566
    %v591 = vmul.f32 %v490, %v567
    %v592 = vmul.f32 %v490, %v568
    %v593 = vmul.f32 %v490, %v569
    %v594 = vmul.f32 %v490, %v570
    %v595 = vmul.f32 %v495, %v563
    %v596 = vmul.f32 %v495, %v564
    %v597 = vmul.f32 %v495, %v565
    %v598 = vmul.f32 %v495, %v566
    %v599 = vmul.f32 %v495, %v567
    %v600 = vmul.f32 %v495, %v568
    %v601 = vmul.f32 %v495, %v569
    %v602 = vmul.f32 %v495, %v570
    %v603 = vmul.f32 %v500, %v563
    %v604 = vmul.f32 %v500, %v564
    %v605 = vmul.f32 %v500, %v565
    %v606 = vmul.f32 %v500, %v566
    %v607 = vmul.f32 %v500, %v567
    %v608 = vmul.f32 %v500, %v568
    %v609 = vmul.f32 %v500, %v569
    %v610 = vmul.f32 %v500, %v570
    %v611 = vmul.f32 %v505, %v563
    %v612 = vmul.f32 %v505, %v564
    %v613 = vmul.f32 %v505, %v565
    %v614 = vmul.f32 %v505, %v566
    %v615 = vmul.f32 %v505, %v567
    %v616 = vmul.f32 %v505, %v568
    %v617 = vmul.f32 %v505, %v569
    %v618 = vmul.f32 %v505, %v570
    %v619 = vmul.f32 %v510, %v563
    %v620 = vmul.f32 %v510, %v564
    %v621 = vmul.f32 %v510, %v565
    %v622 = vmul.f32 %v510, %v566
    %v623 = vmul.f32 %v510, %v567
    %v624 = vmul.f32 %v510, %v568
    %v625 = vmul.f32 %v510, %v569
    %v626 = vmul.f32 %v510, %v570
    %v627 = vmul.f32 %v515, %v563
    %v628 = vmul.f32 %v515, %v564
    %v629 = vmul.f32 %v515, %v565
    %v630 = vmul.f32 %v515, %v566
    %v631 = vmul.f32 %v515, %v567
    %v632 = vmul.f32 %v515, %v568
    %v633 = vmul.f32 %v515, %v569
    %v634 = vmul.f32 %v515, %v570
    %v635 = vmul.f32 %v520, %v563
    %v636 = vmul.f32 %v520, %v564
    %v637 = vmul.f32 %v520, %v565
    %v638 = vmul.f32 %v520, %v566
    %v639 = vmul.f32 %v520, %v567
    %v640 = vmul.f32 %v520, %v568
    %v641 = vmul.f32 %v520, %v569
    %v642 = vmul.f32 %v520, %v570
    %v643 = vmul.f32 %v525, %v563
    %v644 = vmul.f32 %v525, %v564
    %v645 = vmul.f32 %v525, %v565
    %v646 = vmul.f32 %v525, %v566
    %v647 = vmul.f32 %v525, %v567
    %v648 = vmul.f32 %v525, %v568
    %v649 = vmul.f32 %v525, %v569
    %v650 = vmul.f32 %v525, %v570
    %v651 = vmul.f32 %v530, %v563
    %v652 = vmul.f32 %v530, %v564
    %v653 = vmul.f32 %v530, %v565
    %v654 = vmul.f32 %v530, %v566
    %v655 = vmul.f32 %v530, %v567
    %v656 = vmul.f32 %v530, %v568
    %v657 = vmul.f32 %v530, %v569
    %v658 = vmul.f32 %v530, %v570
    %v659 = vmul.f32 %v535, %v563
    %v660 = vmul.f32 %v535, %v564
    %v661 = vmul.f32 %v535, %v565
    %v662 = vmul.f32 %v535, %v566
    %v663 = vmul.f32 %v535, %v567
    %v664 = vmul.f32 %v535, %v568
    %v665 = vmul.f32 %v535, %v569
    %v666 = vmul.f32 %v535, %v570
    %v667 = vmul.f32 %v540, %v563
    %v668 = vmul.f32 %v540, %v564
    %v669 = vmul.f32 %v540, %v565
    %v670 = vmul.f32 %v540, %v566
    %v671 = vmul.f32 %v540, %v567
    %v672 = vmul.f32 %v540, %v568
    %v673 = vmul.f32 %v540, %v569
    %v674 = vmul.f32 %v540, %v570
    %v675 = vmul.f32 %v545, %v563
    %v676 = vmul.f32 %v545, %v564
    %v677 = vmul.f32 %v545, %v565
    %v678 = vmul.f32 %v545, %v566
    %v679 = vmul.f32 %v545, %v567
    %v680 = vmul.f32 %v545, %v568
    %v681 = vmul.f32 %v545, %v569
    %v682 = vmul.f32 %v545, %v570
    %v683 = vmul.f32 %v550, %v563
    %v684 = vmul.f32 %v550, %v564
    %v685 = vmul.f32 %v550, %v565
    %v686 = vmul.f32 %v550, %v566
    %v687 = vmul.f32 %v550, %v567
    %v688 = vmul.f32 %v550, %v568
    %v689 = vmul.f32 %v550, %v569
    %v690 = vmul.f32 %v550, %v570
    %v691 = vmul.f32 %v555, %v563
    %v692 = vmul.f32 %v555, %v564
    %v693 = vmul.f32 %v555, %v565
    %v694 = vmul.f32 %v555, %v566
    %v695 = vmul.f32 %v555, %v567
    %v696 = vmul.f32 %v555, %v568
    %v697 = vmul.f32 %v555, %v569
    %v698 = vmul.f32 %v555, %v570
    %v699 = vmul.f32 %v560, %v563
    %v700 = vmul.f32 %v560, %v564
    %v701 = vmul.f32 %v560, %v565
    %v702 = vmul.f32 %v560, %v566
    %v703 = vmul.f32 %v560, %v567
    %v704 = vmul.f32 %v560, %v568
    %v705 = vmul.f32 %v560, %v569
    %v706 = vmul.f32 %v560, %v570
    %v707 = vld [vmem:[%s3] sm:$0xff]
    %v709 = vperm.slane %v707, 0
    %v710 = vperm.slane %v707, 1
    %v711 = vperm.slane %v707, 2
    %v712 = vperm.slane %v707, 3
    %v713 = vperm.slane %v707, 4
    %v714 = vperm.slane %v707, 5
    %v715 = vperm.slane %v707, 6
    %v716 = vperm.slane %v707, 7
    %v725 = vadd.f32 %v579, %v709
    %v726 = vadd.f32 %v580, %v710
    %v727 = vadd.f32 %v581, %v711
    %v728 = vadd.f32 %v582, %v712
    %v729 = vadd.f32 %v583, %v713
    %v730 = vadd.f32 %v584, %v714
    %v731 = vadd.f32 %v585, %v715
    %v732 = vadd.f32 %v586, %v716
    %v733 = vadd.f32 %v587, %v709
    %v734 = vadd.f32 %v588, %v710
    %v735 = vadd.f32 %v589, %v711
    %v736 = vadd.f32 %v590, %v712
    %v737 = vadd.f32 %v591, %v713
    %v738 = vadd.f32 %v592, %v714
    %v739 = vadd.f32 %v593, %v715
    %v740 = vadd.f32 %v594, %v716
    %v741 = vadd.f32 %v595, %v709
    %v742 = vadd.f32 %v596, %v710
    %v743 = vadd.f32 %v597, %v711
    %v744 = vadd.f32 %v598, %v712
    %v745 = vadd.f32 %v599, %v713
    %v746 = vadd.f32 %v600, %v714
    %v747 = vadd.f32 %v601, %v715
    %v748 = vadd.f32 %v602, %v716
    %v749 = vadd.f32 %v603, %v709
    %v750 = vadd.f32 %v604, %v710
    %v751 = vadd.f32 %v605, %v711
    %v752 = vadd.f32 %v606, %v712
    %v753 = vadd.f32 %v607, %v713
    %v754 = vadd.f32 %v608, %v714
    %v755 = vadd.f32 %v609, %v715
    %v756 = vadd.f32 %v610, %v716
    %v757 = vadd.f32 %v611, %v709
    %v758 = vadd.f32 %v612, %v710
    %v759 = vadd.f32 %v613, %v711
    %v760 = vadd.f32 %v614, %v712
    %v761 = vadd.f32 %v615, %v713
    %v762 = vadd.f32 %v616, %v714
    %v763 = vadd.f32 %v617, %v715
    %v764 = vadd.f32 %v618, %v716
    %v765 = vadd.f32 %v619, %v709
    %v766 = vadd.f32 %v620, %v710
    %v767 = vadd.f32 %v621, %v711
    %v768 = vadd.f32 %v622, %v712
    %v769 = vadd.f32 %v623, %v713
    %v770 = vadd.f32 %v624, %v714
    %v771 = vadd.f32 %v625, %v715
    %v772 = vadd.f32 %v626, %v716
    %v773 = vadd.f32 %v627, %v709
    %v774 = vadd.f32 %v628, %v710
    %v775 = vadd.f32 %v629, %v711
    %v776 = vadd.f32 %v630, %v712
    %v777 = vadd.f32 %v631, %v713
    %v778 = vadd.f32 %v632, %v714
    %v779 = vadd.f32 %v633, %v715
    %v780 = vadd.f32 %v634, %v716
    %v781 = vadd.f32 %v635, %v709
    %v782 = vadd.f32 %v636, %v710
    %v783 = vadd.f32 %v637, %v711
    %v784 = vadd.f32 %v638, %v712
    %v785 = vadd.f32 %v639, %v713
    %v786 = vadd.f32 %v640, %v714
    %v787 = vadd.f32 %v641, %v715
    %v788 = vadd.f32 %v642, %v716
    %v789 = vadd.f32 %v643, %v709
    %v790 = vadd.f32 %v644, %v710
    %v791 = vadd.f32 %v645, %v711
    %v792 = vadd.f32 %v646, %v712
    %v793 = vadd.f32 %v647, %v713
    %v794 = vadd.f32 %v648, %v714
    %v795 = vadd.f32 %v649, %v715
    %v796 = vadd.f32 %v650, %v716
    %v797 = vadd.f32 %v651, %v709
    %v798 = vadd.f32 %v652, %v710
    %v799 = vadd.f32 %v653, %v711
    %v800 = vadd.f32 %v654, %v712
    %v801 = vadd.f32 %v655, %v713
    %v802 = vadd.f32 %v656, %v714
    %v803 = vadd.f32 %v657, %v715
    %v804 = vadd.f32 %v658, %v716
    %v805 = vadd.f32 %v659, %v709
    %v806 = vadd.f32 %v660, %v710
    %v807 = vadd.f32 %v661, %v711
    %v808 = vadd.f32 %v662, %v712
    %v809 = vadd.f32 %v663, %v713
    %v810 = vadd.f32 %v664, %v714
    %v811 = vadd.f32 %v665, %v715
    %v812 = vadd.f32 %v666, %v716
    %v813 = vadd.f32 %v667, %v709
    %v814 = vadd.f32 %v668, %v710
    %v815 = vadd.f32 %v669, %v711
    %v816 = vadd.f32 %v670, %v712
    %v817 = vadd.f32 %v671, %v713
    %v818 = vadd.f32 %v672, %v714
    %v819 = vadd.f32 %v673, %v715
    %v820 = vadd.f32 %v674, %v716
    %v821 = vadd.f32 %v675, %v709
    %v822 = vadd.f32 %v676, %v710
    %v823 = vadd.f32 %v677, %v711
    %v824 = vadd.f32 %v678, %v712
    %v825 = vadd.f32 %v679, %v713
    %v826 = vadd.f32 %v680, %v714
    %v827 = vadd.f32 %v681, %v715
    %v828 = vadd.f32 %v682, %v716
    %v829 = vadd.f32 %v683, %v709
    %v830 = vadd.f32 %v684, %v710
    %v831 = vadd.f32 %v685, %v711
    %v832 = vadd.f32 %v686, %v712
    %v833 = vadd.f32 %v687, %v713
    %v834 = vadd.f32 %v688, %v714
    %v835 = vadd.f32 %v689, %v715
    %v836 = vadd.f32 %v690, %v716
    %v837 = vadd.f32 %v691, %v709
    %v838 = vadd.f32 %v692, %v710
    %v839 = vadd.f32 %v693, %v711
    %v840 = vadd.f32 %v694, %v712
    %v841 = vadd.f32 %v695, %v713
    %v842 = vadd.f32 %v696, %v714
    %v843 = vadd.f32 %v697, %v715
    %v844 = vadd.f32 %v698, %v716
    %v845 = vadd.f32 %v699, %v709
    %v846 = vadd.f32 %v700, %v710
    %v847 = vadd.f32 %v701, %v711
    %v848 = vadd.f32 %v702, %v712
    %v849 = vadd.f32 %v703, %v713
    %v850 = vadd.f32 %v704, %v714
    %v851 = vadd.f32 %v705, %v715
    %v852 = vadd.f32 %v706, %v716
    %853 = vst [vmem:[#allocation2] sm:$0xff] %v725
    %854 = vst [vmem:[#allocation2 + $0x8] sm:$0xff] %v726
    %855 = vst [vmem:[#allocation2 + $0x10] sm:$0xff] %v727
    %856 = vst [vmem:[#allocation2 + $0x18] sm:$0xff] %v728
    %857 = vst [vmem:[#allocation2 + $0x20] sm:$0xff] %v729
    %858 = vst [vmem:[#allocation2 + $0x28] sm:$0xff] %v730
    %859 = vst [vmem:[#allocation2 + $0x30] sm:$0xff] %v731
    %860 = vst [vmem:[#allocation2 + $0x38] sm:$0xff] %v732
    %861 = vst [vmem:[#allocation2 + $0x40] sm:$0xff] %v733
    %862 = vst [vmem:[#allocation2 + $0x48] sm:$0xff] %v734
    %863 = vst [vmem:[#allocation2 + $0x50] sm:$0xff] %v735
    %864 = vst [vmem:[#allocation2 + $0x58] sm:$0xff] %v736
    %865 = vst [vmem:[#allocation2 + $0x60] sm:$0xff] %v737
    %866 = vst [vmem:[#allocation2 + $0x68] sm:$0xff] %v738
    %867 = vst [vmem:[#allocation2 + $0x70] sm:$0xff] %v739
    %868 = vst [vmem:[#allocation2 + $0x78] sm:$0xff] %v740
    %869 = vst [vmem:[#allocation2 + $0x80] sm:$0xff] %v741
    %870 = vst [vmem:[#allocation2 + $0x88] sm:$0xff] %v742
    %871 = vst [vmem:[#allocation2 + $0x90] sm:$0xff] %v743
    %872 = vst [vmem:[#allocation2 + $0x98] sm:$0xff] %v744
    %873 = vst [vmem:[#allocation2 + $0xa0] sm:$0xff] %v745
    %874 = vst [vmem:[#allocation2 + $0xa8] sm:$0xff] %v746
    %875 = vst [vmem:[#allocation2 + $0xb0] sm:$0xff] %v747
    %876 = vst [vmem:[#allocation2 + $0xb8] sm:$0xff] %v748
    %877 = vst [vmem:[#allocation2 + $0xc0] sm:$0xff] %v749
    %878 = vst [vmem:[#allocation2 + $0xc8] sm:$0xff] %v750
    %879 = vst [vmem:[#allocation2 + $0xd0] sm:$0xff] %v751
    %880 = vst [vmem:[#allocation2 + $0xd8] sm:$0xff] %v752
    %881 = vst [vmem:[#allocation2 + $0xe0] sm:$0xff] %v753
    %882 = vst [vmem:[#allocation2 + $0xe8] sm:$0xff] %v754
    %883 = vst [vmem:[#allocation2 + $0xf0] sm:$0xff] %v755
    %884 = vst [vmem:[#allocation2 + $0xf8] sm:$0xff] %v756
    %885 = vst [vmem:[#allocation2 + $0x100] sm:$0xff] %v757
    %886 = vst [vmem:[#allocation2 + $0x108] sm:$0xff] %v758
    %887 = vst [vmem:[#allocation2 + $0x110] sm:$0xff] %v759
    %888 = vst [vmem:[#allocation2 + $0x118] sm:$0xff] %v760
    %889 = vst [vmem:[#allocation2 + $0x120] sm:$0xff] %v761
    %890 = vst [vmem:[#allocation2 + $0x128] sm:$0xff] %v762
    %891 = vst [vmem:[#allocation2 + $0x130] sm:$0xff] %v763
    %892 = vst [vmem:[#allocation2 + $0x138] sm:$0xff] %v764
    %893 = vst [vmem:[#allocation2 + $0x140] sm:$0xff] %v765
    %894 = vst [vmem:[#allocation2 + $0x148] sm:$0xff] %v766
    %895 = vst [vmem:[#allocation2 + $0x150] sm:$0xff] %v767
    %896 = vst [vmem:[#allocation2 + $0x158] sm:$0xff] %v768
    %897 = vst [vmem:[#allocation2 + $0x160] sm:$0xff] %v769
    %898 = vst [vmem:[#allocation2 + $0x168] sm:$0xff] %v770
    %899 = vst [vmem:[#allocation2 + $0x170] sm:$0xff] %v771
    %900 = vst [vmem:[#allocation2 + $0x178] sm:$0xff] %v772
    %901 = vst [vmem:[#allocation2 + $0x180] sm:$0xff] %v773
    %902 = vst [vmem:[#allocation2 + $0x188] sm:$0xff] %v774
    %903 = vst [vmem:[#allocation2 + $0x190] sm:$0xff] %v775
    %904 = vst [vmem:[#allocation2 + $0x198] sm:$0xff] %v776
    %905 = vst [vmem:[#allocation2 + $0x1a0] sm:$0xff] %v777
    %906 = vst [vmem:[#allocation2 + $0x1a8] sm:$0xff] %v778
    %907 = vst [vmem:[#allocation2 + $0x1b0] sm:$0xff] %v779
    %908 = vst [vmem:[#allocation2 + $0x1b8] sm:$0xff] %v780
    %909 = vst [vmem:[#allocation2 + $0x1c0] sm:$0xff] %v781
    %910 = vst [vmem:[#allocation2 + $0x1c8] sm:$0xff] %v782
    %911 = vst [vmem:[#allocation2 + $0x1d0] sm:$0xff] %v783
    %912 = vst [vmem:[#allocation2 + $0x1d8] sm:$0xff] %v784
    %913 = vst [vmem:[#allocation2 + $0x1e0] sm:$0xff] %v785
    %914 = vst [vmem:[#allocation2 + $0x1e8] sm:$0xff] %v786
    %915 = vst [vmem:[#allocation2 + $0x1f0] sm:$0xff] %v787
    %916 = vst [vmem:[#allocation2 + $0x1f8] sm:$0xff] %v788
    %917 = vst [vmem:[#allocation2 + $0x200] sm:$0xff] %v789
    %918 = vst [vmem:[#allocation2 + $0x208] sm:$0xff] %v790
    %919 = vst [vmem:[#allocation2 + $0x210] sm:$0xff] %v791
    %920 = vst [vmem:[#allocation2 + $0x218] sm:$0xff] %v792
    %921 = vst [vmem:[#allocation2 + $0x220] sm:$0xff] %v793
    %922 = vst [vmem:[#allocation2 + $0x228] sm:$0xff] %v794
    %923 = vst [vmem:[#allocation2 + $0x230] sm:$0xff] %v795
    %924 = vst [vmem:[#allocation2 + $0x238] sm:$0xff] %v796
    %925 = vst [vmem:[#allocation2 + $0x240] sm:$0xff] %v797
    %926 = vst [vmem:[#allocation2 + $0x248] sm:$0xff] %v798
    %927 = vst [vmem:[#allocation2 + $0x250] sm:$0xff] %v799
    %928 = vst [vmem:[#allocation2 + $0x258] sm:$0xff] %v800
    %929 = vst [vmem:[#allocation2 + $0x260] sm:$0xff] %v801
    %930 = vst [vmem:[#allocation2 + $0x268] sm:$0xff] %v802
    %931 = vst [vmem:[#allocation2 + $0x270] sm:$0xff] %v803
    %932 = vst [vmem:[#allocation2 + $0x278] sm:$0xff] %v804
    %933 = vst [vmem:[#allocation2 + $0x280] sm:$0xff] %v805
    %934 = vst [vmem:[#allocation2 + $0x288] sm:$0xff] %v806
    %935 = vst [vmem:[#allocation2 + $0x290] sm:$0xff] %v807
    %936 = vst [vmem:[#allocation2 + $0x298] sm:$0xff] %v808
    %937 = vst [vmem:[#allocation2 + $0x2a0] sm:$0xff] %v809
    %938 = vst [vmem:[#allocation2 + $0x2a8] sm:$0xff] %v810
    %939 = vst [vmem:[#allocation2 + $0x2b0] sm:$0xff] %v811
    %940 = vst [vmem:[#allocation2 + $0x2b8] sm:$0xff] %v812
    %941 = vst [vmem:[#allocation2 + $0x2c0] sm:$0xff] %v813
    %942 = vst [vmem:[#allocation2 + $0x2c8] sm:$0xff] %v814
    %943 = vst [vmem:[#allocation2 + $0x2d0] sm:$0xff] %v815
    %944 = vst [vmem:[#allocation2 + $0x2d8] sm:$0xff] %v816
    %945 = vst [vmem:[#allocation2 + $0x2e0] sm:$0xff] %v817
    %946 = vst [vmem:[#allocation2 + $0x2e8] sm:$0xff] %v818
    %947 = vst [vmem:[#allocation2 + $0x2f0] sm:$0xff] %v819
    %948 = vst [vmem:[#allocation2 + $0x2f8] sm:$0xff] %v820
    %949 = vst [vmem:[#allocation2 + $0x300] sm:$0xff] %v821
    %950 = vst [vmem:[#allocation2 + $0x308] sm:$0xff] %v822
    %951 = vst [vmem:[#allocation2 + $0x310] sm:$0xff] %v823
    %952 = vst [vmem:[#allocation2 + $0x318] sm:$0xff] %v824
    %953 = vst [vmem:[#allocation2 + $0x320] sm:$0xff] %v825
    %954 = vst [vmem:[#allocation2 + $0x328] sm:$0xff] %v826
    %955 = vst [vmem:[#allocation2 + $0x330] sm:$0xff] %v827
    %956 = vst [vmem:[#allocation2 + $0x338] sm:$0xff] %v828
    %957 = vst [vmem:[#allocation2 + $0x340] sm:$0xff] %v829
    %958 = vst [vmem:[#allocation2 + $0x348] sm:$0xff] %v830
    %959 = vst [vmem:[#allocation2 + $0x350] sm:$0xff] %v831
    %960 = vst [vmem:[#allocation2 + $0x358] sm:$0xff] %v832
    %961 = vst [vmem:[#allocation2 + $0x360] sm:$0xff] %v833
    %962 = vst [vmem:[#allocation2 + $0x368] sm:$0xff] %v834
    %963 = vst [vmem:[#allocation2 + $0x370] sm:$0xff] %v835
    %964 = vst [vmem:[#allocation2 + $0x378] sm:$0xff] %v836
    %965 = vst [vmem:[#allocation2 + $0x380] sm:$0xff] %v837
    %966 = vst [vmem:[#allocation2 + $0x388] sm:$0xff] %v838
    %967 = vst [vmem:[#allocation2 + $0x390] sm:$0xff] %v839
    %968 = vst [vmem:[#allocation2 + $0x398] sm:$0xff] %v840
    %969 = vst [vmem:[#allocation2 + $0x3a0] sm:$0xff] %v841
    %970 = vst [vmem:[#allocation2 + $0x3a8] sm:$0xff] %v842
    %971 = vst [vmem:[#allocation2 + $0x3b0] sm:$0xff] %v843
    %972 = vst [vmem:[#allocation2 + $0x3b8] sm:$0xff] %v844
    %973 = vst [vmem:[#allocation2 + $0x3c0] sm:$0xff] %v845
    %974 = vst [vmem:[#allocation2 + $0x3c8] sm:$0xff] %v846
    %975 = vst [vmem:[#allocation2 + $0x3d0] sm:$0xff] %v847
    %976 = vst [vmem:[#allocation2 + $0x3d8] sm:$0xff] %v848
    %977 = vst [vmem:[#allocation2 + $0x3e0] sm:$0xff] %v849
    %978 = vst [vmem:[#allocation2 + $0x3e8] sm:$0xff] %v850
    %979 = vst [vmem:[#allocation2 + $0x3f0] sm:$0xff] %v851
    %980 = vst [vmem:[#allocation2 + $0x3f8] sm:$0xff] %v852
    %v1109 = vunpack.c.l.b16 %v319
    %v1110 = vunpack.c.h.b16 %v319
    %v1111 = vunpack.c.l.b16 %v320
    %v1112 = vunpack.c.h.b16 %v320
    %v1113 = vunpack.c.l.b16 %v321
    %v1114 = vunpack.c.h.b16 %v321
    %v1115 = vunpack.c.l.b16 %v322
    %v1116 = vunpack.c.h.b16 %v322
    %v1117 = vunpack.c.l.b16 %v323
    %v1118 = vunpack.c.h.b16 %v323
    %v1119 = vunpack.c.l.b16 %v324
    %v1120 = vunpack.c.h.b16 %v324
    %v1121 = vunpack.c.l.b16 %v325
    %v1122 = vunpack.c.h.b16 %v325
    %v1123 = vunpack.c.l.b16 %v326
    %v1124 = vunpack.c.h.b16 %v326
    %v1125 = vunpack.c.l.b16 %v327
    %v1126 = vunpack.c.h.b16 %v327
    %v1127 = vunpack.c.l.b16 %v328
    %v1128 = vunpack.c.h.b16 %v328
    %v1129 = vunpack.c.l.b16 %v329
    %v1130 = vunpack.c.h.b16 %v329
    %v1131 = vunpack.c.l.b16 %v330
    %v1132 = vunpack.c.h.b16 %v330
    %v1133 = vunpack.c.l.b16 %v331
    %v1134 = vunpack.c.h.b16 %v331
    %v1135 = vunpack.c.l.b16 %v332
    %v1136 = vunpack.c.h.b16 %v332
    %v1137 = vunpack.c.l.b16 %v333
    %v1138 = vunpack.c.h.b16 %v333
    %v1139 = vunpack.c.l.b16 %v334
    %v1140 = vunpack.c.h.b16 %v334
    %v1141 = vunpack.c.l.b16 %v335
    %v1142 = vunpack.c.h.b16 %v335
    %v1143 = vunpack.c.l.b16 %v336
    %v1144 = vunpack.c.h.b16 %v336
    %v1145 = vunpack.c.l.b16 %v337
    %v1146 = vunpack.c.h.b16 %v337
    %v1147 = vunpack.c.l.b16 %v338
    %v1148 = vunpack.c.h.b16 %v338
    %v1149 = vunpack.c.l.b16 %v339
    %v1150 = vunpack.c.h.b16 %v339
    %v1151 = vunpack.c.l.b16 %v340
    %v1152 = vunpack.c.h.b16 %v340
    %v1153 = vunpack.c.l.b16 %v341
    %v1154 = vunpack.c.h.b16 %v341
    %v1155 = vunpack.c.l.b16 %v342
    %v1156 = vunpack.c.h.b16 %v342
    %v1157 = vunpack.c.l.b16 %v343
    %v1158 = vunpack.c.h.b16 %v343
    %v1159 = vunpack.c.l.b16 %v344
    %v1160 = vunpack.c.h.b16 %v344
    %v1161 = vunpack.c.l.b16 %v345
    %v1162 = vunpack.c.h.b16 %v345
    %v1163 = vunpack.c.l.b16 %v346
    %v1164 = vunpack.c.h.b16 %v346
    %v1165 = vunpack.c.l.b16 %v347
    %v1166 = vunpack.c.h.b16 %v347
    %v1167 = vunpack.c.l.b16 %v348
    %v1168 = vunpack.c.h.b16 %v348
    %v1169 = vunpack.c.l.b16 %v349
    %v1170 = vunpack.c.h.b16 %v349
    %v1171 = vunpack.c.l.b16 %v350
    %v1172 = vunpack.c.h.b16 %v350
    %v1173 = vunpack.c.l.b16 %v351
    %v1174 = vunpack.c.h.b16 %v351
    %v1175 = vunpack.c.l.b16 %v352
    %v1176 = vunpack.c.h.b16 %v352
    %v1177 = vunpack.c.l.b16 %v353
    %v1178 = vunpack.c.h.b16 %v353
    %v1179 = vunpack.c.l.b16 %v354
    %v1180 = vunpack.c.h.b16 %v354
    %v1181 = vunpack.c.l.b16 %v355
    %v1182 = vunpack.c.h.b16 %v355
    %v1183 = vunpack.c.l.b16 %v356
    %v1184 = vunpack.c.h.b16 %v356
    %v1185 = vunpack.c.l.b16 %v357
    %v1186 = vunpack.c.h.b16 %v357
    %v1187 = vunpack.c.l.b16 %v358
    %v1188 = vunpack.c.h.b16 %v358
    %v1189 = vunpack.c.l.b16 %v359
    %v1190 = vunpack.c.h.b16 %v359
    %v1191 = vunpack.c.l.b16 %v360
    %v1192 = vunpack.c.h.b16 %v360
    %v1193 = vunpack.c.l.b16 %v361
    %v1194 = vunpack.c.h.b16 %v361
    %v1195 = vunpack.c.l.b16 %v362
    %v1196 = vunpack.c.h.b16 %v362
    %v1197 = vunpack.c.l.b16 %v363
    %v1198 = vunpack.c.h.b16 %v363
    %v1199 = vunpack.c.l.b16 %v364
    %v1200 = vunpack.c.h.b16 %v364
    %v1201 = vunpack.c.l.b16 %v365
    %v1202 = vunpack.c.h.b16 %v365
    %v1203 = vunpack.c.l.b16 %v366
    %v1204 = vunpack.c.h.b16 %v366
    %v1205 = vunpack.c.l.b16 %v367
    %v1206 = vunpack.c.h.b16 %v367
    %v1207 = vunpack.c.l.b16 %v368
    %v1208 = vunpack.c.h.b16 %v368
    %v1209 = vunpack.c.l.b16 %v369
    %v1210 = vunpack.c.h.b16 %v369
    %v1211 = vunpack.c.l.b16 %v370
    %v1212 = vunpack.c.h.b16 %v370
    %v1213 = vunpack.c.l.b16 %v371
    %v1214 = vunpack.c.h.b16 %v371
    %v1215 = vunpack.c.l.b16 %v372
    %v1216 = vunpack.c.h.b16 %v372
    %v1217 = vunpack.c.l.b16 %v373
    %v1218 = vunpack.c.h.b16 %v373
    %v1219 = vunpack.c.l.b16 %v374
    %v1220 = vunpack.c.h.b16 %v374
    %v1221 = vunpack.c.l.b16 %v375
    %v1222 = vunpack.c.h.b16 %v375
    %v1223 = vunpack.c.l.b16 %v376
    %v1224 = vunpack.c.h.b16 %v376
    %v1225 = vunpack.c.l.b16 %v377
    %v1226 = vunpack.c.h.b16 %v377
    %v1227 = vunpack.c.l.b16 %v378
    %v1228 = vunpack.c.h.b16 %v378
    %v1229 = vunpack.c.l.b16 %v379
    %v1230 = vunpack.c.h.b16 %v379
    %v1231 = vunpack.c.l.b16 %v380
    %v1232 = vunpack.c.h.b16 %v380
    %v1233 = vunpack.c.l.b16 %v381
    %v1234 = vunpack.c.h.b16 %v381
    %v1235 = vunpack.c.l.b16 %v382
    %v1236 = vunpack.c.h.b16 %v382
    %v1237 = vunpack.c.l.b16 %v383
    %v1238 = vunpack.c.h.b16 %v383
    %v1239 = vunpack.c.l.b16 %v384
    %v1240 = vunpack.c.h.b16 %v384
    %v1241 = vunpack.c.l.b16 %v385
    %v1242 = vunpack.c.h.b16 %v385
    %v1243 = vunpack.c.l.b16 %v386
    %v1244 = vunpack.c.h.b16 %v386
    %v1245 = vunpack.c.l.b16 %v387
    %v1246 = vunpack.c.h.b16 %v387
    %v1247 = vunpack.c.l.b16 %v388
    %v1248 = vunpack.c.h.b16 %v388
    %v1249 = vunpack.c.l.b16 %v389
    %v1250 = vunpack.c.h.b16 %v389
    %v1251 = vunpack.c.l.b16 %v390
    %v1252 = vunpack.c.h.b16 %v390
    %v1253 = vunpack.c.l.b16 %v391
    %v1254 = vunpack.c.h.b16 %v391
    %v1255 = vunpack.c.l.b16 %v392
    %v1256 = vunpack.c.h.b16 %v392
    %v1257 = vunpack.c.l.b16 %v393
    %v1258 = vunpack.c.h.b16 %v393
    %v1259 = vunpack.c.l.b16 %v394
    %v1260 = vunpack.c.h.b16 %v394
    %v1261 = vunpack.c.l.b16 %v395
    %v1262 = vunpack.c.h.b16 %v395
    %v1263 = vunpack.c.l.b16 %v396
    %v1264 = vunpack.c.h.b16 %v396
    %v1265 = vunpack.c.l.b16 %v397
    %v1266 = vunpack.c.h.b16 %v397
    %v1267 = vunpack.c.l.b16 %v398
    %v1268 = vunpack.c.h.b16 %v398
    %v1269 = vunpack.c.l.b16 %v399
    %v1270 = vunpack.c.h.b16 %v399
    %v1271 = vunpack.c.l.b16 %v400
    %v1272 = vunpack.c.h.b16 %v400
    %v1273 = vunpack.c.l.b16 %v401
    %v1274 = vunpack.c.h.b16 %v401
    %v1275 = vunpack.c.l.b16 %v402
    %v1276 = vunpack.c.h.b16 %v402
    %v1277 = vunpack.c.l.b16 %v403
    %v1278 = vunpack.c.h.b16 %v403
    %v1279 = vunpack.c.l.b16 %v404
    %v1280 = vunpack.c.h.b16 %v404
    %v1281 = vunpack.c.l.b16 %v405
    %v1282 = vunpack.c.h.b16 %v405
    %v1283 = vunpack.c.l.b16 %v406
    %v1284 = vunpack.c.h.b16 %v406
    %v1285 = vunpack.c.l.b16 %v407
    %v1286 = vunpack.c.h.b16 %v407
    %v1287 = vunpack.c.l.b16 %v408
    %v1288 = vunpack.c.h.b16 %v408
    %v1289 = vunpack.c.l.b16 %v409
    %v1290 = vunpack.c.h.b16 %v409
    %v1291 = vunpack.c.l.b16 %v410
    %v1292 = vunpack.c.h.b16 %v410
    %v1293 = vunpack.c.l.b16 %v411
    %v1294 = vunpack.c.h.b16 %v411
    %v1295 = vunpack.c.l.b16 %v412
    %v1296 = vunpack.c.h.b16 %v412
    %v1297 = vunpack.c.l.b16 %v413
    %v1298 = vunpack.c.h.b16 %v413
    %v1299 = vunpack.c.l.b16 %v414
    %v1300 = vunpack.c.h.b16 %v414
    %v1301 = vunpack.c.l.b16 %v415
    %v1302 = vunpack.c.h.b16 %v415
    %v1303 = vunpack.c.l.b16 %v416
    %v1304 = vunpack.c.h.b16 %v416
    %v1305 = vunpack.c.l.b16 %v417
    %v1306 = vunpack.c.h.b16 %v417
    %v1307 = vunpack.c.l.b16 %v418
    %v1308 = vunpack.c.h.b16 %v418
    %v1309 = vunpack.c.l.b16 %v419
    %v1310 = vunpack.c.h.b16 %v419
    %v1311 = vunpack.c.l.b16 %v420
    %v1312 = vunpack.c.h.b16 %v420
    %v1313 = vunpack.c.l.b16 %v421
    %v1314 = vunpack.c.h.b16 %v421
    %v1315 = vunpack.c.l.b16 %v422
    %v1316 = vunpack.c.h.b16 %v422
    %v1317 = vunpack.c.l.b16 %v423
    %v1318 = vunpack.c.h.b16 %v423
    %v1319 = vunpack.c.l.b16 %v424
    %v1320 = vunpack.c.h.b16 %v424
    %v1321 = vunpack.c.l.b16 %v425
    %v1322 = vunpack.c.h.b16 %v425
    %v1323 = vunpack.c.l.b16 %v426
    %v1324 = vunpack.c.h.b16 %v426
    %v1325 = vunpack.c.l.b16 %v427
    %v1326 = vunpack.c.h.b16 %v427
    %v1327 = vunpack.c.l.b16 %v428
    %v1328 = vunpack.c.h.b16 %v428
    %v1329 = vunpack.c.l.b16 %v429
    %v1330 = vunpack.c.h.b16 %v429
    %v1331 = vunpack.c.l.b16 %v430
    %v1332 = vunpack.c.h.b16 %v430
    %v1333 = vunpack.c.l.b16 %v431
    %v1334 = vunpack.c.h.b16 %v431
    %v1335 = vunpack.c.l.b16 %v432
    %v1336 = vunpack.c.h.b16 %v432
    %v1337 = vunpack.c.l.b16 %v433
    %v1338 = vunpack.c.h.b16 %v433
    %v1339 = vunpack.c.l.b16 %v434
    %v1340 = vunpack.c.h.b16 %v434
    %v1341 = vunpack.c.l.b16 %v435
    %v1342 = vunpack.c.h.b16 %v435
    %v1343 = vunpack.c.l.b16 %v436
    %v1344 = vunpack.c.h.b16 %v436
    %v1345 = vunpack.c.l.b16 %v437
    %v1346 = vunpack.c.h.b16 %v437
    %v1347 = vunpack.c.l.b16 %v438
    %v1348 = vunpack.c.h.b16 %v438
    %v1349 = vunpack.c.l.b16 %v439
    %v1350 = vunpack.c.h.b16 %v439
    %v1351 = vunpack.c.l.b16 %v440
    %v1352 = vunpack.c.h.b16 %v440
    %v1353 = vunpack.c.l.b16 %v441
    %v1354 = vunpack.c.h.b16 %v441
    %v1355 = vunpack.c.l.b16 %v442
    %v1356 = vunpack.c.h.b16 %v442
    %v1357 = vunpack.c.l.b16 %v443
    %v1358 = vunpack.c.h.b16 %v443
    %v1359 = vunpack.c.l.b16 %v444
    %v1360 = vunpack.c.h.b16 %v444
    %v1361 = vunpack.c.l.b16 %v445
    %v1362 = vunpack.c.h.b16 %v445
    %v1363 = vunpack.c.l.b16 %v446
    %v1364 = vunpack.c.h.b16 %v446
    %v1365 = vpack.c.b16 %v1117, %v1109
    %v1366 = vpack.c.b16 %v1118, %v1110
    %v1367 = vpack.c.b16 %v1119, %v1111
    %v1368 = vpack.c.b16 %v1120, %v1112
    %v1369 = vpack.c.b16 %v1121, %v1113
    %v1370 = vpack.c.b16 %v1122, %v1114
    %v1371 = vpack.c.b16 %v1123, %v1115
    %v1372 = vpack.c.b16 %v1124, %v1116
    %v1373 = vpack.c.b16 %v1133, %v1125
    %v1374 = vpack.c.b16 %v1134, %v1126
    %v1375 = vpack.c.b16 %v1135, %v1127
    %v1376 = vpack.c.b16 %v1136, %v1128
    %v1377 = vpack.c.b16 %v1137, %v1129
    %v1378 = vpack.c.b16 %v1138, %v1130
    %v1379 = vpack.c.b16 %v1139, %v1131
    %v1380 = vpack.c.b16 %v1140, %v1132
    %v1381 = vpack.c.b16 %v1149, %v1141
    %v1382 = vpack.c.b16 %v1150, %v1142
    %v1383 = vpack.c.b16 %v1151, %v1143
    %v1384 = vpack.c.b16 %v1152, %v1144
    %v1385 = vpack.c.b16 %v1153, %v1145
    %v1386 = vpack.c.b16 %v1154, %v1146
    %v1387 = vpack.c.b16 %v1155, %v1147
    %v1388 = vpack.c.b16 %v1156, %v1148
    %v1389 = vpack.c.b16 %v1165, %v1157
    %v1390 = vpack.c.b16 %v1166, %v1158
    %v1391 = vpack.c.b16 %v1167, %v1159
    %v1392 = vpack.c.b16 %v1168, %v1160
    %v1393 = vpack.c.b16 %v1169, %v1161
    %v1394 = vpack.c.b16 %v1170, %v1162
    %v1395 = vpack.c.b16 %v1171, %v1163
    %v1396 = vpack.c.b16 %v1172, %v1164
    %v1397 = vpack.c.b16 %v1181, %v1173
    %v1398 = vpack.c.b16 %v1182, %v1174
    %v1399 = vpack.c.b16 %v1183, %v1175
    %v1400 = vpack.c.b16 %v1184, %v1176
    %v1401 = vpack.c.b16 %v1185, %v1177
    %v1402 = vpack.c.b16 %v1186, %v1178
    %v1403 = vpack.c.b16 %v1187, %v1179
    %v1404 = vpack.c.b16 %v1188, %v1180
    %v1405 = vpack.c.b16 %v1197, %v1189
    %v1406 = vpack.c.b16 %v1198, %v1190
    %v1407 = vpack.c.b16 %v1199, %v1191
    %v1408 = vpack.c.b16 %v1200, %v1192
    %v1409 = vpack.c.b16 %v1201, %v1193
    %v1410 = vpack.c.b16 %v1202, %v1194
    %v1411 = vpack.c.b16 %v1203, %v1195
    %v1412 = vpack.c.b16 %v1204, %v1196
    %v1413 = vpack.c.b16 %v1213, %v1205
    %v1414 = vpack.c.b16 %v1214, %v1206
    %v1415 = vpack.c.b16 %v1215, %v1207
    %v1416 = vpack.c.b16 %v1216, %v1208
    %v1417 = vpack.c.b16 %v1217, %v1209
    %v1418 = vpack.c.b16 %v1218, %v1210
    %v1419 = vpack.c.b16 %v1219, %v1211
    %v1420 = vpack.c.b16 %v1220, %v1212
    %v1421 = vpack.c.b16 %v1229, %v1221
    %v1422 = vpack.c.b16 %v1230, %v1222
    %v1423 = vpack.c.b16 %v1231, %v1223
    %v1424 = vpack.c.b16 %v1232, %v1224
    %v1425 = vpack.c.b16 %v1233, %v1225
    %v1426 = vpack.c.b16 %v1234, %v1226
    %v1427 = vpack.c.b16 %v1235, %v1227
    %v1428 = vpack.c.b16 %v1236, %v1228
    %v1429 = vpack.c.b16 %v1245, %v1237
    %v1430 = vpack.c.b16 %v1246, %v1238
    %v1431 = vpack.c.b16 %v1247, %v1239
    %v1432 = vpack.c.b16 %v1248, %v1240
    %v1433 = vpack.c.b16 %v1249, %v1241
    %v1434 = vpack.c.b16 %v1250, %v1242
    %v1435 = vpack.c.b16 %v1251, %v1243
    %v1436 = vpack.c.b16 %v1252, %v1244
    %v1437 = vpack.c.b16 %v1261, %v1253
    %v1438 = vpack.c.b16 %v1262, %v1254
    %v1439 = vpack.c.b16 %v1263, %v1255
    %v1440 = vpack.c.b16 %v1264, %v1256
    %v1441 = vpack.c.b16 %v1265, %v1257
    %v1442 = vpack.c.b16 %v1266, %v1258
    %v1443 = vpack.c.b16 %v1267, %v1259
    %v1444 = vpack.c.b16 %v1268, %v1260
    %v1445 = vpack.c.b16 %v1277, %v1269
    %v1446 = vpack.c.b16 %v1278, %v1270
    %v1447 = vpack.c.b16 %v1279, %v1271
    %v1448 = vpack.c.b16 %v1280, %v1272
    %v1449 = vpack.c.b16 %v1281, %v1273
    %v1450 = vpack.c.b16 %v1282, %v1274
    %v1451 = vpack.c.b16 %v1283, %v1275
    %v1452 = vpack.c.b16 %v1284, %v1276
    %v1453 = vpack.c.b16 %v1293, %v1285
    %v1454 = vpack.c.b16 %v1294, %v1286
    %v1455 = vpack.c.b16 %v1295, %v1287
    %v1456 = vpack.c.b16 %v1296, %v1288
    %v1457 = vpack.c.b16 %v1297, %v1289
    %v1458 = vpack.c.b16 %v1298, %v1290
    %v1459 = vpack.c.b16 %v1299, %v1291
    %v1460 = vpack.c.b16 %v1300, %v1292
    %v1461 = vpack.c.b16 %v1309, %v1301
    %v1462 = vpack.c.b16 %v1310, %v1302
    %v1463 = vpack.c.b16 %v1311, %v1303
    %v1464 = vpack.c.b16 %v1312, %v1304
    %v1465 = vpack.c.b16 %v1313, %v1305
    %v1466 = vpack.c.b16 %v1314, %v1306
    %v1467 = vpack.c.b16 %v1315, %v1307
    %v1468 = vpack.c.b16 %v1316, %v1308
    %v1469 = vpack.c.b16 %v1325, %v1317
    %v1470 = vpack.c.b16 %v1326, %v1318
    %v1471 = vpack.c.b16 %v1327, %v1319
    %v1472 = vpack.c.b16 %v1328, %v1320
    %v1473 = vpack.c.b16 %v1329, %v1321
    %v1474 = vpack.c.b16 %v1330, %v1322
    %v1475 = vpack.c.b16 %v1331, %v1323
    %v1476 = vpack.c.b16 %v1332, %v1324
    %v1477 = vpack.c.b16 %v1341, %v1333
    %v1478 = vpack.c.b16 %v1342, %v1334
    %v1479 = vpack.c.b16 %v1343, %v1335
    %v1480 = vpack.c.b16 %v1344, %v1336
    %v1481 = vpack.c.b16 %v1345, %v1337
    %v1482 = vpack.c.b16 %v1346, %v1338
    %v1483 = vpack.c.b16 %v1347, %v1339
    %v1484 = vpack.c.b16 %v1348, %v1340
    %v1485 = vpack.c.b16 %v1357, %v1349
    %v1486 = vpack.c.b16 %v1358, %v1350
    %v1487 = vpack.c.b16 %v1359, %v1351
    %v1488 = vpack.c.b16 %v1360, %v1352
    %v1489 = vpack.c.b16 %v1361, %v1353
    %v1490 = vpack.c.b16 %v1362, %v1354
    %v1491 = vpack.c.b16 %v1363, %v1355
    %v1492 = vpack.c.b16 %v1364, %v1356
    %1621 = vmatpush.bf16.msra.mxu0 %v1421
    %1622 = vmatpush.bf16.msra.mxu0 %v1413
    %1623 = vmatpush.bf16.msra.mxu0 %v1405
    %1624 = vmatpush.bf16.msra.mxu0 %v1397
    %1625 = vmatpush.bf16.msra.mxu0 %v1389
    %1626 = vmatpush.bf16.msra.mxu0 %v1381
    %1627 = vmatpush.bf16.msra.mxu0 %v1373
    %1628 = vmatpush.bf16.msra.mxu0 %v1365
    %1629 = vmatmul.bf16.gmra.mxu0 0
    %v1630 = vpop.f32.mrf.mxu0
    %v1631 = vadd.f32 0.0, %v1630
    %v1632 = vpop.f32.mrf.mxu0
    %v1633 = vadd.f32 0.0, %v1632
    %1634 = vdwg.mxu0
    %1635 = vmatpush.bf16.msra.mxu0 %v1485
    %1636 = vmatpush.bf16.msra.mxu0 %v1477
    %1637 = vmatpush.bf16.msra.mxu0 %v1469
    %1638 = vmatpush.bf16.msra.mxu0 %v1461
    %1639 = vmatpush.bf16.msra.mxu0 %v1453
    %1640 = vmatpush.bf16.msra.mxu0 %v1445
    %1641 = vmatpush.bf16.msra.mxu0 %v1437
    %1642 = vmatpush.bf16.msra.mxu0 %v1429
    %1643 = vmatmul.bf16.gmra.mxu0 0
    %v1644 = vpop.f32.mrf.mxu0
    %v1645 = vadd.f32 %v1631, %v1644
    %v1646 = vpop.f32.mrf.mxu0
    %v1647 = vadd.f32 %v1633, %v1646
    %1648 = vdwg.mxu0
    %1649 = vmatpush.bf16.msra.mxu0 %v1422
    %1650 = vmatpush.bf16.msra.mxu0 %v1414
    %1651 = vmatpush.bf16.msra.mxu0 %v1406
    %1652 = vmatpush.bf16.msra.mxu0 %v1398
    %1653 = vmatpush.bf16.msra.mxu0 %v1390
    %1654 = vmatpush.bf16.msra.mxu0 %v1382
    %1655 = vmatpush.bf16.msra.mxu0 %v1374
    %1656 = vmatpush.bf16.msra.mxu0 %v1366
    %1657 = vmatmul.bf16.gmra.mxu0 0
    %v1658 = vpop.f32.mrf.mxu0
    %v1659 = vadd.f32 0.0, %v1658
    %v1660 = vpop.f32.mrf.mxu0
    %v1661 = vadd.f32 0.0, %v1660
    %1662 = vdwg.mxu0
    %1663 = vmatpush.bf16.msra.mxu0 %v1486
    %1664 = vmatpush.bf16.msra.mxu0 %v1478
    %1665 = vmatpush.bf16.msra.mxu0 %v1470
    %1666 = vmatpush.bf16.msra.mxu0 %v1462
    %1667 = vmatpush.bf16.msra.mxu0 %v1454
    %1668 = vmatpush.bf16.msra.mxu0 %v1446
    %1669 = vmatpush.bf16.msra.mxu0 %v1438
    %1670 = vmatpush.bf16.msra.mxu0 %v1430
    %1671 = vmatmul.bf16.gmra.mxu0 0
    %v1672 = vpop.f32.mrf.mxu0
    %v1673 = vadd.f32 %v1659, %v1672
    %v1674 = vpop.f32.mrf.mxu0
    %v1675 = vadd.f32 %v1661, %v1674
    %1676 = vdwg.mxu0
    %1677 = vmatpush.bf16.msra.mxu0 %v1423
    %1678 = vmatpush.bf16.msra.mxu0 %v1415
    %1679 = vmatpush.bf16.msra.mxu0 %v1407
    %1680 = vmatpush.bf16.msra.mxu0 %v1399
    %1681 = vmatpush.bf16.msra.mxu0 %v1391
    %1682 = vmatpush.bf16.msra.mxu0 %v1383
    %1683 = vmatpush.bf16.msra.mxu0 %v1375
    %1684 = vmatpush.bf16.msra.mxu0 %v1367
    %1685 = vmatmul.bf16.gmra.mxu0 0
    %v1686 = vpop.f32.mrf.mxu0
    %v1687 = vadd.f32 0.0, %v1686
    %v1688 = vpop.f32.mrf.mxu0
    %v1689 = vadd.f32 0.0, %v1688
    %1690 = vdwg.mxu0
    %1691 = vmatpush.bf16.msra.mxu0 %v1487
    %1692 = vmatpush.bf16.msra.mxu0 %v1479
    %1693 = vmatpush.bf16.msra.mxu0 %v1471
    %1694 = vmatpush.bf16.msra.mxu0 %v1463
    %1695 = vmatpush.bf16.msra.mxu0 %v1455
    %1696 = vmatpush.bf16.msra.mxu0 %v1447
    %1697 = vmatpush.bf16.msra.mxu0 %v1439
    %1698 = vmatpush.bf16.msra.mxu0 %v1431
    %1699 = vmatmul.bf16.gmra.mxu0 0
    %v1700 = vpop.f32.mrf.mxu0
    %v1701 = vadd.f32 %v1687, %v1700
    %v1702 = vpop.f32.mrf.mxu0
    %v1703 = vadd.f32 %v1689, %v1702
    %1704 = vdwg.mxu0
    %1705 = vmatpush.bf16.msra.mxu0 %v1424
    %1706 = vmatpush.bf16.msra.mxu0 %v1416
    %1707 = vmatpush.bf16.msra.mxu0 %v1408
    %1708 = vmatpush.bf16.msra.mxu0 %v1400
    %1709 = vmatpush.bf16.msra.mxu0 %v1392
    %1710 = vmatpush.bf16.msra.mxu0 %v1384
    %1711 = vmatpush.bf16.msra.mxu0 %v1376
    %1712 = vmatpush.bf16.msra.mxu0 %v1368
    %1713 = vmatmul.bf16.gmra.mxu0 0
    %v1714 = vpop.f32.mrf.mxu0
    %v1715 = vadd.f32 0.0, %v1714
    %v1716 = vpop.f32.mrf.mxu0
    %v1717 = vadd.f32 0.0, %v1716
    %1718 = vdwg.mxu0
    %1719 = vmatpush.bf16.msra.mxu0 %v1488
    %1720 = vmatpush.bf16.msra.mxu0 %v1480
    %1721 = vmatpush.bf16.msra.mxu0 %v1472
    %1722 = vmatpush.bf16.msra.mxu0 %v1464
    %1723 = vmatpush.bf16.msra.mxu0 %v1456
    %1724 = vmatpush.bf16.msra.mxu0 %v1448
    %1725 = vmatpush.bf16.msra.mxu0 %v1440
    %1726 = vmatpush.bf16.msra.mxu0 %v1432
    %1727 = vmatmul.bf16.gmra.mxu0 0
    %v1728 = vpop.f32.mrf.mxu0
    %v1729 = vadd.f32 %v1715, %v1728
    %v1730 = vpop.f32.mrf.mxu0
    %v1731 = vadd.f32 %v1717, %v1730
    %1732 = vdwg.mxu0
    %1733 = vmatpush.bf16.msra.mxu0 %v1425
    %1734 = vmatpush.bf16.msra.mxu0 %v1417
    %1735 = vmatpush.bf16.msra.mxu0 %v1409
    %1736 = vmatpush.bf16.msra.mxu0 %v1401
    %1737 = vmatpush.bf16.msra.mxu0 %v1393
    %1738 = vmatpush.bf16.msra.mxu0 %v1385
    %1739 = vmatpush.bf16.msra.mxu0 %v1377
    %1740 = vmatpush.bf16.msra.mxu0 %v1369
    %1741 = vmatmul.bf16.gmra.mxu0 0
    %v1742 = vpop.f32.mrf.mxu0
    %v1743 = vadd.f32 0.0, %v1742
    %v1744 = vpop.f32.mrf.mxu0
    %v1745 = vadd.f32 0.0, %v1744
    %1746 = vdwg.mxu0
    %1747 = vmatpush.bf16.msra.mxu0 %v1489
    %1748 = vmatpush.bf16.msra.mxu0 %v1481
    %1749 = vmatpush.bf16.msra.mxu0 %v1473
    %1750 = vmatpush.bf16.msra.mxu0 %v1465
    %1751 = vmatpush.bf16.msra.mxu0 %v1457
    %1752 = vmatpush.bf16.msra.mxu0 %v1449
    %1753 = vmatpush.bf16.msra.mxu0 %v1441
    %1754 = vmatpush.bf16.msra.mxu0 %v1433
    %1755 = vmatmul.bf16.gmra.mxu0 0
    %v1756 = vpop.f32.mrf.mxu0
    %v1757 = vadd.f32 %v1743, %v1756
    %v1758 = vpop.f32.mrf.mxu0
    %v1759 = vadd.f32 %v1745, %v1758
    %1760 = vdwg.mxu0
    %1761 = vmatpush.bf16.msra.mxu0 %v1426
    %1762 = vmatpush.bf16.msra.mxu0 %v1418
    %1763 = vmatpush.bf16.msra.mxu0 %v1410
    %1764 = vmatpush.bf16.msra.mxu0 %v1402
    %1765 = vmatpush.bf16.msra.mxu0 %v1394
    %1766 = vmatpush.bf16.msra.mxu0 %v1386
    %1767 = vmatpush.bf16.msra.mxu0 %v1378
    %1768 = vmatpush.bf16.msra.mxu0 %v1370
    %1769 = vmatmul.bf16.gmra.mxu0 0
    %v1770 = vpop.f32.mrf.mxu0
    %v1771 = vadd.f32 0.0, %v1770
    %v1772 = vpop.f32.mrf.mxu0
    %v1773 = vadd.f32 0.0, %v1772
    %1774 = vdwg.mxu0
    %1775 = vmatpush.bf16.msra.mxu0 %v1490
    %1776 = vmatpush.bf16.msra.mxu0 %v1482
    %1777 = vmatpush.bf16.msra.mxu0 %v1474
    %1778 = vmatpush.bf16.msra.mxu0 %v1466
    %1779 = vmatpush.bf16.msra.mxu0 %v1458
    %1780 = vmatpush.bf16.msra.mxu0 %v1450
    %1781 = vmatpush.bf16.msra.mxu0 %v1442
    %1782 = vmatpush.bf16.msra.mxu0 %v1434
    %1783 = vmatmul.bf16.gmra.mxu0 0
    %v1784 = vpop.f32.mrf.mxu0
    %v1785 = vadd.f32 %v1771, %v1784
    %v1786 = vpop.f32.mrf.mxu0
    %v1787 = vadd.f32 %v1773, %v1786
    %1788 = vdwg.mxu0
    %1789 = vmatpush.bf16.msra.mxu0 %v1427
    %1790 = vmatpush.bf16.msra.mxu0 %v1419
    %1791 = vmatpush.bf16.msra.mxu0 %v1411
    %1792 = vmatpush.bf16.msra.mxu0 %v1403
    %1793 = vmatpush.bf16.msra.mxu0 %v1395
    %1794 = vmatpush.bf16.msra.mxu0 %v1387
    %1795 = vmatpush.bf16.msra.mxu0 %v1379
    %1796 = vmatpush.bf16.msra.mxu0 %v1371
    %1797 = vmatmul.bf16.gmra.mxu0 0
    %v1798 = vpop.f32.mrf.mxu0
    %v1799 = vadd.f32 0.0, %v1798
    %v1800 = vpop.f32.mrf.mxu0
    %v1801 = vadd.f32 0.0, %v1800
    %1802 = vdwg.mxu0
    %1803 = vmatpush.bf16.msra.mxu0 %v1491
    %1804 = vmatpush.bf16.msra.mxu0 %v1483
    %1805 = vmatpush.bf16.msra.mxu0 %v1475
    %1806 = vmatpush.bf16.msra.mxu0 %v1467
    %1807 = vmatpush.bf16.msra.mxu0 %v1459
    %1808 = vmatpush.bf16.msra.mxu0 %v1451
    %1809 = vmatpush.bf16.msra.mxu0 %v1443
    %1810 = vmatpush.bf16.msra.mxu0 %v1435
    %1811 = vmatmul.bf16.gmra.mxu0 0
    %v1812 = vpop.f32.mrf.mxu0
    %v1813 = vadd.f32 %v1799, %v1812
    %v1814 = vpop.f32.mrf.mxu0
    %v1815 = vadd.f32 %v1801, %v1814
    %1816 = vdwg.mxu0
    %1817 = vmatpush.bf16.msra.mxu0 %v1428
    %1818 = vmatpush.bf16.msra.mxu0 %v1420
    %1819 = vmatpush.bf16.msra.mxu0 %v1412
    %1820 = vmatpush.bf16.msra.mxu0 %v1404
    %1821 = vmatpush.bf16.msra.mxu0 %v1396
    %1822 = vmatpush.bf16.msra.mxu0 %v1388
    %1823 = vmatpush.bf16.msra.mxu0 %v1380
    %1824 = vmatpush.bf16.msra.mxu0 %v1372
    %1825 = vmatmul.bf16.gmra.mxu0 0
    %v1826 = vpop.f32.mrf.mxu0
    %v1827 = vadd.f32 0.0, %v1826
    %v1828 = vpop.f32.mrf.mxu0
    %v1829 = vadd.f32 0.0, %v1828
    %1830 = vdwg.mxu0
    %1831 = vmatpush.bf16.msra.mxu0 %v1492
    %1832 = vmatpush.bf16.msra.mxu0 %v1484
    %1833 = vmatpush.bf16.msra.mxu0 %v1476
    %1834 = vmatpush.bf16.msra.mxu0 %v1468
    %1835 = vmatpush.bf16.msra.mxu0 %v1460
    %1836 = vmatpush.bf16.msra.mxu0 %v1452
    %1837 = vmatpush.bf16.msra.mxu0 %v1444
    %1838 = vmatpush.bf16.msra.mxu0 %v1436
    %1839 = vmatmul.bf16.gmra.mxu0 0
    %v1840 = vpop.f32.mrf.mxu0
    %v1841 = vadd.f32 %v1827, %v1840
    %v1842 = vpop.f32.mrf.mxu0
    %v1843 = vadd.f32 %v1829, %v1842
    %1844 = vdwg.mxu0
    %v1845 = vld [vmem:[#allocation2] sm:$0xff]
    %v1846 = vld [vmem:[#allocation2 + $0x8] sm:$0xff]
    %v1847 = vld [vmem:[#allocation2 + $0x10] sm:$0xff]
    %v1848 = vld [vmem:[#allocation2 + $0x18] sm:$0xff]
    %v1849 = vld [vmem:[#allocation2 + $0x20] sm:$0xff]
    %v1850 = vld [vmem:[#allocation2 + $0x28] sm:$0xff]
    %v1851 = vld [vmem:[#allocation2 + $0x30] sm:$0xff]
    %v1852 = vld [vmem:[#allocation2 + $0x38] sm:$0xff]
    %v1853 = vld [vmem:[#allocation2 + $0x40] sm:$0xff]
    %v1854 = vld [vmem:[#allocation2 + $0x48] sm:$0xff]
    %v1855 = vld [vmem:[#allocation2 + $0x50] sm:$0xff]
    %v1856 = vld [vmem:[#allocation2 + $0x58] sm:$0xff]
    %v1857 = vld [vmem:[#allocation2 + $0x60] sm:$0xff]
    %v1858 = vld [vmem:[#allocation2 + $0x68] sm:$0xff]
    %v1859 = vld [vmem:[#allocation2 + $0x70] sm:$0xff]
    %v1860 = vld [vmem:[#allocation2 + $0x78] sm:$0xff]
    %v1989 = vunpack.c.l.b16 %v63
    %v1990 = vunpack.c.h.b16 %v63
    %v1991 = vunpack.c.l.b16 %v64
    %v1992 = vunpack.c.h.b16 %v64
    %v1993 = vunpack.c.l.b16 %v65
    %v1994 = vunpack.c.h.b16 %v65
    %v1995 = vunpack.c.l.b16 %v66
    %v1996 = vunpack.c.h.b16 %v66
    %v1997 = vunpack.c.l.b16 %v67
    %v1998 = vunpack.c.h.b16 %v67
    %v1999 = vunpack.c.l.b16 %v68
    %v2000 = vunpack.c.h.b16 %v68
    %v2001 = vunpack.c.l.b16 %v69
    %v2002 = vunpack.c.h.b16 %v69
    %v2003 = vunpack.c.l.b16 %v70
    %v2004 = vunpack.c.h.b16 %v70
    %v2005 = vunpack.c.l.b16 %v71
    %v2006 = vunpack.c.h.b16 %v71
    %v2007 = vunpack.c.l.b16 %v72
    %v2008 = vunpack.c.h.b16 %v72
    %v2009 = vunpack.c.l.b16 %v73
    %v2010 = vunpack.c.h.b16 %v73
    %v2011 = vunpack.c.l.b16 %v74
    %v2012 = vunpack.c.h.b16 %v74
    %v2013 = vunpack.c.l.b16 %v75
    %v2014 = vunpack.c.h.b16 %v75
    %v2015 = vunpack.c.l.b16 %v76
    %v2016 = vunpack.c.h.b16 %v76
    %v2017 = vunpack.c.l.b16 %v77
    %v2018 = vunpack.c.h.b16 %v77
    %v2019 = vunpack.c.l.b16 %v78
    %v2020 = vunpack.c.h.b16 %v78
    %v2021 = vunpack.c.l.b16 %v79
    %v2022 = vunpack.c.h.b16 %v79
    %v2023 = vunpack.c.l.b16 %v80
    %v2024 = vunpack.c.h.b16 %v80
    %v2025 = vunpack.c.l.b16 %v81
    %v2026 = vunpack.c.h.b16 %v81
    %v2027 = vunpack.c.l.b16 %v82
    %v2028 = vunpack.c.h.b16 %v82
    %v2029 = vunpack.c.l.b16 %v83
    %v2030 = vunpack.c.h.b16 %v83
    %v2031 = vunpack.c.l.b16 %v84
    %v2032 = vunpack.c.h.b16 %v84
    %v2033 = vunpack.c.l.b16 %v85
    %v2034 = vunpack.c.h.b16 %v85
    %v2035 = vunpack.c.l.b16 %v86
    %v2036 = vunpack.c.h.b16 %v86
    %v2037 = vunpack.c.l.b16 %v87
    %v2038 = vunpack.c.h.b16 %v87
    %v2039 = vunpack.c.l.b16 %v88
    %v2040 = vunpack.c.h.b16 %v88
    %v2041 = vunpack.c.l.b16 %v89
    %v2042 = vunpack.c.h.b16 %v89
    %v2043 = vunpack.c.l.b16 %v90
    %v2044 = vunpack.c.h.b16 %v90
    %v2045 = vunpack.c.l.b16 %v91
    %v2046 = vunpack.c.h.b16 %v91
    %v2047 = vunpack.c.l.b16 %v92
    %v2048 = vunpack.c.h.b16 %v92
    %v2049 = vunpack.c.l.b16 %v93
    %v2050 = vunpack.c.h.b16 %v93
    %v2051 = vunpack.c.l.b16 %v94
    %v2052 = vunpack.c.h.b16 %v94
    %v2053 = vunpack.c.l.b16 %v95
    %v2054 = vunpack.c.h.b16 %v95
    %v2055 = vunpack.c.l.b16 %v96
    %v2056 = vunpack.c.h.b16 %v96
    %v2057 = vunpack.c.l.b16 %v97
    %v2058 = vunpack.c.h.b16 %v97
    %v2059 = vunpack.c.l.b16 %v98
    %v2060 = vunpack.c.h.b16 %v98
    %v2061 = vunpack.c.l.b16 %v99
    %v2062 = vunpack.c.h.b16 %v99
    %v2063 = vunpack.c.l.b16 %v100
    %v2064 = vunpack.c.h.b16 %v100
    %v2065 = vunpack.c.l.b16 %v101
    %v2066 = vunpack.c.h.b16 %v101
    %v2067 = vunpack.c.l.b16 %v102
    %v2068 = vunpack.c.h.b16 %v102
    %v2069 = vunpack.c.l.b16 %v103
    %v2070 = vunpack.c.h.b16 %v103
    %v2071 = vunpack.c.l.b16 %v104
    %v2072 = vunpack.c.h.b16 %v104
    %v2073 = vunpack.c.l.b16 %v105
    %v2074 = vunpack.c.h.b16 %v105
    %v2075 = vunpack.c.l.b16 %v106
    %v2076 = vunpack.c.h.b16 %v106
    %v2077 = vunpack.c.l.b16 %v107
    %v2078 = vunpack.c.h.b16 %v107
    %v2079 = vunpack.c.l.b16 %v108
    %v2080 = vunpack.c.h.b16 %v108
    %v2081 = vunpack.c.l.b16 %v109
    %v2082 = vunpack.c.h.b16 %v109
    %v2083 = vunpack.c.l.b16 %v110
    %v2084 = vunpack.c.h.b16 %v110
    %v2085 = vunpack.c.l.b16 %v111
    %v2086 = vunpack.c.h.b16 %v111
    %v2087 = vunpack.c.l.b16 %v112
    %v2088 = vunpack.c.h.b16 %v112
    %v2089 = vunpack.c.l.b16 %v113
    %v2090 = vunpack.c.h.b16 %v113
    %v2091 = vunpack.c.l.b16 %v114
    %v2092 = vunpack.c.h.b16 %v114
    %v2093 = vunpack.c.l.b16 %v115
    %v2094 = vunpack.c.h.b16 %v115
    %v2095 = vunpack.c.l.b16 %v116
    %v2096 = vunpack.c.h.b16 %v116
    %v2097 = vunpack.c.l.b16 %v117
    %v2098 = vunpack.c.h.b16 %v117
    %v2099 = vunpack.c.l.b16 %v118
    %v2100 = vunpack.c.h.b16 %v118
    %v2101 = vunpack.c.l.b16 %v119
    %v2102 = vunpack.c.h.b16 %v119
    %v2103 = vunpack.c.l.b16 %v120
    %v2104 = vunpack.c.h.b16 %v120
    %v2105 = vunpack.c.l.b16 %v121
    %v2106 = vunpack.c.h.b16 %v121
    %v2107 = vunpack.c.l.b16 %v122
    %v2108 = vunpack.c.h.b16 %v122
    %v2109 = vunpack.c.l.b16 %v123
    %v2110 = vunpack.c.h.b16 %v123
    %v2111 = vunpack.c.l.b16 %v124
    %v2112 = vunpack.c.h.b16 %v124
    %v2113 = vunpack.c.l.b16 %v125
    %v2114 = vunpack.c.h.b16 %v125
    %v2115 = vunpack.c.l.b16 %v126
    %v2116 = vunpack.c.h.b16 %v126
    %v2117 = vunpack.c.l.b16 %v127
    %v2118 = vunpack.c.h.b16 %v127
    %v2119 = vunpack.c.l.b16 %v128
    %v2120 = vunpack.c.h.b16 %v128
    %v2121 = vunpack.c.l.b16 %v129
    %v2122 = vunpack.c.h.b16 %v129
    %v2123 = vunpack.c.l.b16 %v130
    %v2124 = vunpack.c.h.b16 %v130
    %v2125 = vunpack.c.l.b16 %v131
    %v2126 = vunpack.c.h.b16 %v131
    %v2127 = vunpack.c.l.b16 %v132
    %v2128 = vunpack.c.h.b16 %v132
    %v2129 = vunpack.c.l.b16 %v133
    %v2130 = vunpack.c.h.b16 %v133
    %v2131 = vunpack.c.l.b16 %v134
    %v2132 = vunpack.c.h.b16 %v134
    %v2133 = vunpack.c.l.b16 %v135
    %v2134 = vunpack.c.h.b16 %v135
    %v2135 = vunpack.c.l.b16 %v136
    %v2136 = vunpack.c.h.b16 %v136
    %v2137 = vunpack.c.l.b16 %v137
    %v2138 = vunpack.c.h.b16 %v137
    %v2139 = vunpack.c.l.b16 %v138
    %v2140 = vunpack.c.h.b16 %v138
    %v2141 = vunpack.c.l.b16 %v139
    %v2142 = vunpack.c.h.b16 %v139
    %v2143 = vunpack.c.l.b16 %v140
    %v2144 = vunpack.c.h.b16 %v140
    %v2145 = vunpack.c.l.b16 %v141
    %v2146 = vunpack.c.h.b16 %v141
    %v2147 = vunpack.c.l.b16 %v142
    %v2148 = vunpack.c.h.b16 %v142
    %v2149 = vunpack.c.l.b16 %v143
    %v2150 = vunpack.c.h.b16 %v143
    %v2151 = vunpack.c.l.b16 %v144
    %v2152 = vunpack.c.h.b16 %v144
    %v2153 = vunpack.c.l.b16 %v145
    %v2154 = vunpack.c.h.b16 %v145
    %v2155 = vunpack.c.l.b16 %v146
    %v2156 = vunpack.c.h.b16 %v146
    %v2157 = vunpack.c.l.b16 %v147
    %v2158 = vunpack.c.h.b16 %v147
    %v2159 = vunpack.c.l.b16 %v148
    %v2160 = vunpack.c.h.b16 %v148
    %v2161 = vunpack.c.l.b16 %v149
    %v2162 = vunpack.c.h.b16 %v149
    %v2163 = vunpack.c.l.b16 %v150
    %v2164 = vunpack.c.h.b16 %v150
    %v2165 = vunpack.c.l.b16 %v151
    %v2166 = vunpack.c.h.b16 %v151
    %v2167 = vunpack.c.l.b16 %v152
    %v2168 = vunpack.c.h.b16 %v152
    %v2169 = vunpack.c.l.b16 %v153
    %v2170 = vunpack.c.h.b16 %v153
    %v2171 = vunpack.c.l.b16 %v154
    %v2172 = vunpack.c.h.b16 %v154
    %v2173 = vunpack.c.l.b16 %v155
    %v2174 = vunpack.c.h.b16 %v155
    %v2175 = vunpack.c.l.b16 %v156
    %v2176 = vunpack.c.h.b16 %v156
    %v2177 = vunpack.c.l.b16 %v157
    %v2178 = vunpack.c.h.b16 %v157
    %v2179 = vunpack.c.l.b16 %v158
    %v2180 = vunpack.c.h.b16 %v158
    %v2181 = vunpack.c.l.b16 %v159
    %v2182 = vunpack.c.h.b16 %v159
    %v2183 = vunpack.c.l.b16 %v160
    %v2184 = vunpack.c.h.b16 %v160
    %v2185 = vunpack.c.l.b16 %v161
    %v2186 = vunpack.c.h.b16 %v161
    %v2187 = vunpack.c.l.b16 %v162
    %v2188 = vunpack.c.h.b16 %v162
    %v2189 = vunpack.c.l.b16 %v163
    %v2190 = vunpack.c.h.b16 %v163
    %v2191 = vunpack.c.l.b16 %v164
    %v2192 = vunpack.c.h.b16 %v164
    %v2193 = vunpack.c.l.b16 %v165
    %v2194 = vunpack.c.h.b16 %v165
    %v2195 = vunpack.c.l.b16 %v166
    %v2196 = vunpack.c.h.b16 %v166
    %v2197 = vunpack.c.l.b16 %v167
    %v2198 = vunpack.c.h.b16 %v167
    %v2199 = vunpack.c.l.b16 %v168
    %v2200 = vunpack.c.h.b16 %v168
    %v2201 = vunpack.c.l.b16 %v169
    %v2202 = vunpack.c.h.b16 %v169
    %v2203 = vunpack.c.l.b16 %v170
    %v2204 = vunpack.c.h.b16 %v170
    %v2205 = vunpack.c.l.b16 %v171
    %v2206 = vunpack.c.h.b16 %v171
    %v2207 = vunpack.c.l.b16 %v172
    %v2208 = vunpack.c.h.b16 %v172
    %v2209 = vunpack.c.l.b16 %v173
    %v2210 = vunpack.c.h.b16 %v173
    %v2211 = vunpack.c.l.b16 %v174
    %v2212 = vunpack.c.h.b16 %v174
    %v2213 = vunpack.c.l.b16 %v175
    %v2214 = vunpack.c.h.b16 %v175
    %v2215 = vunpack.c.l.b16 %v176
    %v2216 = vunpack.c.h.b16 %v176
    %v2217 = vunpack.c.l.b16 %v177
    %v2218 = vunpack.c.h.b16 %v177
    %v2219 = vunpack.c.l.b16 %v178
    %v2220 = vunpack.c.h.b16 %v178
    %v2221 = vunpack.c.l.b16 %v179
    %v2222 = vunpack.c.h.b16 %v179
    %v2223 = vunpack.c.l.b16 %v180
    %v2224 = vunpack.c.h.b16 %v180
    %v2225 = vunpack.c.l.b16 %v181
    %v2226 = vunpack.c.h.b16 %v181
    %v2227 = vunpack.c.l.b16 %v182
    %v2228 = vunpack.c.h.b16 %v182
    %v2229 = vunpack.c.l.b16 %v183
    %v2230 = vunpack.c.h.b16 %v183
    %v2231 = vunpack.c.l.b16 %v184
    %v2232 = vunpack.c.h.b16 %v184
    %v2233 = vunpack.c.l.b16 %v185
    %v2234 = vunpack.c.h.b16 %v185
    %v2235 = vunpack.c.l.b16 %v186
    %v2236 = vunpack.c.h.b16 %v186
    %v2237 = vunpack.c.l.b16 %v187
    %v2238 = vunpack.c.h.b16 %v187
    %v2239 = vunpack.c.l.b16 %v188
    %v2240 = vunpack.c.h.b16 %v188
    %v2241 = vunpack.c.l.b16 %v189
    %v2242 = vunpack.c.h.b16 %v189
    %v2243 = vunpack.c.l.b16 %v190
    %v2244 = vunpack.c.h.b16 %v190
    %v2245 = vpack.c.b16 %v1997, %v1989
    %v2246 = vpack.c.b16 %v1998, %v1990
    %v2247 = vpack.c.b16 %v1999, %v1991
    %v2248 = vpack.c.b16 %v2000, %v1992
    %v2249 = vpack.c.b16 %v2001, %v1993
    %v2250 = vpack.c.b16 %v2002, %v1994
    %v2251 = vpack.c.b16 %v2003, %v1995
    %v2252 = vpack.c.b16 %v2004, %v1996
    %v2253 = vpack.c.b16 %v2013, %v2005
    %v2254 = vpack.c.b16 %v2014, %v2006
    %v2255 = vpack.c.b16 %v2015, %v2007
    %v2256 = vpack.c.b16 %v2016, %v2008
    %v2257 = vpack.c.b16 %v2017, %v2009
    %v2258 = vpack.c.b16 %v2018, %v2010
    %v2259 = vpack.c.b16 %v2019, %v2011
    %v2260 = vpack.c.b16 %v2020, %v2012
    %v2261 = vpack.c.b16 %v2029, %v2021
    %v2262 = vpack.c.b16 %v2030, %v2022
    %v2263 = vpack.c.b16 %v2031, %v2023
    %v2264 = vpack.c.b16 %v2032, %v2024
    %v2265 = vpack.c.b16 %v2033, %v2025
    %v2266 = vpack.c.b16 %v2034, %v2026
    %v2267 = vpack.c.b16 %v2035, %v2027
    %v2268 = vpack.c.b16 %v2036, %v2028
    %v2269 = vpack.c.b16 %v2045, %v2037
    %v2270 = vpack.c.b16 %v2046, %v2038
    %v2271 = vpack.c.b16 %v2047, %v2039
    %v2272 = vpack.c.b16 %v2048, %v2040
    %v2273 = vpack.c.b16 %v2049, %v2041
    %v2274 = vpack.c.b16 %v2050, %v2042
    %v2275 = vpack.c.b16 %v2051, %v2043
    %v2276 = vpack.c.b16 %v2052, %v2044
    %v2277 = vpack.c.b16 %v2061, %v2053
    %v2278 = vpack.c.b16 %v2062, %v2054
    %v2279 = vpack.c.b16 %v2063, %v2055
    %v2280 = vpack.c.b16 %v2064, %v2056
    %v2281 = vpack.c.b16 %v2065, %v2057
    %v2282 = vpack.c.b16 %v2066, %v2058
    %v2283 = vpack.c.b16 %v2067, %v2059
    %v2284 = vpack.c.b16 %v2068, %v2060
    %v2285 = vpack.c.b16 %v2077, %v2069
    %v2286 = vpack.c.b16 %v2078, %v2070
    %v2287 = vpack.c.b16 %v2079, %v2071
    %v2288 = vpack.c.b16 %v2080, %v2072
    %v2289 = vpack.c.b16 %v2081, %v2073
    %v2290 = vpack.c.b16 %v2082, %v2074
    %v2291 = vpack.c.b16 %v2083, %v2075
    %v2292 = vpack.c.b16 %v2084, %v2076
    %v2293 = vpack.c.b16 %v2093, %v2085
    %v2294 = vpack.c.b16 %v2094, %v2086
    %v2295 = vpack.c.b16 %v2095, %v2087
    %v2296 = vpack.c.b16 %v2096, %v2088
    %v2297 = vpack.c.b16 %v2097, %v2089
    %v2298 = vpack.c.b16 %v2098, %v2090
    %v2299 = vpack.c.b16 %v2099, %v2091
    %v2300 = vpack.c.b16 %v2100, %v2092
    %v2301 = vpack.c.b16 %v2109, %v2101
    %v2302 = vpack.c.b16 %v2110, %v2102
    %v2303 = vpack.c.b16 %v2111, %v2103
    %v2304 = vpack.c.b16 %v2112, %v2104
    %v2305 = vpack.c.b16 %v2113, %v2105
    %v2306 = vpack.c.b16 %v2114, %v2106
    %v2307 = vpack.c.b16 %v2115, %v2107
    %v2308 = vpack.c.b16 %v2116, %v2108
    %v2309 = vpack.c.b16 %v2125, %v2117
    %v2310 = vpack.c.b16 %v2126, %v2118
    %v2311 = vpack.c.b16 %v2127, %v2119
    %v2312 = vpack.c.b16 %v2128, %v2120
    %v2313 = vpack.c.b16 %v2129, %v2121
    %v2314 = vpack.c.b16 %v2130, %v2122
    %v2315 = vpack.c.b16 %v2131, %v2123
    %v2316 = vpack.c.b16 %v2132, %v2124
    %v2317 = vpack.c.b16 %v2141, %v2133
    %v2318 = vpack.c.b16 %v2142, %v2134
    %v2319 = vpack.c.b16 %v2143, %v2135
    %v2320 = vpack.c.b16 %v2144, %v2136
    %v2321 = vpack.c.b16 %v2145, %v2137
    %v2322 = vpack.c.b16 %v2146, %v2138
    %v2323 = vpack.c.b16 %v2147, %v2139
    %v2324 = vpack.c.b16 %v2148, %v2140
    %v2325 = vpack.c.b16 %v2157, %v2149
    %v2326 = vpack.c.b16 %v2158, %v2150
    %v2327 = vpack.c.b16 %v2159, %v2151
    %v2328 = vpack.c.b16 %v2160, %v2152
    %v2329 = vpack.c.b16 %v2161, %v2153
    %v2330 = vpack.c.b16 %v2162, %v2154
    %v2331 = vpack.c.b16 %v2163, %v2155
    %v2332 = vpack.c.b16 %v2164, %v2156
    %v2333 = vpack.c.b16 %v2173, %v2165
    %v2334 = vpack.c.b16 %v2174, %v2166
    %v2335 = vpack.c.b16 %v2175, %v2167
    %v2336 = vpack.c.b16 %v2176, %v2168
    %v2337 = vpack.c.b16 %v2177, %v2169
    %v2338 = vpack.c.b16 %v2178, %v2170
    %v2339 = vpack.c.b16 %v2179, %v2171
    %v2340 = vpack.c.b16 %v2180, %v2172
    %v2341 = vpack.c.b16 %v2189, %v2181
    %v2342 = vpack.c.b16 %v2190, %v2182
    %v2343 = vpack.c.b16 %v2191, %v2183
    %v2344 = vpack.c.b16 %v2192, %v2184
    %v2345 = vpack.c.b16 %v2193, %v2185
    %v2346 = vpack.c.b16 %v2194, %v2186
    %v2347 = vpack.c.b16 %v2195, %v2187
    %v2348 = vpack.c.b16 %v2196, %v2188
    %v2349 = vpack.c.b16 %v2205, %v2197
    %v2350 = vpack.c.b16 %v2206, %v2198
    %v2351 = vpack.c.b16 %v2207, %v2199
    %v2352 = vpack.c.b16 %v2208, %v2200
    %v2353 = vpack.c.b16 %v2209, %v2201
    %v2354 = vpack.c.b16 %v2210, %v2202
    %v2355 = vpack.c.b16 %v2211, %v2203
    %v2356 = vpack.c.b16 %v2212, %v2204
    %v2357 = vpack.c.b16 %v2221, %v2213
    %v2358 = vpack.c.b16 %v2222, %v2214
    %v2359 = vpack.c.b16 %v2223, %v2215
    %v2360 = vpack.c.b16 %v2224, %v2216
    %v2361 = vpack.c.b16 %v2225, %v2217
    %v2362 = vpack.c.b16 %v2226, %v2218
    %v2363 = vpack.c.b16 %v2227, %v2219
    %v2364 = vpack.c.b16 %v2228, %v2220
    %v2365 = vpack.c.b16 %v2237, %v2229
    %v2366 = vpack.c.b16 %v2238, %v2230
    %v2367 = vpack.c.b16 %v2239, %v2231
    %v2368 = vpack.c.b16 %v2240, %v2232
    %v2369 = vpack.c.b16 %v2241, %v2233
    %v2370 = vpack.c.b16 %v2242, %v2234
    %v2371 = vpack.c.b16 %v2243, %v2235
    %v2372 = vpack.c.b16 %v2244, %v2236
    %2501 = vmatpush.bf16.msra.mxu0 %v2301
    %2502 = vmatpush.bf16.msra.mxu0 %v2293
    %2503 = vmatpush.bf16.msra.mxu0 %v2285
    %2504 = vmatpush.bf16.msra.mxu0 %v2277
    %2505 = vmatpush.bf16.msra.mxu0 %v2269
    %2506 = vmatpush.bf16.msra.mxu0 %v2261
    %2507 = vmatpush.bf16.msra.mxu0 %v2253
    %2508 = vmatpush.bf16.msra.mxu0 %v2245
    %2509 = vmatmul.bf16.gmra.mxu0 0
    %v2510 = vpop.f32.mrf.mxu0
    %v2511 = vadd.f32 0.0, %v2510
    %v2512 = vpop.f32.mrf.mxu0
    %v2513 = vadd.f32 0.0, %v2512
    %2514 = vdwg.mxu0
    %2515 = vmatpush.bf16.msra.mxu0 %v2365
    %2516 = vmatpush.bf16.msra.mxu0 %v2357
    %2517 = vmatpush.bf16.msra.mxu0 %v2349
    %2518 = vmatpush.bf16.msra.mxu0 %v2341
    %2519 = vmatpush.bf16.msra.mxu0 %v2333
    %2520 = vmatpush.bf16.msra.mxu0 %v2325
    %2521 = vmatpush.bf16.msra.mxu0 %v2317
    %2522 = vmatpush.bf16.msra.mxu0 %v2309
    %2523 = vmatmul.bf16.gmra.mxu0 0
    %v2524 = vpop.f32.mrf.mxu0
    %v2525 = vadd.f32 %v2511, %v2524
    %v2526 = vpop.f32.mrf.mxu0
    %v2527 = vadd.f32 %v2513, %v2526
    %2528 = vdwg.mxu0
    %2529 = vmatpush.bf16.msra.mxu0 %v2302
    %2530 = vmatpush.bf16.msra.mxu0 %v2294
    %2531 = vmatpush.bf16.msra.mxu0 %v2286
    %2532 = vmatpush.bf16.msra.mxu0 %v2278
    %2533 = vmatpush.bf16.msra.mxu0 %v2270
    %2534 = vmatpush.bf16.msra.mxu0 %v2262
    %2535 = vmatpush.bf16.msra.mxu0 %v2254
    %2536 = vmatpush.bf16.msra.mxu0 %v2246
    %2537 = vmatmul.bf16.gmra.mxu0 0
    %v2538 = vpop.f32.mrf.mxu0
    %v2539 = vadd.f32 0.0, %v2538
    %v2540 = vpop.f32.mrf.mxu0
    %v2541 = vadd.f32 0.0, %v2540
    %2542 = vdwg.mxu0
    %2543 = vmatpush.bf16.msra.mxu0 %v2366
    %2544 = vmatpush.bf16.msra.mxu0 %v2358
    %2545 = vmatpush.bf16.msra.mxu0 %v2350
    %2546 = vmatpush.bf16.msra.mxu0 %v2342
    %2547 = vmatpush.bf16.msra.mxu0 %v2334
    %2548 = vmatpush.bf16.msra.mxu0 %v2326
    %2549 = vmatpush.bf16.msra.mxu0 %v2318
    %2550 = vmatpush.bf16.msra.mxu0 %v2310
    %2551 = vmatmul.bf16.gmra.mxu0 0
    %v2552 = vpop.f32.mrf.mxu0
    %v2553 = vadd.f32 %v2539, %v2552
    %v2554 = vpop.f32.mrf.mxu0
    %v2555 = vadd.f32 %v2541, %v2554
    %2556 = vdwg.mxu0
    %2557 = vmatpush.bf16.msra.mxu0 %v2303
    %2558 = vmatpush.bf16.msra.mxu0 %v2295
    %2559 = vmatpush.bf16.msra.mxu0 %v2287
    %2560 = vmatpush.bf16.msra.mxu0 %v2279
    %2561 = vmatpush.bf16.msra.mxu0 %v2271
    %2562 = vmatpush.bf16.msra.mxu0 %v2263
    %2563 = vmatpush.bf16.msra.mxu0 %v2255
    %2564 = vmatpush.bf16.msra.mxu0 %v2247
    %2565 = vmatmul.bf16.gmra.mxu0 0
    %v2566 = vpop.f32.mrf.mxu0
    %v2567 = vadd.f32 0.0, %v2566
    %v2568 = vpop.f32.mrf.mxu0
    %v2569 = vadd.f32 0.0, %v2568
    %2570 = vdwg.mxu0
    %2571 = vmatpush.bf16.msra.mxu0 %v2367
    %2572 = vmatpush.bf16.msra.mxu0 %v2359
    %2573 = vmatpush.bf16.msra.mxu0 %v2351
    %2574 = vmatpush.bf16.msra.mxu0 %v2343
    %2575 = vmatpush.bf16.msra.mxu0 %v2335
    %2576 = vmatpush.bf16.msra.mxu0 %v2327
    %2577 = vmatpush.bf16.msra.mxu0 %v2319
    %2578 = vmatpush.bf16.msra.mxu0 %v2311
    %2579 = vmatmul.bf16.gmra.mxu0 0
    %v2580 = vpop.f32.mrf.mxu0
    %v2581 = vadd.f32 %v2567, %v2580
    %v2582 = vpop.f32.mrf.mxu0
    %v2583 = vadd.f32 %v2569, %v2582
    %2584 = vdwg.mxu0
    %2585 = vmatpush.bf16.msra.mxu0 %v2304
    %2586 = vmatpush.bf16.msra.mxu0 %v2296
    %2587 = vmatpush.bf16.msra.mxu0 %v2288
    %2588 = vmatpush.bf16.msra.mxu0 %v2280
    %2589 = vmatpush.bf16.msra.mxu0 %v2272
    %2590 = vmatpush.bf16.msra.mxu0 %v2264
    %2591 = vmatpush.bf16.msra.mxu0 %v2256
    %2592 = vmatpush.bf16.msra.mxu0 %v2248
    %2593 = vmatmul.bf16.gmra.mxu0 0
    %v2594 = vpop.f32.mrf.mxu0
    %v2595 = vadd.f32 0.0, %v2594
    %v2596 = vpop.f32.mrf.mxu0
    %v2597 = vadd.f32 0.0, %v2596
    %2598 = vdwg.mxu0
    %2599 = vmatpush.bf16.msra.mxu0 %v2368
    %2600 = vmatpush.bf16.msra.mxu0 %v2360
    %2601 = vmatpush.bf16.msra.mxu0 %v2352
    %2602 = vmatpush.bf16.msra.mxu0 %v2344
    %2603 = vmatpush.bf16.msra.mxu0 %v2336
    %2604 = vmatpush.bf16.msra.mxu0 %v2328
    %2605 = vmatpush.bf16.msra.mxu0 %v2320
    %2606 = vmatpush.bf16.msra.mxu0 %v2312
    %2607 = vmatmul.bf16.gmra.mxu0 0
    %v2608 = vpop.f32.mrf.mxu0
    %v2609 = vadd.f32 %v2595, %v2608
    %v2610 = vpop.f32.mrf.mxu0
    %v2611 = vadd.f32 %v2597, %v2610
    %2612 = vdwg.mxu0
    %2613 = vmatpush.bf16.msra.mxu0 %v2305
    %2614 = vmatpush.bf16.msra.mxu0 %v2297
    %2615 = vmatpush.bf16.msra.mxu0 %v2289
    %2616 = vmatpush.bf16.msra.mxu0 %v2281
    %2617 = vmatpush.bf16.msra.mxu0 %v2273
    %2618 = vmatpush.bf16.msra.mxu0 %v2265
    %2619 = vmatpush.bf16.msra.mxu0 %v2257
    %2620 = vmatpush.bf16.msra.mxu0 %v2249
    %2621 = vmatmul.bf16.gmra.mxu0 0
    %v2622 = vpop.f32.mrf.mxu0
    %v2623 = vadd.f32 0.0, %v2622
    %v2624 = vpop.f32.mrf.mxu0
    %v2625 = vadd.f32 0.0, %v2624
    %2626 = vdwg.mxu0
    %2627 = vmatpush.bf16.msra.mxu0 %v2369
    %2628 = vmatpush.bf16.msra.mxu0 %v2361
    %2629 = vmatpush.bf16.msra.mxu0 %v2353
    %2630 = vmatpush.bf16.msra.mxu0 %v2345
    %2631 = vmatpush.bf16.msra.mxu0 %v2337
    %2632 = vmatpush.bf16.msra.mxu0 %v2329
    %2633 = vmatpush.bf16.msra.mxu0 %v2321
    %2634 = vmatpush.bf16.msra.mxu0 %v2313
    %2635 = vmatmul.bf16.gmra.mxu0 0
    %v2636 = vpop.f32.mrf.mxu0
    %v2637 = vadd.f32 %v2623, %v2636
    %v2638 = vpop.f32.mrf.mxu0
    %v2639 = vadd.f32 %v2625, %v2638
    %2640 = vdwg.mxu0
    %2641 = vmatpush.bf16.msra.mxu0 %v2306
    %2642 = vmatpush.bf16.msra.mxu0 %v2298
    %2643 = vmatpush.bf16.msra.mxu0 %v2290
    %2644 = vmatpush.bf16.msra.mxu0 %v2282
    %2645 = vmatpush.bf16.msra.mxu0 %v2274
    %2646 = vmatpush.bf16.msra.mxu0 %v2266
    %2647 = vmatpush.bf16.msra.mxu0 %v2258
    %2648 = vmatpush.bf16.msra.mxu0 %v2250
    %2649 = vmatmul.bf16.gmra.mxu0 0
    %v2650 = vpop.f32.mrf.mxu0
    %v2651 = vadd.f32 0.0, %v2650
    %v2652 = vpop.f32.mrf.mxu0
    %v2653 = vadd.f32 0.0, %v2652
    %2654 = vdwg.mxu0
    %2655 = vmatpush.bf16.msra.mxu0 %v2370
    %2656 = vmatpush.bf16.msra.mxu0 %v2362
    %2657 = vmatpush.bf16.msra.mxu0 %v2354
    %2658 = vmatpush.bf16.msra.mxu0 %v2346
    %2659 = vmatpush.bf16.msra.mxu0 %v2338
    %2660 = vmatpush.bf16.msra.mxu0 %v2330
    %2661 = vmatpush.bf16.msra.mxu0 %v2322
    %2662 = vmatpush.bf16.msra.mxu0 %v2314
    %2663 = vmatmul.bf16.gmra.mxu0 0
    %v2664 = vpop.f32.mrf.mxu0
    %v2665 = vadd.f32 %v2651, %v2664
    %v2666 = vpop.f32.mrf.mxu0
    %v2667 = vadd.f32 %v2653, %v2666
    %2668 = vdwg.mxu0
    %2669 = vmatpush.bf16.msra.mxu0 %v2307
    %2670 = vmatpush.bf16.msra.mxu0 %v2299
    %2671 = vmatpush.bf16.msra.mxu0 %v2291
    %2672 = vmatpush.bf16.msra.mxu0 %v2283
    %2673 = vmatpush.bf16.msra.mxu0 %v2275
    %2674 = vmatpush.bf16.msra.mxu0 %v2267
    %2675 = vmatpush.bf16.msra.mxu0 %v2259
    %2676 = vmatpush.bf16.msra.mxu0 %v2251
    %2677 = vmatmul.bf16.gmra.mxu0 0
    %v2678 = vpop.f32.mrf.mxu0
    %v2679 = vadd.f32 0.0, %v2678
    %v2680 = vpop.f32.mrf.mxu0
    %v2681 = vadd.f32 0.0, %v2680
    %2682 = vdwg.mxu0
    %2683 = vmatpush.bf16.msra.mxu0 %v2371
    %2684 = vmatpush.bf16.msra.mxu0 %v2363
    %2685 = vmatpush.bf16.msra.mxu0 %v2355
    %2686 = vmatpush.bf16.msra.mxu0 %v2347
    %2687 = vmatpush.bf16.msra.mxu0 %v2339
    %2688 = vmatpush.bf16.msra.mxu0 %v2331
    %2689 = vmatpush.bf16.msra.mxu0 %v2323
    %2690 = vmatpush.bf16.msra.mxu0 %v2315
    %2691 = vmatmul.bf16.gmra.mxu0 0
    %v2692 = vpop.f32.mrf.mxu0
    %v2693 = vadd.f32 %v2679, %v2692
    %v2694 = vpop.f32.mrf.mxu0
    %v2695 = vadd.f32 %v2681, %v2694
    %2696 = vdwg.mxu0
    %2697 = vmatpush.bf16.msra.mxu0 %v2308
    %2698 = vmatpush.bf16.msra.mxu0 %v2300
    %2699 = vmatpush.bf16.msra.mxu0 %v2292
    %2700 = vmatpush.bf16.msra.mxu0 %v2284
    %2701 = vmatpush.bf16.msra.mxu0 %v2276
    %2702 = vmatpush.bf16.msra.mxu0 %v2268
    %2703 = vmatpush.bf16.msra.mxu0 %v2260
    %2704 = vmatpush.bf16.msra.mxu0 %v2252
    %2705 = vmatmul.bf16.gmra.mxu0 0
    %v2706 = vpop.f32.mrf.mxu0
    %v2707 = vadd.f32 0.0, %v2706
    %v2708 = vpop.f32.mrf.mxu0
    %v2709 = vadd.f32 0.0, %v2708
    %2710 = vdwg.mxu0
    %2711 = vmatpush.bf16.msra.mxu0 %v2372
    %2712 = vmatpush.bf16.msra.mxu0 %v2364
    %2713 = vmatpush.bf16.msra.mxu0 %v2356
    %2714 = vmatpush.bf16.msra.mxu0 %v2348
    %2715 = vmatpush.bf16.msra.mxu0 %v2340
    %2716 = vmatpush.bf16.msra.mxu0 %v2332
    %2717 = vmatpush.bf16.msra.mxu0 %v2324
    %2718 = vmatpush.bf16.msra.mxu0 %v2316
    %2719 = vmatmul.bf16.gmra.mxu0 0
    %v2720 = vpop.f32.mrf.mxu0
    %v2721 = vadd.f32 %v2707, %v2720
    %v2722 = vpop.f32.mrf.mxu0
    %v2723 = vadd.f32 %v2709, %v2722
    %2724 = vdwg.mxu0
    %v2725 = vadd.f32 %v1845, %v2525
    %v2726 = vadd.f32 %v1846, %v2553
    %v2727 = vadd.f32 %v1847, %v2581
    %v2728 = vadd.f32 %v1848, %v2609
    %v2729 = vadd.f32 %v1849, %v2637
    %v2730 = vadd.f32 %v1850, %v2665
    %v2731 = vadd.f32 %v1851, %v2693
    %v2732 = vadd.f32 %v1852, %v2721
    %v2733 = vadd.f32 %v1853, %v2527
    %v2734 = vadd.f32 %v1854, %v2555
    %v2735 = vadd.f32 %v1855, %v2583
    %v2736 = vadd.f32 %v1856, %v2611
    %v2737 = vadd.f32 %v1857, %v2639
    %v2738 = vadd.f32 %v1858, %v2667
    %v2739 = vadd.f32 %v1859, %v2695
    %v2740 = vadd.f32 %v1860, %v2723
    %v2741 = vmul.f32 %v2725, 0.5
    %v2742 = vmul.f32 %v2726, 0.5
    %v2743 = vmul.f32 %v2727, 0.5
    %v2744 = vmul.f32 %v2728, 0.5
    %v2745 = vmul.f32 %v2729, 0.5
    %v2746 = vmul.f32 %v2730, 0.5
    %v2747 = vmul.f32 %v2733, 0.5
    %v2748 = vmul.f32 %v2734, 0.5
    %v2749 = vmul.f32 %v2735, 0.5
    %v2750 = vmul.f32 %v2736, 0.5
    %v2751 = vmul.f32 %v2737, 0.5
    %v2752 = vmul.f32 %v2738, 0.5
    %v2753 = vtanh.pop %v2741
    %v2754 = vtanh.pop %v2742
    %v2755 = vtanh.pop %v2743
    %v2756 = vtanh.pop %v2744
    %v2757 = vtanh.pop %v2745
    %v2758 = vtanh.pop %v2746
    %v2759 = vtanh.pop %v2747
    %v2760 = vtanh.pop %v2748
    %v2761 = vtanh.pop %v2749
    %v2762 = vtanh.pop %v2750
    %v2763 = vtanh.pop %v2751
    %v2764 = vtanh.pop %v2752
    %v2765 = vmul.f32 %v2753, 0.5
    %v2766 = vmul.f32 %v2754, 0.5
    %v2767 = vmul.f32 %v2755, 0.5
    %v2768 = vmul.f32 %v2756, 0.5
    %v2769 = vmul.f32 %v2757, 0.5
    %v2770 = vmul.f32 %v2758, 0.5
    %v2771 = vmul.f32 %v2759, 0.5
    %v2772 = vmul.f32 %v2760, 0.5
    %v2773 = vmul.f32 %v2761, 0.5
    %v2774 = vmul.f32 %v2762, 0.5
    %v2775 = vmul.f32 %v2763, 0.5
    %v2776 = vmul.f32 %v2764, 0.5
    %v2777 = vadd.f32 %v2765, 0.5
    %v2778 = vadd.f32 %v2766, 0.5
    %v2779 = vadd.f32 %v2767, 0.5
    %v2780 = vadd.f32 %v2768, 0.5
    %v2781 = vadd.f32 %v2769, 0.5
    %v2782 = vadd.f32 %v2770, 0.5
    %v2783 = vadd.f32 %v2771, 0.5
    %v2784 = vadd.f32 %v2772, 0.5
    %v2785 = vadd.f32 %v2773, 0.5
    %v2786 = vadd.f32 %v2774, 0.5
    %v2787 = vadd.f32 %v2775, 0.5
    %v2788 = vadd.f32 %v2776, 0.5
    %v2789 = vtanh.pop %v2731
    %v2790 = vtanh.pop %v2732
    %v2791 = vtanh.pop %v2739
    %v2792 = vtanh.pop %v2740
    %v2793 = vmul.f32 %v2779, 0.0
    %v2794 = vmul.f32 %v2780, 0.0
    %v2795 = vmul.f32 %v2785, 0.0
    %v2796 = vmul.f32 %v2786, 0.0
    %v2797 = vmul.f32 %v2777, %v2789
    %v2798 = vmul.f32 %v2778, %v2790
    %v2799 = vmul.f32 %v2783, %v2791
    %v2800 = vmul.f32 %v2784, %v2792
    %v2801 = vadd.f32 %v2793, %v2797
    %v2802 = vadd.f32 %v2794, %v2798
    %v2803 = vadd.f32 %v2795, %v2799
    %v2804 = vadd.f32 %v2796, %v2800
    %v2805 = vtanh.pop %v2801
    %v2806 = vtanh.pop %v2802
    %v2807 = vtanh.pop %v2803
    %v2808 = vtanh.pop %v2804
    %v2809 = vmul.f32 %v2781, %v2805
    %v2810 = vmul.f32 %v2782, %v2806
    %v2811 = vmul.f32 %v2787, %v2807
    %v2812 = vmul.f32 %v2788, %v2808
    %v2813 = vpack.c.bf16 %v2811, %v2809
    %v2814 = vpack.c.bf16 %v2812, %v2810
    %v2943 = vunpack.c.l.b16 %v191
    %v2944 = vunpack.c.h.b16 %v191
    %v2945 = vunpack.c.l.b16 %v192
    %v2946 = vunpack.c.h.b16 %v192
    %v2947 = vunpack.c.l.b16 %v193
    %v2948 = vunpack.c.h.b16 %v193
    %v2949 = vunpack.c.l.b16 %v194
    %v2950 = vunpack.c.h.b16 %v194
    %v2951 = vunpack.c.l.b16 %v195
    %v2952 = vunpack.c.h.b16 %v195
    %v2953 = vunpack.c.l.b16 %v196
    %v2954 = vunpack.c.h.b16 %v196
    %v2955 = vunpack.c.l.b16 %v197
    %v2956 = vunpack.c.h.b16 %v197
    %v2957 = vunpack.c.l.b16 %v198
    %v2958 = vunpack.c.h.b16 %v198
    %v2959 = vunpack.c.l.b16 %v199
    %v2960 = vunpack.c.h.b16 %v199
    %v2961 = vunpack.c.l.b16 %v200
    %v2962 = vunpack.c.h.b16 %v200
    %v2963 = vunpack.c.l.b16 %v201
    %v2964 = vunpack.c.h.b16 %v201
    %v2965 = vunpack.c.l.b16 %v202
    %v2966 = vunpack.c.h.b16 %v202
    %v2967 = vunpack.c.l.b16 %v203
    %v2968 = vunpack.c.h.b16 %v203
    %v2969 = vunpack.c.l.b16 %v204
    %v2970 = vunpack.c.h.b16 %v204
    %v2971 = vunpack.c.l.b16 %v205
    %v2972 = vunpack.c.h.b16 %v205
    %v2973 = vunpack.c.l.b16 %v206
    %v2974 = vunpack.c.h.b16 %v206
    %v2975 = vunpack.c.l.b16 %v207
    %v2976 = vunpack.c.h.b16 %v207
    %v2977 = vunpack.c.l.b16 %v208
    %v2978 = vunpack.c.h.b16 %v208
    %v2979 = vunpack.c.l.b16 %v209
    %v2980 = vunpack.c.h.b16 %v209
    %v2981 = vunpack.c.l.b16 %v210
    %v2982 = vunpack.c.h.b16 %v210
    %v2983 = vunpack.c.l.b16 %v211
    %v2984 = vunpack.c.h.b16 %v211
    %v2985 = vunpack.c.l.b16 %v212
    %v2986 = vunpack.c.h.b16 %v212
    %v2987 = vunpack.c.l.b16 %v213
    %v2988 = vunpack.c.h.b16 %v213
    %v2989 = vunpack.c.l.b16 %v214
    %v2990 = vunpack.c.h.b16 %v214
    %v2991 = vunpack.c.l.b16 %v215
    %v2992 = vunpack.c.h.b16 %v215
    %v2993 = vunpack.c.l.b16 %v216
    %v2994 = vunpack.c.h.b16 %v216
    %v2995 = vunpack.c.l.b16 %v217
    %v2996 = vunpack.c.h.b16 %v217
    %v2997 = vunpack.c.l.b16 %v218
    %v2998 = vunpack.c.h.b16 %v218
    %v2999 = vunpack.c.l.b16 %v219
    %v3000 = vunpack.c.h.b16 %v219
    %v3001 = vunpack.c.l.b16 %v220
    %v3002 = vunpack.c.h.b16 %v220
    %v3003 = vunpack.c.l.b16 %v221
    %v3004 = vunpack.c.h.b16 %v221
    %v3005 = vunpack.c.l.b16 %v222
    %v3006 = vunpack.c.h.b16 %v222
    %v3007 = vunpack.c.l.b16 %v223
    %v3008 = vunpack.c.h.b16 %v223
    %v3009 = vunpack.c.l.b16 %v224
    %v3010 = vunpack.c.h.b16 %v224
    %v3011 = vunpack.c.l.b16 %v225
    %v3012 = vunpack.c.h.b16 %v225
    %v3013 = vunpack.c.l.b16 %v226
    %v3014 = vunpack.c.h.b16 %v226
    %v3015 = vunpack.c.l.b16 %v227
    %v3016 = vunpack.c.h.b16 %v227
    %v3017 = vunpack.c.l.b16 %v228
    %v3018 = vunpack.c.h.b16 %v228
    %v3019 = vunpack.c.l.b16 %v229
    %v3020 = vunpack.c.h.b16 %v229
    %v3021 = vunpack.c.l.b16 %v230
    %v3022 = vunpack.c.h.b16 %v230
    %v3023 = vunpack.c.l.b16 %v231
    %v3024 = vunpack.c.h.b16 %v231
    %v3025 = vunpack.c.l.b16 %v232
    %v3026 = vunpack.c.h.b16 %v232
    %v3027 = vunpack.c.l.b16 %v233
    %v3028 = vunpack.c.h.b16 %v233
    %v3029 = vunpack.c.l.b16 %v234
    %v3030 = vunpack.c.h.b16 %v234
    %v3031 = vunpack.c.l.b16 %v235
    %v3032 = vunpack.c.h.b16 %v235
    %v3033 = vunpack.c.l.b16 %v236
    %v3034 = vunpack.c.h.b16 %v236
    %v3035 = vunpack.c.l.b16 %v237
    %v3036 = vunpack.c.h.b16 %v237
    %v3037 = vunpack.c.l.b16 %v238
    %v3038 = vunpack.c.h.b16 %v238
    %v3039 = vunpack.c.l.b16 %v239
    %v3040 = vunpack.c.h.b16 %v239
    %v3041 = vunpack.c.l.b16 %v240
    %v3042 = vunpack.c.h.b16 %v240
    %v3043 = vunpack.c.l.b16 %v241
    %v3044 = vunpack.c.h.b16 %v241
    %v3045 = vunpack.c.l.b16 %v242
    %v3046 = vunpack.c.h.b16 %v242
    %v3047 = vunpack.c.l.b16 %v243
    %v3048 = vunpack.c.h.b16 %v243
    %v3049 = vunpack.c.l.b16 %v244
    %v3050 = vunpack.c.h.b16 %v244
    %v3051 = vunpack.c.l.b16 %v245
    %v3052 = vunpack.c.h.b16 %v245
    %v3053 = vunpack.c.l.b16 %v246
    %v3054 = vunpack.c.h.b16 %v246
    %v3055 = vunpack.c.l.b16 %v247
    %v3056 = vunpack.c.h.b16 %v247
    %v3057 = vunpack.c.l.b16 %v248
    %v3058 = vunpack.c.h.b16 %v248
    %v3059 = vunpack.c.l.b16 %v249
    %v3060 = vunpack.c.h.b16 %v249
    %v3061 = vunpack.c.l.b16 %v250
    %v3062 = vunpack.c.h.b16 %v250
    %v3063 = vunpack.c.l.b16 %v251
    %v3064 = vunpack.c.h.b16 %v251
    %v3065 = vunpack.c.l.b16 %v252
    %v3066 = vunpack.c.h.b16 %v252
    %v3067 = vunpack.c.l.b16 %v253
    %v3068 = vunpack.c.h.b16 %v253
    %v3069 = vunpack.c.l.b16 %v254
    %v3070 = vunpack.c.h.b16 %v254
    %v3071 = vunpack.c.l.b16 %v255
    %v3072 = vunpack.c.h.b16 %v255
    %v3073 = vunpack.c.l.b16 %v256
    %v3074 = vunpack.c.h.b16 %v256
    %v3075 = vunpack.c.l.b16 %v257
    %v3076 = vunpack.c.h.b16 %v257
    %v3077 = vunpack.c.l.b16 %v258
    %v3078 = vunpack.c.h.b16 %v258
    %v3079 = vunpack.c.l.b16 %v259
    %v3080 = vunpack.c.h.b16 %v259
    %v3081 = vunpack.c.l.b16 %v260
    %v3082 = vunpack.c.h.b16 %v260
    %v3083 = vunpack.c.l.b16 %v261
    %v3084 = vunpack.c.h.b16 %v261
    %v3085 = vunpack.c.l.b16 %v262
    %v3086 = vunpack.c.h.b16 %v262
    %v3087 = vunpack.c.l.b16 %v263
    %v3088 = vunpack.c.h.b16 %v263
    %v3089 = vunpack.c.l.b16 %v264
    %v3090 = vunpack.c.h.b16 %v264
    %v3091 = vunpack.c.l.b16 %v265
    %v3092 = vunpack.c.h.b16 %v265
    %v3093 = vunpack.c.l.b16 %v266
    %v3094 = vunpack.c.h.b16 %v266
    %v3095 = vunpack.c.l.b16 %v267
    %v3096 = vunpack.c.h.b16 %v267
    %v3097 = vunpack.c.l.b16 %v268
    %v3098 = vunpack.c.h.b16 %v268
    %v3099 = vunpack.c.l.b16 %v269
    %v3100 = vunpack.c.h.b16 %v269
    %v3101 = vunpack.c.l.b16 %v270
    %v3102 = vunpack.c.h.b16 %v270
    %v3103 = vunpack.c.l.b16 %v271
    %v3104 = vunpack.c.h.b16 %v271
    %v3105 = vunpack.c.l.b16 %v272
    %v3106 = vunpack.c.h.b16 %v272
    %v3107 = vunpack.c.l.b16 %v273
    %v3108 = vunpack.c.h.b16 %v273
    %v3109 = vunpack.c.l.b16 %v274
    %v3110 = vunpack.c.h.b16 %v274
    %v3111 = vunpack.c.l.b16 %v275
    %v3112 = vunpack.c.h.b16 %v275
    %v3113 = vunpack.c.l.b16 %v276
    %v3114 = vunpack.c.h.b16 %v276
    %v3115 = vunpack.c.l.b16 %v277
    %v3116 = vunpack.c.h.b16 %v277
    %v3117 = vunpack.c.l.b16 %v278
    %v3118 = vunpack.c.h.b16 %v278
    %v3119 = vunpack.c.l.b16 %v279
    %v3120 = vunpack.c.h.b16 %v279
    %v3121 = vunpack.c.l.b16 %v280
    %v3122 = vunpack.c.h.b16 %v280
    %v3123 = vunpack.c.l.b16 %v281
    %v3124 = vunpack.c.h.b16 %v281
    %v3125 = vunpack.c.l.b16 %v282
    %v3126 = vunpack.c.h.b16 %v282
    %v3127 = vunpack.c.l.b16 %v283
    %v3128 = vunpack.c.h.b16 %v283
    %v3129 = vunpack.c.l.b16 %v284
    %v3130 = vunpack.c.h.b16 %v284
    %v3131 = vunpack.c.l.b16 %v285
    %v3132 = vunpack.c.h.b16 %v285
    %v3133 = vunpack.c.l.b16 %v286
    %v3134 = vunpack.c.h.b16 %v286
    %v3135 = vunpack.c.l.b16 %v287
    %v3136 = vunpack.c.h.b16 %v287
    %v3137 = vunpack.c.l.b16 %v288
    %v3138 = vunpack.c.h.b16 %v288
    %v3139 = vunpack.c.l.b16 %v289
    %v3140 = vunpack.c.h.b16 %v289
    %v3141 = vunpack.c.l.b16 %v290
    %v3142 = vunpack.c.h.b16 %v290
    %v3143 = vunpack.c.l.b16 %v291
    %v3144 = vunpack.c.h.b16 %v291
    %v3145 = vunpack.c.l.b16 %v292
    %v3146 = vunpack.c.h.b16 %v292
    %v3147 = vunpack.c.l.b16 %v293
    %v3148 = vunpack.c.h.b16 %v293
    %v3149 = vunpack.c.l.b16 %v294
    %v3150 = vunpack.c.h.b16 %v294
    %v3151 = vunpack.c.l.b16 %v295
    %v3152 = vunpack.c.h.b16 %v295
    %v3153 = vunpack.c.l.b16 %v296
    %v3154 = vunpack.c.h.b16 %v296
    %v3155 = vunpack.c.l.b16 %v297
    %v3156 = vunpack.c.h.b16 %v297
    %v3157 = vunpack.c.l.b16 %v298
    %v3158 = vunpack.c.h.b16 %v298
    %v3159 = vunpack.c.l.b16 %v299
    %v3160 = vunpack.c.h.b16 %v299
    %v3161 = vunpack.c.l.b16 %v300
    %v3162 = vunpack.c.h.b16 %v300
    %v3163 = vunpack.c.l.b16 %v301
    %v3164 = vunpack.c.h.b16 %v301
    %v3165 = vunpack.c.l.b16 %v302
    %v3166 = vunpack.c.h.b16 %v302
    %v3167 = vunpack.c.l.b16 %v303
    %v3168 = vunpack.c.h.b16 %v303
    %v3169 = vunpack.c.l.b16 %v304
    %v3170 = vunpack.c.h.b16 %v304
    %v3171 = vunpack.c.l.b16 %v305
    %v3172 = vunpack.c.h.b16 %v305
    %v3173 = vunpack.c.l.b16 %v306
    %v3174 = vunpack.c.h.b16 %v306
    %v3175 = vunpack.c.l.b16 %v307
    %v3176 = vunpack.c.h.b16 %v307
    %v3177 = vunpack.c.l.b16 %v308
    %v3178 = vunpack.c.h.b16 %v308
    %v3179 = vunpack.c.l.b16 %v309
    %v3180 = vunpack.c.h.b16 %v309
    %v3181 = vunpack.c.l.b16 %v310
    %v3182 = vunpack.c.h.b16 %v310
    %v3183 = vunpack.c.l.b16 %v311
    %v3184 = vunpack.c.h.b16 %v311
    %v3185 = vunpack.c.l.b16 %v312
    %v3186 = vunpack.c.h.b16 %v312
    %v3187 = vunpack.c.l.b16 %v313
    %v3188 = vunpack.c.h.b16 %v313
    %v3189 = vunpack.c.l.b16 %v314
    %v3190 = vunpack.c.h.b16 %v314
    %v3191 = vunpack.c.l.b16 %v315
    %v3192 = vunpack.c.h.b16 %v315
    %v3193 = vunpack.c.l.b16 %v316
    %v3194 = vunpack.c.h.b16 %v316
    %v3195 = vunpack.c.l.b16 %v317
    %v3196 = vunpack.c.h.b16 %v317
    %v3197 = vunpack.c.l.b16 %v318
    %v3198 = vunpack.c.h.b16 %v318
    %v3199 = vpack.c.b16 %v2951, %v2943
    %v3200 = vpack.c.b16 %v2952, %v2944
    %v3201 = vpack.c.b16 %v2953, %v2945
    %v3202 = vpack.c.b16 %v2954, %v2946
    %v3203 = vpack.c.b16 %v2955, %v2947
    %v3204 = vpack.c.b16 %v2956, %v2948
    %v3205 = vpack.c.b16 %v2957, %v2949
    %v3206 = vpack.c.b16 %v2958, %v2950
    %v3207 = vpack.c.b16 %v2967, %v2959
    %v3208 = vpack.c.b16 %v2968, %v2960
    %v3209 = vpack.c.b16 %v2969, %v2961
    %v3210 = vpack.c.b16 %v2970, %v2962
    %v3211 = vpack.c.b16 %v2971, %v2963
    %v3212 = vpack.c.b16 %v2972, %v2964
    %v3213 = vpack.c.b16 %v2973, %v2965
    %v3214 = vpack.c.b16 %v2974, %v2966
    %v3215 = vpack.c.b16 %v2983, %v2975
    %v3216 = vpack.c.b16 %v2984, %v2976
    %v3217 = vpack.c.b16 %v2985, %v2977
    %v3218 = vpack.c.b16 %v2986, %v2978
    %v3219 = vpack.c.b16 %v2987, %v2979
    %v3220 = vpack.c.b16 %v2988, %v2980
    %v3221 = vpack.c.b16 %v2989, %v2981
    %v3222 = vpack.c.b16 %v2990, %v2982
    %v3223 = vpack.c.b16 %v2999, %v2991
    %v3224 = vpack.c.b16 %v3000, %v2992
    %v3225 = vpack.c.b16 %v3001, %v2993
    %v3226 = vpack.c.b16 %v3002, %v2994
    %v3227 = vpack.c.b16 %v3003, %v2995
    %v3228 = vpack.c.b16 %v3004, %v2996
    %v3229 = vpack.c.b16 %v3005, %v2997
    %v3230 = vpack.c.b16 %v3006, %v2998
    %v3231 = vpack.c.b16 %v3015, %v3007
    %v3232 = vpack.c.b16 %v3016, %v3008
    %v3233 = vpack.c.b16 %v3017, %v3009
    %v3234 = vpack.c.b16 %v3018, %v3010
    %v3235 = vpack.c.b16 %v3019, %v3011
    %v3236 = vpack.c.b16 %v3020, %v3012
    %v3237 = vpack.c.b16 %v3021, %v3013
    %v3238 = vpack.c.b16 %v3022, %v3014
    %v3239 = vpack.c.b16 %v3031, %v3023
    %v3240 = vpack.c.b16 %v3032, %v3024
    %v3241 = vpack.c.b16 %v3033, %v3025
    %v3242 = vpack.c.b16 %v3034, %v3026
    %v3243 = vpack.c.b16 %v3035, %v3027
    %v3244 = vpack.c.b16 %v3036, %v3028
    %v3245 = vpack.c.b16 %v3037, %v3029
    %v3246 = vpack.c.b16 %v3038, %v3030
    %v3247 = vpack.c.b16 %v3047, %v3039
    %v3248 = vpack.c.b16 %v3048, %v3040
    %v3249 = vpack.c.b16 %v3049, %v3041
    %v3250 = vpack.c.b16 %v3050, %v3042
    %v3251 = vpack.c.b16 %v3051, %v3043
    %v3252 = vpack.c.b16 %v3052, %v3044
    %v3253 = vpack.c.b16 %v3053, %v3045
    %v3254 = vpack.c.b16 %v3054, %v3046
    %v3255 = vpack.c.b16 %v3063, %v3055
    %v3256 = vpack.c.b16 %v3064, %v3056
    %v3257 = vpack.c.b16 %v3065, %v3057
    %v3258 = vpack.c.b16 %v3066, %v3058
    %v3259 = vpack.c.b16 %v3067, %v3059
    %v3260 = vpack.c.b16 %v3068, %v3060
    %v3261 = vpack.c.b16 %v3069, %v3061
    %v3262 = vpack.c.b16 %v3070, %v3062
    %v3263 = vpack.c.b16 %v3079, %v3071
    %v3264 = vpack.c.b16 %v3080, %v3072
    %v3265 = vpack.c.b16 %v3081, %v3073
    %v3266 = vpack.c.b16 %v3082, %v3074
    %v3267 = vpack.c.b16 %v3083, %v3075
    %v3268 = vpack.c.b16 %v3084, %v3076
    %v3269 = vpack.c.b16 %v3085, %v3077
    %v3270 = vpack.c.b16 %v3086, %v3078
    %v3271 = vpack.c.b16 %v3095, %v3087
    %v3272 = vpack.c.b16 %v3096, %v3088
    %v3273 = vpack.c.b16 %v3097, %v3089
    %v3274 = vpack.c.b16 %v3098, %v3090
    %v3275 = vpack.c.b16 %v3099, %v3091
    %v3276 = vpack.c.b16 %v3100, %v3092
    %v3277 = vpack.c.b16 %v3101, %v3093
    %v3278 = vpack.c.b16 %v3102, %v3094
    %v3279 = vpack.c.b16 %v3111, %v3103
    %v3280 = vpack.c.b16 %v3112, %v3104
    %v3281 = vpack.c.b16 %v3113, %v3105
    %v3282 = vpack.c.b16 %v3114, %v3106
    %v3283 = vpack.c.b16 %v3115, %v3107
    %v3284 = vpack.c.b16 %v3116, %v3108
    %v3285 = vpack.c.b16 %v3117, %v3109
    %v3286 = vpack.c.b16 %v3118, %v3110
    %v3287 = vpack.c.b16 %v3127, %v3119
    %v3288 = vpack.c.b16 %v3128, %v3120
    %v3289 = vpack.c.b16 %v3129, %v3121
    %v3290 = vpack.c.b16 %v3130, %v3122
    %v3291 = vpack.c.b16 %v3131, %v3123
    %v3292 = vpack.c.b16 %v3132, %v3124
    %v3293 = vpack.c.b16 %v3133, %v3125
    %v3294 = vpack.c.b16 %v3134, %v3126
    %v3295 = vpack.c.b16 %v3143, %v3135
    %v3296 = vpack.c.b16 %v3144, %v3136
    %v3297 = vpack.c.b16 %v3145, %v3137
    %v3298 = vpack.c.b16 %v3146, %v3138
    %v3299 = vpack.c.b16 %v3147, %v3139
    %v3300 = vpack.c.b16 %v3148, %v3140
    %v3301 = vpack.c.b16 %v3149, %v3141
    %v3302 = vpack.c.b16 %v3150, %v3142
    %v3303 = vpack.c.b16 %v3159, %v3151
    %v3304 = vpack.c.b16 %v3160, %v3152
    %v3305 = vpack.c.b16 %v3161, %v3153
    %v3306 = vpack.c.b16 %v3162, %v3154
    %v3307 = vpack.c.b16 %v3163, %v3155
    %v3308 = vpack.c.b16 %v3164, %v3156
    %v3309 = vpack.c.b16 %v3165, %v3157
    %v3310 = vpack.c.b16 %v3166, %v3158
    %v3311 = vpack.c.b16 %v3175, %v3167
    %v3312 = vpack.c.b16 %v3176, %v3168
    %v3313 = vpack.c.b16 %v3177, %v3169
    %v3314 = vpack.c.b16 %v3178, %v3170
    %v3315 = vpack.c.b16 %v3179, %v3171
    %v3316 = vpack.c.b16 %v3180, %v3172
    %v3317 = vpack.c.b16 %v3181, %v3173
    %v3318 = vpack.c.b16 %v3182, %v3174
    %v3319 = vpack.c.b16 %v3191, %v3183
    %v3320 = vpack.c.b16 %v3192, %v3184
    %v3321 = vpack.c.b16 %v3193, %v3185
    %v3322 = vpack.c.b16 %v3194, %v3186
    %v3323 = vpack.c.b16 %v3195, %v3187
    %v3324 = vpack.c.b16 %v3196, %v3188
    %v3325 = vpack.c.b16 %v3197, %v3189
    %v3326 = vpack.c.b16 %v3198, %v3190
    %3455 = vmatpush.bf16.msra.mxu0 %v3255
    %3456 = vmatpush.bf16.msra.mxu0 %v3247
    %3457 = vmatpush.bf16.msra.mxu0 %v3239
    %3458 = vmatpush.bf16.msra.mxu0 %v3231
    %3459 = vmatpush.bf16.msra.mxu0 %v3223
    %3460 = vmatpush.bf16.msra.mxu0 %v3215
    %3461 = vmatpush.bf16.msra.mxu0 %v3207
    %3462 = vmatpush.bf16.msra.mxu0 %v3199
    %3463 = vmatmul.bf16.gmra.mxu0 %v2813
    %v3464 = vpop.f32.mrf.mxu0
    %v3465 = vadd.f32 %v1645, %v3464
    %v3466 = vpop.f32.mrf.mxu0
    %v3467 = vadd.f32 %v1647, %v3466
    %3468 = vdwg.mxu0
    %3469 = vmatpush.bf16.msra.mxu0 %v3319
    %3470 = vmatpush.bf16.msra.mxu0 %v3311
    %3471 = vmatpush.bf16.msra.mxu0 %v3303
    %3472 = vmatpush.bf16.msra.mxu0 %v3295
    %3473 = vmatpush.bf16.msra.mxu0 %v3287
    %3474 = vmatpush.bf16.msra.mxu0 %v3279
    %3475 = vmatpush.bf16.msra.mxu0 %v3271
    %3476 = vmatpush.bf16.msra.mxu0 %v3263
    %3477 = vmatmul.bf16.gmra.mxu0 %v2814
    %v3478 = vpop.f32.mrf.mxu0
    %v3479 = vadd.f32 %v3465, %v3478
    %v3480 = vpop.f32.mrf.mxu0
    %v3481 = vadd.f32 %v3467, %v3480
    %3482 = vdwg.mxu0
    %3483 = vmatpush.bf16.msra.mxu0 %v3256
    %3484 = vmatpush.bf16.msra.mxu0 %v3248
    %3485 = vmatpush.bf16.msra.mxu0 %v3240
    %3486 = vmatpush.bf16.msra.mxu0 %v3232
    %3487 = vmatpush.bf16.msra.mxu0 %v3224
    %3488 = vmatpush.bf16.msra.mxu0 %v3216
    %3489 = vmatpush.bf16.msra.mxu0 %v3208
    %3490 = vmatpush.bf16.msra.mxu0 %v3200
    %3491 = vmatmul.bf16.gmra.mxu0 %v2813
    %v3492 = vpop.f32.mrf.mxu0
    %v3493 = vadd.f32 %v1673, %v3492
    %v3494 = vpop.f32.mrf.mxu0
    %v3495 = vadd.f32 %v1675, %v3494
    %3496 = vdwg.mxu0
    %3497 = vmatpush.bf16.msra.mxu0 %v3320
    %3498 = vmatpush.bf16.msra.mxu0 %v3312
    %3499 = vmatpush.bf16.msra.mxu0 %v3304
    %3500 = vmatpush.bf16.msra.mxu0 %v3296
    %3501 = vmatpush.bf16.msra.mxu0 %v3288
    %3502 = vmatpush.bf16.msra.mxu0 %v3280
    %3503 = vmatpush.bf16.msra.mxu0 %v3272
    %3504 = vmatpush.bf16.msra.mxu0 %v3264
    %3505 = vmatmul.bf16.gmra.mxu0 %v2814
    %v3506 = vpop.f32.mrf.mxu0
    %v3507 = vadd.f32 %v3493, %v3506
    %v3508 = vpop.f32.mrf.mxu0
    %v3509 = vadd.f32 %v3495, %v3508
    %3510 = vdwg.mxu0
    %3511 = vmatpush.bf16.msra.mxu0 %v3257
    %3512 = vmatpush.bf16.msra.mxu0 %v3249
    %3513 = vmatpush.bf16.msra.mxu0 %v3241
    %3514 = vmatpush.bf16.msra.mxu0 %v3233
    %3515 = vmatpush.bf16.msra.mxu0 %v3225
    %3516 = vmatpush.bf16.msra.mxu0 %v3217
    %3517 = vmatpush.bf16.msra.mxu0 %v3209
    %3518 = vmatpush.bf16.msra.mxu0 %v3201
    %3519 = vmatmul.bf16.gmra.mxu0 %v2813
    %v3520 = vpop.f32.mrf.mxu0
    %v3521 = vadd.f32 %v1701, %v3520
    %v3522 = vpop.f32.mrf.mxu0
    %v3523 = vadd.f32 %v1703, %v3522
    %3524 = vdwg.mxu0
    %3525 = vmatpush.bf16.msra.mxu0 %v3321
    %3526 = vmatpush.bf16.msra.mxu0 %v3313
    %3527 = vmatpush.bf16.msra.mxu0 %v3305
    %3528 = vmatpush.bf16.msra.mxu0 %v3297
    %3529 = vmatpush.bf16.msra.mxu0 %v3289
    %3530 = vmatpush.bf16.msra.mxu0 %v3281
    %3531 = vmatpush.bf16.msra.mxu0 %v3273
    %3532 = vmatpush.bf16.msra.mxu0 %v3265
    %3533 = vmatmul.bf16.gmra.mxu0 %v2814
    %v3534 = vpop.f32.mrf.mxu0
    %v3535 = vadd.f32 %v3521, %v3534
    %v3536 = vpop.f32.mrf.mxu0
    %v3537 = vadd.f32 %v3523, %v3536
    %3538 = vdwg.mxu0
    %3539 = vmatpush.bf16.msra.mxu0 %v3258
    %3540 = vmatpush.bf16.msra.mxu0 %v3250
    %3541 = vmatpush.bf16.msra.mxu0 %v3242
    %3542 = vmatpush.bf16.msra.mxu0 %v3234
    %3543 = vmatpush.bf16.msra.mxu0 %v3226
    %3544 = vmatpush.bf16.msra.mxu0 %v3218
    %3545 = vmatpush.bf16.msra.mxu0 %v3210
    %3546 = vmatpush.bf16.msra.mxu0 %v3202
    %3547 = vmatmul.bf16.gmra.mxu0 %v2813
    %v3548 = vpop.f32.mrf.mxu0
    %v3549 = vadd.f32 %v1729, %v3548
    %v3550 = vpop.f32.mrf.mxu0
    %v3551 = vadd.f32 %v1731, %v3550
    %3552 = vdwg.mxu0
    %3553 = vmatpush.bf16.msra.mxu0 %v3322
    %3554 = vmatpush.bf16.msra.mxu0 %v3314
    %3555 = vmatpush.bf16.msra.mxu0 %v3306
    %3556 = vmatpush.bf16.msra.mxu0 %v3298
    %3557 = vmatpush.bf16.msra.mxu0 %v3290
    %3558 = vmatpush.bf16.msra.mxu0 %v3282
    %3559 = vmatpush.bf16.msra.mxu0 %v3274
    %3560 = vmatpush.bf16.msra.mxu0 %v3266
    %3561 = vmatmul.bf16.gmra.mxu0 %v2814
    %v3562 = vpop.f32.mrf.mxu0
    %v3563 = vadd.f32 %v3549, %v3562
    %v3564 = vpop.f32.mrf.mxu0
    %v3565 = vadd.f32 %v3551, %v3564
    %3566 = vdwg.mxu0
    %3567 = vmatpush.bf16.msra.mxu0 %v3259
    %3568 = vmatpush.bf16.msra.mxu0 %v3251
    %3569 = vmatpush.bf16.msra.mxu0 %v3243
    %3570 = vmatpush.bf16.msra.mxu0 %v3235
    %3571 = vmatpush.bf16.msra.mxu0 %v3227
    %3572 = vmatpush.bf16.msra.mxu0 %v3219
    %3573 = vmatpush.bf16.msra.mxu0 %v3211
    %3574 = vmatpush.bf16.msra.mxu0 %v3203
    %3575 = vmatmul.bf16.gmra.mxu0 %v2813
    %v3576 = vpop.f32.mrf.mxu0
    %v3577 = vadd.f32 %v1757, %v3576
    %v3578 = vpop.f32.mrf.mxu0
    %v3579 = vadd.f32 %v1759, %v3578
    %3580 = vdwg.mxu0
    %3581 = vmatpush.bf16.msra.mxu0 %v3323
    %3582 = vmatpush.bf16.msra.mxu0 %v3315
    %3583 = vmatpush.bf16.msra.mxu0 %v3307
    %3584 = vmatpush.bf16.msra.mxu0 %v3299
    %3585 = vmatpush.bf16.msra.mxu0 %v3291
    %3586 = vmatpush.bf16.msra.mxu0 %v3283
    %3587 = vmatpush.bf16.msra.mxu0 %v3275
    %3588 = vmatpush.bf16.msra.mxu0 %v3267
    %3589 = vmatmul.bf16.gmra.mxu0 %v2814
    %v3590 = vpop.f32.mrf.mxu0
    %v3591 = vadd.f32 %v3577, %v3590
    %v3592 = vpop.f32.mrf.mxu0
    %v3593 = vadd.f32 %v3579, %v3592
    %3594 = vdwg.mxu0
    %3595 = vmatpush.bf16.msra.mxu0 %v3260
    %3596 = vmatpush.bf16.msra.mxu0 %v3252
    %3597 = vmatpush.bf16.msra.mxu0 %v3244
    %3598 = vmatpush.bf16.msra.mxu0 %v3236
    %3599 = vmatpush.bf16.msra.mxu0 %v3228
    %3600 = vmatpush.bf16.msra.mxu0 %v3220
    %3601 = vmatpush.bf16.msra.mxu0 %v3212
    %3602 = vmatpush.bf16.msra.mxu0 %v3204
    %3603 = vmatmul.bf16.gmra.mxu0 %v2813
    %v3604 = vpop.f32.mrf.mxu0
    %v3605 = vadd.f32 %v1785, %v3604
    %v3606 = vpop.f32.mrf.mxu0
    %v3607 = vadd.f32 %v1787, %v3606
    %3608 = vdwg.mxu0
    %3609 = vmatpush.bf16.msra.mxu0 %v3324
    %3610 = vmatpush.bf16.msra.mxu0 %v3316
    %3611 = vmatpush.bf16.msra.mxu0 %v3308
    %3612 = vmatpush.bf16.msra.mxu0 %v3300
    %3613 = vmatpush.bf16.msra.mxu0 %v3292
    %3614 = vmatpush.bf16.msra.mxu0 %v3284
    %3615 = vmatpush.bf16.msra.mxu0 %v3276
    %3616 = vmatpush.bf16.msra.mxu0 %v3268
    %3617 = vmatmul.bf16.gmra.mxu0 %v2814
    %v3618 = vpop.f32.mrf.mxu0
    %v3619 = vadd.f32 %v3605, %v3618
    %v3620 = vpop.f32.mrf.mxu0
    %v3621 = vadd.f32 %v3607, %v3620
    %3622 = vdwg.mxu0
    %3623 = vmatpush.bf16.msra.mxu0 %v3261
    %3624 = vmatpush.bf16.msra.mxu0 %v3253
    %3625 = vmatpush.bf16.msra.mxu0 %v3245
    %3626 = vmatpush.bf16.msra.mxu0 %v3237
    %3627 = vmatpush.bf16.msra.mxu0 %v3229
    %3628 = vmatpush.bf16.msra.mxu0 %v3221
    %3629 = vmatpush.bf16.msra.mxu0 %v3213
    %3630 = vmatpush.bf16.msra.mxu0 %v3205
    %3631 = vmatmul.bf16.gmra.mxu0 %v2813
    %v3632 = vpop.f32.mrf.mxu0
    %v3633 = vadd.f32 %v1813, %v3632
    %v3634 = vpop.f32.mrf.mxu0
    %v3635 = vadd.f32 %v1815, %v3634
    %3636 = vdwg.mxu0
    %3637 = vmatpush.bf16.msra.mxu0 %v3325
    %3638 = vmatpush.bf16.msra.mxu0 %v3317
    %3639 = vmatpush.bf16.msra.mxu0 %v3309
    %3640 = vmatpush.bf16.msra.mxu0 %v3301
    %3641 = vmatpush.bf16.msra.mxu0 %v3293
    %3642 = vmatpush.bf16.msra.mxu0 %v3285
    %3643 = vmatpush.bf16.msra.mxu0 %v3277
    %3644 = vmatpush.bf16.msra.mxu0 %v3269
    %3645 = vmatmul.bf16.gmra.mxu0 %v2814
    %v3646 = vpop.f32.mrf.mxu0
    %v3647 = vadd.f32 %v3633, %v3646
    %v3648 = vpop.f32.mrf.mxu0
    %v3649 = vadd.f32 %v3635, %v3648
    %3650 = vdwg.mxu0
    %3651 = vmatpush.bf16.msra.mxu0 %v3262
    %3652 = vmatpush.bf16.msra.mxu0 %v3254
    %3653 = vmatpush.bf16.msra.mxu0 %v3246
    %3654 = vmatpush.bf16.msra.mxu0 %v3238
    %3655 = vmatpush.bf16.msra.mxu0 %v3230
    %3656 = vmatpush.bf16.msra.mxu0 %v3222
    %3657 = vmatpush.bf16.msra.mxu0 %v3214
    %3658 = vmatpush.bf16.msra.mxu0 %v3206
    %3659 = vmatmul.bf16.gmra.mxu0 %v2813
    %v3660 = vpop.f32.mrf.mxu0
    %v3661 = vadd.f32 %v1841, %v3660
    %v3662 = vpop.f32.mrf.mxu0
    %v3663 = vadd.f32 %v1843, %v3662
    %3664 = vdwg.mxu0
    %3665 = vmatpush.bf16.msra.mxu0 %v3326
    %3666 = vmatpush.bf16.msra.mxu0 %v3318
    %3667 = vmatpush.bf16.msra.mxu0 %v3310
    %3668 = vmatpush.bf16.msra.mxu0 %v3302
    %3669 = vmatpush.bf16.msra.mxu0 %v3294
    %3670 = vmatpush.bf16.msra.mxu0 %v3286
    %3671 = vmatpush.bf16.msra.mxu0 %v3278
    %3672 = vmatpush.bf16.msra.mxu0 %v3270
    %3673 = vmatmul.bf16.gmra.mxu0 %v2814
    %v3674 = vpop.f32.mrf.mxu0
    %v3675 = vadd.f32 %v3661, %v3674
    %v3676 = vpop.f32.mrf.mxu0
    %v3677 = vadd.f32 %v3663, %v3676
    %3678 = vdwg.mxu0
    %v3679 = vadd.f32 %v3479, %v449
    %v3680 = vadd.f32 %v3507, %v450
    %v3681 = vadd.f32 %v3535, %v451
    %v3682 = vadd.f32 %v3563, %v452
    %v3683 = vadd.f32 %v3591, %v453
    %v3684 = vadd.f32 %v3619, %v454
    %v3685 = vadd.f32 %v3647, %v455
    %v3686 = vadd.f32 %v3675, %v456
    %v3687 = vadd.f32 %v3481, %v449
    %v3688 = vadd.f32 %v3509, %v450
    %v3689 = vadd.f32 %v3537, %v451
    %v3690 = vadd.f32 %v3565, %v452
    %v3691 = vadd.f32 %v3593, %v453
    %v3692 = vadd.f32 %v3621, %v454
    %v3693 = vadd.f32 %v3649, %v455
    %v3694 = vadd.f32 %v3677, %v456
    %v3695 = vmul.f32 %v3679, 0.5
    %v3696 = vmul.f32 %v3680, 0.5
    %v3697 = vmul.f32 %v3681, 0.5
    %v3698 = vmul.f32 %v3682, 0.5
    %v3699 = vmul.f32 %v3683, 0.5
    %v3700 = vmul.f32 %v3684, 0.5
    %v3701 = vmul.f32 %v3687, 0.5
    %v3702 = vmul.f32 %v3688, 0.5
    %v3703 = vmul.f32 %v3689, 0.5
    %v3704 = vmul.f32 %v3690, 0.5
    %v3705 = vmul.f32 %v3691, 0.5
    %v3706 = vmul.f32 %v3692, 0.5
    %v3707 = vtanh.pop %v3695
    %v3708 = vtanh.pop %v3696
    %v3709 = vtanh.pop %v3697
    %v3710 = vtanh.pop %v3698
    %v3711 = vtanh.pop %v3699
    %v3712 = vtanh.pop %v3700
    %v3713 = vtanh.pop %v3701
    %v3714 = vtanh.pop %v3702
    %v3715 = vtanh.pop %v3703
    %v3716 = vtanh.pop %v3704
    %v3717 = vtanh.pop %v3705
    %v3718 = vtanh.pop %v3706
    %v3719 = vmul.f32 %v3707, 0.5
    %v3720 = vmul.f32 %v3708, 0.5
    %v3721 = vmul.f32 %v3709, 0.5
    %v3722 = vmul.f32 %v3710, 0.5
    %v3723 = vmul.f32 %v3711, 0.5
    %v3724 = vmul.f32 %v3712, 0.5
    %v3725 = vmul.f32 %v3713, 0.5
    %v3726 = vmul.f32 %v3714, 0.5
    %v3727 = vmul.f32 %v3715, 0.5
    %v3728 = vmul.f32 %v3716, 0.5
    %v3729 = vmul.f32 %v3717, 0.5
    %v3730 = vmul.f32 %v3718, 0.5
    %v3731 = vadd.f32 %v3719, 0.5
    %v3732 = vadd.f32 %v3720, 0.5
    %v3733 = vadd.f32 %v3721, 0.5
    %v3734 = vadd.f32 %v3722, 0.5
    %v3735 = vadd.f32 %v3723, 0.5
    %v3736 = vadd.f32 %v3724, 0.5
    %v3737 = vadd.f32 %v3725, 0.5
    %v3738 = vadd.f32 %v3726, 0.5
    %v3739 = vadd.f32 %v3727, 0.5
    %v3740 = vadd.f32 %v3728, 0.5
    %v3741 = vadd.f32 %v3729, 0.5
    %v3742 = vadd.f32 %v3730, 0.5
    %v3743 = vtanh.pop %v3685
    %v3744 = vtanh.pop %v3686
    %v3745 = vtanh.pop %v3693
    %v3746 = vtanh.pop %v3694
    %v3747 = vmul.f32 %v3733, 0.0
    %v3748 = vmul.f32 %v3734, 0.0
    %v3749 = vmul.f32 %v3739, 0.0
    %v3750 = vmul.f32 %v3740, 0.0
    %v3751 = vmul.f32 %v3731, %v3743
    %v3752 = vmul.f32 %v3732, %v3744
    %v3753 = vmul.f32 %v3737, %v3745
    %v3754 = vmul.f32 %v3738, %v3746
    %v3755 = vadd.f32 %v3747, %v3751
    %v3756 = vadd.f32 %v3748, %v3752
    %v3757 = vadd.f32 %v3749, %v3753
    %v3758 = vadd.f32 %v3750, %v3754
    %v3759 = vtanh.pop %v3755
    %v3760 = vtanh.pop %v3756
    %v3761 = vtanh.pop %v3757
    %v3762 = vtanh.pop %v3758
    %v3763 = vmul.f32 %v3735, %v3759
    %v3764 = vmul.f32 %v3736, %v3760
    %v3765 = vmul.f32 %v3741, %v3761
    %v3766 = vmul.f32 %v3742, %v3762
    %v3767 = vpack.c.bf16 %v3765, %v3763
    %v3768 = vpack.c.bf16 %v3766, %v3764
    %3769 = vmatpush.bf16.msra.mxu0 %v1421
    %3770 = vmatpush.bf16.msra.mxu0 %v1413
    %3771 = vmatpush.bf16.msra.mxu0 %v1405
    %3772 = vmatpush.bf16.msra.mxu0 %v1397
    %3773 = vmatpush.bf16.msra.mxu0 %v1389
    %3774 = vmatpush.bf16.msra.mxu0 %v1381
    %3775 = vmatpush.bf16.msra.mxu0 %v1373
    %3776 = vmatpush.bf16.msra.mxu0 %v1365
    %3777 = vmatmul.bf16.gmra.mxu0 %v3767
    %v3778 = vpop.f32.mrf.mxu0
    %v3779 = vadd.f32 0.0, %v3778
    %v3780 = vpop.f32.mrf.mxu0
    %v3781 = vadd.f32 0.0, %v3780
    %3782 = vdwg.mxu0
    %3783 = vmatpush.bf16.msra.mxu0 %v1485
    %3784 = vmatpush.bf16.msra.mxu0 %v1477
    %3785 = vmatpush.bf16.msra.mxu0 %v1469
    %3786 = vmatpush.bf16.msra.mxu0 %v1461
    %3787 = vmatpush.bf16.msra.mxu0 %v1453
    %3788 = vmatpush.bf16.msra.mxu0 %v1445
    %3789 = vmatpush.bf16.msra.mxu0 %v1437
    %3790 = vmatpush.bf16.msra.mxu0 %v1429
    %3791 = vmatmul.bf16.gmra.mxu0 %v3768
    %v3792 = vpop.f32.mrf.mxu0
    %v3793 = vadd.f32 %v3779, %v3792
    %v3794 = vpop.f32.mrf.mxu0
    %v3795 = vadd.f32 %v3781, %v3794
    %3796 = vdwg.mxu0
    %3797 = vmatpush.bf16.msra.mxu0 %v1422
    %3798 = vmatpush.bf16.msra.mxu0 %v1414
    %3799 = vmatpush.bf16.msra.mxu0 %v1406
    %3800 = vmatpush.bf16.msra.mxu0 %v1398
    %3801 = vmatpush.bf16.msra.mxu0 %v1390
    %3802 = vmatpush.bf16.msra.mxu0 %v1382
    %3803 = vmatpush.bf16.msra.mxu0 %v1374
    %3804 = vmatpush.bf16.msra.mxu0 %v1366
    %3805 = vmatmul.bf16.gmra.mxu0 %v3767
    %v3806 = vpop.f32.mrf.mxu0
    %v3807 = vadd.f32 0.0, %v3806
    %v3808 = vpop.f32.mrf.mxu0
    %v3809 = vadd.f32 0.0, %v3808
    %3810 = vdwg.mxu0
    %3811 = vmatpush.bf16.msra.mxu0 %v1486
    %3812 = vmatpush.bf16.msra.mxu0 %v1478
    %3813 = vmatpush.bf16.msra.mxu0 %v1470
    %3814 = vmatpush.bf16.msra.mxu0 %v1462
    %3815 = vmatpush.bf16.msra.mxu0 %v1454
    %3816 = vmatpush.bf16.msra.mxu0 %v1446
    %3817 = vmatpush.bf16.msra.mxu0 %v1438
    %3818 = vmatpush.bf16.msra.mxu0 %v1430
    %3819 = vmatmul.bf16.gmra.mxu0 %v3768
    %v3820 = vpop.f32.mrf.mxu0
    %v3821 = vadd.f32 %v3807, %v3820
    %v3822 = vpop.f32.mrf.mxu0
    %v3823 = vadd.f32 %v3809, %v3822
    %3824 = vdwg.mxu0
    %3825 = vmatpush.bf16.msra.mxu0 %v1423
    %3826 = vmatpush.bf16.msra.mxu0 %v1415
    %3827 = vmatpush.bf16.msra.mxu0 %v1407
    %3828 = vmatpush.bf16.msra.mxu0 %v1399
    %3829 = vmatpush.bf16.msra.mxu0 %v1391
    %3830 = vmatpush.bf16.msra.mxu0 %v1383
    %3831 = vmatpush.bf16.msra.mxu0 %v1375
    %3832 = vmatpush.bf16.msra.mxu0 %v1367
    %3833 = vmatmul.bf16.gmra.mxu0 %v3767
    %v3834 = vpop.f32.mrf.mxu0
    %v3835 = vadd.f32 0.0, %v3834
    %v3836 = vpop.f32.mrf.mxu0
    %v3837 = vadd.f32 0.0, %v3836
    %3838 = vdwg.mxu0
    %3839 = vmatpush.bf16.msra.mxu0 %v1487
    %3840 = vmatpush.bf16.msra.mxu0 %v1479
    %3841 = vmatpush.bf16.msra.mxu0 %v1471
    %3842 = vmatpush.bf16.msra.mxu0 %v1463
    %3843 = vmatpush.bf16.msra.mxu0 %v1455
    %3844 = vmatpush.bf16.msra.mxu0 %v1447
    %3845 = vmatpush.bf16.msra.mxu0 %v1439
    %3846 = vmatpush.bf16.msra.mxu0 %v1431
    %3847 = vmatmul.bf16.gmra.mxu0 %v3768
    %v3848 = vpop.f32.mrf.mxu0
    %v3849 = vadd.f32 %v3835, %v3848
    %v3850 = vpop.f32.mrf.mxu0
    %v3851 = vadd.f32 %v3837, %v3850
    %3852 = vdwg.mxu0
    %3853 = vmatpush.bf16.msra.mxu0 %v1424
    %3854 = vmatpush.bf16.msra.mxu0 %v1416
    %3855 = vmatpush.bf16.msra.mxu0 %v1408
    %3856 = vmatpush.bf16.msra.mxu0 %v1400
    %3857 = vmatpush.bf16.msra.mxu0 %v1392
    %3858 = vmatpush.bf16.msra.mxu0 %v1384
    %3859 = vmatpush.bf16.msra.mxu0 %v1376
    %3860 = vmatpush.bf16.msra.mxu0 %v1368
    %3861 = vmatmul.bf16.gmra.mxu0 %v3767
    %v3862 = vpop.f32.mrf.mxu0
    %v3863 = vadd.f32 0.0, %v3862
    %v3864 = vpop.f32.mrf.mxu0
    %v3865 = vadd.f32 0.0, %v3864
    %3866 = vdwg.mxu0
    %3867 = vmatpush.bf16.msra.mxu0 %v1488
    %3868 = vmatpush.bf16.msra.mxu0 %v1480
    %3869 = vmatpush.bf16.msra.mxu0 %v1472
    %3870 = vmatpush.bf16.msra.mxu0 %v1464
    %3871 = vmatpush.bf16.msra.mxu0 %v1456
    %3872 = vmatpush.bf16.msra.mxu0 %v1448
    %3873 = vmatpush.bf16.msra.mxu0 %v1440
    %3874 = vmatpush.bf16.msra.mxu0 %v1432
    %3875 = vmatmul.bf16.gmra.mxu0 %v3768
    %v3876 = vpop.f32.mrf.mxu0
    %v3877 = vadd.f32 %v3863, %v3876
    %v3878 = vpop.f32.mrf.mxu0
    %v3879 = vadd.f32 %v3865, %v3878
    %3880 = vdwg.mxu0
    %3881 = vmatpush.bf16.msra.mxu0 %v1425
    %3882 = vmatpush.bf16.msra.mxu0 %v1417
    %3883 = vmatpush.bf16.msra.mxu0 %v1409
    %3884 = vmatpush.bf16.msra.mxu0 %v1401
    %3885 = vmatpush.bf16.msra.mxu0 %v1393
    %3886 = vmatpush.bf16.msra.mxu0 %v1385
    %3887 = vmatpush.bf16.msra.mxu0 %v1377
    %3888 = vmatpush.bf16.msra.mxu0 %v1369
    %3889 = vmatmul.bf16.gmra.mxu0 %v3767
    %v3890 = vpop.f32.mrf.mxu0
    %v3891 = vadd.f32 0.0, %v3890
    %v3892 = vpop.f32.mrf.mxu0
    %v3893 = vadd.f32 0.0, %v3892
    %3894 = vdwg.mxu0
    %3895 = vmatpush.bf16.msra.mxu0 %v1489
    %3896 = vmatpush.bf16.msra.mxu0 %v1481
    %3897 = vmatpush.bf16.msra.mxu0 %v1473
    %3898 = vmatpush.bf16.msra.mxu0 %v1465
    %3899 = vmatpush.bf16.msra.mxu0 %v1457
    %3900 = vmatpush.bf16.msra.mxu0 %v1449
    %3901 = vmatpush.bf16.msra.mxu0 %v1441
    %3902 = vmatpush.bf16.msra.mxu0 %v1433
    %3903 = vmatmul.bf16.gmra.mxu0 %v3768
    %v3904 = vpop.f32.mrf.mxu0
    %v3905 = vadd.f32 %v3891, %v3904
    %v3906 = vpop.f32.mrf.mxu0
    %v3907 = vadd.f32 %v3893, %v3906
    %3908 = vdwg.mxu0
    %3909 = vmatpush.bf16.msra.mxu0 %v1426
    %3910 = vmatpush.bf16.msra.mxu0 %v1418
    %3911 = vmatpush.bf16.msra.mxu0 %v1410
    %3912 = vmatpush.bf16.msra.mxu0 %v1402
    %3913 = vmatpush.bf16.msra.mxu0 %v1394
    %3914 = vmatpush.bf16.msra.mxu0 %v1386
    %3915 = vmatpush.bf16.msra.mxu0 %v1378
    %3916 = vmatpush.bf16.msra.mxu0 %v1370
    %3917 = vmatmul.bf16.gmra.mxu0 %v3767
    %v3918 = vpop.f32.mrf.mxu0
    %v3919 = vadd.f32 0.0, %v3918
    %v3920 = vpop.f32.mrf.mxu0
    %v3921 = vadd.f32 0.0, %v3920
    %3922 = vdwg.mxu0
    %3923 = vmatpush.bf16.msra.mxu0 %v1490
    %3924 = vmatpush.bf16.msra.mxu0 %v1482
    %3925 = vmatpush.bf16.msra.mxu0 %v1474
    %3926 = vmatpush.bf16.msra.mxu0 %v1466
    %3927 = vmatpush.bf16.msra.mxu0 %v1458
    %3928 = vmatpush.bf16.msra.mxu0 %v1450
    %3929 = vmatpush.bf16.msra.mxu0 %v1442
    %3930 = vmatpush.bf16.msra.mxu0 %v1434
    %3931 = vmatmul.bf16.gmra.mxu0 %v3768
    %v3932 = vpop.f32.mrf.mxu0
    %v3933 = vadd.f32 %v3919, %v3932
    %v3934 = vpop.f32.mrf.mxu0
    %v3935 = vadd.f32 %v3921, %v3934
    %3936 = vdwg.mxu0
    %3937 = vmatpush.bf16.msra.mxu0 %v1427
    %3938 = vmatpush.bf16.msra.mxu0 %v1419
    %3939 = vmatpush.bf16.msra.mxu0 %v1411
    %3940 = vmatpush.bf16.msra.mxu0 %v1403
    %3941 = vmatpush.bf16.msra.mxu0 %v1395
    %3942 = vmatpush.bf16.msra.mxu0 %v1387
    %3943 = vmatpush.bf16.msra.mxu0 %v1379
    %3944 = vmatpush.bf16.msra.mxu0 %v1371
    %3945 = vmatmul.bf16.gmra.mxu0 %v3767
    %v3946 = vpop.f32.mrf.mxu0
    %v3947 = vadd.f32 0.0, %v3946
    %v3948 = vpop.f32.mrf.mxu0
    %v3949 = vadd.f32 0.0, %v3948
    %3950 = vdwg.mxu0
    %3951 = vmatpush.bf16.msra.mxu0 %v1491
    %3952 = vmatpush.bf16.msra.mxu0 %v1483
    %3953 = vmatpush.bf16.msra.mxu0 %v1475
    %3954 = vmatpush.bf16.msra.mxu0 %v1467
    %3955 = vmatpush.bf16.msra.mxu0 %v1459
    %3956 = vmatpush.bf16.msra.mxu0 %v1451
    %3957 = vmatpush.bf16.msra.mxu0 %v1443
    %3958 = vmatpush.bf16.msra.mxu0 %v1435
    %3959 = vmatmul.bf16.gmra.mxu0 %v3768
    %v3960 = vpop.f32.mrf.mxu0
    %v3961 = vadd.f32 %v3947, %v3960
    %v3962 = vpop.f32.mrf.mxu0
    %v3963 = vadd.f32 %v3949, %v3962
    %3964 = vdwg.mxu0
    %3965 = vmatpush.bf16.msra.mxu0 %v1428
    %3966 = vmatpush.bf16.msra.mxu0 %v1420
    %3967 = vmatpush.bf16.msra.mxu0 %v1412
    %3968 = vmatpush.bf16.msra.mxu0 %v1404
    %3969 = vmatpush.bf16.msra.mxu0 %v1396
    %3970 = vmatpush.bf16.msra.mxu0 %v1388
    %3971 = vmatpush.bf16.msra.mxu0 %v1380
    %3972 = vmatpush.bf16.msra.mxu0 %v1372
    %3973 = vmatmul.bf16.gmra.mxu0 %v3767
    %v3974 = vpop.f32.mrf.mxu0
    %v3975 = vadd.f32 0.0, %v3974
    %v3976 = vpop.f32.mrf.mxu0
    %v3977 = vadd.f32 0.0, %v3976
    %3978 = vdwg.mxu0
    %3979 = vmatpush.bf16.msra.mxu0 %v1492
    %3980 = vmatpush.bf16.msra.mxu0 %v1484
    %3981 = vmatpush.bf16.msra.mxu0 %v1476
    %3982 = vmatpush.bf16.msra.mxu0 %v1468
    %3983 = vmatpush.bf16.msra.mxu0 %v1460
    %3984 = vmatpush.bf16.msra.mxu0 %v1452
    %3985 = vmatpush.bf16.msra.mxu0 %v1444
    %3986 = vmatpush.bf16.msra.mxu0 %v1436
    %3987 = vmatmul.bf16.gmra.mxu0 %v3768
    %v3988 = vpop.f32.mrf.mxu0
    %v3989 = vadd.f32 %v3975, %v3988
    %v3990 = vpop.f32.mrf.mxu0
    %v3991 = vadd.f32 %v3977, %v3990
    %3992 = vdwg.mxu0
    %s3993 = scalar_lea.vmem [#allocation2], 128
    %v3994 = vld [vmem:[%s3993] sm:$0xff]
    %v3995 = vld [vmem:[%s3993 + $0x8] sm:$0xff]
    %v3996 = vld [vmem:[%s3993 + $0x10] sm:$0xff]
    %v3997 = vld [vmem:[%s3993 + $0x18] sm:$0xff]
    %v3998 = vld [vmem:[%s3993 + $0x20] sm:$0xff]
    %v3999 = vld [vmem:[%s3993 + $0x28] sm:$0xff]
    %v4000 = vld [vmem:[%s3993 + $0x30] sm:$0xff]
    %v4001 = vld [vmem:[%s3993 + $0x38] sm:$0xff]
    %v4002 = vld [vmem:[%s3993 + $0x40] sm:$0xff]
    %v4003 = vld [vmem:[%s3993 + $0x48] sm:$0xff]
    %v4004 = vld [vmem:[%s3993 + $0x50] sm:$0xff]
    %v4005 = vld [vmem:[%s3993 + $0x58] sm:$0xff]
    %v4006 = vld [vmem:[%s3993 + $0x60] sm:$0xff]
    %v4007 = vld [vmem:[%s3993 + $0x68] sm:$0xff]
    %v4008 = vld [vmem:[%s3993 + $0x70] sm:$0xff]
    %v4009 = vld [vmem:[%s3993 + $0x78] sm:$0xff]
    %4010 = vmatpush.bf16.msra.mxu0 %v2301
    %4011 = vmatpush.bf16.msra.mxu0 %v2293
    %4012 = vmatpush.bf16.msra.mxu0 %v2285
    %4013 = vmatpush.bf16.msra.mxu0 %v2277
    %4014 = vmatpush.bf16.msra.mxu0 %v2269
    %4015 = vmatpush.bf16.msra.mxu0 %v2261
    %4016 = vmatpush.bf16.msra.mxu0 %v2253
    %4017 = vmatpush.bf16.msra.mxu0 %v2245
    %4018 = vmatmul.bf16.gmra.mxu0 %v2813
    %v4019 = vpop.f32.mrf.mxu0
    %v4020 = vadd.f32 0.0, %v4019
    %v4021 = vpop.f32.mrf.mxu0
    %v4022 = vadd.f32 0.0, %v4021
    %4023 = vdwg.mxu0
    %4024 = vmatpush.bf16.msra.mxu0 %v2365
    %4025 = vmatpush.bf16.msra.mxu0 %v2357
    %4026 = vmatpush.bf16.msra.mxu0 %v2349
    %4027 = vmatpush.bf16.msra.mxu0 %v2341
    %4028 = vmatpush.bf16.msra.mxu0 %v2333
    %4029 = vmatpush.bf16.msra.mxu0 %v2325
    %4030 = vmatpush.bf16.msra.mxu0 %v2317
    %4031 = vmatpush.bf16.msra.mxu0 %v2309
    %4032 = vmatmul.bf16.gmra.mxu0 %v2814
    %v4033 = vpop.f32.mrf.mxu0
    %v4034 = vadd.f32 %v4020, %v4033
    %v4035 = vpop.f32.mrf.mxu0
    %v4036 = vadd.f32 %v4022, %v4035
    %4037 = vdwg.mxu0
    %4038 = vmatpush.bf16.msra.mxu0 %v2302
    %4039 = vmatpush.bf16.msra.mxu0 %v2294
    %4040 = vmatpush.bf16.msra.mxu0 %v2286
    %4041 = vmatpush.bf16.msra.mxu0 %v2278
    %4042 = vmatpush.bf16.msra.mxu0 %v2270
    %4043 = vmatpush.bf16.msra.mxu0 %v2262
    %4044 = vmatpush.bf16.msra.mxu0 %v2254
    %4045 = vmatpush.bf16.msra.mxu0 %v2246
    %4046 = vmatmul.bf16.gmra.mxu0 %v2813
    %v4047 = vpop.f32.mrf.mxu0
    %v4048 = vadd.f32 0.0, %v4047
    %v4049 = vpop.f32.mrf.mxu0
    %v4050 = vadd.f32 0.0, %v4049
    %4051 = vdwg.mxu0
    %4052 = vmatpush.bf16.msra.mxu0 %v2366
    %4053 = vmatpush.bf16.msra.mxu0 %v2358
    %4054 = vmatpush.bf16.msra.mxu0 %v2350
    %4055 = vmatpush.bf16.msra.mxu0 %v2342
    %4056 = vmatpush.bf16.msra.mxu0 %v2334
    %4057 = vmatpush.bf16.msra.mxu0 %v2326
    %4058 = vmatpush.bf16.msra.mxu0 %v2318
    %4059 = vmatpush.bf16.msra.mxu0 %v2310
    %4060 = vmatmul.bf16.gmra.mxu0 %v2814
    %v4061 = vpop.f32.mrf.mxu0
    %v4062 = vadd.f32 %v4048, %v4061
    %v4063 = vpop.f32.mrf.mxu0
    %v4064 = vadd.f32 %v4050, %v4063
    %4065 = vdwg.mxu0
    %4066 = vmatpush.bf16.msra.mxu0 %v2303
    %4067 = vmatpush.bf16.msra.mxu0 %v2295
    %4068 = vmatpush.bf16.msra.mxu0 %v2287
    %4069 = vmatpush.bf16.msra.mxu0 %v2279
    %4070 = vmatpush.bf16.msra.mxu0 %v2271
    %4071 = vmatpush.bf16.msra.mxu0 %v2263
    %4072 = vmatpush.bf16.msra.mxu0 %v2255
    %4073 = vmatpush.bf16.msra.mxu0 %v2247
    %4074 = vmatmul.bf16.gmra.mxu0 %v2813
    %v4075 = vpop.f32.mrf.mxu0
    %v4076 = vadd.f32 0.0, %v4075
    %v4077 = vpop.f32.mrf.mxu0
    %v4078 = vadd.f32 0.0, %v4077
    %4079 = vdwg.mxu0
    %4080 = vmatpush.bf16.msra.mxu0 %v2367
    %4081 = vmatpush.bf16.msra.mxu0 %v2359
    %4082 = vmatpush.bf16.msra.mxu0 %v2351
    %4083 = vmatpush.bf16.msra.mxu0 %v2343
    %4084 = vmatpush.bf16.msra.mxu0 %v2335
    %4085 = vmatpush.bf16.msra.mxu0 %v2327
    %4086 = vmatpush.bf16.msra.mxu0 %v2319
    %4087 = vmatpush.bf16.msra.mxu0 %v2311
    %4088 = vmatmul.bf16.gmra.mxu0 %v2814
    %v4089 = vpop.f32.mrf.mxu0
    %v4090 = vadd.f32 %v4076, %v4089
    %v4091 = vpop.f32.mrf.mxu0
    %v4092 = vadd.f32 %v4078, %v4091
    %4093 = vdwg.mxu0
    %4094 = vmatpush.bf16.msra.mxu0 %v2304
    %4095 = vmatpush.bf16.msra.mxu0 %v2296
    %4096 = vmatpush.bf16.msra.mxu0 %v2288
    %4097 = vmatpush.bf16.msra.mxu0 %v2280
    %4098 = vmatpush.bf16.msra.mxu0 %v2272
    %4099 = vmatpush.bf16.msra.mxu0 %v2264
    %4100 = vmatpush.bf16.msra.mxu0 %v2256
    %4101 = vmatpush.bf16.msra.mxu0 %v2248
    %4102 = vmatmul.bf16.gmra.mxu0 %v2813
    %v4103 = vpop.f32.mrf.mxu0
    %v4104 = vadd.f32 0.0, %v4103
    %v4105 = vpop.f32.mrf.mxu0
    %v4106 = vadd.f32 0.0, %v4105
    %4107 = vdwg.mxu0
    %4108 = vmatpush.bf16.msra.mxu0 %v2368
    %4109 = vmatpush.bf16.msra.mxu0 %v2360
    %4110 = vmatpush.bf16.msra.mxu0 %v2352
    %4111 = vmatpush.bf16.msra.mxu0 %v2344
    %4112 = vmatpush.bf16.msra.mxu0 %v2336
    %4113 = vmatpush.bf16.msra.mxu0 %v2328
    %4114 = vmatpush.bf16.msra.mxu0 %v2320
    %4115 = vmatpush.bf16.msra.mxu0 %v2312
    %4116 = vmatmul.bf16.gmra.mxu0 %v2814
    %v4117 = vpop.f32.mrf.mxu0
    %v4118 = vadd.f32 %v4104, %v4117
    %v4119 = vpop.f32.mrf.mxu0
    %v4120 = vadd.f32 %v4106, %v4119
    %4121 = vdwg.mxu0
    %4122 = vmatpush.bf16.msra.mxu0 %v2305
    %4123 = vmatpush.bf16.msra.mxu0 %v2297
    %4124 = vmatpush.bf16.msra.mxu0 %v2289
    %4125 = vmatpush.bf16.msra.mxu0 %v2281
    %4126 = vmatpush.bf16.msra.mxu0 %v2273
    %4127 = vmatpush.bf16.msra.mxu0 %v2265
    %4128 = vmatpush.bf16.msra.mxu0 %v2257
    %4129 = vmatpush.bf16.msra.mxu0 %v2249
    %4130 = vmatmul.bf16.gmra.mxu0 %v2813
    %v4131 = vpop.f32.mrf.mxu0
    %v4132 = vadd.f32 0.0, %v4131
    %v4133 = vpop.f32.mrf.mxu0
    %v4134 = vadd.f32 0.0, %v4133
    %4135 = vdwg.mxu0
    %4136 = vmatpush.bf16.msra.mxu0 %v2369
    %4137 = vmatpush.bf16.msra.mxu0 %v2361
    %4138 = vmatpush.bf16.msra.mxu0 %v2353
    %4139 = vmatpush.bf16.msra.mxu0 %v2345
    %4140 = vmatpush.bf16.msra.mxu0 %v2337
    %4141 = vmatpush.bf16.msra.mxu0 %v2329
    %4142 = vmatpush.bf16.msra.mxu0 %v2321
    %4143 = vmatpush.bf16.msra.mxu0 %v2313
    %4144 = vmatmul.bf16.gmra.mxu0 %v2814
    %v4145 = vpop.f32.mrf.mxu0
    %v4146 = vadd.f32 %v4132, %v4145
    %v4147 = vpop.f32.mrf.mxu0
    %v4148 = vadd.f32 %v4134, %v4147
    %4149 = vdwg.mxu0
    %4150 = vmatpush.bf16.msra.mxu0 %v2306
    %4151 = vmatpush.bf16.msra.mxu0 %v2298
    %4152 = vmatpush.bf16.msra.mxu0 %v2290
    %4153 = vmatpush.bf16.msra.mxu0 %v2282
    %4154 = vmatpush.bf16.msra.mxu0 %v2274
    %4155 = vmatpush.bf16.msra.mxu0 %v2266
    %4156 = vmatpush.bf16.msra.mxu0 %v2258
    %4157 = vmatpush.bf16.msra.mxu0 %v2250
    %4158 = vmatmul.bf16.gmra.mxu0 %v2813
    %v4159 = vpop.f32.mrf.mxu0
    %v4160 = vadd.f32 0.0, %v4159
    %v4161 = vpop.f32.mrf.mxu0
    %v4162 = vadd.f32 0.0, %v4161
    %4163 = vdwg.mxu0
    %4164 = vmatpush.bf16.msra.mxu0 %v2370
    %4165 = vmatpush.bf16.msra.mxu0 %v2362
    %4166 = vmatpush.bf16.msra.mxu0 %v2354
    %4167 = vmatpush.bf16.msra.mxu0 %v2346
    %4168 = vmatpush.bf16.msra.mxu0 %v2338
    %4169 = vmatpush.bf16.msra.mxu0 %v2330
    %4170 = vmatpush.bf16.msra.mxu0 %v2322
    %4171 = vmatpush.bf16.msra.mxu0 %v2314
    %4172 = vmatmul.bf16.gmra.mxu0 %v2814
    %v4173 = vpop.f32.mrf.mxu0
    %v4174 = vadd.f32 %v4160, %v4173
    %v4175 = vpop.f32.mrf.mxu0
    %v4176 = vadd.f32 %v4162, %v4175
    %4177 = vdwg.mxu0
    %4178 = vmatpush.bf16.msra.mxu0 %v2307
    %4179 = vmatpush.bf16.msra.mxu0 %v2299
    %4180 = vmatpush.bf16.msra.mxu0 %v2291
    %4181 = vmatpush.bf16.msra.mxu0 %v2283
    %4182 = vmatpush.bf16.msra.mxu0 %v2275
    %4183 = vmatpush.bf16.msra.mxu0 %v2267
    %4184 = vmatpush.bf16.msra.mxu0 %v2259
    %4185 = vmatpush.bf16.msra.mxu0 %v2251
    %4186 = vmatmul.bf16.gmra.mxu0 %v2813
    %v4187 = vpop.f32.mrf.mxu0
    %v4188 = vadd.f32 0.0, %v4187
    %v4189 = vpop.f32.mrf.mxu0
    %v4190 = vadd.f32 0.0, %v4189
    %4191 = vdwg.mxu0
    %4192 = vmatpush.bf16.msra.mxu0 %v2371
    %4193 = vmatpush.bf16.msra.mxu0 %v2363
    %4194 = vmatpush.bf16.msra.mxu0 %v2355
    %4195 = vmatpush.bf16.msra.mxu0 %v2347
    %4196 = vmatpush.bf16.msra.mxu0 %v2339
    %4197 = vmatpush.bf16.msra.mxu0 %v2331
    %4198 = vmatpush.bf16.msra.mxu0 %v2323
    %4199 = vmatpush.bf16.msra.mxu0 %v2315
    %4200 = vmatmul.bf16.gmra.mxu0 %v2814
    %v4201 = vpop.f32.mrf.mxu0
    %v4202 = vadd.f32 %v4188, %v4201
    %v4203 = vpop.f32.mrf.mxu0
    %v4204 = vadd.f32 %v4190, %v4203
    %4205 = vdwg.mxu0
    %4206 = vmatpush.bf16.msra.mxu0 %v2308
    %4207 = vmatpush.bf16.msra.mxu0 %v2300
    %4208 = vmatpush.bf16.msra.mxu0 %v2292
    %4209 = vmatpush.bf16.msra.mxu0 %v2284
    %4210 = vmatpush.bf16.msra.mxu0 %v2276
    %4211 = vmatpush.bf16.msra.mxu0 %v2268
    %4212 = vmatpush.bf16.msra.mxu0 %v2260
    %4213 = vmatpush.bf16.msra.mxu0 %v2252
    %4214 = vmatmul.bf16.gmra.mxu0 %v2813
    %v4215 = vpop.f32.mrf.mxu0
    %v4216 = vadd.f32 0.0, %v4215
    %v4217 = vpop.f32.mrf.mxu0
    %v4218 = vadd.f32 0.0, %v4217
    %4219 = vdwg.mxu0
    %4220 = vmatpush.bf16.msra.mxu0 %v2372
    %4221 = vmatpush.bf16.msra.mxu0 %v2364
    %4222 = vmatpush.bf16.msra.mxu0 %v2356
    %4223 = vmatpush.bf16.msra.mxu0 %v2348
    %4224 = vmatpush.bf16.msra.mxu0 %v2340
    %4225 = vmatpush.bf16.msra.mxu0 %v2332
    %4226 = vmatpush.bf16.msra.mxu0 %v2324
    %4227 = vmatpush.bf16.msra.mxu0 %v2316
    %4228 = vmatmul.bf16.gmra.mxu0 %v2814
    %v4229 = vpop.f32.mrf.mxu0
    %v4230 = vadd.f32 %v4216, %v4229
    %v4231 = vpop.f32.mrf.mxu0
    %v4232 = vadd.f32 %v4218, %v4231
    %4233 = vdwg.mxu0
    %v4234 = vadd.f32 %v3994, %v4034
    %v4235 = vadd.f32 %v3995, %v4062
    %v4236 = vadd.f32 %v3996, %v4090
    %v4237 = vadd.f32 %v3997, %v4118
    %v4238 = vadd.f32 %v3998, %v4146
    %v4239 = vadd.f32 %v3999, %v4174
    %v4240 = vadd.f32 %v4000, %v4202
    %v4241 = vadd.f32 %v4001, %v4230
    %v4242 = vadd.f32 %v4002, %v4036
    %v4243 = vadd.f32 %v4003, %v4064
    %v4244 = vadd.f32 %v4004, %v4092
    %v4245 = vadd.f32 %v4005, %v4120
    %v4246 = vadd.f32 %v4006, %v4148
    %v4247 = vadd.f32 %v4007, %v4176
    %v4248 = vadd.f32 %v4008, %v4204
    %v4249 = vadd.f32 %v4009, %v4232
    %v4250 = vmul.f32 %v4234, 0.5
    %v4251 = vmul.f32 %v4235, 0.5
    %v4252 = vmul.f32 %v4236, 0.5
    %v4253 = vmul.f32 %v4237, 0.5
    %v4254 = vmul.f32 %v4238, 0.5
    %v4255 = vmul.f32 %v4239, 0.5
    %v4256 = vmul.f32 %v4242, 0.5
    %v4257 = vmul.f32 %v4243, 0.5
    %v4258 = vmul.f32 %v4244, 0.5
    %v4259 = vmul.f32 %v4245, 0.5
    %v4260 = vmul.f32 %v4246, 0.5
    %v4261 = vmul.f32 %v4247, 0.5
    %v4262 = vtanh.pop %v4250
    %v4263 = vtanh.pop %v4251
    %v4264 = vtanh.pop %v4252
    %v4265 = vtanh.pop %v4253
    %v4266 = vtanh.pop %v4254
    %v4267 = vtanh.pop %v4255
    %v4268 = vtanh.pop %v4256
    %v4269 = vtanh.pop %v4257
    %v4270 = vtanh.pop %v4258
    %v4271 = vtanh.pop %v4259
    %v4272 = vtanh.pop %v4260
    %v4273 = vtanh.pop %v4261
    %v4274 = vmul.f32 %v4262, 0.5
    %v4275 = vmul.f32 %v4263, 0.5
    %v4276 = vmul.f32 %v4264, 0.5
    %v4277 = vmul.f32 %v4265, 0.5
    %v4278 = vmul.f32 %v4266, 0.5
    %v4279 = vmul.f32 %v4267, 0.5
    %v4280 = vmul.f32 %v4268, 0.5
    %v4281 = vmul.f32 %v4269, 0.5
    %v4282 = vmul.f32 %v4270, 0.5
    %v4283 = vmul.f32 %v4271, 0.5
    %v4284 = vmul.f32 %v4272, 0.5
    %v4285 = vmul.f32 %v4273, 0.5
    %v4286 = vadd.f32 %v4274, 0.5
    %v4287 = vadd.f32 %v4275, 0.5
    %v4288 = vadd.f32 %v4276, 0.5
    %v4289 = vadd.f32 %v4277, 0.5
    %v4290 = vadd.f32 %v4278, 0.5
    %v4291 = vadd.f32 %v4279, 0.5
    %v4292 = vadd.f32 %v4280, 0.5
    %v4293 = vadd.f32 %v4281, 0.5
    %v4294 = vadd.f32 %v4282, 0.5
    %v4295 = vadd.f32 %v4283, 0.5
    %v4296 = vadd.f32 %v4284, 0.5
    %v4297 = vadd.f32 %v4285, 0.5
    %v4298 = vtanh.pop %v4240
    %v4299 = vtanh.pop %v4241
    %v4300 = vtanh.pop %v4248
    %v4301 = vtanh.pop %v4249
    %v4302 = vmul.f32 %v4288, %v2801
    %v4303 = vmul.f32 %v4289, %v2802
    %v4304 = vmul.f32 %v4294, %v2803
    %v4305 = vmul.f32 %v4295, %v2804
    %v4306 = vmul.f32 %v4286, %v4298
    %v4307 = vmul.f32 %v4287, %v4299
    %v4308 = vmul.f32 %v4292, %v4300
    %v4309 = vmul.f32 %v4293, %v4301
    %v4310 = vadd.f32 %v4302, %v4306
    %v4311 = vadd.f32 %v4303, %v4307
    %v4312 = vadd.f32 %v4304, %v4308
    %v4313 = vadd.f32 %v4305, %v4309
    %v4314 = vtanh.pop %v4310
    %v4315 = vtanh.pop %v4311
    %v4316 = vtanh.pop %v4312
    %v4317 = vtanh.pop %v4313
    %v4318 = vmul.f32 %v4290, %v4314
    %v4319 = vmul.f32 %v4291, %v4315
    %v4320 = vmul.f32 %v4296, %v4316
    %v4321 = vmul.f32 %v4297, %v4317
    %v4322 = vpack.c.bf16 %v4320, %v4318
    %v4323 = vpack.c.bf16 %v4321, %v4319
    %4324 = vmatpush.bf16.msra.mxu0 %v3255
    %4325 = vmatpush.bf16.msra.mxu0 %v3247
    %4326 = vmatpush.bf16.msra.mxu0 %v3239
    %4327 = vmatpush.bf16.msra.mxu0 %v3231
    %4328 = vmatpush.bf16.msra.mxu0 %v3223
    %4329 = vmatpush.bf16.msra.mxu0 %v3215
    %4330 = vmatpush.bf16.msra.mxu0 %v3207
    %4331 = vmatpush.bf16.msra.mxu0 %v3199
    %4332 = vmatmul.bf16.gmra.mxu0 %v4322
    %v4333 = vpop.f32.mrf.mxu0
    %v4334 = vadd.f32 %v3793, %v4333
    %v4335 = vpop.f32.mrf.mxu0
    %v4336 = vadd.f32 %v3795, %v4335
    %4337 = vdwg.mxu0
    %4338 = vmatpush.bf16.msra.mxu0 %v3319
    %4339 = vmatpush.bf16.msra.mxu0 %v3311
    %4340 = vmatpush.bf16.msra.mxu0 %v3303
    %4341 = vmatpush.bf16.msra.mxu0 %v3295
    %4342 = vmatpush.bf16.msra.mxu0 %v3287
    %4343 = vmatpush.bf16.msra.mxu0 %v3279
    %4344 = vmatpush.bf16.msra.mxu0 %v3271
    %4345 = vmatpush.bf16.msra.mxu0 %v3263
    %4346 = vmatmul.bf16.gmra.mxu0 %v4323
    %v4347 = vpop.f32.mrf.mxu0
    %v4348 = vadd.f32 %v4334, %v4347
    %v4349 = vpop.f32.mrf.mxu0
    %v4350 = vadd.f32 %v4336, %v4349
    %4351 = vdwg.mxu0
    %4352 = vmatpush.bf16.msra.mxu0 %v3256
    %4353 = vmatpush.bf16.msra.mxu0 %v3248
    %4354 = vmatpush.bf16.msra.mxu0 %v3240
    %4355 = vmatpush.bf16.msra.mxu0 %v3232
    %4356 = vmatpush.bf16.msra.mxu0 %v3224
    %4357 = vmatpush.bf16.msra.mxu0 %v3216
    %4358 = vmatpush.bf16.msra.mxu0 %v3208
    %4359 = vmatpush.bf16.msra.mxu0 %v3200
    %4360 = vmatmul.bf16.gmra.mxu0 %v4322
    %v4361 = vpop.f32.mrf.mxu0
    %v4362 = vadd.f32 %v3821, %v4361
    %v4363 = vpop.f32.mrf.mxu0
    %v4364 = vadd.f32 %v3823, %v4363
    %4365 = vdwg.mxu0
    %4366 = vmatpush.bf16.msra.mxu0 %v3320
    %4367 = vmatpush.bf16.msra.mxu0 %v3312
    %4368 = vmatpush.bf16.msra.mxu0 %v3304
    %4369 = vmatpush.bf16.msra.mxu0 %v3296
    %4370 = vmatpush.bf16.msra.mxu0 %v3288
    %4371 = vmatpush.bf16.msra.mxu0 %v3280
    %4372 = vmatpush.bf16.msra.mxu0 %v3272
    %4373 = vmatpush.bf16.msra.mxu0 %v3264
    %4374 = vmatmul.bf16.gmra.mxu0 %v4323
    %v4375 = vpop.f32.mrf.mxu0
    %v4376 = vadd.f32 %v4362, %v4375
    %v4377 = vpop.f32.mrf.mxu0
    %v4378 = vadd.f32 %v4364, %v4377
    %4379 = vdwg.mxu0
    %4380 = vmatpush.bf16.msra.mxu0 %v3257
    %4381 = vmatpush.bf16.msra.mxu0 %v3249
    %4382 = vmatpush.bf16.msra.mxu0 %v3241
    %4383 = vmatpush.bf16.msra.mxu0 %v3233
    %4384 = vmatpush.bf16.msra.mxu0 %v3225
    %4385 = vmatpush.bf16.msra.mxu0 %v3217
    %4386 = vmatpush.bf16.msra.mxu0 %v3209
    %4387 = vmatpush.bf16.msra.mxu0 %v3201
    %4388 = vmatmul.bf16.gmra.mxu0 %v4322
    %v4389 = vpop.f32.mrf.mxu0
    %v4390 = vadd.f32 %v3849, %v4389
    %v4391 = vpop.f32.mrf.mxu0
    %v4392 = vadd.f32 %v3851, %v4391
    %4393 = vdwg.mxu0
    %4394 = vmatpush.bf16.msra.mxu0 %v3321
    %4395 = vmatpush.bf16.msra.mxu0 %v3313
    %4396 = vmatpush.bf16.msra.mxu0 %v3305
    %4397 = vmatpush.bf16.msra.mxu0 %v3297
    %4398 = vmatpush.bf16.msra.mxu0 %v3289
    %4399 = vmatpush.bf16.msra.mxu0 %v3281
    %4400 = vmatpush.bf16.msra.mxu0 %v3273
    %4401 = vmatpush.bf16.msra.mxu0 %v3265
    %4402 = vmatmul.bf16.gmra.mxu0 %v4323
    %v4403 = vpop.f32.mrf.mxu0
    %v4404 = vadd.f32 %v4390, %v4403
    %v4405 = vpop.f32.mrf.mxu0
    %v4406 = vadd.f32 %v4392, %v4405
    %4407 = vdwg.mxu0
    %4408 = vmatpush.bf16.msra.mxu0 %v3258
    %4409 = vmatpush.bf16.msra.mxu0 %v3250
    %4410 = vmatpush.bf16.msra.mxu0 %v3242
    %4411 = vmatpush.bf16.msra.mxu0 %v3234
    %4412 = vmatpush.bf16.msra.mxu0 %v3226
    %4413 = vmatpush.bf16.msra.mxu0 %v3218
    %4414 = vmatpush.bf16.msra.mxu0 %v3210
    %4415 = vmatpush.bf16.msra.mxu0 %v3202
    %4416 = vmatmul.bf16.gmra.mxu0 %v4322
    %v4417 = vpop.f32.mrf.mxu0
    %v4418 = vadd.f32 %v3877, %v4417
    %v4419 = vpop.f32.mrf.mxu0
    %v4420 = vadd.f32 %v3879, %v4419
    %4421 = vdwg.mxu0
    %4422 = vmatpush.bf16.msra.mxu0 %v3322
    %4423 = vmatpush.bf16.msra.mxu0 %v3314
    %4424 = vmatpush.bf16.msra.mxu0 %v3306
    %4425 = vmatpush.bf16.msra.mxu0 %v3298
    %4426 = vmatpush.bf16.msra.mxu0 %v3290
    %4427 = vmatpush.bf16.msra.mxu0 %v3282
    %4428 = vmatpush.bf16.msra.mxu0 %v3274
    %4429 = vmatpush.bf16.msra.mxu0 %v3266
    %4430 = vmatmul.bf16.gmra.mxu0 %v4323
    %v4431 = vpop.f32.mrf.mxu0
    %v4432 = vadd.f32 %v4418, %v4431
    %v4433 = vpop.f32.mrf.mxu0
    %v4434 = vadd.f32 %v4420, %v4433
    %4435 = vdwg.mxu0
    %4436 = vmatpush.bf16.msra.mxu0 %v3259
    %4437 = vmatpush.bf16.msra.mxu0 %v3251
    %4438 = vmatpush.bf16.msra.mxu0 %v3243
    %4439 = vmatpush.bf16.msra.mxu0 %v3235
    %4440 = vmatpush.bf16.msra.mxu0 %v3227
    %4441 = vmatpush.bf16.msra.mxu0 %v3219
    %4442 = vmatpush.bf16.msra.mxu0 %v3211
    %4443 = vmatpush.bf16.msra.mxu0 %v3203
    %4444 = vmatmul.bf16.gmra.mxu0 %v4322
    %v4445 = vpop.f32.mrf.mxu0
    %v4446 = vadd.f32 %v3905, %v4445
    %v4447 = vpop.f32.mrf.mxu0
    %v4448 = vadd.f32 %v3907, %v4447
    %4449 = vdwg.mxu0
    %4450 = vmatpush.bf16.msra.mxu0 %v3323
    %4451 = vmatpush.bf16.msra.mxu0 %v3315
    %4452 = vmatpush.bf16.msra.mxu0 %v3307
    %4453 = vmatpush.bf16.msra.mxu0 %v3299
    %4454 = vmatpush.bf16.msra.mxu0 %v3291
    %4455 = vmatpush.bf16.msra.mxu0 %v3283
    %4456 = vmatpush.bf16.msra.mxu0 %v3275
    %4457 = vmatpush.bf16.msra.mxu0 %v3267
    %4458 = vmatmul.bf16.gmra.mxu0 %v4323
    %v4459 = vpop.f32.mrf.mxu0
    %v4460 = vadd.f32 %v4446, %v4459
    %v4461 = vpop.f32.mrf.mxu0
    %v4462 = vadd.f32 %v4448, %v4461
    %4463 = vdwg.mxu0
    %4464 = vmatpush.bf16.msra.mxu0 %v3260
    %4465 = vmatpush.bf16.msra.mxu0 %v3252
    %4466 = vmatpush.bf16.msra.mxu0 %v3244
    %4467 = vmatpush.bf16.msra.mxu0 %v3236
    %4468 = vmatpush.bf16.msra.mxu0 %v3228
    %4469 = vmatpush.bf16.msra.mxu0 %v3220
    %4470 = vmatpush.bf16.msra.mxu0 %v3212
    %4471 = vmatpush.bf16.msra.mxu0 %v3204
    %4472 = vmatmul.bf16.gmra.mxu0 %v4322
    %v4473 = vpop.f32.mrf.mxu0
    %v4474 = vadd.f32 %v3933, %v4473
    %v4475 = vpop.f32.mrf.mxu0
    %v4476 = vadd.f32 %v3935, %v4475
    %4477 = vdwg.mxu0
    %4478 = vmatpush.bf16.msra.mxu0 %v3324
    %4479 = vmatpush.bf16.msra.mxu0 %v3316
    %4480 = vmatpush.bf16.msra.mxu0 %v3308
    %4481 = vmatpush.bf16.msra.mxu0 %v3300
    %4482 = vmatpush.bf16.msra.mxu0 %v3292
    %4483 = vmatpush.bf16.msra.mxu0 %v3284
    %4484 = vmatpush.bf16.msra.mxu0 %v3276
    %4485 = vmatpush.bf16.msra.mxu0 %v3268
    %4486 = vmatmul.bf16.gmra.mxu0 %v4323
    %v4487 = vpop.f32.mrf.mxu0
    %v4488 = vadd.f32 %v4474, %v4487
    %v4489 = vpop.f32.mrf.mxu0
    %v4490 = vadd.f32 %v4476, %v4489
    %4491 = vdwg.mxu0
    %4492 = vmatpush.bf16.msra.mxu0 %v3261
    %4493 = vmatpush.bf16.msra.mxu0 %v3253
    %4494 = vmatpush.bf16.msra.mxu0 %v3245
    %4495 = vmatpush.bf16.msra.mxu0 %v3237
    %4496 = vmatpush.bf16.msra.mxu0 %v3229
    %4497 = vmatpush.bf16.msra.mxu0 %v3221
    %4498 = vmatpush.bf16.msra.mxu0 %v3213
    %4499 = vmatpush.bf16.msra.mxu0 %v3205
    %4500 = vmatmul.bf16.gmra.mxu0 %v4322
    %v4501 = vpop.f32.mrf.mxu0
    %v4502 = vadd.f32 %v3961, %v4501
    %v4503 = vpop.f32.mrf.mxu0
    %v4504 = vadd.f32 %v3963, %v4503
    %4505 = vdwg.mxu0
    %4506 = vmatpush.bf16.msra.mxu0 %v3325
    %4507 = vmatpush.bf16.msra.mxu0 %v3317
    %4508 = vmatpush.bf16.msra.mxu0 %v3309
    %4509 = vmatpush.bf16.msra.mxu0 %v3301
    %4510 = vmatpush.bf16.msra.mxu0 %v3293
    %4511 = vmatpush.bf16.msra.mxu0 %v3285
    %4512 = vmatpush.bf16.msra.mxu0 %v3277
    %4513 = vmatpush.bf16.msra.mxu0 %v3269
    %4514 = vmatmul.bf16.gmra.mxu0 %v4323
    %v4515 = vpop.f32.mrf.mxu0
    %v4516 = vadd.f32 %v4502, %v4515
    %v4517 = vpop.f32.mrf.mxu0
    %v4518 = vadd.f32 %v4504, %v4517
    %4519 = vdwg.mxu0
    %4520 = vmatpush.bf16.msra.mxu0 %v3262
    %4521 = vmatpush.bf16.msra.mxu0 %v3254
    %4522 = vmatpush.bf16.msra.mxu0 %v3246
    %4523 = vmatpush.bf16.msra.mxu0 %v3238
    %4524 = vmatpush.bf16.msra.mxu0 %v3230
    %4525 = vmatpush.bf16.msra.mxu0 %v3222
    %4526 = vmatpush.bf16.msra.mxu0 %v3214
    %4527 = vmatpush.bf16.msra.mxu0 %v3206
    %4528 = vmatmul.bf16.gmra.mxu0 %v4322
    %v4529 = vpop.f32.mrf.mxu0
    %v4530 = vadd.f32 %v3989, %v4529
    %v4531 = vpop.f32.mrf.mxu0
    %v4532 = vadd.f32 %v3991, %v4531
    %4533 = vdwg.mxu0
    %4534 = vmatpush.bf16.msra.mxu0 %v3326
    %4535 = vmatpush.bf16.msra.mxu0 %v3318
    %4536 = vmatpush.bf16.msra.mxu0 %v3310
    %4537 = vmatpush.bf16.msra.mxu0 %v3302
    %4538 = vmatpush.bf16.msra.mxu0 %v3294
    %4539 = vmatpush.bf16.msra.mxu0 %v3286
    %4540 = vmatpush.bf16.msra.mxu0 %v3278
    %4541 = vmatpush.bf16.msra.mxu0 %v3270
    %4542 = vmatmul.bf16.gmra.mxu0 %v4323
    %v4543 = vpop.f32.mrf.mxu0
    %v4544 = vadd.f32 %v4530, %v4543
    %v4545 = vpop.f32.mrf.mxu0
    %v4546 = vadd.f32 %v4532, %v4545
    %4547 = vdwg.mxu0
    %v4548 = vadd.f32 %v4348, %v449
    %v4549 = vadd.f32 %v4376, %v450
    %v4550 = vadd.f32 %v4404, %v451
    %v4551 = vadd.f32 %v4432, %v452
    %v4552 = vadd.f32 %v4460, %v453
    %v4553 = vadd.f32 %v4488, %v454
    %v4554 = vadd.f32 %v4516, %v455
    %v4555 = vadd.f32 %v4544, %v456
    %v4556 = vadd.f32 %v4350, %v449
    %v4557 = vadd.f32 %v4378, %v450
    %v4558 = vadd.f32 %v4406, %v451
    %v4559 = vadd.f32 %v4434, %v452
    %v4560 = vadd.f32 %v4462, %v453
    %v4561 = vadd.f32 %v4490, %v454
    %v4562 = vadd.f32 %v4518, %v455
    %v4563 = vadd.f32 %v4546, %v456
    %v4564 = vmul.f32 %v4548, 0.5
    %v4565 = vmul.f32 %v4549, 0.5
    %v4566 = vmul.f32 %v4550, 0.5
    %v4567 = vmul.f32 %v4551, 0.5
    %v4568 = vmul.f32 %v4552, 0.5
    %v4569 = vmul.f32 %v4553, 0.5
    %v4570 = vmul.f32 %v4556, 0.5
    %v4571 = vmul.f32 %v4557, 0.5
    %v4572 = vmul.f32 %v4558, 0.5
    %v4573 = vmul.f32 %v4559, 0.5
    %v4574 = vmul.f32 %v4560, 0.5
    %v4575 = vmul.f32 %v4561, 0.5
    %v4576 = vtanh.pop %v4564
    %v4577 = vtanh.pop %v4565
    %v4578 = vtanh.pop %v4566
    %v4579 = vtanh.pop %v4567
    %v4580 = vtanh.pop %v4568
    %v4581 = vtanh.pop %v4569
    %v4582 = vtanh.pop %v4570
    %v4583 = vtanh.pop %v4571
    %v4584 = vtanh.pop %v4572
    %v4585 = vtanh.pop %v4573
    %v4586 = vtanh.pop %v4574
    %v4587 = vtanh.pop %v4575
    %v4588 = vmul.f32 %v4576, 0.5
    %v4589 = vmul.f32 %v4577, 0.5
    %v4590 = vmul.f32 %v4578, 0.5
    %v4591 = vmul.f32 %v4579, 0.5
    %v4592 = vmul.f32 %v4580, 0.5
    %v4593 = vmul.f32 %v4581, 0.5
    %v4594 = vmul.f32 %v4582, 0.5
    %v4595 = vmul.f32 %v4583, 0.5
    %v4596 = vmul.f32 %v4584, 0.5
    %v4597 = vmul.f32 %v4585, 0.5
    %v4598 = vmul.f32 %v4586, 0.5
    %v4599 = vmul.f32 %v4587, 0.5
    %v4600 = vadd.f32 %v4588, 0.5
    %v4601 = vadd.f32 %v4589, 0.5
    %v4602 = vadd.f32 %v4590, 0.5
    %v4603 = vadd.f32 %v4591, 0.5
    %v4604 = vadd.f32 %v4592, 0.5
    %v4605 = vadd.f32 %v4593, 0.5
    %v4606 = vadd.f32 %v4594, 0.5
    %v4607 = vadd.f32 %v4595, 0.5
    %v4608 = vadd.f32 %v4596, 0.5
    %v4609 = vadd.f32 %v4597, 0.5
    %v4610 = vadd.f32 %v4598, 0.5
    %v4611 = vadd.f32 %v4599, 0.5
    %v4612 = vtanh.pop %v4554
    %v4613 = vtanh.pop %v4555
    %v4614 = vtanh.pop %v4562
    %v4615 = vtanh.pop %v4563
    %v4616 = vmul.f32 %v4602, %v3755
    %v4617 = vmul.f32 %v4603, %v3756
    %v4618 = vmul.f32 %v4608, %v3757
    %v4619 = vmul.f32 %v4609, %v3758
    %v4620 = vmul.f32 %v4600, %v4612
    %v4621 = vmul.f32 %v4601, %v4613
    %v4622 = vmul.f32 %v4606, %v4614
    %v4623 = vmul.f32 %v4607, %v4615
    %v4624 = vadd.f32 %v4616, %v4620
    %v4625 = vadd.f32 %v4617, %v4621
    %v4626 = vadd.f32 %v4618, %v4622
    %v4627 = vadd.f32 %v4619, %v4623
    %v4628 = vtanh.pop %v4624
    %v4629 = vtanh.pop %v4625
    %v4630 = vtanh.pop %v4626
    %v4631 = vtanh.pop %v4627
    %v4632 = vmul.f32 %v4604, %v4628
    %v4633 = vmul.f32 %v4605, %v4629
    %v4634 = vmul.f32 %v4610, %v4630
    %v4635 = vmul.f32 %v4611, %v4631
    %v4636 = vpack.c.bf16 %v4634, %v4632
    %v4637 = vpack.c.bf16 %v4635, %v4633
    %4638 = vmatpush.bf16.msra.mxu0 %v1421
    %4639 = vmatpush.bf16.msra.mxu0 %v1413
    %4640 = vmatpush.bf16.msra.mxu0 %v1405
    %4641 = vmatpush.bf16.msra.mxu0 %v1397
    %4642 = vmatpush.bf16.msra.mxu0 %v1389
    %4643 = vmatpush.bf16.msra.mxu0 %v1381
    %4644 = vmatpush.bf16.msra.mxu0 %v1373
    %4645 = vmatpush.bf16.msra.mxu0 %v1365
    %4646 = vmatmul.bf16.gmra.mxu0 %v4636
    %v4647 = vpop.f32.mrf.mxu0
    %v4648 = vadd.f32 0.0, %v4647
    %v4649 = vpop.f32.mrf.mxu0
    %v4650 = vadd.f32 0.0, %v4649
    %4651 = vdwg.mxu0
    %4652 = vmatpush.bf16.msra.mxu0 %v1485
    %4653 = vmatpush.bf16.msra.mxu0 %v1477
    %4654 = vmatpush.bf16.msra.mxu0 %v1469
    %4655 = vmatpush.bf16.msra.mxu0 %v1461
    %4656 = vmatpush.bf16.msra.mxu0 %v1453
    %4657 = vmatpush.bf16.msra.mxu0 %v1445
    %4658 = vmatpush.bf16.msra.mxu0 %v1437
    %4659 = vmatpush.bf16.msra.mxu0 %v1429
    %4660 = vmatmul.bf16.gmra.mxu0 %v4637
    %v4661 = vpop.f32.mrf.mxu0
    %v4662 = vadd.f32 %v4648, %v4661
    %v4663 = vpop.f32.mrf.mxu0
    %v4664 = vadd.f32 %v4650, %v4663
    %4665 = vdwg.mxu0
    %4666 = vmatpush.bf16.msra.mxu0 %v1422
    %4667 = vmatpush.bf16.msra.mxu0 %v1414
    %4668 = vmatpush.bf16.msra.mxu0 %v1406
    %4669 = vmatpush.bf16.msra.mxu0 %v1398
    %4670 = vmatpush.bf16.msra.mxu0 %v1390
    %4671 = vmatpush.bf16.msra.mxu0 %v1382
    %4672 = vmatpush.bf16.msra.mxu0 %v1374
    %4673 = vmatpush.bf16.msra.mxu0 %v1366
    %4674 = vmatmul.bf16.gmra.mxu0 %v4636
    %v4675 = vpop.f32.mrf.mxu0
    %v4676 = vadd.f32 0.0, %v4675
    %v4677 = vpop.f32.mrf.mxu0
    %v4678 = vadd.f32 0.0, %v4677
    %4679 = vdwg.mxu0
    %4680 = vmatpush.bf16.msra.mxu0 %v1486
    %4681 = vmatpush.bf16.msra.mxu0 %v1478
    %4682 = vmatpush.bf16.msra.mxu0 %v1470
    %4683 = vmatpush.bf16.msra.mxu0 %v1462
    %4684 = vmatpush.bf16.msra.mxu0 %v1454
    %4685 = vmatpush.bf16.msra.mxu0 %v1446
    %4686 = vmatpush.bf16.msra.mxu0 %v1438
    %4687 = vmatpush.bf16.msra.mxu0 %v1430
    %4688 = vmatmul.bf16.gmra.mxu0 %v4637
    %v4689 = vpop.f32.mrf.mxu0
    %v4690 = vadd.f32 %v4676, %v4689
    %v4691 = vpop.f32.mrf.mxu0
    %v4692 = vadd.f32 %v4678, %v4691
    %4693 = vdwg.mxu0
    %4694 = vmatpush.bf16.msra.mxu0 %v1423
    %4695 = vmatpush.bf16.msra.mxu0 %v1415
    %4696 = vmatpush.bf16.msra.mxu0 %v1407
    %4697 = vmatpush.bf16.msra.mxu0 %v1399
    %4698 = vmatpush.bf16.msra.mxu0 %v1391
    %4699 = vmatpush.bf16.msra.mxu0 %v1383
    %4700 = vmatpush.bf16.msra.mxu0 %v1375
    %4701 = vmatpush.bf16.msra.mxu0 %v1367
    %4702 = vmatmul.bf16.gmra.mxu0 %v4636
    %v4703 = vpop.f32.mrf.mxu0
    %v4704 = vadd.f32 0.0, %v4703
    %v4705 = vpop.f32.mrf.mxu0
    %v4706 = vadd.f32 0.0, %v4705
    %4707 = vdwg.mxu0
    %4708 = vmatpush.bf16.msra.mxu0 %v1487
    %4709 = vmatpush.bf16.msra.mxu0 %v1479
    %4710 = vmatpush.bf16.msra.mxu0 %v1471
    %4711 = vmatpush.bf16.msra.mxu0 %v1463
    %4712 = vmatpush.bf16.msra.mxu0 %v1455
    %4713 = vmatpush.bf16.msra.mxu0 %v1447
    %4714 = vmatpush.bf16.msra.mxu0 %v1439
    %4715 = vmatpush.bf16.msra.mxu0 %v1431
    %4716 = vmatmul.bf16.gmra.mxu0 %v4637
    %v4717 = vpop.f32.mrf.mxu0
    %v4718 = vadd.f32 %v4704, %v4717
    %v4719 = vpop.f32.mrf.mxu0
    %v4720 = vadd.f32 %v4706, %v4719
    %4721 = vdwg.mxu0
    %4722 = vmatpush.bf16.msra.mxu0 %v1424
    %4723 = vmatpush.bf16.msra.mxu0 %v1416
    %4724 = vmatpush.bf16.msra.mxu0 %v1408
    %4725 = vmatpush.bf16.msra.mxu0 %v1400
    %4726 = vmatpush.bf16.msra.mxu0 %v1392
    %4727 = vmatpush.bf16.msra.mxu0 %v1384
    %4728 = vmatpush.bf16.msra.mxu0 %v1376
    %4729 = vmatpush.bf16.msra.mxu0 %v1368
    %4730 = vmatmul.bf16.gmra.mxu0 %v4636
    %v4731 = vpop.f32.mrf.mxu0
    %v4732 = vadd.f32 0.0, %v4731
    %v4733 = vpop.f32.mrf.mxu0
    %v4734 = vadd.f32 0.0, %v4733
    %4735 = vdwg.mxu0
    %4736 = vmatpush.bf16.msra.mxu0 %v1488
    %4737 = vmatpush.bf16.msra.mxu0 %v1480
    %4738 = vmatpush.bf16.msra.mxu0 %v1472
    %4739 = vmatpush.bf16.msra.mxu0 %v1464
    %4740 = vmatpush.bf16.msra.mxu0 %v1456
    %4741 = vmatpush.bf16.msra.mxu0 %v1448
    %4742 = vmatpush.bf16.msra.mxu0 %v1440
    %4743 = vmatpush.bf16.msra.mxu0 %v1432
    %4744 = vmatmul.bf16.gmra.mxu0 %v4637
    %v4745 = vpop.f32.mrf.mxu0
    %v4746 = vadd.f32 %v4732, %v4745
    %v4747 = vpop.f32.mrf.mxu0
    %v4748 = vadd.f32 %v4734, %v4747
    %4749 = vdwg.mxu0
    %4750 = vmatpush.bf16.msra.mxu0 %v1425
    %4751 = vmatpush.bf16.msra.mxu0 %v1417
    %4752 = vmatpush.bf16.msra.mxu0 %v1409
    %4753 = vmatpush.bf16.msra.mxu0 %v1401
    %4754 = vmatpush.bf16.msra.mxu0 %v1393
    %4755 = vmatpush.bf16.msra.mxu0 %v1385
    %4756 = vmatpush.bf16.msra.mxu0 %v1377
    %4757 = vmatpush.bf16.msra.mxu0 %v1369
    %4758 = vmatmul.bf16.gmra.mxu0 %v4636
    %v4759 = vpop.f32.mrf.mxu0
    %v4760 = vadd.f32 0.0, %v4759
    %v4761 = vpop.f32.mrf.mxu0
    %v4762 = vadd.f32 0.0, %v4761
    %4763 = vdwg.mxu0
    %4764 = vmatpush.bf16.msra.mxu0 %v1489
    %4765 = vmatpush.bf16.msra.mxu0 %v1481
    %4766 = vmatpush.bf16.msra.mxu0 %v1473
    %4767 = vmatpush.bf16.msra.mxu0 %v1465
    %4768 = vmatpush.bf16.msra.mxu0 %v1457
    %4769 = vmatpush.bf16.msra.mxu0 %v1449
    %4770 = vmatpush.bf16.msra.mxu0 %v1441
    %4771 = vmatpush.bf16.msra.mxu0 %v1433
    %4772 = vmatmul.bf16.gmra.mxu0 %v4637
    %v4773 = vpop.f32.mrf.mxu0
    %v4774 = vadd.f32 %v4760, %v4773
    %v4775 = vpop.f32.mrf.mxu0
    %v4776 = vadd.f32 %v4762, %v4775
    %4777 = vdwg.mxu0
    %4778 = vmatpush.bf16.msra.mxu0 %v1426
    %4779 = vmatpush.bf16.msra.mxu0 %v1418
    %4780 = vmatpush.bf16.msra.mxu0 %v1410
    %4781 = vmatpush.bf16.msra.mxu0 %v1402
    %4782 = vmatpush.bf16.msra.mxu0 %v1394
    %4783 = vmatpush.bf16.msra.mxu0 %v1386
    %4784 = vmatpush.bf16.msra.mxu0 %v1378
    %4785 = vmatpush.bf16.msra.mxu0 %v1370
    %4786 = vmatmul.bf16.gmra.mxu0 %v4636
    %v4787 = vpop.f32.mrf.mxu0
    %v4788 = vadd.f32 0.0, %v4787
    %v4789 = vpop.f32.mrf.mxu0
    %v4790 = vadd.f32 0.0, %v4789
    %4791 = vdwg.mxu0
    %4792 = vmatpush.bf16.msra.mxu0 %v1490
    %4793 = vmatpush.bf16.msra.mxu0 %v1482
    %4794 = vmatpush.bf16.msra.mxu0 %v1474
    %4795 = vmatpush.bf16.msra.mxu0 %v1466
    %4796 = vmatpush.bf16.msra.mxu0 %v1458
    %4797 = vmatpush.bf16.msra.mxu0 %v1450
    %4798 = vmatpush.bf16.msra.mxu0 %v1442
    %4799 = vmatpush.bf16.msra.mxu0 %v1434
    %4800 = vmatmul.bf16.gmra.mxu0 %v4637
    %v4801 = vpop.f32.mrf.mxu0
    %v4802 = vadd.f32 %v4788, %v4801
    %v4803 = vpop.f32.mrf.mxu0
    %v4804 = vadd.f32 %v4790, %v4803
    %4805 = vdwg.mxu0
    %4806 = vmatpush.bf16.msra.mxu0 %v1427
    %4807 = vmatpush.bf16.msra.mxu0 %v1419
    %4808 = vmatpush.bf16.msra.mxu0 %v1411
    %4809 = vmatpush.bf16.msra.mxu0 %v1403
    %4810 = vmatpush.bf16.msra.mxu0 %v1395
    %4811 = vmatpush.bf16.msra.mxu0 %v1387
    %4812 = vmatpush.bf16.msra.mxu0 %v1379
    %4813 = vmatpush.bf16.msra.mxu0 %v1371
    %4814 = vmatmul.bf16.gmra.mxu0 %v4636
    %v4815 = vpop.f32.mrf.mxu0
    %v4816 = vadd.f32 0.0, %v4815
    %v4817 = vpop.f32.mrf.mxu0
    %v4818 = vadd.f32 0.0, %v4817
    %4819 = vdwg.mxu0
    %4820 = vmatpush.bf16.msra.mxu0 %v1491
    %4821 = vmatpush.bf16.msra.mxu0 %v1483
    %4822 = vmatpush.bf16.msra.mxu0 %v1475
    %4823 = vmatpush.bf16.msra.mxu0 %v1467
    %4824 = vmatpush.bf16.msra.mxu0 %v1459
    %4825 = vmatpush.bf16.msra.mxu0 %v1451
    %4826 = vmatpush.bf16.msra.mxu0 %v1443
    %4827 = vmatpush.bf16.msra.mxu0 %v1435
    %4828 = vmatmul.bf16.gmra.mxu0 %v4637
    %v4829 = vpop.f32.mrf.mxu0
    %v4830 = vadd.f32 %v4816, %v4829
    %v4831 = vpop.f32.mrf.mxu0
    %v4832 = vadd.f32 %v4818, %v4831
    %4833 = vdwg.mxu0
    %4834 = vmatpush.bf16.msra.mxu0 %v1428
    %4835 = vmatpush.bf16.msra.mxu0 %v1420
    %4836 = vmatpush.bf16.msra.mxu0 %v1412
    %4837 = vmatpush.bf16.msra.mxu0 %v1404
    %4838 = vmatpush.bf16.msra.mxu0 %v1396
    %4839 = vmatpush.bf16.msra.mxu0 %v1388
    %4840 = vmatpush.bf16.msra.mxu0 %v1380
    %4841 = vmatpush.bf16.msra.mxu0 %v1372
    %4842 = vmatmul.bf16.gmra.mxu0 %v4636
    %v4843 = vpop.f32.mrf.mxu0
    %v4844 = vadd.f32 0.0, %v4843
    %v4845 = vpop.f32.mrf.mxu0
    %v4846 = vadd.f32 0.0, %v4845
    %4847 = vdwg.mxu0
    %4848 = vmatpush.bf16.msra.mxu0 %v1492
    %4849 = vmatpush.bf16.msra.mxu0 %v1484
    %4850 = vmatpush.bf16.msra.mxu0 %v1476
    %4851 = vmatpush.bf16.msra.mxu0 %v1468
    %4852 = vmatpush.bf16.msra.mxu0 %v1460
    %4853 = vmatpush.bf16.msra.mxu0 %v1452
    %4854 = vmatpush.bf16.msra.mxu0 %v1444
    %4855 = vmatpush.bf16.msra.mxu0 %v1436
    %4856 = vmatmul.bf16.gmra.mxu0 %v4637
    %v4857 = vpop.f32.mrf.mxu0
    %v4858 = vadd.f32 %v4844, %v4857
    %v4859 = vpop.f32.mrf.mxu0
    %v4860 = vadd.f32 %v4846, %v4859
    %4861 = vdwg.mxu0
    %s4862 = scalar_lea.vmem [#allocation2], 256
    %v4863 = vld [vmem:[%s4862] sm:$0xff]
    %v4864 = vld [vmem:[%s4862 + $0x8] sm:$0xff]
    %v4865 = vld [vmem:[%s4862 + $0x10] sm:$0xff]
    %v4866 = vld [vmem:[%s4862 + $0x18] sm:$0xff]
    %v4867 = vld [vmem:[%s4862 + $0x20] sm:$0xff]
    %v4868 = vld [vmem:[%s4862 + $0x28] sm:$0xff]
    %v4869 = vld [vmem:[%s4862 + $0x30] sm:$0xff]
    %v4870 = vld [vmem:[%s4862 + $0x38] sm:$0xff]
    %v4871 = vld [vmem:[%s4862 + $0x40] sm:$0xff]
    %v4872 = vld [vmem:[%s4862 + $0x48] sm:$0xff]
    %v4873 = vld [vmem:[%s4862 + $0x50] sm:$0xff]
    %v4874 = vld [vmem:[%s4862 + $0x58] sm:$0xff]
    %v4875 = vld [vmem:[%s4862 + $0x60] sm:$0xff]
    %v4876 = vld [vmem:[%s4862 + $0x68] sm:$0xff]
    %v4877 = vld [vmem:[%s4862 + $0x70] sm:$0xff]
    %v4878 = vld [vmem:[%s4862 + $0x78] sm:$0xff]
    %4879 = vmatpush.bf16.msra.mxu0 %v2301
    %4880 = vmatpush.bf16.msra.mxu0 %v2293
    %4881 = vmatpush.bf16.msra.mxu0 %v2285
    %4882 = vmatpush.bf16.msra.mxu0 %v2277
    %4883 = vmatpush.bf16.msra.mxu0 %v2269
    %4884 = vmatpush.bf16.msra.mxu0 %v2261
    %4885 = vmatpush.bf16.msra.mxu0 %v2253
    %4886 = vmatpush.bf16.msra.mxu0 %v2245
    %4887 = vmatmul.bf16.gmra.mxu0 %v4322
    %v4888 = vpop.f32.mrf.mxu0
    %v4889 = vadd.f32 0.0, %v4888
    %v4890 = vpop.f32.mrf.mxu0
    %v4891 = vadd.f32 0.0, %v4890
    %4892 = vdwg.mxu0
    %4893 = vmatpush.bf16.msra.mxu0 %v2365
    %4894 = vmatpush.bf16.msra.mxu0 %v2357
    %4895 = vmatpush.bf16.msra.mxu0 %v2349
    %4896 = vmatpush.bf16.msra.mxu0 %v2341
    %4897 = vmatpush.bf16.msra.mxu0 %v2333
    %4898 = vmatpush.bf16.msra.mxu0 %v2325
    %4899 = vmatpush.bf16.msra.mxu0 %v2317
    %4900 = vmatpush.bf16.msra.mxu0 %v2309
    %4901 = vmatmul.bf16.gmra.mxu0 %v4323
    %v4902 = vpop.f32.mrf.mxu0
    %v4903 = vadd.f32 %v4889, %v4902
    %v4904 = vpop.f32.mrf.mxu0
    %v4905 = vadd.f32 %v4891, %v4904
    %4906 = vdwg.mxu0
    %4907 = vmatpush.bf16.msra.mxu0 %v2302
    %4908 = vmatpush.bf16.msra.mxu0 %v2294
    %4909 = vmatpush.bf16.msra.mxu0 %v2286
    %4910 = vmatpush.bf16.msra.mxu0 %v2278
    %4911 = vmatpush.bf16.msra.mxu0 %v2270
    %4912 = vmatpush.bf16.msra.mxu0 %v2262
    %4913 = vmatpush.bf16.msra.mxu0 %v2254
    %4914 = vmatpush.bf16.msra.mxu0 %v2246
    %4915 = vmatmul.bf16.gmra.mxu0 %v4322
    %v4916 = vpop.f32.mrf.mxu0
    %v4917 = vadd.f32 0.0, %v4916
    %v4918 = vpop.f32.mrf.mxu0
    %v4919 = vadd.f32 0.0, %v4918
    %4920 = vdwg.mxu0
    %4921 = vmatpush.bf16.msra.mxu0 %v2366
    %4922 = vmatpush.bf16.msra.mxu0 %v2358
    %4923 = vmatpush.bf16.msra.mxu0 %v2350
    %4924 = vmatpush.bf16.msra.mxu0 %v2342
    %4925 = vmatpush.bf16.msra.mxu0 %v2334
    %4926 = vmatpush.bf16.msra.mxu0 %v2326
    %4927 = vmatpush.bf16.msra.mxu0 %v2318
    %4928 = vmatpush.bf16.msra.mxu0 %v2310
    %4929 = vmatmul.bf16.gmra.mxu0 %v4323
    %v4930 = vpop.f32.mrf.mxu0
    %v4931 = vadd.f32 %v4917, %v4930
    %v4932 = vpop.f32.mrf.mxu0
    %v4933 = vadd.f32 %v4919, %v4932
    %4934 = vdwg.mxu0
    %4935 = vmatpush.bf16.msra.mxu0 %v2303
    %4936 = vmatpush.bf16.msra.mxu0 %v2295
    %4937 = vmatpush.bf16.msra.mxu0 %v2287
    %4938 = vmatpush.bf16.msra.mxu0 %v2279
    %4939 = vmatpush.bf16.msra.mxu0 %v2271
    %4940 = vmatpush.bf16.msra.mxu0 %v2263
    %4941 = vmatpush.bf16.msra.mxu0 %v2255
    %4942 = vmatpush.bf16.msra.mxu0 %v2247
    %4943 = vmatmul.bf16.gmra.mxu0 %v4322
    %v4944 = vpop.f32.mrf.mxu0
    %v4945 = vadd.f32 0.0, %v4944
    %v4946 = vpop.f32.mrf.mxu0
    %v4947 = vadd.f32 0.0, %v4946
    %4948 = vdwg.mxu0
    %4949 = vmatpush.bf16.msra.mxu0 %v2367
    %4950 = vmatpush.bf16.msra.mxu0 %v2359
    %4951 = vmatpush.bf16.msra.mxu0 %v2351
    %4952 = vmatpush.bf16.msra.mxu0 %v2343
    %4953 = vmatpush.bf16.msra.mxu0 %v2335
    %4954 = vmatpush.bf16.msra.mxu0 %v2327
    %4955 = vmatpush.bf16.msra.mxu0 %v2319
    %4956 = vmatpush.bf16.msra.mxu0 %v2311
    %4957 = vmatmul.bf16.gmra.mxu0 %v4323
    %v4958 = vpop.f32.mrf.mxu0
    %v4959 = vadd.f32 %v4945, %v4958
    %v4960 = vpop.f32.mrf.mxu0
    %v4961 = vadd.f32 %v4947, %v4960
    %4962 = vdwg.mxu0
    %4963 = vmatpush.bf16.msra.mxu0 %v2304
    %4964 = vmatpush.bf16.msra.mxu0 %v2296
    %4965 = vmatpush.bf16.msra.mxu0 %v2288
    %4966 = vmatpush.bf16.msra.mxu0 %v2280
    %4967 = vmatpush.bf16.msra.mxu0 %v2272
    %4968 = vmatpush.bf16.msra.mxu0 %v2264
    %4969 = vmatpush.bf16.msra.mxu0 %v2256
    %4970 = vmatpush.bf16.msra.mxu0 %v2248
    %4971 = vmatmul.bf16.gmra.mxu0 %v4322
    %v4972 = vpop.f32.mrf.mxu0
    %v4973 = vadd.f32 0.0, %v4972
    %v4974 = vpop.f32.mrf.mxu0
    %v4975 = vadd.f32 0.0, %v4974
    %4976 = vdwg.mxu0
    %4977 = vmatpush.bf16.msra.mxu0 %v2368
    %4978 = vmatpush.bf16.msra.mxu0 %v2360
    %4979 = vmatpush.bf16.msra.mxu0 %v2352
    %4980 = vmatpush.bf16.msra.mxu0 %v2344
    %4981 = vmatpush.bf16.msra.mxu0 %v2336
    %4982 = vmatpush.bf16.msra.mxu0 %v2328
    %4983 = vmatpush.bf16.msra.mxu0 %v2320
    %4984 = vmatpush.bf16.msra.mxu0 %v2312
    %4985 = vmatmul.bf16.gmra.mxu0 %v4323
    %v4986 = vpop.f32.mrf.mxu0
    %v4987 = vadd.f32 %v4973, %v4986
    %v4988 = vpop.f32.mrf.mxu0
    %v4989 = vadd.f32 %v4975, %v4988
    %4990 = vdwg.mxu0
    %4991 = vmatpush.bf16.msra.mxu0 %v2305
    %4992 = vmatpush.bf16.msra.mxu0 %v2297
    %4993 = vmatpush.bf16.msra.mxu0 %v2289
    %4994 = vmatpush.bf16.msra.mxu0 %v2281
    %4995 = vmatpush.bf16.msra.mxu0 %v2273
    %4996 = vmatpush.bf16.msra.mxu0 %v2265
    %4997 = vmatpush.bf16.msra.mxu0 %v2257
    %4998 = vmatpush.bf16.msra.mxu0 %v2249
    %4999 = vmatmul.bf16.gmra.mxu0 %v4322
    %v5000 = vpop.f32.mrf.mxu0
    %v5001 = vadd.f32 0.0, %v5000
    %v5002 = vpop.f32.mrf.mxu0
    %v5003 = vadd.f32 0.0, %v5002
    %5004 = vdwg.mxu0
    %5005 = vmatpush.bf16.msra.mxu0 %v2369
    %5006 = vmatpush.bf16.msra.mxu0 %v2361
    %5007 = vmatpush.bf16.msra.mxu0 %v2353
    %5008 = vmatpush.bf16.msra.mxu0 %v2345
    %5009 = vmatpush.bf16.msra.mxu0 %v2337
    %5010 = vmatpush.bf16.msra.mxu0 %v2329
    %5011 = vmatpush.bf16.msra.mxu0 %v2321
    %5012 = vmatpush.bf16.msra.mxu0 %v2313
    %5013 = vmatmul.bf16.gmra.mxu0 %v4323
    %v5014 = vpop.f32.mrf.mxu0
    %v5015 = vadd.f32 %v5001, %v5014
    %v5016 = vpop.f32.mrf.mxu0
    %v5017 = vadd.f32 %v5003, %v5016
    %5018 = vdwg.mxu0
    %5019 = vmatpush.bf16.msra.mxu0 %v2306
    %5020 = vmatpush.bf16.msra.mxu0 %v2298
    %5021 = vmatpush.bf16.msra.mxu0 %v2290
    %5022 = vmatpush.bf16.msra.mxu0 %v2282
    %5023 = vmatpush.bf16.msra.mxu0 %v2274
    %5024 = vmatpush.bf16.msra.mxu0 %v2266
    %5025 = vmatpush.bf16.msra.mxu0 %v2258
    %5026 = vmatpush.bf16.msra.mxu0 %v2250
    %5027 = vmatmul.bf16.gmra.mxu0 %v4322
    %v5028 = vpop.f32.mrf.mxu0
    %v5029 = vadd.f32 0.0, %v5028
    %v5030 = vpop.f32.mrf.mxu0
    %v5031 = vadd.f32 0.0, %v5030
    %5032 = vdwg.mxu0
    %5033 = vmatpush.bf16.msra.mxu0 %v2370
    %5034 = vmatpush.bf16.msra.mxu0 %v2362
    %5035 = vmatpush.bf16.msra.mxu0 %v2354
    %5036 = vmatpush.bf16.msra.mxu0 %v2346
    %5037 = vmatpush.bf16.msra.mxu0 %v2338
    %5038 = vmatpush.bf16.msra.mxu0 %v2330
    %5039 = vmatpush.bf16.msra.mxu0 %v2322
    %5040 = vmatpush.bf16.msra.mxu0 %v2314
    %5041 = vmatmul.bf16.gmra.mxu0 %v4323
    %v5042 = vpop.f32.mrf.mxu0
    %v5043 = vadd.f32 %v5029, %v5042
    %v5044 = vpop.f32.mrf.mxu0
    %v5045 = vadd.f32 %v5031, %v5044
    %5046 = vdwg.mxu0
    %5047 = vmatpush.bf16.msra.mxu0 %v2307
    %5048 = vmatpush.bf16.msra.mxu0 %v2299
    %5049 = vmatpush.bf16.msra.mxu0 %v2291
    %5050 = vmatpush.bf16.msra.mxu0 %v2283
    %5051 = vmatpush.bf16.msra.mxu0 %v2275
    %5052 = vmatpush.bf16.msra.mxu0 %v2267
    %5053 = vmatpush.bf16.msra.mxu0 %v2259
    %5054 = vmatpush.bf16.msra.mxu0 %v2251
    %5055 = vmatmul.bf16.gmra.mxu0 %v4322
    %v5056 = vpop.f32.mrf.mxu0
    %v5057 = vadd.f32 0.0, %v5056
    %v5058 = vpop.f32.mrf.mxu0
    %v5059 = vadd.f32 0.0, %v5058
    %5060 = vdwg.mxu0
    %5061 = vmatpush.bf16.msra.mxu0 %v2371
    %5062 = vmatpush.bf16.msra.mxu0 %v2363
    %5063 = vmatpush.bf16.msra.mxu0 %v2355
    %5064 = vmatpush.bf16.msra.mxu0 %v2347
    %5065 = vmatpush.bf16.msra.mxu0 %v2339
    %5066 = vmatpush.bf16.msra.mxu0 %v2331
    %5067 = vmatpush.bf16.msra.mxu0 %v2323
    %5068 = vmatpush.bf16.msra.mxu0 %v2315
    %5069 = vmatmul.bf16.gmra.mxu0 %v4323
    %v5070 = vpop.f32.mrf.mxu0
    %v5071 = vadd.f32 %v5057, %v5070
    %v5072 = vpop.f32.mrf.mxu0
    %v5073 = vadd.f32 %v5059, %v5072
    %5074 = vdwg.mxu0
    %5075 = vmatpush.bf16.msra.mxu0 %v2308
    %5076 = vmatpush.bf16.msra.mxu0 %v2300
    %5077 = vmatpush.bf16.msra.mxu0 %v2292
    %5078 = vmatpush.bf16.msra.mxu0 %v2284
    %5079 = vmatpush.bf16.msra.mxu0 %v2276
    %5080 = vmatpush.bf16.msra.mxu0 %v2268
    %5081 = vmatpush.bf16.msra.mxu0 %v2260
    %5082 = vmatpush.bf16.msra.mxu0 %v2252
    %5083 = vmatmul.bf16.gmra.mxu0 %v4322
    %v5084 = vpop.f32.mrf.mxu0
    %v5085 = vadd.f32 0.0, %v5084
    %v5086 = vpop.f32.mrf.mxu0
    %v5087 = vadd.f32 0.0, %v5086
    %5088 = vdwg.mxu0
    %5089 = vmatpush.bf16.msra.mxu0 %v2372
    %5090 = vmatpush.bf16.msra.mxu0 %v2364
    %5091 = vmatpush.bf16.msra.mxu0 %v2356
    %5092 = vmatpush.bf16.msra.mxu0 %v2348
    %5093 = vmatpush.bf16.msra.mxu0 %v2340
    %5094 = vmatpush.bf16.msra.mxu0 %v2332
    %5095 = vmatpush.bf16.msra.mxu0 %v2324
    %5096 = vmatpush.bf16.msra.mxu0 %v2316
    %5097 = vmatmul.bf16.gmra.mxu0 %v4323
    %v5098 = vpop.f32.mrf.mxu0
    %v5099 = vadd.f32 %v5085, %v5098
    %v5100 = vpop.f32.mrf.mxu0
    %v5101 = vadd.f32 %v5087, %v5100
    %5102 = vdwg.mxu0
    %v5103 = vadd.f32 %v4863, %v4903
    %v5104 = vadd.f32 %v4864, %v4931
    %v5105 = vadd.f32 %v4865, %v4959
    %v5106 = vadd.f32 %v4866, %v4987
    %v5107 = vadd.f32 %v4867, %v5015
    %v5108 = vadd.f32 %v4868, %v5043
    %v5109 = vadd.f32 %v4869, %v5071
    %v5110 = vadd.f32 %v4870, %v5099
    %v5111 = vadd.f32 %v4871, %v4905
    %v5112 = vadd.f32 %v4872, %v4933
    %v5113 = vadd.f32 %v4873, %v4961
    %v5114 = vadd.f32 %v4874, %v4989
    %v5115 = vadd.f32 %v4875, %v5017
    %v5116 = vadd.f32 %v4876, %v5045
    %v5117 = vadd.f32 %v4877, %v5073
    %v5118 = vadd.f32 %v4878, %v5101
    %v5119 = vmul.f32 %v5103, 0.5
    %v5120 = vmul.f32 %v5104, 0.5
    %v5121 = vmul.f32 %v5105, 0.5
    %v5122 = vmul.f32 %v5106, 0.5
    %v5123 = vmul.f32 %v5107, 0.5
    %v5124 = vmul.f32 %v5108, 0.5
    %v5125 = vmul.f32 %v5111, 0.5
    %v5126 = vmul.f32 %v5112, 0.5
    %v5127 = vmul.f32 %v5113, 0.5
    %v5128 = vmul.f32 %v5114, 0.5
    %v5129 = vmul.f32 %v5115, 0.5
    %v5130 = vmul.f32 %v5116, 0.5
    %v5131 = vtanh.pop %v5119
    %v5132 = vtanh.pop %v5120
    %v5133 = vtanh.pop %v5121
    %v5134 = vtanh.pop %v5122
    %v5135 = vtanh.pop %v5123
    %v5136 = vtanh.pop %v5124
    %v5137 = vtanh.pop %v5125
    %v5138 = vtanh.pop %v5126
    %v5139 = vtanh.pop %v5127
    %v5140 = vtanh.pop %v5128
    %v5141 = vtanh.pop %v5129
    %v5142 = vtanh.pop %v5130
    %v5143 = vmul.f32 %v5131, 0.5
    %v5144 = vmul.f32 %v5132, 0.5
    %v5145 = vmul.f32 %v5133, 0.5
    %v5146 = vmul.f32 %v5134, 0.5
    %v5147 = vmul.f32 %v5135, 0.5
    %v5148 = vmul.f32 %v5136, 0.5
    %v5149 = vmul.f32 %v5137, 0.5
    %v5150 = vmul.f32 %v5138, 0.5
    %v5151 = vmul.f32 %v5139, 0.5
    %v5152 = vmul.f32 %v5140, 0.5
    %v5153 = vmul.f32 %v5141, 0.5
    %v5154 = vmul.f32 %v5142, 0.5
    %v5155 = vadd.f32 %v5143, 0.5
    %v5156 = vadd.f32 %v5144, 0.5
    %v5157 = vadd.f32 %v5145, 0.5
    %v5158 = vadd.f32 %v5146, 0.5
    %v5159 = vadd.f32 %v5147, 0.5
    %v5160 = vadd.f32 %v5148, 0.5
    %v5161 = vadd.f32 %v5149, 0.5
    %v5162 = vadd.f32 %v5150, 0.5
    %v5163 = vadd.f32 %v5151, 0.5
    %v5164 = vadd.f32 %v5152, 0.5
    %v5165 = vadd.f32 %v5153, 0.5
    %v5166 = vadd.f32 %v5154, 0.5
    %v5167 = vtanh.pop %v5109
    %v5168 = vtanh.pop %v5110
    %v5169 = vtanh.pop %v5117
    %v5170 = vtanh.pop %v5118
    %v5171 = vmul.f32 %v5157, %v4310
    %v5172 = vmul.f32 %v5158, %v4311
    %v5173 = vmul.f32 %v5163, %v4312
    %v5174 = vmul.f32 %v5164, %v4313
    %v5175 = vmul.f32 %v5155, %v5167
    %v5176 = vmul.f32 %v5156, %v5168
    %v5177 = vmul.f32 %v5161, %v5169
    %v5178 = vmul.f32 %v5162, %v5170
    %v5179 = vadd.f32 %v5171, %v5175
    %v5180 = vadd.f32 %v5172, %v5176
    %v5181 = vadd.f32 %v5173, %v5177
    %v5182 = vadd.f32 %v5174, %v5178
    %v5183 = vtanh.pop %v5179
    %v5184 = vtanh.pop %v5180
    %v5185 = vtanh.pop %v5181
    %v5186 = vtanh.pop %v5182
    %v5187 = vmul.f32 %v5159, %v5183
    %v5188 = vmul.f32 %v5160, %v5184
    %v5189 = vmul.f32 %v5165, %v5185
    %v5190 = vmul.f32 %v5166, %v5186
    %v5191 = vpack.c.bf16 %v5189, %v5187
    %v5192 = vpack.c.bf16 %v5190, %v5188
    %5193 = vmatpush.bf16.msra.mxu0 %v3255
    %5194 = vmatpush.bf16.msra.mxu0 %v3247
    %5195 = vmatpush.bf16.msra.mxu0 %v3239
    %5196 = vmatpush.bf16.msra.mxu0 %v3231
    %5197 = vmatpush.bf16.msra.mxu0 %v3223
    %5198 = vmatpush.bf16.msra.mxu0 %v3215
    %5199 = vmatpush.bf16.msra.mxu0 %v3207
    %5200 = vmatpush.bf16.msra.mxu0 %v3199
    %5201 = vmatmul.bf16.gmra.mxu0 %v5191
    %v5202 = vpop.f32.mrf.mxu0
    %v5203 = vadd.f32 %v4662, %v5202
    %v5204 = vpop.f32.mrf.mxu0
    %v5205 = vadd.f32 %v4664, %v5204
    %5206 = vdwg.mxu0
    %5207 = vmatpush.bf16.msra.mxu0 %v3319
    %5208 = vmatpush.bf16.msra.mxu0 %v3311
    %5209 = vmatpush.bf16.msra.mxu0 %v3303
    %5210 = vmatpush.bf16.msra.mxu0 %v3295
    %5211 = vmatpush.bf16.msra.mxu0 %v3287
    %5212 = vmatpush.bf16.msra.mxu0 %v3279
    %5213 = vmatpush.bf16.msra.mxu0 %v3271
    %5214 = vmatpush.bf16.msra.mxu0 %v3263
    %5215 = vmatmul.bf16.gmra.mxu0 %v5192
    %v5216 = vpop.f32.mrf.mxu0
    %v5217 = vadd.f32 %v5203, %v5216
    %v5218 = vpop.f32.mrf.mxu0
    %v5219 = vadd.f32 %v5205, %v5218
    %5220 = vdwg.mxu0
    %5221 = vmatpush.bf16.msra.mxu0 %v3256
    %5222 = vmatpush.bf16.msra.mxu0 %v3248
    %5223 = vmatpush.bf16.msra.mxu0 %v3240
    %5224 = vmatpush.bf16.msra.mxu0 %v3232
    %5225 = vmatpush.bf16.msra.mxu0 %v3224
    %5226 = vmatpush.bf16.msra.mxu0 %v3216
    %5227 = vmatpush.bf16.msra.mxu0 %v3208
    %5228 = vmatpush.bf16.msra.mxu0 %v3200
    %5229 = vmatmul.bf16.gmra.mxu0 %v5191
    %v5230 = vpop.f32.mrf.mxu0
    %v5231 = vadd.f32 %v4690, %v5230
    %v5232 = vpop.f32.mrf.mxu0
    %v5233 = vadd.f32 %v4692, %v5232
    %5234 = vdwg.mxu0
    %5235 = vmatpush.bf16.msra.mxu0 %v3320
    %5236 = vmatpush.bf16.msra.mxu0 %v3312
    %5237 = vmatpush.bf16.msra.mxu0 %v3304
    %5238 = vmatpush.bf16.msra.mxu0 %v3296
    %5239 = vmatpush.bf16.msra.mxu0 %v3288
    %5240 = vmatpush.bf16.msra.mxu0 %v3280
    %5241 = vmatpush.bf16.msra.mxu0 %v3272
    %5242 = vmatpush.bf16.msra.mxu0 %v3264
    %5243 = vmatmul.bf16.gmra.mxu0 %v5192
    %v5244 = vpop.f32.mrf.mxu0
    %v5245 = vadd.f32 %v5231, %v5244
    %v5246 = vpop.f32.mrf.mxu0
    %v5247 = vadd.f32 %v5233, %v5246
    %5248 = vdwg.mxu0
    %5249 = vmatpush.bf16.msra.mxu0 %v3257
    %5250 = vmatpush.bf16.msra.mxu0 %v3249
    %5251 = vmatpush.bf16.msra.mxu0 %v3241
    %5252 = vmatpush.bf16.msra.mxu0 %v3233
    %5253 = vmatpush.bf16.msra.mxu0 %v3225
    %5254 = vmatpush.bf16.msra.mxu0 %v3217
    %5255 = vmatpush.bf16.msra.mxu0 %v3209
    %5256 = vmatpush.bf16.msra.mxu0 %v3201
    %5257 = vmatmul.bf16.gmra.mxu0 %v5191
    %v5258 = vpop.f32.mrf.mxu0
    %v5259 = vadd.f32 %v4718, %v5258
    %v5260 = vpop.f32.mrf.mxu0
    %v5261 = vadd.f32 %v4720, %v5260
    %5262 = vdwg.mxu0
    %5263 = vmatpush.bf16.msra.mxu0 %v3321
    %5264 = vmatpush.bf16.msra.mxu0 %v3313
    %5265 = vmatpush.bf16.msra.mxu0 %v3305
    %5266 = vmatpush.bf16.msra.mxu0 %v3297
    %5267 = vmatpush.bf16.msra.mxu0 %v3289
    %5268 = vmatpush.bf16.msra.mxu0 %v3281
    %5269 = vmatpush.bf16.msra.mxu0 %v3273
    %5270 = vmatpush.bf16.msra.mxu0 %v3265
    %5271 = vmatmul.bf16.gmra.mxu0 %v5192
    %v5272 = vpop.f32.mrf.mxu0
    %v5273 = vadd.f32 %v5259, %v5272
    %v5274 = vpop.f32.mrf.mxu0
    %v5275 = vadd.f32 %v5261, %v5274
    %5276 = vdwg.mxu0
    %5277 = vmatpush.bf16.msra.mxu0 %v3258
    %5278 = vmatpush.bf16.msra.mxu0 %v3250
    %5279 = vmatpush.bf16.msra.mxu0 %v3242
    %5280 = vmatpush.bf16.msra.mxu0 %v3234
    %5281 = vmatpush.bf16.msra.mxu0 %v3226
    %5282 = vmatpush.bf16.msra.mxu0 %v3218
    %5283 = vmatpush.bf16.msra.mxu0 %v3210
    %5284 = vmatpush.bf16.msra.mxu0 %v3202
    %5285 = vmatmul.bf16.gmra.mxu0 %v5191
    %v5286 = vpop.f32.mrf.mxu0
    %v5287 = vadd.f32 %v4746, %v5286
    %v5288 = vpop.f32.mrf.mxu0
    %v5289 = vadd.f32 %v4748, %v5288
    %5290 = vdwg.mxu0
    %5291 = vmatpush.bf16.msra.mxu0 %v3322
    %5292 = vmatpush.bf16.msra.mxu0 %v3314
    %5293 = vmatpush.bf16.msra.mxu0 %v3306
    %5294 = vmatpush.bf16.msra.mxu0 %v3298
    %5295 = vmatpush.bf16.msra.mxu0 %v3290
    %5296 = vmatpush.bf16.msra.mxu0 %v3282
    %5297 = vmatpush.bf16.msra.mxu0 %v3274
    %5298 = vmatpush.bf16.msra.mxu0 %v3266
    %5299 = vmatmul.bf16.gmra.mxu0 %v5192
    %v5300 = vpop.f32.mrf.mxu0
    %v5301 = vadd.f32 %v5287, %v5300
    %v5302 = vpop.f32.mrf.mxu0
    %v5303 = vadd.f32 %v5289, %v5302
    %5304 = vdwg.mxu0
    %5305 = vmatpush.bf16.msra.mxu0 %v3259
    %5306 = vmatpush.bf16.msra.mxu0 %v3251
    %5307 = vmatpush.bf16.msra.mxu0 %v3243
    %5308 = vmatpush.bf16.msra.mxu0 %v3235
    %5309 = vmatpush.bf16.msra.mxu0 %v3227
    %5310 = vmatpush.bf16.msra.mxu0 %v3219
    %5311 = vmatpush.bf16.msra.mxu0 %v3211
    %5312 = vmatpush.bf16.msra.mxu0 %v3203
    %5313 = vmatmul.bf16.gmra.mxu0 %v5191
    %v5314 = vpop.f32.mrf.mxu0
    %v5315 = vadd.f32 %v4774, %v5314
    %v5316 = vpop.f32.mrf.mxu0
    %v5317 = vadd.f32 %v4776, %v5316
    %5318 = vdwg.mxu0
    %5319 = vmatpush.bf16.msra.mxu0 %v3323
    %5320 = vmatpush.bf16.msra.mxu0 %v3315
    %5321 = vmatpush.bf16.msra.mxu0 %v3307
    %5322 = vmatpush.bf16.msra.mxu0 %v3299
    %5323 = vmatpush.bf16.msra.mxu0 %v3291
    %5324 = vmatpush.bf16.msra.mxu0 %v3283
    %5325 = vmatpush.bf16.msra.mxu0 %v3275
    %5326 = vmatpush.bf16.msra.mxu0 %v3267
    %5327 = vmatmul.bf16.gmra.mxu0 %v5192
    %v5328 = vpop.f32.mrf.mxu0
    %v5329 = vadd.f32 %v5315, %v5328
    %v5330 = vpop.f32.mrf.mxu0
    %v5331 = vadd.f32 %v5317, %v5330
    %5332 = vdwg.mxu0
    %5333 = vmatpush.bf16.msra.mxu0 %v3260
    %5334 = vmatpush.bf16.msra.mxu0 %v3252
    %5335 = vmatpush.bf16.msra.mxu0 %v3244
    %5336 = vmatpush.bf16.msra.mxu0 %v3236
    %5337 = vmatpush.bf16.msra.mxu0 %v3228
    %5338 = vmatpush.bf16.msra.mxu0 %v3220
    %5339 = vmatpush.bf16.msra.mxu0 %v3212
    %5340 = vmatpush.bf16.msra.mxu0 %v3204
    %5341 = vmatmul.bf16.gmra.mxu0 %v5191
    %v5342 = vpop.f32.mrf.mxu0
    %v5343 = vadd.f32 %v4802, %v5342
    %v5344 = vpop.f32.mrf.mxu0
    %v5345 = vadd.f32 %v4804, %v5344
    %5346 = vdwg.mxu0
    %5347 = vmatpush.bf16.msra.mxu0 %v3324
    %5348 = vmatpush.bf16.msra.mxu0 %v3316
    %5349 = vmatpush.bf16.msra.mxu0 %v3308
    %5350 = vmatpush.bf16.msra.mxu0 %v3300
    %5351 = vmatpush.bf16.msra.mxu0 %v3292
    %5352 = vmatpush.bf16.msra.mxu0 %v3284
    %5353 = vmatpush.bf16.msra.mxu0 %v3276
    %5354 = vmatpush.bf16.msra.mxu0 %v3268
    %5355 = vmatmul.bf16.gmra.mxu0 %v5192
    %v5356 = vpop.f32.mrf.mxu0
    %v5357 = vadd.f32 %v5343, %v5356
    %v5358 = vpop.f32.mrf.mxu0
    %v5359 = vadd.f32 %v5345, %v5358
    %5360 = vdwg.mxu0
    %5361 = vmatpush.bf16.msra.mxu0 %v3261
    %5362 = vmatpush.bf16.msra.mxu0 %v3253
    %5363 = vmatpush.bf16.msra.mxu0 %v3245
    %5364 = vmatpush.bf16.msra.mxu0 %v3237
    %5365 = vmatpush.bf16.msra.mxu0 %v3229
    %5366 = vmatpush.bf16.msra.mxu0 %v3221
    %5367 = vmatpush.bf16.msra.mxu0 %v3213
    %5368 = vmatpush.bf16.msra.mxu0 %v3205
    %5369 = vmatmul.bf16.gmra.mxu0 %v5191
    %v5370 = vpop.f32.mrf.mxu0
    %v5371 = vadd.f32 %v4830, %v5370
    %v5372 = vpop.f32.mrf.mxu0
    %v5373 = vadd.f32 %v4832, %v5372
    %5374 = vdwg.mxu0
    %5375 = vmatpush.bf16.msra.mxu0 %v3325
    %5376 = vmatpush.bf16.msra.mxu0 %v3317
    %5377 = vmatpush.bf16.msra.mxu0 %v3309
    %5378 = vmatpush.bf16.msra.mxu0 %v3301
    %5379 = vmatpush.bf16.msra.mxu0 %v3293
    %5380 = vmatpush.bf16.msra.mxu0 %v3285
    %5381 = vmatpush.bf16.msra.mxu0 %v3277
    %5382 = vmatpush.bf16.msra.mxu0 %v3269
    %5383 = vmatmul.bf16.gmra.mxu0 %v5192
    %v5384 = vpop.f32.mrf.mxu0
    %v5385 = vadd.f32 %v5371, %v5384
    %v5386 = vpop.f32.mrf.mxu0
    %v5387 = vadd.f32 %v5373, %v5386
    %5388 = vdwg.mxu0
    %5389 = vmatpush.bf16.msra.mxu0 %v3262
    %5390 = vmatpush.bf16.msra.mxu0 %v3254
    %5391 = vmatpush.bf16.msra.mxu0 %v3246
    %5392 = vmatpush.bf16.msra.mxu0 %v3238
    %5393 = vmatpush.bf16.msra.mxu0 %v3230
    %5394 = vmatpush.bf16.msra.mxu0 %v3222
    %5395 = vmatpush.bf16.msra.mxu0 %v3214
    %5396 = vmatpush.bf16.msra.mxu0 %v3206
    %5397 = vmatmul.bf16.gmra.mxu0 %v5191
    %v5398 = vpop.f32.mrf.mxu0
    %v5399 = vadd.f32 %v4858, %v5398
    %v5400 = vpop.f32.mrf.mxu0
    %v5401 = vadd.f32 %v4860, %v5400
    %5402 = vdwg.mxu0
    %5403 = vmatpush.bf16.msra.mxu0 %v3326
    %5404 = vmatpush.bf16.msra.mxu0 %v3318
    %5405 = vmatpush.bf16.msra.mxu0 %v3310
    %5406 = vmatpush.bf16.msra.mxu0 %v3302
    %5407 = vmatpush.bf16.msra.mxu0 %v3294
    %5408 = vmatpush.bf16.msra.mxu0 %v3286
    %5409 = vmatpush.bf16.msra.mxu0 %v3278
    %5410 = vmatpush.bf16.msra.mxu0 %v3270
    %5411 = vmatmul.bf16.gmra.mxu0 %v5192
    %v5412 = vpop.f32.mrf.mxu0
    %v5413 = vadd.f32 %v5399, %v5412
    %v5414 = vpop.f32.mrf.mxu0
    %v5415 = vadd.f32 %v5401, %v5414
    %5416 = vdwg.mxu0
    %v5417 = vadd.f32 %v5217, %v449
    %v5418 = vadd.f32 %v5245, %v450
    %v5419 = vadd.f32 %v5273, %v451
    %v5420 = vadd.f32 %v5301, %v452
    %v5421 = vadd.f32 %v5329, %v453
    %v5422 = vadd.f32 %v5357, %v454
    %v5423 = vadd.f32 %v5385, %v455
    %v5424 = vadd.f32 %v5413, %v456
    %v5425 = vadd.f32 %v5219, %v449
    %v5426 = vadd.f32 %v5247, %v450
    %v5427 = vadd.f32 %v5275, %v451
    %v5428 = vadd.f32 %v5303, %v452
    %v5429 = vadd.f32 %v5331, %v453
    %v5430 = vadd.f32 %v5359, %v454
    %v5431 = vadd.f32 %v5387, %v455
    %v5432 = vadd.f32 %v5415, %v456
    %v5433 = vmul.f32 %v5417, 0.5
    %v5434 = vmul.f32 %v5418, 0.5
    %v5435 = vmul.f32 %v5419, 0.5
    %v5436 = vmul.f32 %v5420, 0.5
    %v5437 = vmul.f32 %v5421, 0.5
    %v5438 = vmul.f32 %v5422, 0.5
    %v5439 = vmul.f32 %v5425, 0.5
    %v5440 = vmul.f32 %v5426, 0.5
    %v5441 = vmul.f32 %v5427, 0.5
    %v5442 = vmul.f32 %v5428, 0.5
    %v5443 = vmul.f32 %v5429, 0.5
    %v5444 = vmul.f32 %v5430, 0.5
    %v5445 = vtanh.pop %v5433
    %v5446 = vtanh.pop %v5434
    %v5447 = vtanh.pop %v5435
    %v5448 = vtanh.pop %v5436
    %v5449 = vtanh.pop %v5437
    %v5450 = vtanh.pop %v5438
    %v5451 = vtanh.pop %v5439
    %v5452 = vtanh.pop %v5440
    %v5453 = vtanh.pop %v5441
    %v5454 = vtanh.pop %v5442
    %v5455 = vtanh.pop %v5443
    %v5456 = vtanh.pop %v5444
    %v5457 = vmul.f32 %v5445, 0.5
    %v5458 = vmul.f32 %v5446, 0.5
    %v5459 = vmul.f32 %v5447, 0.5
    %v5460 = vmul.f32 %v5448, 0.5
    %v5461 = vmul.f32 %v5449, 0.5
    %v5462 = vmul.f32 %v5450, 0.5
    %v5463 = vmul.f32 %v5451, 0.5
    %v5464 = vmul.f32 %v5452, 0.5
    %v5465 = vmul.f32 %v5453, 0.5
    %v5466 = vmul.f32 %v5454, 0.5
    %v5467 = vmul.f32 %v5455, 0.5
    %v5468 = vmul.f32 %v5456, 0.5
    %v5469 = vadd.f32 %v5457, 0.5
    %v5470 = vadd.f32 %v5458, 0.5
    %v5471 = vadd.f32 %v5459, 0.5
    %v5472 = vadd.f32 %v5460, 0.5
    %v5473 = vadd.f32 %v5461, 0.5
    %v5474 = vadd.f32 %v5462, 0.5
    %v5475 = vadd.f32 %v5463, 0.5
    %v5476 = vadd.f32 %v5464, 0.5
    %v5477 = vadd.f32 %v5465, 0.5
    %v5478 = vadd.f32 %v5466, 0.5
    %v5479 = vadd.f32 %v5467, 0.5
    %v5480 = vadd.f32 %v5468, 0.5
    %v5481 = vtanh.pop %v5423
    %v5482 = vtanh.pop %v5424
    %v5483 = vtanh.pop %v5431
    %v5484 = vtanh.pop %v5432
    %v5485 = vmul.f32 %v5471, %v4624
    %v5486 = vmul.f32 %v5472, %v4625
    %v5487 = vmul.f32 %v5477, %v4626
    %v5488 = vmul.f32 %v5478, %v4627
    %v5489 = vmul.f32 %v5469, %v5481
    %v5490 = vmul.f32 %v5470, %v5482
    %v5491 = vmul.f32 %v5475, %v5483
    %v5492 = vmul.f32 %v5476, %v5484
    %v5493 = vadd.f32 %v5485, %v5489
    %v5494 = vadd.f32 %v5486, %v5490
    %v5495 = vadd.f32 %v5487, %v5491
    %v5496 = vadd.f32 %v5488, %v5492
    %v5497 = vtanh.pop %v5493
    %v5498 = vtanh.pop %v5494
    %v5499 = vtanh.pop %v5495
    %v5500 = vtanh.pop %v5496
    %v5501 = vmul.f32 %v5473, %v5497
    %v5502 = vmul.f32 %v5474, %v5498
    %v5503 = vmul.f32 %v5479, %v5499
    %v5504 = vmul.f32 %v5480, %v5500
    %v5505 = vpack.c.bf16 %v5503, %v5501
    %v5506 = vpack.c.bf16 %v5504, %v5502
    %5507 = vmatpush.bf16.msra.mxu0 %v1421
    %5508 = vmatpush.bf16.msra.mxu0 %v1413
    %5509 = vmatpush.bf16.msra.mxu0 %v1405
    %5510 = vmatpush.bf16.msra.mxu0 %v1397
    %5511 = vmatpush.bf16.msra.mxu0 %v1389
    %5512 = vmatpush.bf16.msra.mxu0 %v1381
    %5513 = vmatpush.bf16.msra.mxu0 %v1373
    %5514 = vmatpush.bf16.msra.mxu0 %v1365
    %5515 = vmatmul.bf16.gmra.mxu0 %v5505
    %v5516 = vpop.f32.mrf.mxu0
    %v5517 = vadd.f32 0.0, %v5516
    %v5518 = vpop.f32.mrf.mxu0
    %v5519 = vadd.f32 0.0, %v5518
    %5520 = vdwg.mxu0
    %5521 = vmatpush.bf16.msra.mxu0 %v1485
    %5522 = vmatpush.bf16.msra.mxu0 %v1477
    %5523 = vmatpush.bf16.msra.mxu0 %v1469
    %5524 = vmatpush.bf16.msra.mxu0 %v1461
    %5525 = vmatpush.bf16.msra.mxu0 %v1453
    %5526 = vmatpush.bf16.msra.mxu0 %v1445
    %5527 = vmatpush.bf16.msra.mxu0 %v1437
    %5528 = vmatpush.bf16.msra.mxu0 %v1429
    %5529 = vmatmul.bf16.gmra.mxu0 %v5506
    %v5530 = vpop.f32.mrf.mxu0
    %v5531 = vadd.f32 %v5517, %v5530
    %v5532 = vpop.f32.mrf.mxu0
    %v5533 = vadd.f32 %v5519, %v5532
    %5534 = vdwg.mxu0
    %5535 = vmatpush.bf16.msra.mxu0 %v1422
    %5536 = vmatpush.bf16.msra.mxu0 %v1414
    %5537 = vmatpush.bf16.msra.mxu0 %v1406
    %5538 = vmatpush.bf16.msra.mxu0 %v1398
    %5539 = vmatpush.bf16.msra.mxu0 %v1390
    %5540 = vmatpush.bf16.msra.mxu0 %v1382
    %5541 = vmatpush.bf16.msra.mxu0 %v1374
    %5542 = vmatpush.bf16.msra.mxu0 %v1366
    %5543 = vmatmul.bf16.gmra.mxu0 %v5505
    %v5544 = vpop.f32.mrf.mxu0
    %v5545 = vadd.f32 0.0, %v5544
    %v5546 = vpop.f32.mrf.mxu0
    %v5547 = vadd.f32 0.0, %v5546
    %5548 = vdwg.mxu0
    %5549 = vmatpush.bf16.msra.mxu0 %v1486
    %5550 = vmatpush.bf16.msra.mxu0 %v1478
    %5551 = vmatpush.bf16.msra.mxu0 %v1470
    %5552 = vmatpush.bf16.msra.mxu0 %v1462
    %5553 = vmatpush.bf16.msra.mxu0 %v1454
    %5554 = vmatpush.bf16.msra.mxu0 %v1446
    %5555 = vmatpush.bf16.msra.mxu0 %v1438
    %5556 = vmatpush.bf16.msra.mxu0 %v1430
    %5557 = vmatmul.bf16.gmra.mxu0 %v5506
    %v5558 = vpop.f32.mrf.mxu0
    %v5559 = vadd.f32 %v5545, %v5558
    %v5560 = vpop.f32.mrf.mxu0
    %v5561 = vadd.f32 %v5547, %v5560
    %5562 = vdwg.mxu0
    %5563 = vmatpush.bf16.msra.mxu0 %v1423
    %5564 = vmatpush.bf16.msra.mxu0 %v1415
    %5565 = vmatpush.bf16.msra.mxu0 %v1407
    %5566 = vmatpush.bf16.msra.mxu0 %v1399
    %5567 = vmatpush.bf16.msra.mxu0 %v1391
    %5568 = vmatpush.bf16.msra.mxu0 %v1383
    %5569 = vmatpush.bf16.msra.mxu0 %v1375
    %5570 = vmatpush.bf16.msra.mxu0 %v1367
    %5571 = vmatmul.bf16.gmra.mxu0 %v5505
    %v5572 = vpop.f32.mrf.mxu0
    %v5573 = vadd.f32 0.0, %v5572
    %v5574 = vpop.f32.mrf.mxu0
    %v5575 = vadd.f32 0.0, %v5574
    %5576 = vdwg.mxu0
    %5577 = vmatpush.bf16.msra.mxu0 %v1487
    %5578 = vmatpush.bf16.msra.mxu0 %v1479
    %5579 = vmatpush.bf16.msra.mxu0 %v1471
    %5580 = vmatpush.bf16.msra.mxu0 %v1463
    %5581 = vmatpush.bf16.msra.mxu0 %v1455
    %5582 = vmatpush.bf16.msra.mxu0 %v1447
    %5583 = vmatpush.bf16.msra.mxu0 %v1439
    %5584 = vmatpush.bf16.msra.mxu0 %v1431
    %5585 = vmatmul.bf16.gmra.mxu0 %v5506
    %v5586 = vpop.f32.mrf.mxu0
    %v5587 = vadd.f32 %v5573, %v5586
    %v5588 = vpop.f32.mrf.mxu0
    %v5589 = vadd.f32 %v5575, %v5588
    %5590 = vdwg.mxu0
    %5591 = vmatpush.bf16.msra.mxu0 %v1424
    %5592 = vmatpush.bf16.msra.mxu0 %v1416
    %5593 = vmatpush.bf16.msra.mxu0 %v1408
    %5594 = vmatpush.bf16.msra.mxu0 %v1400
    %5595 = vmatpush.bf16.msra.mxu0 %v1392
    %5596 = vmatpush.bf16.msra.mxu0 %v1384
    %5597 = vmatpush.bf16.msra.mxu0 %v1376
    %5598 = vmatpush.bf16.msra.mxu0 %v1368
    %5599 = vmatmul.bf16.gmra.mxu0 %v5505
    %v5600 = vpop.f32.mrf.mxu0
    %v5601 = vadd.f32 0.0, %v5600
    %v5602 = vpop.f32.mrf.mxu0
    %v5603 = vadd.f32 0.0, %v5602
    %5604 = vdwg.mxu0
    %5605 = vmatpush.bf16.msra.mxu0 %v1488
    %5606 = vmatpush.bf16.msra.mxu0 %v1480
    %5607 = vmatpush.bf16.msra.mxu0 %v1472
    %5608 = vmatpush.bf16.msra.mxu0 %v1464
    %5609 = vmatpush.bf16.msra.mxu0 %v1456
    %5610 = vmatpush.bf16.msra.mxu0 %v1448
    %5611 = vmatpush.bf16.msra.mxu0 %v1440
    %5612 = vmatpush.bf16.msra.mxu0 %v1432
    %5613 = vmatmul.bf16.gmra.mxu0 %v5506
    %v5614 = vpop.f32.mrf.mxu0
    %v5615 = vadd.f32 %v5601, %v5614
    %v5616 = vpop.f32.mrf.mxu0
    %v5617 = vadd.f32 %v5603, %v5616
    %5618 = vdwg.mxu0
    %5619 = vmatpush.bf16.msra.mxu0 %v1425
    %5620 = vmatpush.bf16.msra.mxu0 %v1417
    %5621 = vmatpush.bf16.msra.mxu0 %v1409
    %5622 = vmatpush.bf16.msra.mxu0 %v1401
    %5623 = vmatpush.bf16.msra.mxu0 %v1393
    %5624 = vmatpush.bf16.msra.mxu0 %v1385
    %5625 = vmatpush.bf16.msra.mxu0 %v1377
    %5626 = vmatpush.bf16.msra.mxu0 %v1369
    %5627 = vmatmul.bf16.gmra.mxu0 %v5505
    %v5628 = vpop.f32.mrf.mxu0
    %v5629 = vadd.f32 0.0, %v5628
    %v5630 = vpop.f32.mrf.mxu0
    %v5631 = vadd.f32 0.0, %v5630
    %5632 = vdwg.mxu0
    %5633 = vmatpush.bf16.msra.mxu0 %v1489
    %5634 = vmatpush.bf16.msra.mxu0 %v1481
    %5635 = vmatpush.bf16.msra.mxu0 %v1473
    %5636 = vmatpush.bf16.msra.mxu0 %v1465
    %5637 = vmatpush.bf16.msra.mxu0 %v1457
    %5638 = vmatpush.bf16.msra.mxu0 %v1449
    %5639 = vmatpush.bf16.msra.mxu0 %v1441
    %5640 = vmatpush.bf16.msra.mxu0 %v1433
    %5641 = vmatmul.bf16.gmra.mxu0 %v5506
    %v5642 = vpop.f32.mrf.mxu0
    %v5643 = vadd.f32 %v5629, %v5642
    %v5644 = vpop.f32.mrf.mxu0
    %v5645 = vadd.f32 %v5631, %v5644
    %5646 = vdwg.mxu0
    %5647 = vmatpush.bf16.msra.mxu0 %v1426
    %5648 = vmatpush.bf16.msra.mxu0 %v1418
    %5649 = vmatpush.bf16.msra.mxu0 %v1410
    %5650 = vmatpush.bf16.msra.mxu0 %v1402
    %5651 = vmatpush.bf16.msra.mxu0 %v1394
    %5652 = vmatpush.bf16.msra.mxu0 %v1386
    %5653 = vmatpush.bf16.msra.mxu0 %v1378
    %5654 = vmatpush.bf16.msra.mxu0 %v1370
    %5655 = vmatmul.bf16.gmra.mxu0 %v5505
    %v5656 = vpop.f32.mrf.mxu0
    %v5657 = vadd.f32 0.0, %v5656
    %v5658 = vpop.f32.mrf.mxu0
    %v5659 = vadd.f32 0.0, %v5658
    %5660 = vdwg.mxu0
    %5661 = vmatpush.bf16.msra.mxu0 %v1490
    %5662 = vmatpush.bf16.msra.mxu0 %v1482
    %5663 = vmatpush.bf16.msra.mxu0 %v1474
    %5664 = vmatpush.bf16.msra.mxu0 %v1466
    %5665 = vmatpush.bf16.msra.mxu0 %v1458
    %5666 = vmatpush.bf16.msra.mxu0 %v1450
    %5667 = vmatpush.bf16.msra.mxu0 %v1442
    %5668 = vmatpush.bf16.msra.mxu0 %v1434
    %5669 = vmatmul.bf16.gmra.mxu0 %v5506
    %v5670 = vpop.f32.mrf.mxu0
    %v5671 = vadd.f32 %v5657, %v5670
    %v5672 = vpop.f32.mrf.mxu0
    %v5673 = vadd.f32 %v5659, %v5672
    %5674 = vdwg.mxu0
    %5675 = vmatpush.bf16.msra.mxu0 %v1427
    %5676 = vmatpush.bf16.msra.mxu0 %v1419
    %5677 = vmatpush.bf16.msra.mxu0 %v1411
    %5678 = vmatpush.bf16.msra.mxu0 %v1403
    %5679 = vmatpush.bf16.msra.mxu0 %v1395
    %5680 = vmatpush.bf16.msra.mxu0 %v1387
    %5681 = vmatpush.bf16.msra.mxu0 %v1379
    %5682 = vmatpush.bf16.msra.mxu0 %v1371
    %5683 = vmatmul.bf16.gmra.mxu0 %v5505
    %v5684 = vpop.f32.mrf.mxu0
    %v5685 = vadd.f32 0.0, %v5684
    %v5686 = vpop.f32.mrf.mxu0
    %v5687 = vadd.f32 0.0, %v5686
    %5688 = vdwg.mxu0
    %5689 = vmatpush.bf16.msra.mxu0 %v1491
    %5690 = vmatpush.bf16.msra.mxu0 %v1483
    %5691 = vmatpush.bf16.msra.mxu0 %v1475
    %5692 = vmatpush.bf16.msra.mxu0 %v1467
    %5693 = vmatpush.bf16.msra.mxu0 %v1459
    %5694 = vmatpush.bf16.msra.mxu0 %v1451
    %5695 = vmatpush.bf16.msra.mxu0 %v1443
    %5696 = vmatpush.bf16.msra.mxu0 %v1435
    %5697 = vmatmul.bf16.gmra.mxu0 %v5506
    %v5698 = vpop.f32.mrf.mxu0
    %v5699 = vadd.f32 %v5685, %v5698
    %v5700 = vpop.f32.mrf.mxu0
    %v5701 = vadd.f32 %v5687, %v5700
    %5702 = vdwg.mxu0
    %5703 = vmatpush.bf16.msra.mxu0 %v1428
    %5704 = vmatpush.bf16.msra.mxu0 %v1420
    %5705 = vmatpush.bf16.msra.mxu0 %v1412
    %5706 = vmatpush.bf16.msra.mxu0 %v1404
    %5707 = vmatpush.bf16.msra.mxu0 %v1396
    %5708 = vmatpush.bf16.msra.mxu0 %v1388
    %5709 = vmatpush.bf16.msra.mxu0 %v1380
    %5710 = vmatpush.bf16.msra.mxu0 %v1372
    %5711 = vmatmul.bf16.gmra.mxu0 %v5505
    %v5712 = vpop.f32.mrf.mxu0
    %v5713 = vadd.f32 0.0, %v5712
    %v5714 = vpop.f32.mrf.mxu0
    %v5715 = vadd.f32 0.0, %v5714
    %5716 = vdwg.mxu0
    %5717 = vmatpush.bf16.msra.mxu0 %v1492
    %5718 = vmatpush.bf16.msra.mxu0 %v1484
    %5719 = vmatpush.bf16.msra.mxu0 %v1476
    %5720 = vmatpush.bf16.msra.mxu0 %v1468
    %5721 = vmatpush.bf16.msra.mxu0 %v1460
    %5722 = vmatpush.bf16.msra.mxu0 %v1452
    %5723 = vmatpush.bf16.msra.mxu0 %v1444
    %5724 = vmatpush.bf16.msra.mxu0 %v1436
    %5725 = vmatmul.bf16.gmra.mxu0 %v5506
    %v5726 = vpop.f32.mrf.mxu0
    %v5727 = vadd.f32 %v5713, %v5726
    %v5728 = vpop.f32.mrf.mxu0
    %v5729 = vadd.f32 %v5715, %v5728
    %5730 = vdwg.mxu0
    %s5731 = scalar_lea.vmem [#allocation2], 384
    %v5732 = vld [vmem:[%s5731] sm:$0xff]
    %v5733 = vld [vmem:[%s5731 + $0x8] sm:$0xff]
    %v5734 = vld [vmem:[%s5731 + $0x10] sm:$0xff]
    %v5735 = vld [vmem:[%s5731 + $0x18] sm:$0xff]
    %v5736 = vld [vmem:[%s5731 + $0x20] sm:$0xff]
    %v5737 = vld [vmem:[%s5731 + $0x28] sm:$0xff]
    %v5738 = vld [vmem:[%s5731 + $0x30] sm:$0xff]
    %v5739 = vld [vmem:[%s5731 + $0x38] sm:$0xff]
    %v5740 = vld [vmem:[%s5731 + $0x40] sm:$0xff]
    %v5741 = vld [vmem:[%s5731 + $0x48] sm:$0xff]
    %v5742 = vld [vmem:[%s5731 + $0x50] sm:$0xff]
    %v5743 = vld [vmem:[%s5731 + $0x58] sm:$0xff]
    %v5744 = vld [vmem:[%s5731 + $0x60] sm:$0xff]
    %v5745 = vld [vmem:[%s5731 + $0x68] sm:$0xff]
    %v5746 = vld [vmem:[%s5731 + $0x70] sm:$0xff]
    %v5747 = vld [vmem:[%s5731 + $0x78] sm:$0xff]
    %5748 = vmatpush.bf16.msra.mxu0 %v2301
    %5749 = vmatpush.bf16.msra.mxu0 %v2293
    %5750 = vmatpush.bf16.msra.mxu0 %v2285
    %5751 = vmatpush.bf16.msra.mxu0 %v2277
    %5752 = vmatpush.bf16.msra.mxu0 %v2269
    %5753 = vmatpush.bf16.msra.mxu0 %v2261
    %5754 = vmatpush.bf16.msra.mxu0 %v2253
    %5755 = vmatpush.bf16.msra.mxu0 %v2245
    %5756 = vmatmul.bf16.gmra.mxu0 %v5191
    %v5757 = vpop.f32.mrf.mxu0
    %v5758 = vadd.f32 0.0, %v5757
    %v5759 = vpop.f32.mrf.mxu0
    %v5760 = vadd.f32 0.0, %v5759
    %5761 = vdwg.mxu0
    %5762 = vmatpush.bf16.msra.mxu0 %v2365
    %5763 = vmatpush.bf16.msra.mxu0 %v2357
    %5764 = vmatpush.bf16.msra.mxu0 %v2349
    %5765 = vmatpush.bf16.msra.mxu0 %v2341
    %5766 = vmatpush.bf16.msra.mxu0 %v2333
    %5767 = vmatpush.bf16.msra.mxu0 %v2325
    %5768 = vmatpush.bf16.msra.mxu0 %v2317
    %5769 = vmatpush.bf16.msra.mxu0 %v2309
    %5770 = vmatmul.bf16.gmra.mxu0 %v5192
    %v5771 = vpop.f32.mrf.mxu0
    %v5772 = vadd.f32 %v5758, %v5771
    %v5773 = vpop.f32.mrf.mxu0
    %v5774 = vadd.f32 %v5760, %v5773
    %5775 = vdwg.mxu0
    %5776 = vmatpush.bf16.msra.mxu0 %v2302
    %5777 = vmatpush.bf16.msra.mxu0 %v2294
    %5778 = vmatpush.bf16.msra.mxu0 %v2286
    %5779 = vmatpush.bf16.msra.mxu0 %v2278
    %5780 = vmatpush.bf16.msra.mxu0 %v2270
    %5781 = vmatpush.bf16.msra.mxu0 %v2262
    %5782 = vmatpush.bf16.msra.mxu0 %v2254
    %5783 = vmatpush.bf16.msra.mxu0 %v2246
    %5784 = vmatmul.bf16.gmra.mxu0 %v5191
    %v5785 = vpop.f32.mrf.mxu0
    %v5786 = vadd.f32 0.0, %v5785
    %v5787 = vpop.f32.mrf.mxu0
    %v5788 = vadd.f32 0.0, %v5787
    %5789 = vdwg.mxu0
    %5790 = vmatpush.bf16.msra.mxu0 %v2366
    %5791 = vmatpush.bf16.msra.mxu0 %v2358
    %5792 = vmatpush.bf16.msra.mxu0 %v2350
    %5793 = vmatpush.bf16.msra.mxu0 %v2342
    %5794 = vmatpush.bf16.msra.mxu0 %v2334
    %5795 = vmatpush.bf16.msra.mxu0 %v2326
    %5796 = vmatpush.bf16.msra.mxu0 %v2318
    %5797 = vmatpush.bf16.msra.mxu0 %v2310
    %5798 = vmatmul.bf16.gmra.mxu0 %v5192
    %v5799 = vpop.f32.mrf.mxu0
    %v5800 = vadd.f32 %v5786, %v5799
    %v5801 = vpop.f32.mrf.mxu0
    %v5802 = vadd.f32 %v5788, %v5801
    %5803 = vdwg.mxu0
    %5804 = vmatpush.bf16.msra.mxu0 %v2303
    %5805 = vmatpush.bf16.msra.mxu0 %v2295
    %5806 = vmatpush.bf16.msra.mxu0 %v2287
    %5807 = vmatpush.bf16.msra.mxu0 %v2279
    %5808 = vmatpush.bf16.msra.mxu0 %v2271
    %5809 = vmatpush.bf16.msra.mxu0 %v2263
    %5810 = vmatpush.bf16.msra.mxu0 %v2255
    %5811 = vmatpush.bf16.msra.mxu0 %v2247
    %5812 = vmatmul.bf16.gmra.mxu0 %v5191
    %v5813 = vpop.f32.mrf.mxu0
    %v5814 = vadd.f32 0.0, %v5813
    %v5815 = vpop.f32.mrf.mxu0
    %v5816 = vadd.f32 0.0, %v5815
    %5817 = vdwg.mxu0
    %5818 = vmatpush.bf16.msra.mxu0 %v2367
    %5819 = vmatpush.bf16.msra.mxu0 %v2359
    %5820 = vmatpush.bf16.msra.mxu0 %v2351
    %5821 = vmatpush.bf16.msra.mxu0 %v2343
    %5822 = vmatpush.bf16.msra.mxu0 %v2335
    %5823 = vmatpush.bf16.msra.mxu0 %v2327
    %5824 = vmatpush.bf16.msra.mxu0 %v2319
    %5825 = vmatpush.bf16.msra.mxu0 %v2311
    %5826 = vmatmul.bf16.gmra.mxu0 %v5192
    %v5827 = vpop.f32.mrf.mxu0
    %v5828 = vadd.f32 %v5814, %v5827
    %v5829 = vpop.f32.mrf.mxu0
    %v5830 = vadd.f32 %v5816, %v5829
    %5831 = vdwg.mxu0
    %5832 = vmatpush.bf16.msra.mxu0 %v2304
    %5833 = vmatpush.bf16.msra.mxu0 %v2296
    %5834 = vmatpush.bf16.msra.mxu0 %v2288
    %5835 = vmatpush.bf16.msra.mxu0 %v2280
    %5836 = vmatpush.bf16.msra.mxu0 %v2272
    %5837 = vmatpush.bf16.msra.mxu0 %v2264
    %5838 = vmatpush.bf16.msra.mxu0 %v2256
    %5839 = vmatpush.bf16.msra.mxu0 %v2248
    %5840 = vmatmul.bf16.gmra.mxu0 %v5191
    %v5841 = vpop.f32.mrf.mxu0
    %v5842 = vadd.f32 0.0, %v5841
    %v5843 = vpop.f32.mrf.mxu0
    %v5844 = vadd.f32 0.0, %v5843
    %5845 = vdwg.mxu0
    %5846 = vmatpush.bf16.msra.mxu0 %v2368
    %5847 = vmatpush.bf16.msra.mxu0 %v2360
    %5848 = vmatpush.bf16.msra.mxu0 %v2352
    %5849 = vmatpush.bf16.msra.mxu0 %v2344
    %5850 = vmatpush.bf16.msra.mxu0 %v2336
    %5851 = vmatpush.bf16.msra.mxu0 %v2328
    %5852 = vmatpush.bf16.msra.mxu0 %v2320
    %5853 = vmatpush.bf16.msra.mxu0 %v2312
    %5854 = vmatmul.bf16.gmra.mxu0 %v5192
    %v5855 = vpop.f32.mrf.mxu0
    %v5856 = vadd.f32 %v5842, %v5855
    %v5857 = vpop.f32.mrf.mxu0
    %v5858 = vadd.f32 %v5844, %v5857
    %5859 = vdwg.mxu0
    %5860 = vmatpush.bf16.msra.mxu0 %v2305
    %5861 = vmatpush.bf16.msra.mxu0 %v2297
    %5862 = vmatpush.bf16.msra.mxu0 %v2289
    %5863 = vmatpush.bf16.msra.mxu0 %v2281
    %5864 = vmatpush.bf16.msra.mxu0 %v2273
    %5865 = vmatpush.bf16.msra.mxu0 %v2265
    %5866 = vmatpush.bf16.msra.mxu0 %v2257
    %5867 = vmatpush.bf16.msra.mxu0 %v2249
    %5868 = vmatmul.bf16.gmra.mxu0 %v5191
    %v5869 = vpop.f32.mrf.mxu0
    %v5870 = vadd.f32 0.0, %v5869
    %v5871 = vpop.f32.mrf.mxu0
    %v5872 = vadd.f32 0.0, %v5871
    %5873 = vdwg.mxu0
    %5874 = vmatpush.bf16.msra.mxu0 %v2369
    %5875 = vmatpush.bf16.msra.mxu0 %v2361
    %5876 = vmatpush.bf16.msra.mxu0 %v2353
    %5877 = vmatpush.bf16.msra.mxu0 %v2345
    %5878 = vmatpush.bf16.msra.mxu0 %v2337
    %5879 = vmatpush.bf16.msra.mxu0 %v2329
    %5880 = vmatpush.bf16.msra.mxu0 %v2321
    %5881 = vmatpush.bf16.msra.mxu0 %v2313
    %5882 = vmatmul.bf16.gmra.mxu0 %v5192
    %v5883 = vpop.f32.mrf.mxu0
    %v5884 = vadd.f32 %v5870, %v5883
    %v5885 = vpop.f32.mrf.mxu0
    %v5886 = vadd.f32 %v5872, %v5885
    %5887 = vdwg.mxu0
    %5888 = vmatpush.bf16.msra.mxu0 %v2306
    %5889 = vmatpush.bf16.msra.mxu0 %v2298
    %5890 = vmatpush.bf16.msra.mxu0 %v2290
    %5891 = vmatpush.bf16.msra.mxu0 %v2282
    %5892 = vmatpush.bf16.msra.mxu0 %v2274
    %5893 = vmatpush.bf16.msra.mxu0 %v2266
    %5894 = vmatpush.bf16.msra.mxu0 %v2258
    %5895 = vmatpush.bf16.msra.mxu0 %v2250
    %5896 = vmatmul.bf16.gmra.mxu0 %v5191
    %v5897 = vpop.f32.mrf.mxu0
    %v5898 = vadd.f32 0.0, %v5897
    %v5899 = vpop.f32.mrf.mxu0
    %v5900 = vadd.f32 0.0, %v5899
    %5901 = vdwg.mxu0
    %5902 = vmatpush.bf16.msra.mxu0 %v2370
    %5903 = vmatpush.bf16.msra.mxu0 %v2362
    %5904 = vmatpush.bf16.msra.mxu0 %v2354
    %5905 = vmatpush.bf16.msra.mxu0 %v2346
    %5906 = vmatpush.bf16.msra.mxu0 %v2338
    %5907 = vmatpush.bf16.msra.mxu0 %v2330
    %5908 = vmatpush.bf16.msra.mxu0 %v2322
    %5909 = vmatpush.bf16.msra.mxu0 %v2314
    %5910 = vmatmul.bf16.gmra.mxu0 %v5192
    %v5911 = vpop.f32.mrf.mxu0
    %v5912 = vadd.f32 %v5898, %v5911
    %v5913 = vpop.f32.mrf.mxu0
    %v5914 = vadd.f32 %v5900, %v5913
    %5915 = vdwg.mxu0
    %5916 = vmatpush.bf16.msra.mxu0 %v2307
    %5917 = vmatpush.bf16.msra.mxu0 %v2299
    %5918 = vmatpush.bf16.msra.mxu0 %v2291
    %5919 = vmatpush.bf16.msra.mxu0 %v2283
    %5920 = vmatpush.bf16.msra.mxu0 %v2275
    %5921 = vmatpush.bf16.msra.mxu0 %v2267
    %5922 = vmatpush.bf16.msra.mxu0 %v2259
    %5923 = vmatpush.bf16.msra.mxu0 %v2251
    %5924 = vmatmul.bf16.gmra.mxu0 %v5191
    %v5925 = vpop.f32.mrf.mxu0
    %v5926 = vadd.f32 0.0, %v5925
    %v5927 = vpop.f32.mrf.mxu0
    %v5928 = vadd.f32 0.0, %v5927
    %5929 = vdwg.mxu0
    %5930 = vmatpush.bf16.msra.mxu0 %v2371
    %5931 = vmatpush.bf16.msra.mxu0 %v2363
    %5932 = vmatpush.bf16.msra.mxu0 %v2355
    %5933 = vmatpush.bf16.msra.mxu0 %v2347
    %5934 = vmatpush.bf16.msra.mxu0 %v2339
    %5935 = vmatpush.bf16.msra.mxu0 %v2331
    %5936 = vmatpush.bf16.msra.mxu0 %v2323
    %5937 = vmatpush.bf16.msra.mxu0 %v2315
    %5938 = vmatmul.bf16.gmra.mxu0 %v5192
    %v5939 = vpop.f32.mrf.mxu0
    %v5940 = vadd.f32 %v5926, %v5939
    %v5941 = vpop.f32.mrf.mxu0
    %v5942 = vadd.f32 %v5928, %v5941
    %5943 = vdwg.mxu0
    %5944 = vmatpush.bf16.msra.mxu0 %v2308
    %5945 = vmatpush.bf16.msra.mxu0 %v2300
    %5946 = vmatpush.bf16.msra.mxu0 %v2292
    %5947 = vmatpush.bf16.msra.mxu0 %v2284
    %5948 = vmatpush.bf16.msra.mxu0 %v2276
    %5949 = vmatpush.bf16.msra.mxu0 %v2268
    %5950 = vmatpush.bf16.msra.mxu0 %v2260
    %5951 = vmatpush.bf16.msra.mxu0 %v2252
    %5952 = vmatmul.bf16.gmra.mxu0 %v5191
    %v5953 = vpop.f32.mrf.mxu0
    %v5954 = vadd.f32 0.0, %v5953
    %v5955 = vpop.f32.mrf.mxu0
    %v5956 = vadd.f32 0.0, %v5955
    %5957 = vdwg.mxu0
    %5958 = vmatpush.bf16.msra.mxu0 %v2372
    %5959 = vmatpush.bf16.msra.mxu0 %v2364
    %5960 = vmatpush.bf16.msra.mxu0 %v2356
    %5961 = vmatpush.bf16.msra.mxu0 %v2348
    %5962 = vmatpush.bf16.msra.mxu0 %v2340
    %5963 = vmatpush.bf16.msra.mxu0 %v2332
    %5964 = vmatpush.bf16.msra.mxu0 %v2324
    %5965 = vmatpush.bf16.msra.mxu0 %v2316
    %5966 = vmatmul.bf16.gmra.mxu0 %v5192
    %v5967 = vpop.f32.mrf.mxu0
    %v5968 = vadd.f32 %v5954, %v5967
    %v5969 = vpop.f32.mrf.mxu0
    %v5970 = vadd.f32 %v5956, %v5969
    %5971 = vdwg.mxu0
    %v5972 = vadd.f32 %v5732, %v5772
    %v5973 = vadd.f32 %v5733, %v5800
    %v5974 = vadd.f32 %v5734, %v5828
    %v5975 = vadd.f32 %v5735, %v5856
    %v5976 = vadd.f32 %v5736, %v5884
    %v5977 = vadd.f32 %v5737, %v5912
    %v5978 = vadd.f32 %v5738, %v5940
    %v5979 = vadd.f32 %v5739, %v5968
    %v5980 = vadd.f32 %v5740, %v5774
    %v5981 = vadd.f32 %v5741, %v5802
    %v5982 = vadd.f32 %v5742, %v5830
    %v5983 = vadd.f32 %v5743, %v5858
    %v5984 = vadd.f32 %v5744, %v5886
    %v5985 = vadd.f32 %v5745, %v5914
    %v5986 = vadd.f32 %v5746, %v5942
    %v5987 = vadd.f32 %v5747, %v5970
    %v5988 = vmul.f32 %v5972, 0.5
    %v5989 = vmul.f32 %v5973, 0.5
    %v5990 = vmul.f32 %v5974, 0.5
    %v5991 = vmul.f32 %v5975, 0.5
    %v5992 = vmul.f32 %v5976, 0.5
    %v5993 = vmul.f32 %v5977, 0.5
    %v5994 = vmul.f32 %v5980, 0.5
    %v5995 = vmul.f32 %v5981, 0.5
    %v5996 = vmul.f32 %v5982, 0.5
    %v5997 = vmul.f32 %v5983, 0.5
    %v5998 = vmul.f32 %v5984, 0.5
    %v5999 = vmul.f32 %v5985, 0.5
    %v6000 = vtanh.pop %v5988
    %v6001 = vtanh.pop %v5989
    %v6002 = vtanh.pop %v5990
    %v6003 = vtanh.pop %v5991
    %v6004 = vtanh.pop %v5992
    %v6005 = vtanh.pop %v5993
    %v6006 = vtanh.pop %v5994
    %v6007 = vtanh.pop %v5995
    %v6008 = vtanh.pop %v5996
    %v6009 = vtanh.pop %v5997
    %v6010 = vtanh.pop %v5998
    %v6011 = vtanh.pop %v5999
    %v6012 = vmul.f32 %v6000, 0.5
    %v6013 = vmul.f32 %v6001, 0.5
    %v6014 = vmul.f32 %v6002, 0.5
    %v6015 = vmul.f32 %v6003, 0.5
    %v6016 = vmul.f32 %v6004, 0.5
    %v6017 = vmul.f32 %v6005, 0.5
    %v6018 = vmul.f32 %v6006, 0.5
    %v6019 = vmul.f32 %v6007, 0.5
    %v6020 = vmul.f32 %v6008, 0.5
    %v6021 = vmul.f32 %v6009, 0.5
    %v6022 = vmul.f32 %v6010, 0.5
    %v6023 = vmul.f32 %v6011, 0.5
    %v6024 = vadd.f32 %v6012, 0.5
    %v6025 = vadd.f32 %v6013, 0.5
    %v6026 = vadd.f32 %v6014, 0.5
    %v6027 = vadd.f32 %v6015, 0.5
    %v6028 = vadd.f32 %v6016, 0.5
    %v6029 = vadd.f32 %v6017, 0.5
    %v6030 = vadd.f32 %v6018, 0.5
    %v6031 = vadd.f32 %v6019, 0.5
    %v6032 = vadd.f32 %v6020, 0.5
    %v6033 = vadd.f32 %v6021, 0.5
    %v6034 = vadd.f32 %v6022, 0.5
    %v6035 = vadd.f32 %v6023, 0.5
    %v6036 = vtanh.pop %v5978
    %v6037 = vtanh.pop %v5979
    %v6038 = vtanh.pop %v5986
    %v6039 = vtanh.pop %v5987
    %v6040 = vmul.f32 %v6026, %v5179
    %v6041 = vmul.f32 %v6027, %v5180
    %v6042 = vmul.f32 %v6032, %v5181
    %v6043 = vmul.f32 %v6033, %v5182
    %v6044 = vmul.f32 %v6024, %v6036
    %v6045 = vmul.f32 %v6025, %v6037
    %v6046 = vmul.f32 %v6030, %v6038
    %v6047 = vmul.f32 %v6031, %v6039
    %v6048 = vadd.f32 %v6040, %v6044
    %v6049 = vadd.f32 %v6041, %v6045
    %v6050 = vadd.f32 %v6042, %v6046
    %v6051 = vadd.f32 %v6043, %v6047
    %v6052 = vtanh.pop %v6048
    %v6053 = vtanh.pop %v6049
    %v6054 = vtanh.pop %v6050
    %v6055 = vtanh.pop %v6051
    %v6056 = vmul.f32 %v6028, %v6052
    %v6057 = vmul.f32 %v6029, %v6053
    %v6058 = vmul.f32 %v6034, %v6054
    %v6059 = vmul.f32 %v6035, %v6055
    %v6060 = vpack.c.bf16 %v6058, %v6056
    %v6061 = vpack.c.bf16 %v6059, %v6057
    %6062 = vmatpush.bf16.msra.mxu0 %v3255
    %6063 = vmatpush.bf16.msra.mxu0 %v3247
    %6064 = vmatpush.bf16.msra.mxu0 %v3239
    %6065 = vmatpush.bf16.msra.mxu0 %v3231
    %6066 = vmatpush.bf16.msra.mxu0 %v3223
    %6067 = vmatpush.bf16.msra.mxu0 %v3215
    %6068 = vmatpush.bf16.msra.mxu0 %v3207
    %6069 = vmatpush.bf16.msra.mxu0 %v3199
    %6070 = vmatmul.bf16.gmra.mxu0 %v6060
    %v6071 = vpop.f32.mrf.mxu0
    %v6072 = vadd.f32 %v5531, %v6071
    %v6073 = vpop.f32.mrf.mxu0
    %v6074 = vadd.f32 %v5533, %v6073
    %6075 = vdwg.mxu0
    %6076 = vmatpush.bf16.msra.mxu0 %v3319
    %6077 = vmatpush.bf16.msra.mxu0 %v3311
    %6078 = vmatpush.bf16.msra.mxu0 %v3303
    %6079 = vmatpush.bf16.msra.mxu0 %v3295
    %6080 = vmatpush.bf16.msra.mxu0 %v3287
    %6081 = vmatpush.bf16.msra.mxu0 %v3279
    %6082 = vmatpush.bf16.msra.mxu0 %v3271
    %6083 = vmatpush.bf16.msra.mxu0 %v3263
    %6084 = vmatmul.bf16.gmra.mxu0 %v6061
    %v6085 = vpop.f32.mrf.mxu0
    %v6086 = vadd.f32 %v6072, %v6085
    %v6087 = vpop.f32.mrf.mxu0
    %v6088 = vadd.f32 %v6074, %v6087
    %6089 = vdwg.mxu0
    %6090 = vmatpush.bf16.msra.mxu0 %v3256
    %6091 = vmatpush.bf16.msra.mxu0 %v3248
    %6092 = vmatpush.bf16.msra.mxu0 %v3240
    %6093 = vmatpush.bf16.msra.mxu0 %v3232
    %6094 = vmatpush.bf16.msra.mxu0 %v3224
    %6095 = vmatpush.bf16.msra.mxu0 %v3216
    %6096 = vmatpush.bf16.msra.mxu0 %v3208
    %6097 = vmatpush.bf16.msra.mxu0 %v3200
    %6098 = vmatmul.bf16.gmra.mxu0 %v6060
    %v6099 = vpop.f32.mrf.mxu0
    %v6100 = vadd.f32 %v5559, %v6099
    %v6101 = vpop.f32.mrf.mxu0
    %v6102 = vadd.f32 %v5561, %v6101
    %6103 = vdwg.mxu0
    %6104 = vmatpush.bf16.msra.mxu0 %v3320
    %6105 = vmatpush.bf16.msra.mxu0 %v3312
    %6106 = vmatpush.bf16.msra.mxu0 %v3304
    %6107 = vmatpush.bf16.msra.mxu0 %v3296
    %6108 = vmatpush.bf16.msra.mxu0 %v3288
    %6109 = vmatpush.bf16.msra.mxu0 %v3280
    %6110 = vmatpush.bf16.msra.mxu0 %v3272
    %6111 = vmatpush.bf16.msra.mxu0 %v3264
    %6112 = vmatmul.bf16.gmra.mxu0 %v6061
    %v6113 = vpop.f32.mrf.mxu0
    %v6114 = vadd.f32 %v6100, %v6113
    %v6115 = vpop.f32.mrf.mxu0
    %v6116 = vadd.f32 %v6102, %v6115
    %6117 = vdwg.mxu0
    %6118 = vmatpush.bf16.msra.mxu0 %v3257
    %6119 = vmatpush.bf16.msra.mxu0 %v3249
    %6120 = vmatpush.bf16.msra.mxu0 %v3241
    %6121 = vmatpush.bf16.msra.mxu0 %v3233
    %6122 = vmatpush.bf16.msra.mxu0 %v3225
    %6123 = vmatpush.bf16.msra.mxu0 %v3217
    %6124 = vmatpush.bf16.msra.mxu0 %v3209
    %6125 = vmatpush.bf16.msra.mxu0 %v3201
    %6126 = vmatmul.bf16.gmra.mxu0 %v6060
    %v6127 = vpop.f32.mrf.mxu0
    %v6128 = vadd.f32 %v5587, %v6127
    %v6129 = vpop.f32.mrf.mxu0
    %v6130 = vadd.f32 %v5589, %v6129
    %6131 = vdwg.mxu0
    %6132 = vmatpush.bf16.msra.mxu0 %v3321
    %6133 = vmatpush.bf16.msra.mxu0 %v3313
    %6134 = vmatpush.bf16.msra.mxu0 %v3305
    %6135 = vmatpush.bf16.msra.mxu0 %v3297
    %6136 = vmatpush.bf16.msra.mxu0 %v3289
    %6137 = vmatpush.bf16.msra.mxu0 %v3281
    %6138 = vmatpush.bf16.msra.mxu0 %v3273
    %6139 = vmatpush.bf16.msra.mxu0 %v3265
    %6140 = vmatmul.bf16.gmra.mxu0 %v6061
    %v6141 = vpop.f32.mrf.mxu0
    %v6142 = vadd.f32 %v6128, %v6141
    %v6143 = vpop.f32.mrf.mxu0
    %v6144 = vadd.f32 %v6130, %v6143
    %6145 = vdwg.mxu0
    %6146 = vmatpush.bf16.msra.mxu0 %v3258
    %6147 = vmatpush.bf16.msra.mxu0 %v3250
    %6148 = vmatpush.bf16.msra.mxu0 %v3242
    %6149 = vmatpush.bf16.msra.mxu0 %v3234
    %6150 = vmatpush.bf16.msra.mxu0 %v3226
    %6151 = vmatpush.bf16.msra.mxu0 %v3218
    %6152 = vmatpush.bf16.msra.mxu0 %v3210
    %6153 = vmatpush.bf16.msra.mxu0 %v3202
    %6154 = vmatmul.bf16.gmra.mxu0 %v6060
    %v6155 = vpop.f32.mrf.mxu0
    %v6156 = vadd.f32 %v5615, %v6155
    %v6157 = vpop.f32.mrf.mxu0
    %v6158 = vadd.f32 %v5617, %v6157
    %6159 = vdwg.mxu0
    %6160 = vmatpush.bf16.msra.mxu0 %v3322
    %6161 = vmatpush.bf16.msra.mxu0 %v3314
    %6162 = vmatpush.bf16.msra.mxu0 %v3306
    %6163 = vmatpush.bf16.msra.mxu0 %v3298
    %6164 = vmatpush.bf16.msra.mxu0 %v3290
    %6165 = vmatpush.bf16.msra.mxu0 %v3282
    %6166 = vmatpush.bf16.msra.mxu0 %v3274
    %6167 = vmatpush.bf16.msra.mxu0 %v3266
    %6168 = vmatmul.bf16.gmra.mxu0 %v6061
    %v6169 = vpop.f32.mrf.mxu0
    %v6170 = vadd.f32 %v6156, %v6169
    %v6171 = vpop.f32.mrf.mxu0
    %v6172 = vadd.f32 %v6158, %v6171
    %6173 = vdwg.mxu0
    %6174 = vmatpush.bf16.msra.mxu0 %v3259
    %6175 = vmatpush.bf16.msra.mxu0 %v3251
    %6176 = vmatpush.bf16.msra.mxu0 %v3243
    %6177 = vmatpush.bf16.msra.mxu0 %v3235
    %6178 = vmatpush.bf16.msra.mxu0 %v3227
    %6179 = vmatpush.bf16.msra.mxu0 %v3219
    %6180 = vmatpush.bf16.msra.mxu0 %v3211
    %6181 = vmatpush.bf16.msra.mxu0 %v3203
    %6182 = vmatmul.bf16.gmra.mxu0 %v6060
    %v6183 = vpop.f32.mrf.mxu0
    %v6184 = vadd.f32 %v5643, %v6183
    %v6185 = vpop.f32.mrf.mxu0
    %v6186 = vadd.f32 %v5645, %v6185
    %6187 = vdwg.mxu0
    %6188 = vmatpush.bf16.msra.mxu0 %v3323
    %6189 = vmatpush.bf16.msra.mxu0 %v3315
    %6190 = vmatpush.bf16.msra.mxu0 %v3307
    %6191 = vmatpush.bf16.msra.mxu0 %v3299
    %6192 = vmatpush.bf16.msra.mxu0 %v3291
    %6193 = vmatpush.bf16.msra.mxu0 %v3283
    %6194 = vmatpush.bf16.msra.mxu0 %v3275
    %6195 = vmatpush.bf16.msra.mxu0 %v3267
    %6196 = vmatmul.bf16.gmra.mxu0 %v6061
    %v6197 = vpop.f32.mrf.mxu0
    %v6198 = vadd.f32 %v6184, %v6197
    %v6199 = vpop.f32.mrf.mxu0
    %v6200 = vadd.f32 %v6186, %v6199
    %6201 = vdwg.mxu0
    %6202 = vmatpush.bf16.msra.mxu0 %v3260
    %6203 = vmatpush.bf16.msra.mxu0 %v3252
    %6204 = vmatpush.bf16.msra.mxu0 %v3244
    %6205 = vmatpush.bf16.msra.mxu0 %v3236
    %6206 = vmatpush.bf16.msra.mxu0 %v3228
    %6207 = vmatpush.bf16.msra.mxu0 %v3220
    %6208 = vmatpush.bf16.msra.mxu0 %v3212
    %6209 = vmatpush.bf16.msra.mxu0 %v3204
    %6210 = vmatmul.bf16.gmra.mxu0 %v6060
    %v6211 = vpop.f32.mrf.mxu0
    %v6212 = vadd.f32 %v5671, %v6211
    %v6213 = vpop.f32.mrf.mxu0
    %v6214 = vadd.f32 %v5673, %v6213
    %6215 = vdwg.mxu0
    %6216 = vmatpush.bf16.msra.mxu0 %v3324
    %6217 = vmatpush.bf16.msra.mxu0 %v3316
    %6218 = vmatpush.bf16.msra.mxu0 %v3308
    %6219 = vmatpush.bf16.msra.mxu0 %v3300
    %6220 = vmatpush.bf16.msra.mxu0 %v3292
    %6221 = vmatpush.bf16.msra.mxu0 %v3284
    %6222 = vmatpush.bf16.msra.mxu0 %v3276
    %6223 = vmatpush.bf16.msra.mxu0 %v3268
    %6224 = vmatmul.bf16.gmra.mxu0 %v6061
    %v6225 = vpop.f32.mrf.mxu0
    %v6226 = vadd.f32 %v6212, %v6225
    %v6227 = vpop.f32.mrf.mxu0
    %v6228 = vadd.f32 %v6214, %v6227
    %6229 = vdwg.mxu0
    %6230 = vmatpush.bf16.msra.mxu0 %v3261
    %6231 = vmatpush.bf16.msra.mxu0 %v3253
    %6232 = vmatpush.bf16.msra.mxu0 %v3245
    %6233 = vmatpush.bf16.msra.mxu0 %v3237
    %6234 = vmatpush.bf16.msra.mxu0 %v3229
    %6235 = vmatpush.bf16.msra.mxu0 %v3221
    %6236 = vmatpush.bf16.msra.mxu0 %v3213
    %6237 = vmatpush.bf16.msra.mxu0 %v3205
    %6238 = vmatmul.bf16.gmra.mxu0 %v6060
    %v6239 = vpop.f32.mrf.mxu0
    %v6240 = vadd.f32 %v5699, %v6239
    %v6241 = vpop.f32.mrf.mxu0
    %v6242 = vadd.f32 %v5701, %v6241
    %6243 = vdwg.mxu0
    %6244 = vmatpush.bf16.msra.mxu0 %v3325
    %6245 = vmatpush.bf16.msra.mxu0 %v3317
    %6246 = vmatpush.bf16.msra.mxu0 %v3309
    %6247 = vmatpush.bf16.msra.mxu0 %v3301
    %6248 = vmatpush.bf16.msra.mxu0 %v3293
    %6249 = vmatpush.bf16.msra.mxu0 %v3285
    %6250 = vmatpush.bf16.msra.mxu0 %v3277
    %6251 = vmatpush.bf16.msra.mxu0 %v3269
    %6252 = vmatmul.bf16.gmra.mxu0 %v6061
    %v6253 = vpop.f32.mrf.mxu0
    %v6254 = vadd.f32 %v6240, %v6253
    %v6255 = vpop.f32.mrf.mxu0
    %v6256 = vadd.f32 %v6242, %v6255
    %6257 = vdwg.mxu0
    %6258 = vmatpush.bf16.msra.mxu0 %v3262
    %6259 = vmatpush.bf16.msra.mxu0 %v3254
    %6260 = vmatpush.bf16.msra.mxu0 %v3246
    %6261 = vmatpush.bf16.msra.mxu0 %v3238
    %6262 = vmatpush.bf16.msra.mxu0 %v3230
    %6263 = vmatpush.bf16.msra.mxu0 %v3222
    %6264 = vmatpush.bf16.msra.mxu0 %v3214
    %6265 = vmatpush.bf16.msra.mxu0 %v3206
    %6266 = vmatmul.bf16.gmra.mxu0 %v6060
    %v6267 = vpop.f32.mrf.mxu0
    %v6268 = vadd.f32 %v5727, %v6267
    %v6269 = vpop.f32.mrf.mxu0
    %v6270 = vadd.f32 %v5729, %v6269
    %6271 = vdwg.mxu0
    %6272 = vmatpush.bf16.msra.mxu0 %v3326
    %6273 = vmatpush.bf16.msra.mxu0 %v3318
    %6274 = vmatpush.bf16.msra.mxu0 %v3310
    %6275 = vmatpush.bf16.msra.mxu0 %v3302
    %6276 = vmatpush.bf16.msra.mxu0 %v3294
    %6277 = vmatpush.bf16.msra.mxu0 %v3286
    %6278 = vmatpush.bf16.msra.mxu0 %v3278
    %6279 = vmatpush.bf16.msra.mxu0 %v3270
    %6280 = vmatmul.bf16.gmra.mxu0 %v6061
    %v6281 = vpop.f32.mrf.mxu0
    %v6282 = vadd.f32 %v6268, %v6281
    %v6283 = vpop.f32.mrf.mxu0
    %v6284 = vadd.f32 %v6270, %v6283
    %6285 = vdwg.mxu0
    %v6286 = vadd.f32 %v6086, %v449
    %v6287 = vadd.f32 %v6114, %v450
    %v6288 = vadd.f32 %v6142, %v451
    %v6289 = vadd.f32 %v6170, %v452
    %v6290 = vadd.f32 %v6198, %v453
    %v6291 = vadd.f32 %v6226, %v454
    %v6292 = vadd.f32 %v6254, %v455
    %v6293 = vadd.f32 %v6282, %v456
    %v6294 = vadd.f32 %v6088, %v449
    %v6295 = vadd.f32 %v6116, %v450
    %v6296 = vadd.f32 %v6144, %v451
    %v6297 = vadd.f32 %v6172, %v452
    %v6298 = vadd.f32 %v6200, %v453
    %v6299 = vadd.f32 %v6228, %v454
    %v6300 = vadd.f32 %v6256, %v455
    %v6301 = vadd.f32 %v6284, %v456
    %v6302 = vmul.f32 %v6286, 0.5
    %v6303 = vmul.f32 %v6287, 0.5
    %v6304 = vmul.f32 %v6288, 0.5
    %v6305 = vmul.f32 %v6289, 0.5
    %v6306 = vmul.f32 %v6290, 0.5
    %v6307 = vmul.f32 %v6291, 0.5
    %v6308 = vmul.f32 %v6294, 0.5
    %v6309 = vmul.f32 %v6295, 0.5
    %v6310 = vmul.f32 %v6296, 0.5
    %v6311 = vmul.f32 %v6297, 0.5
    %v6312 = vmul.f32 %v6298, 0.5
    %v6313 = vmul.f32 %v6299, 0.5
    %v6314 = vtanh.pop %v6302
    %v6315 = vtanh.pop %v6303
    %v6316 = vtanh.pop %v6304
    %v6317 = vtanh.pop %v6305
    %v6318 = vtanh.pop %v6306
    %v6319 = vtanh.pop %v6307
    %v6320 = vtanh.pop %v6308
    %v6321 = vtanh.pop %v6309
    %v6322 = vtanh.pop %v6310
    %v6323 = vtanh.pop %v6311
    %v6324 = vtanh.pop %v6312
    %v6325 = vtanh.pop %v6313
    %v6326 = vmul.f32 %v6314, 0.5
    %v6327 = vmul.f32 %v6315, 0.5
    %v6328 = vmul.f32 %v6316, 0.5
    %v6329 = vmul.f32 %v6317, 0.5
    %v6330 = vmul.f32 %v6318, 0.5
    %v6331 = vmul.f32 %v6319, 0.5
    %v6332 = vmul.f32 %v6320, 0.5
    %v6333 = vmul.f32 %v6321, 0.5
    %v6334 = vmul.f32 %v6322, 0.5
    %v6335 = vmul.f32 %v6323, 0.5
    %v6336 = vmul.f32 %v6324, 0.5
    %v6337 = vmul.f32 %v6325, 0.5
    %v6338 = vadd.f32 %v6326, 0.5
    %v6339 = vadd.f32 %v6327, 0.5
    %v6340 = vadd.f32 %v6328, 0.5
    %v6341 = vadd.f32 %v6329, 0.5
    %v6342 = vadd.f32 %v6330, 0.5
    %v6343 = vadd.f32 %v6331, 0.5
    %v6344 = vadd.f32 %v6332, 0.5
    %v6345 = vadd.f32 %v6333, 0.5
    %v6346 = vadd.f32 %v6334, 0.5
    %v6347 = vadd.f32 %v6335, 0.5
    %v6348 = vadd.f32 %v6336, 0.5
    %v6349 = vadd.f32 %v6337, 0.5
    %v6350 = vtanh.pop %v6292
    %v6351 = vtanh.pop %v6293
    %v6352 = vtanh.pop %v6300
    %v6353 = vtanh.pop %v6301
    %v6354 = vmul.f32 %v6340, %v5493
    %v6355 = vmul.f32 %v6341, %v5494
    %v6356 = vmul.f32 %v6346, %v5495
    %v6357 = vmul.f32 %v6347, %v5496
    %v6358 = vmul.f32 %v6338, %v6350
    %v6359 = vmul.f32 %v6339, %v6351
    %v6360 = vmul.f32 %v6344, %v6352
    %v6361 = vmul.f32 %v6345, %v6353
    %v6362 = vadd.f32 %v6354, %v6358
    %v6363 = vadd.f32 %v6355, %v6359
    %v6364 = vadd.f32 %v6356, %v6360
    %v6365 = vadd.f32 %v6357, %v6361
    %v6366 = vtanh.pop %v6362
    %v6367 = vtanh.pop %v6363
    %v6368 = vtanh.pop %v6364
    %v6369 = vtanh.pop %v6365
    %v6370 = vmul.f32 %v6342, %v6366
    %v6371 = vmul.f32 %v6343, %v6367
    %v6372 = vmul.f32 %v6348, %v6368
    %v6373 = vmul.f32 %v6349, %v6369
    %v6374 = vpack.c.bf16 %v6372, %v6370
    %v6375 = vpack.c.bf16 %v6373, %v6371
    %6376 = vmatpush.bf16.msra.mxu0 %v1421
    %6377 = vmatpush.bf16.msra.mxu0 %v1413
    %6378 = vmatpush.bf16.msra.mxu0 %v1405
    %6379 = vmatpush.bf16.msra.mxu0 %v1397
    %6380 = vmatpush.bf16.msra.mxu0 %v1389
    %6381 = vmatpush.bf16.msra.mxu0 %v1381
    %6382 = vmatpush.bf16.msra.mxu0 %v1373
    %6383 = vmatpush.bf16.msra.mxu0 %v1365
    %6384 = vmatmul.bf16.gmra.mxu0 %v6374
    %v6385 = vpop.f32.mrf.mxu0
    %v6386 = vadd.f32 0.0, %v6385
    %v6387 = vpop.f32.mrf.mxu0
    %v6388 = vadd.f32 0.0, %v6387
    %6389 = vdwg.mxu0
    %6390 = vmatpush.bf16.msra.mxu0 %v1485
    %6391 = vmatpush.bf16.msra.mxu0 %v1477
    %6392 = vmatpush.bf16.msra.mxu0 %v1469
    %6393 = vmatpush.bf16.msra.mxu0 %v1461
    %6394 = vmatpush.bf16.msra.mxu0 %v1453
    %6395 = vmatpush.bf16.msra.mxu0 %v1445
    %6396 = vmatpush.bf16.msra.mxu0 %v1437
    %6397 = vmatpush.bf16.msra.mxu0 %v1429
    %6398 = vmatmul.bf16.gmra.mxu0 %v6375
    %v6399 = vpop.f32.mrf.mxu0
    %v6400 = vadd.f32 %v6386, %v6399
    %v6401 = vpop.f32.mrf.mxu0
    %v6402 = vadd.f32 %v6388, %v6401
    %6403 = vdwg.mxu0
    %6404 = vmatpush.bf16.msra.mxu0 %v1422
    %6405 = vmatpush.bf16.msra.mxu0 %v1414
    %6406 = vmatpush.bf16.msra.mxu0 %v1406
    %6407 = vmatpush.bf16.msra.mxu0 %v1398
    %6408 = vmatpush.bf16.msra.mxu0 %v1390
    %6409 = vmatpush.bf16.msra.mxu0 %v1382
    %6410 = vmatpush.bf16.msra.mxu0 %v1374
    %6411 = vmatpush.bf16.msra.mxu0 %v1366
    %6412 = vmatmul.bf16.gmra.mxu0 %v6374
    %v6413 = vpop.f32.mrf.mxu0
    %v6414 = vadd.f32 0.0, %v6413
    %v6415 = vpop.f32.mrf.mxu0
    %v6416 = vadd.f32 0.0, %v6415
    %6417 = vdwg.mxu0
    %6418 = vmatpush.bf16.msra.mxu0 %v1486
    %6419 = vmatpush.bf16.msra.mxu0 %v1478
    %6420 = vmatpush.bf16.msra.mxu0 %v1470
    %6421 = vmatpush.bf16.msra.mxu0 %v1462
    %6422 = vmatpush.bf16.msra.mxu0 %v1454
    %6423 = vmatpush.bf16.msra.mxu0 %v1446
    %6424 = vmatpush.bf16.msra.mxu0 %v1438
    %6425 = vmatpush.bf16.msra.mxu0 %v1430
    %6426 = vmatmul.bf16.gmra.mxu0 %v6375
    %v6427 = vpop.f32.mrf.mxu0
    %v6428 = vadd.f32 %v6414, %v6427
    %v6429 = vpop.f32.mrf.mxu0
    %v6430 = vadd.f32 %v6416, %v6429
    %6431 = vdwg.mxu0
    %6432 = vmatpush.bf16.msra.mxu0 %v1423
    %6433 = vmatpush.bf16.msra.mxu0 %v1415
    %6434 = vmatpush.bf16.msra.mxu0 %v1407
    %6435 = vmatpush.bf16.msra.mxu0 %v1399
    %6436 = vmatpush.bf16.msra.mxu0 %v1391
    %6437 = vmatpush.bf16.msra.mxu0 %v1383
    %6438 = vmatpush.bf16.msra.mxu0 %v1375
    %6439 = vmatpush.bf16.msra.mxu0 %v1367
    %6440 = vmatmul.bf16.gmra.mxu0 %v6374
    %v6441 = vpop.f32.mrf.mxu0
    %v6442 = vadd.f32 0.0, %v6441
    %v6443 = vpop.f32.mrf.mxu0
    %v6444 = vadd.f32 0.0, %v6443
    %6445 = vdwg.mxu0
    %6446 = vmatpush.bf16.msra.mxu0 %v1487
    %6447 = vmatpush.bf16.msra.mxu0 %v1479
    %6448 = vmatpush.bf16.msra.mxu0 %v1471
    %6449 = vmatpush.bf16.msra.mxu0 %v1463
    %6450 = vmatpush.bf16.msra.mxu0 %v1455
    %6451 = vmatpush.bf16.msra.mxu0 %v1447
    %6452 = vmatpush.bf16.msra.mxu0 %v1439
    %6453 = vmatpush.bf16.msra.mxu0 %v1431
    %6454 = vmatmul.bf16.gmra.mxu0 %v6375
    %v6455 = vpop.f32.mrf.mxu0
    %v6456 = vadd.f32 %v6442, %v6455
    %v6457 = vpop.f32.mrf.mxu0
    %v6458 = vadd.f32 %v6444, %v6457
    %6459 = vdwg.mxu0
    %6460 = vmatpush.bf16.msra.mxu0 %v1424
    %6461 = vmatpush.bf16.msra.mxu0 %v1416
    %6462 = vmatpush.bf16.msra.mxu0 %v1408
    %6463 = vmatpush.bf16.msra.mxu0 %v1400
    %6464 = vmatpush.bf16.msra.mxu0 %v1392
    %6465 = vmatpush.bf16.msra.mxu0 %v1384
    %6466 = vmatpush.bf16.msra.mxu0 %v1376
    %6467 = vmatpush.bf16.msra.mxu0 %v1368
    %6468 = vmatmul.bf16.gmra.mxu0 %v6374
    %v6469 = vpop.f32.mrf.mxu0
    %v6470 = vadd.f32 0.0, %v6469
    %v6471 = vpop.f32.mrf.mxu0
    %v6472 = vadd.f32 0.0, %v6471
    %6473 = vdwg.mxu0
    %6474 = vmatpush.bf16.msra.mxu0 %v1488
    %6475 = vmatpush.bf16.msra.mxu0 %v1480
    %6476 = vmatpush.bf16.msra.mxu0 %v1472
    %6477 = vmatpush.bf16.msra.mxu0 %v1464
    %6478 = vmatpush.bf16.msra.mxu0 %v1456
    %6479 = vmatpush.bf16.msra.mxu0 %v1448
    %6480 = vmatpush.bf16.msra.mxu0 %v1440
    %6481 = vmatpush.bf16.msra.mxu0 %v1432
    %6482 = vmatmul.bf16.gmra.mxu0 %v6375
    %v6483 = vpop.f32.mrf.mxu0
    %v6484 = vadd.f32 %v6470, %v6483
    %v6485 = vpop.f32.mrf.mxu0
    %v6486 = vadd.f32 %v6472, %v6485
    %6487 = vdwg.mxu0
    %6488 = vmatpush.bf16.msra.mxu0 %v1425
    %6489 = vmatpush.bf16.msra.mxu0 %v1417
    %6490 = vmatpush.bf16.msra.mxu0 %v1409
    %6491 = vmatpush.bf16.msra.mxu0 %v1401
    %6492 = vmatpush.bf16.msra.mxu0 %v1393
    %6493 = vmatpush.bf16.msra.mxu0 %v1385
    %6494 = vmatpush.bf16.msra.mxu0 %v1377
    %6495 = vmatpush.bf16.msra.mxu0 %v1369
    %6496 = vmatmul.bf16.gmra.mxu0 %v6374
    %v6497 = vpop.f32.mrf.mxu0
    %v6498 = vadd.f32 0.0, %v6497
    %v6499 = vpop.f32.mrf.mxu0
    %v6500 = vadd.f32 0.0, %v6499
    %6501 = vdwg.mxu0
    %6502 = vmatpush.bf16.msra.mxu0 %v1489
    %6503 = vmatpush.bf16.msra.mxu0 %v1481
    %6504 = vmatpush.bf16.msra.mxu0 %v1473
    %6505 = vmatpush.bf16.msra.mxu0 %v1465
    %6506 = vmatpush.bf16.msra.mxu0 %v1457
    %6507 = vmatpush.bf16.msra.mxu0 %v1449
    %6508 = vmatpush.bf16.msra.mxu0 %v1441
    %6509 = vmatpush.bf16.msra.mxu0 %v1433
    %6510 = vmatmul.bf16.gmra.mxu0 %v6375
    %v6511 = vpop.f32.mrf.mxu0
    %v6512 = vadd.f32 %v6498, %v6511
    %v6513 = vpop.f32.mrf.mxu0
    %v6514 = vadd.f32 %v6500, %v6513
    %6515 = vdwg.mxu0
    %6516 = vmatpush.bf16.msra.mxu0 %v1426
    %6517 = vmatpush.bf16.msra.mxu0 %v1418
    %6518 = vmatpush.bf16.msra.mxu0 %v1410
    %6519 = vmatpush.bf16.msra.mxu0 %v1402
    %6520 = vmatpush.bf16.msra.mxu0 %v1394
    %6521 = vmatpush.bf16.msra.mxu0 %v1386
    %6522 = vmatpush.bf16.msra.mxu0 %v1378
    %6523 = vmatpush.bf16.msra.mxu0 %v1370
    %6524 = vmatmul.bf16.gmra.mxu0 %v6374
    %v6525 = vpop.f32.mrf.mxu0
    %v6526 = vadd.f32 0.0, %v6525
    %v6527 = vpop.f32.mrf.mxu0
    %v6528 = vadd.f32 0.0, %v6527
    %6529 = vdwg.mxu0
    %6530 = vmatpush.bf16.msra.mxu0 %v1490
    %6531 = vmatpush.bf16.msra.mxu0 %v1482
    %6532 = vmatpush.bf16.msra.mxu0 %v1474
    %6533 = vmatpush.bf16.msra.mxu0 %v1466
    %6534 = vmatpush.bf16.msra.mxu0 %v1458
    %6535 = vmatpush.bf16.msra.mxu0 %v1450
    %6536 = vmatpush.bf16.msra.mxu0 %v1442
    %6537 = vmatpush.bf16.msra.mxu0 %v1434
    %6538 = vmatmul.bf16.gmra.mxu0 %v6375
    %v6539 = vpop.f32.mrf.mxu0
    %v6540 = vadd.f32 %v6526, %v6539
    %v6541 = vpop.f32.mrf.mxu0
    %v6542 = vadd.f32 %v6528, %v6541
    %6543 = vdwg.mxu0
    %6544 = vmatpush.bf16.msra.mxu0 %v1427
    %6545 = vmatpush.bf16.msra.mxu0 %v1419
    %6546 = vmatpush.bf16.msra.mxu0 %v1411
    %6547 = vmatpush.bf16.msra.mxu0 %v1403
    %6548 = vmatpush.bf16.msra.mxu0 %v1395
    %6549 = vmatpush.bf16.msra.mxu0 %v1387
    %6550 = vmatpush.bf16.msra.mxu0 %v1379
    %6551 = vmatpush.bf16.msra.mxu0 %v1371
    %6552 = vmatmul.bf16.gmra.mxu0 %v6374
    %v6553 = vpop.f32.mrf.mxu0
    %v6554 = vadd.f32 0.0, %v6553
    %v6555 = vpop.f32.mrf.mxu0
    %v6556 = vadd.f32 0.0, %v6555
    %6557 = vdwg.mxu0
    %6558 = vmatpush.bf16.msra.mxu0 %v1491
    %6559 = vmatpush.bf16.msra.mxu0 %v1483
    %6560 = vmatpush.bf16.msra.mxu0 %v1475
    %6561 = vmatpush.bf16.msra.mxu0 %v1467
    %6562 = vmatpush.bf16.msra.mxu0 %v1459
    %6563 = vmatpush.bf16.msra.mxu0 %v1451
    %6564 = vmatpush.bf16.msra.mxu0 %v1443
    %6565 = vmatpush.bf16.msra.mxu0 %v1435
    %6566 = vmatmul.bf16.gmra.mxu0 %v6375
    %v6567 = vpop.f32.mrf.mxu0
    %v6568 = vadd.f32 %v6554, %v6567
    %v6569 = vpop.f32.mrf.mxu0
    %v6570 = vadd.f32 %v6556, %v6569
    %6571 = vdwg.mxu0
    %6572 = vmatpush.bf16.msra.mxu0 %v1428
    %6573 = vmatpush.bf16.msra.mxu0 %v1420
    %6574 = vmatpush.bf16.msra.mxu0 %v1412
    %6575 = vmatpush.bf16.msra.mxu0 %v1404
    %6576 = vmatpush.bf16.msra.mxu0 %v1396
    %6577 = vmatpush.bf16.msra.mxu0 %v1388
    %6578 = vmatpush.bf16.msra.mxu0 %v1380
    %6579 = vmatpush.bf16.msra.mxu0 %v1372
    %6580 = vmatmul.bf16.gmra.mxu0 %v6374
    %v6581 = vpop.f32.mrf.mxu0
    %v6582 = vadd.f32 0.0, %v6581
    %v6583 = vpop.f32.mrf.mxu0
    %v6584 = vadd.f32 0.0, %v6583
    %6585 = vdwg.mxu0
    %6586 = vmatpush.bf16.msra.mxu0 %v1492
    %6587 = vmatpush.bf16.msra.mxu0 %v1484
    %6588 = vmatpush.bf16.msra.mxu0 %v1476
    %6589 = vmatpush.bf16.msra.mxu0 %v1468
    %6590 = vmatpush.bf16.msra.mxu0 %v1460
    %6591 = vmatpush.bf16.msra.mxu0 %v1452
    %6592 = vmatpush.bf16.msra.mxu0 %v1444
    %6593 = vmatpush.bf16.msra.mxu0 %v1436
    %6594 = vmatmul.bf16.gmra.mxu0 %v6375
    %v6595 = vpop.f32.mrf.mxu0
    %v6596 = vadd.f32 %v6582, %v6595
    %v6597 = vpop.f32.mrf.mxu0
    %v6598 = vadd.f32 %v6584, %v6597
    %6599 = vdwg.mxu0
    %s6600 = scalar_lea.vmem [#allocation2], 512
    %v6601 = vld [vmem:[%s6600] sm:$0xff]
    %v6602 = vld [vmem:[%s6600 + $0x8] sm:$0xff]
    %v6603 = vld [vmem:[%s6600 + $0x10] sm:$0xff]
    %v6604 = vld [vmem:[%s6600 + $0x18] sm:$0xff]
    %v6605 = vld [vmem:[%s6600 + $0x20] sm:$0xff]
    %v6606 = vld [vmem:[%s6600 + $0x28] sm:$0xff]
    %v6607 = vld [vmem:[%s6600 + $0x30] sm:$0xff]
    %v6608 = vld [vmem:[%s6600 + $0x38] sm:$0xff]
    %v6609 = vld [vmem:[%s6600 + $0x40] sm:$0xff]
    %v6610 = vld [vmem:[%s6600 + $0x48] sm:$0xff]
    %v6611 = vld [vmem:[%s6600 + $0x50] sm:$0xff]
    %v6612 = vld [vmem:[%s6600 + $0x58] sm:$0xff]
    %v6613 = vld [vmem:[%s6600 + $0x60] sm:$0xff]
    %v6614 = vld [vmem:[%s6600 + $0x68] sm:$0xff]
    %v6615 = vld [vmem:[%s6600 + $0x70] sm:$0xff]
    %v6616 = vld [vmem:[%s6600 + $0x78] sm:$0xff]
    %6617 = vmatpush.bf16.msra.mxu0 %v2301
    %6618 = vmatpush.bf16.msra.mxu0 %v2293
    %6619 = vmatpush.bf16.msra.mxu0 %v2285
    %6620 = vmatpush.bf16.msra.mxu0 %v2277
    %6621 = vmatpush.bf16.msra.mxu0 %v2269
    %6622 = vmatpush.bf16.msra.mxu0 %v2261
    %6623 = vmatpush.bf16.msra.mxu0 %v2253
    %6624 = vmatpush.bf16.msra.mxu0 %v2245
    %6625 = vmatmul.bf16.gmra.mxu0 %v6060
    %v6626 = vpop.f32.mrf.mxu0
    %v6627 = vadd.f32 0.0, %v6626
    %v6628 = vpop.f32.mrf.mxu0
    %v6629 = vadd.f32 0.0, %v6628
    %6630 = vdwg.mxu0
    %6631 = vmatpush.bf16.msra.mxu0 %v2365
    %6632 = vmatpush.bf16.msra.mxu0 %v2357
    %6633 = vmatpush.bf16.msra.mxu0 %v2349
    %6634 = vmatpush.bf16.msra.mxu0 %v2341
    %6635 = vmatpush.bf16.msra.mxu0 %v2333
    %6636 = vmatpush.bf16.msra.mxu0 %v2325
    %6637 = vmatpush.bf16.msra.mxu0 %v2317
    %6638 = vmatpush.bf16.msra.mxu0 %v2309
    %6639 = vmatmul.bf16.gmra.mxu0 %v6061
    %v6640 = vpop.f32.mrf.mxu0
    %v6641 = vadd.f32 %v6627, %v6640
    %v6642 = vpop.f32.mrf.mxu0
    %v6643 = vadd.f32 %v6629, %v6642
    %6644 = vdwg.mxu0
    %6645 = vmatpush.bf16.msra.mxu0 %v2302
    %6646 = vmatpush.bf16.msra.mxu0 %v2294
    %6647 = vmatpush.bf16.msra.mxu0 %v2286
    %6648 = vmatpush.bf16.msra.mxu0 %v2278
    %6649 = vmatpush.bf16.msra.mxu0 %v2270
    %6650 = vmatpush.bf16.msra.mxu0 %v2262
    %6651 = vmatpush.bf16.msra.mxu0 %v2254
    %6652 = vmatpush.bf16.msra.mxu0 %v2246
    %6653 = vmatmul.bf16.gmra.mxu0 %v6060
    %v6654 = vpop.f32.mrf.mxu0
    %v6655 = vadd.f32 0.0, %v6654
    %v6656 = vpop.f32.mrf.mxu0
    %v6657 = vadd.f32 0.0, %v6656
    %6658 = vdwg.mxu0
    %6659 = vmatpush.bf16.msra.mxu0 %v2366
    %6660 = vmatpush.bf16.msra.mxu0 %v2358
    %6661 = vmatpush.bf16.msra.mxu0 %v2350
    %6662 = vmatpush.bf16.msra.mxu0 %v2342
    %6663 = vmatpush.bf16.msra.mxu0 %v2334
    %6664 = vmatpush.bf16.msra.mxu0 %v2326
    %6665 = vmatpush.bf16.msra.mxu0 %v2318
    %6666 = vmatpush.bf16.msra.mxu0 %v2310
    %6667 = vmatmul.bf16.gmra.mxu0 %v6061
    %v6668 = vpop.f32.mrf.mxu0
    %v6669 = vadd.f32 %v6655, %v6668
    %v6670 = vpop.f32.mrf.mxu0
    %v6671 = vadd.f32 %v6657, %v6670
    %6672 = vdwg.mxu0
    %6673 = vmatpush.bf16.msra.mxu0 %v2303
    %6674 = vmatpush.bf16.msra.mxu0 %v2295
    %6675 = vmatpush.bf16.msra.mxu0 %v2287
    %6676 = vmatpush.bf16.msra.mxu0 %v2279
    %6677 = vmatpush.bf16.msra.mxu0 %v2271
    %6678 = vmatpush.bf16.msra.mxu0 %v2263
    %6679 = vmatpush.bf16.msra.mxu0 %v2255
    %6680 = vmatpush.bf16.msra.mxu0 %v2247
    %6681 = vmatmul.bf16.gmra.mxu0 %v6060
    %v6682 = vpop.f32.mrf.mxu0
    %v6683 = vadd.f32 0.0, %v6682
    %v6684 = vpop.f32.mrf.mxu0
    %v6685 = vadd.f32 0.0, %v6684
    %6686 = vdwg.mxu0
    %6687 = vmatpush.bf16.msra.mxu0 %v2367
    %6688 = vmatpush.bf16.msra.mxu0 %v2359
    %6689 = vmatpush.bf16.msra.mxu0 %v2351
    %6690 = vmatpush.bf16.msra.mxu0 %v2343
    %6691 = vmatpush.bf16.msra.mxu0 %v2335
    %6692 = vmatpush.bf16.msra.mxu0 %v2327
    %6693 = vmatpush.bf16.msra.mxu0 %v2319
    %6694 = vmatpush.bf16.msra.mxu0 %v2311
    %6695 = vmatmul.bf16.gmra.mxu0 %v6061
    %v6696 = vpop.f32.mrf.mxu0
    %v6697 = vadd.f32 %v6683, %v6696
    %v6698 = vpop.f32.mrf.mxu0
    %v6699 = vadd.f32 %v6685, %v6698
    %6700 = vdwg.mxu0
    %6701 = vmatpush.bf16.msra.mxu0 %v2304
    %6702 = vmatpush.bf16.msra.mxu0 %v2296
    %6703 = vmatpush.bf16.msra.mxu0 %v2288
    %6704 = vmatpush.bf16.msra.mxu0 %v2280
    %6705 = vmatpush.bf16.msra.mxu0 %v2272
    %6706 = vmatpush.bf16.msra.mxu0 %v2264
    %6707 = vmatpush.bf16.msra.mxu0 %v2256
    %6708 = vmatpush.bf16.msra.mxu0 %v2248
    %6709 = vmatmul.bf16.gmra.mxu0 %v6060
    %v6710 = vpop.f32.mrf.mxu0
    %v6711 = vadd.f32 0.0, %v6710
    %v6712 = vpop.f32.mrf.mxu0
    %v6713 = vadd.f32 0.0, %v6712
    %6714 = vdwg.mxu0
    %6715 = vmatpush.bf16.msra.mxu0 %v2368
    %6716 = vmatpush.bf16.msra.mxu0 %v2360
    %6717 = vmatpush.bf16.msra.mxu0 %v2352
    %6718 = vmatpush.bf16.msra.mxu0 %v2344
    %6719 = vmatpush.bf16.msra.mxu0 %v2336
    %6720 = vmatpush.bf16.msra.mxu0 %v2328
    %6721 = vmatpush.bf16.msra.mxu0 %v2320
    %6722 = vmatpush.bf16.msra.mxu0 %v2312
    %6723 = vmatmul.bf16.gmra.mxu0 %v6061
    %v6724 = vpop.f32.mrf.mxu0
    %v6725 = vadd.f32 %v6711, %v6724
    %v6726 = vpop.f32.mrf.mxu0
    %v6727 = vadd.f32 %v6713, %v6726
    %6728 = vdwg.mxu0
    %6729 = vmatpush.bf16.msra.mxu0 %v2305
    %6730 = vmatpush.bf16.msra.mxu0 %v2297
    %6731 = vmatpush.bf16.msra.mxu0 %v2289
    %6732 = vmatpush.bf16.msra.mxu0 %v2281
    %6733 = vmatpush.bf16.msra.mxu0 %v2273
    %6734 = vmatpush.bf16.msra.mxu0 %v2265
    %6735 = vmatpush.bf16.msra.mxu0 %v2257
    %6736 = vmatpush.bf16.msra.mxu0 %v2249
    %6737 = vmatmul.bf16.gmra.mxu0 %v6060
    %v6738 = vpop.f32.mrf.mxu0
    %v6739 = vadd.f32 0.0, %v6738
    %v6740 = vpop.f32.mrf.mxu0
    %v6741 = vadd.f32 0.0, %v6740
    %6742 = vdwg.mxu0
    %6743 = vmatpush.bf16.msra.mxu0 %v2369
    %6744 = vmatpush.bf16.msra.mxu0 %v2361
    %6745 = vmatpush.bf16.msra.mxu0 %v2353
    %6746 = vmatpush.bf16.msra.mxu0 %v2345
    %6747 = vmatpush.bf16.msra.mxu0 %v2337
    %6748 = vmatpush.bf16.msra.mxu0 %v2329
    %6749 = vmatpush.bf16.msra.mxu0 %v2321
    %6750 = vmatpush.bf16.msra.mxu0 %v2313
    %6751 = vmatmul.bf16.gmra.mxu0 %v6061
    %v6752 = vpop.f32.mrf.mxu0
    %v6753 = vadd.f32 %v6739, %v6752
    %v6754 = vpop.f32.mrf.mxu0
    %v6755 = vadd.f32 %v6741, %v6754
    %6756 = vdwg.mxu0
    %6757 = vmatpush.bf16.msra.mxu0 %v2306
    %6758 = vmatpush.bf16.msra.mxu0 %v2298
    %6759 = vmatpush.bf16.msra.mxu0 %v2290
    %6760 = vmatpush.bf16.msra.mxu0 %v2282
    %6761 = vmatpush.bf16.msra.mxu0 %v2274
    %6762 = vmatpush.bf16.msra.mxu0 %v2266
    %6763 = vmatpush.bf16.msra.mxu0 %v2258
    %6764 = vmatpush.bf16.msra.mxu0 %v2250
    %6765 = vmatmul.bf16.gmra.mxu0 %v6060
    %v6766 = vpop.f32.mrf.mxu0
    %v6767 = vadd.f32 0.0, %v6766
    %v6768 = vpop.f32.mrf.mxu0
    %v6769 = vadd.f32 0.0, %v6768
    %6770 = vdwg.mxu0
    %6771 = vmatpush.bf16.msra.mxu0 %v2370
    %6772 = vmatpush.bf16.msra.mxu0 %v2362
    %6773 = vmatpush.bf16.msra.mxu0 %v2354
    %6774 = vmatpush.bf16.msra.mxu0 %v2346
    %6775 = vmatpush.bf16.msra.mxu0 %v2338
    %6776 = vmatpush.bf16.msra.mxu0 %v2330
    %6777 = vmatpush.bf16.msra.mxu0 %v2322
    %6778 = vmatpush.bf16.msra.mxu0 %v2314
    %6779 = vmatmul.bf16.gmra.mxu0 %v6061
    %v6780 = vpop.f32.mrf.mxu0
    %v6781 = vadd.f32 %v6767, %v6780
    %v6782 = vpop.f32.mrf.mxu0
    %v6783 = vadd.f32 %v6769, %v6782
    %6784 = vdwg.mxu0
    %6785 = vmatpush.bf16.msra.mxu0 %v2307
    %6786 = vmatpush.bf16.msra.mxu0 %v2299
    %6787 = vmatpush.bf16.msra.mxu0 %v2291
    %6788 = vmatpush.bf16.msra.mxu0 %v2283
    %6789 = vmatpush.bf16.msra.mxu0 %v2275
    %6790 = vmatpush.bf16.msra.mxu0 %v2267
    %6791 = vmatpush.bf16.msra.mxu0 %v2259
    %6792 = vmatpush.bf16.msra.mxu0 %v2251
    %6793 = vmatmul.bf16.gmra.mxu0 %v6060
    %v6794 = vpop.f32.mrf.mxu0
    %v6795 = vadd.f32 0.0, %v6794
    %v6796 = vpop.f32.mrf.mxu0
    %v6797 = vadd.f32 0.0, %v6796
    %6798 = vdwg.mxu0
    %6799 = vmatpush.bf16.msra.mxu0 %v2371
    %6800 = vmatpush.bf16.msra.mxu0 %v2363
    %6801 = vmatpush.bf16.msra.mxu0 %v2355
    %6802 = vmatpush.bf16.msra.mxu0 %v2347
    %6803 = vmatpush.bf16.msra.mxu0 %v2339
    %6804 = vmatpush.bf16.msra.mxu0 %v2331
    %6805 = vmatpush.bf16.msra.mxu0 %v2323
    %6806 = vmatpush.bf16.msra.mxu0 %v2315
    %6807 = vmatmul.bf16.gmra.mxu0 %v6061
    %v6808 = vpop.f32.mrf.mxu0
    %v6809 = vadd.f32 %v6795, %v6808
    %v6810 = vpop.f32.mrf.mxu0
    %v6811 = vadd.f32 %v6797, %v6810
    %6812 = vdwg.mxu0
    %6813 = vmatpush.bf16.msra.mxu0 %v2308
    %6814 = vmatpush.bf16.msra.mxu0 %v2300
    %6815 = vmatpush.bf16.msra.mxu0 %v2292
    %6816 = vmatpush.bf16.msra.mxu0 %v2284
    %6817 = vmatpush.bf16.msra.mxu0 %v2276
    %6818 = vmatpush.bf16.msra.mxu0 %v2268
    %6819 = vmatpush.bf16.msra.mxu0 %v2260
    %6820 = vmatpush.bf16.msra.mxu0 %v2252
    %6821 = vmatmul.bf16.gmra.mxu0 %v6060
    %v6822 = vpop.f32.mrf.mxu0
    %v6823 = vadd.f32 0.0, %v6822
    %v6824 = vpop.f32.mrf.mxu0
    %v6825 = vadd.f32 0.0, %v6824
    %6826 = vdwg.mxu0
    %6827 = vmatpush.bf16.msra.mxu0 %v2372
    %6828 = vmatpush.bf16.msra.mxu0 %v2364
    %6829 = vmatpush.bf16.msra.mxu0 %v2356
    %6830 = vmatpush.bf16.msra.mxu0 %v2348
    %6831 = vmatpush.bf16.msra.mxu0 %v2340
    %6832 = vmatpush.bf16.msra.mxu0 %v2332
    %6833 = vmatpush.bf16.msra.mxu0 %v2324
    %6834 = vmatpush.bf16.msra.mxu0 %v2316
    %6835 = vmatmul.bf16.gmra.mxu0 %v6061
    %v6836 = vpop.f32.mrf.mxu0
    %v6837 = vadd.f32 %v6823, %v6836
    %v6838 = vpop.f32.mrf.mxu0
    %v6839 = vadd.f32 %v6825, %v6838
    %6840 = vdwg.mxu0
    %v6841 = vadd.f32 %v6601, %v6641
    %v6842 = vadd.f32 %v6602, %v6669
    %v6843 = vadd.f32 %v6603, %v6697
    %v6844 = vadd.f32 %v6604, %v6725
    %v6845 = vadd.f32 %v6605, %v6753
    %v6846 = vadd.f32 %v6606, %v6781
    %v6847 = vadd.f32 %v6607, %v6809
    %v6848 = vadd.f32 %v6608, %v6837
    %v6849 = vadd.f32 %v6609, %v6643
    %v6850 = vadd.f32 %v6610, %v6671
    %v6851 = vadd.f32 %v6611, %v6699
    %v6852 = vadd.f32 %v6612, %v6727
    %v6853 = vadd.f32 %v6613, %v6755
    %v6854 = vadd.f32 %v6614, %v6783
    %v6855 = vadd.f32 %v6615, %v6811
    %v6856 = vadd.f32 %v6616, %v6839
    %v6857 = vmul.f32 %v6841, 0.5
    %v6858 = vmul.f32 %v6842, 0.5
    %v6859 = vmul.f32 %v6843, 0.5
    %v6860 = vmul.f32 %v6844, 0.5
    %v6861 = vmul.f32 %v6845, 0.5
    %v6862 = vmul.f32 %v6846, 0.5
    %v6863 = vmul.f32 %v6849, 0.5
    %v6864 = vmul.f32 %v6850, 0.5
    %v6865 = vmul.f32 %v6851, 0.5
    %v6866 = vmul.f32 %v6852, 0.5
    %v6867 = vmul.f32 %v6853, 0.5
    %v6868 = vmul.f32 %v6854, 0.5
    %v6869 = vtanh.pop %v6857
    %v6870 = vtanh.pop %v6858
    %v6871 = vtanh.pop %v6859
    %v6872 = vtanh.pop %v6860
    %v6873 = vtanh.pop %v6861
    %v6874 = vtanh.pop %v6862
    %v6875 = vtanh.pop %v6863
    %v6876 = vtanh.pop %v6864
    %v6877 = vtanh.pop %v6865
    %v6878 = vtanh.pop %v6866
    %v6879 = vtanh.pop %v6867
    %v6880 = vtanh.pop %v6868
    %v6881 = vmul.f32 %v6869, 0.5
    %v6882 = vmul.f32 %v6870, 0.5
    %v6883 = vmul.f32 %v6871, 0.5
    %v6884 = vmul.f32 %v6872, 0.5
    %v6885 = vmul.f32 %v6873, 0.5
    %v6886 = vmul.f32 %v6874, 0.5
    %v6887 = vmul.f32 %v6875, 0.5
    %v6888 = vmul.f32 %v6876, 0.5
    %v6889 = vmul.f32 %v6877, 0.5
    %v6890 = vmul.f32 %v6878, 0.5
    %v6891 = vmul.f32 %v6879, 0.5
    %v6892 = vmul.f32 %v6880, 0.5
    %v6893 = vadd.f32 %v6881, 0.5
    %v6894 = vadd.f32 %v6882, 0.5
    %v6895 = vadd.f32 %v6883, 0.5
    %v6896 = vadd.f32 %v6884, 0.5
    %v6897 = vadd.f32 %v6885, 0.5
    %v6898 = vadd.f32 %v6886, 0.5
    %v6899 = vadd.f32 %v6887, 0.5
    %v6900 = vadd.f32 %v6888, 0.5
    %v6901 = vadd.f32 %v6889, 0.5
    %v6902 = vadd.f32 %v6890, 0.5
    %v6903 = vadd.f32 %v6891, 0.5
    %v6904 = vadd.f32 %v6892, 0.5
    %v6905 = vtanh.pop %v6847
    %v6906 = vtanh.pop %v6848
    %v6907 = vtanh.pop %v6855
    %v6908 = vtanh.pop %v6856
    %v6909 = vmul.f32 %v6895, %v6048
    %v6910 = vmul.f32 %v6896, %v6049
    %v6911 = vmul.f32 %v6901, %v6050
    %v6912 = vmul.f32 %v6902, %v6051
    %v6913 = vmul.f32 %v6893, %v6905
    %v6914 = vmul.f32 %v6894, %v6906
    %v6915 = vmul.f32 %v6899, %v6907
    %v6916 = vmul.f32 %v6900, %v6908
    %v6917 = vadd.f32 %v6909, %v6913
    %v6918 = vadd.f32 %v6910, %v6914
    %v6919 = vadd.f32 %v6911, %v6915
    %v6920 = vadd.f32 %v6912, %v6916
    %v6921 = vtanh.pop %v6917
    %v6922 = vtanh.pop %v6918
    %v6923 = vtanh.pop %v6919
    %v6924 = vtanh.pop %v6920
    %v6925 = vmul.f32 %v6897, %v6921
    %v6926 = vmul.f32 %v6898, %v6922
    %v6927 = vmul.f32 %v6903, %v6923
    %v6928 = vmul.f32 %v6904, %v6924
    %v6929 = vpack.c.bf16 %v6927, %v6925
    %v6930 = vpack.c.bf16 %v6928, %v6926
    %6931 = vmatpush.bf16.msra.mxu0 %v3255
    %6932 = vmatpush.bf16.msra.mxu0 %v3247
    %6933 = vmatpush.bf16.msra.mxu0 %v3239
    %6934 = vmatpush.bf16.msra.mxu0 %v3231
    %6935 = vmatpush.bf16.msra.mxu0 %v3223
    %6936 = vmatpush.bf16.msra.mxu0 %v3215
    %6937 = vmatpush.bf16.msra.mxu0 %v3207
    %6938 = vmatpush.bf16.msra.mxu0 %v3199
    %6939 = vmatmul.bf16.gmra.mxu0 %v6929
    %v6940 = vpop.f32.mrf.mxu0
    %v6941 = vadd.f32 %v6400, %v6940
    %v6942 = vpop.f32.mrf.mxu0
    %v6943 = vadd.f32 %v6402, %v6942
    %6944 = vdwg.mxu0
    %6945 = vmatpush.bf16.msra.mxu0 %v3319
    %6946 = vmatpush.bf16.msra.mxu0 %v3311
    %6947 = vmatpush.bf16.msra.mxu0 %v3303
    %6948 = vmatpush.bf16.msra.mxu0 %v3295
    %6949 = vmatpush.bf16.msra.mxu0 %v3287
    %6950 = vmatpush.bf16.msra.mxu0 %v3279
    %6951 = vmatpush.bf16.msra.mxu0 %v3271
    %6952 = vmatpush.bf16.msra.mxu0 %v3263
    %6953 = vmatmul.bf16.gmra.mxu0 %v6930
    %v6954 = vpop.f32.mrf.mxu0
    %v6955 = vadd.f32 %v6941, %v6954
    %v6956 = vpop.f32.mrf.mxu0
    %v6957 = vadd.f32 %v6943, %v6956
    %6958 = vdwg.mxu0
    %6959 = vmatpush.bf16.msra.mxu0 %v3256
    %6960 = vmatpush.bf16.msra.mxu0 %v3248
    %6961 = vmatpush.bf16.msra.mxu0 %v3240
    %6962 = vmatpush.bf16.msra.mxu0 %v3232
    %6963 = vmatpush.bf16.msra.mxu0 %v3224
    %6964 = vmatpush.bf16.msra.mxu0 %v3216
    %6965 = vmatpush.bf16.msra.mxu0 %v3208
    %6966 = vmatpush.bf16.msra.mxu0 %v3200
    %6967 = vmatmul.bf16.gmra.mxu0 %v6929
    %v6968 = vpop.f32.mrf.mxu0
    %v6969 = vadd.f32 %v6428, %v6968
    %v6970 = vpop.f32.mrf.mxu0
    %v6971 = vadd.f32 %v6430, %v6970
    %6972 = vdwg.mxu0
    %6973 = vmatpush.bf16.msra.mxu0 %v3320
    %6974 = vmatpush.bf16.msra.mxu0 %v3312
    %6975 = vmatpush.bf16.msra.mxu0 %v3304
    %6976 = vmatpush.bf16.msra.mxu0 %v3296
    %6977 = vmatpush.bf16.msra.mxu0 %v3288
    %6978 = vmatpush.bf16.msra.mxu0 %v3280
    %6979 = vmatpush.bf16.msra.mxu0 %v3272
    %6980 = vmatpush.bf16.msra.mxu0 %v3264
    %6981 = vmatmul.bf16.gmra.mxu0 %v6930
    %v6982 = vpop.f32.mrf.mxu0
    %v6983 = vadd.f32 %v6969, %v6982
    %v6984 = vpop.f32.mrf.mxu0
    %v6985 = vadd.f32 %v6971, %v6984
    %6986 = vdwg.mxu0
    %6987 = vmatpush.bf16.msra.mxu0 %v3257
    %6988 = vmatpush.bf16.msra.mxu0 %v3249
    %6989 = vmatpush.bf16.msra.mxu0 %v3241
    %6990 = vmatpush.bf16.msra.mxu0 %v3233
    %6991 = vmatpush.bf16.msra.mxu0 %v3225
    %6992 = vmatpush.bf16.msra.mxu0 %v3217
    %6993 = vmatpush.bf16.msra.mxu0 %v3209
    %6994 = vmatpush.bf16.msra.mxu0 %v3201
    %6995 = vmatmul.bf16.gmra.mxu0 %v6929
    %v6996 = vpop.f32.mrf.mxu0
    %v6997 = vadd.f32 %v6456, %v6996
    %v6998 = vpop.f32.mrf.mxu0
    %v6999 = vadd.f32 %v6458, %v6998
    %7000 = vdwg.mxu0
    %7001 = vmatpush.bf16.msra.mxu0 %v3321
    %7002 = vmatpush.bf16.msra.mxu0 %v3313
    %7003 = vmatpush.bf16.msra.mxu0 %v3305
    %7004 = vmatpush.bf16.msra.mxu0 %v3297
    %7005 = vmatpush.bf16.msra.mxu0 %v3289
    %7006 = vmatpush.bf16.msra.mxu0 %v3281
    %7007 = vmatpush.bf16.msra.mxu0 %v3273
    %7008 = vmatpush.bf16.msra.mxu0 %v3265
    %7009 = vmatmul.bf16.gmra.mxu0 %v6930
    %v7010 = vpop.f32.mrf.mxu0
    %v7011 = vadd.f32 %v6997, %v7010
    %v7012 = vpop.f32.mrf.mxu0
    %v7013 = vadd.f32 %v6999, %v7012
    %7014 = vdwg.mxu0
    %7015 = vmatpush.bf16.msra.mxu0 %v3258
    %7016 = vmatpush.bf16.msra.mxu0 %v3250
    %7017 = vmatpush.bf16.msra.mxu0 %v3242
    %7018 = vmatpush.bf16.msra.mxu0 %v3234
    %7019 = vmatpush.bf16.msra.mxu0 %v3226
    %7020 = vmatpush.bf16.msra.mxu0 %v3218
    %7021 = vmatpush.bf16.msra.mxu0 %v3210
    %7022 = vmatpush.bf16.msra.mxu0 %v3202
    %7023 = vmatmul.bf16.gmra.mxu0 %v6929
    %v7024 = vpop.f32.mrf.mxu0
    %v7025 = vadd.f32 %v6484, %v7024
    %v7026 = vpop.f32.mrf.mxu0
    %v7027 = vadd.f32 %v6486, %v7026
    %7028 = vdwg.mxu0
    %7029 = vmatpush.bf16.msra.mxu0 %v3322
    %7030 = vmatpush.bf16.msra.mxu0 %v3314
    %7031 = vmatpush.bf16.msra.mxu0 %v3306
    %7032 = vmatpush.bf16.msra.mxu0 %v3298
    %7033 = vmatpush.bf16.msra.mxu0 %v3290
    %7034 = vmatpush.bf16.msra.mxu0 %v3282
    %7035 = vmatpush.bf16.msra.mxu0 %v3274
    %7036 = vmatpush.bf16.msra.mxu0 %v3266
    %7037 = vmatmul.bf16.gmra.mxu0 %v6930
    %v7038 = vpop.f32.mrf.mxu0
    %v7039 = vadd.f32 %v7025, %v7038
    %v7040 = vpop.f32.mrf.mxu0
    %v7041 = vadd.f32 %v7027, %v7040
    %7042 = vdwg.mxu0
    %7043 = vmatpush.bf16.msra.mxu0 %v3259
    %7044 = vmatpush.bf16.msra.mxu0 %v3251
    %7045 = vmatpush.bf16.msra.mxu0 %v3243
    %7046 = vmatpush.bf16.msra.mxu0 %v3235
    %7047 = vmatpush.bf16.msra.mxu0 %v3227
    %7048 = vmatpush.bf16.msra.mxu0 %v3219
    %7049 = vmatpush.bf16.msra.mxu0 %v3211
    %7050 = vmatpush.bf16.msra.mxu0 %v3203
    %7051 = vmatmul.bf16.gmra.mxu0 %v6929
    %v7052 = vpop.f32.mrf.mxu0
    %v7053 = vadd.f32 %v6512, %v7052
    %v7054 = vpop.f32.mrf.mxu0
    %v7055 = vadd.f32 %v6514, %v7054
    %7056 = vdwg.mxu0
    %7057 = vmatpush.bf16.msra.mxu0 %v3323
    %7058 = vmatpush.bf16.msra.mxu0 %v3315
    %7059 = vmatpush.bf16.msra.mxu0 %v3307
    %7060 = vmatpush.bf16.msra.mxu0 %v3299
    %7061 = vmatpush.bf16.msra.mxu0 %v3291
    %7062 = vmatpush.bf16.msra.mxu0 %v3283
    %7063 = vmatpush.bf16.msra.mxu0 %v3275
    %7064 = vmatpush.bf16.msra.mxu0 %v3267
    %7065 = vmatmul.bf16.gmra.mxu0 %v6930
    %v7066 = vpop.f32.mrf.mxu0
    %v7067 = vadd.f32 %v7053, %v7066
    %v7068 = vpop.f32.mrf.mxu0
    %v7069 = vadd.f32 %v7055, %v7068
    %7070 = vdwg.mxu0
    %7071 = vmatpush.bf16.msra.mxu0 %v3260
    %7072 = vmatpush.bf16.msra.mxu0 %v3252
    %7073 = vmatpush.bf16.msra.mxu0 %v3244
    %7074 = vmatpush.bf16.msra.mxu0 %v3236
    %7075 = vmatpush.bf16.msra.mxu0 %v3228
    %7076 = vmatpush.bf16.msra.mxu0 %v3220
    %7077 = vmatpush.bf16.msra.mxu0 %v3212
    %7078 = vmatpush.bf16.msra.mxu0 %v3204
    %7079 = vmatmul.bf16.gmra.mxu0 %v6929
    %v7080 = vpop.f32.mrf.mxu0
    %v7081 = vadd.f32 %v6540, %v7080
    %v7082 = vpop.f32.mrf.mxu0
    %v7083 = vadd.f32 %v6542, %v7082
    %7084 = vdwg.mxu0
    %7085 = vmatpush.bf16.msra.mxu0 %v3324
    %7086 = vmatpush.bf16.msra.mxu0 %v3316
    %7087 = vmatpush.bf16.msra.mxu0 %v3308
    %7088 = vmatpush.bf16.msra.mxu0 %v3300
    %7089 = vmatpush.bf16.msra.mxu0 %v3292
    %7090 = vmatpush.bf16.msra.mxu0 %v3284
    %7091 = vmatpush.bf16.msra.mxu0 %v3276
    %7092 = vmatpush.bf16.msra.mxu0 %v3268
    %7093 = vmatmul.bf16.gmra.mxu0 %v6930
    %v7094 = vpop.f32.mrf.mxu0
    %v7095 = vadd.f32 %v7081, %v7094
    %v7096 = vpop.f32.mrf.mxu0
    %v7097 = vadd.f32 %v7083, %v7096
    %7098 = vdwg.mxu0
    %7099 = vmatpush.bf16.msra.mxu0 %v3261
    %7100 = vmatpush.bf16.msra.mxu0 %v3253
    %7101 = vmatpush.bf16.msra.mxu0 %v3245
    %7102 = vmatpush.bf16.msra.mxu0 %v3237
    %7103 = vmatpush.bf16.msra.mxu0 %v3229
    %7104 = vmatpush.bf16.msra.mxu0 %v3221
    %7105 = vmatpush.bf16.msra.mxu0 %v3213
    %7106 = vmatpush.bf16.msra.mxu0 %v3205
    %7107 = vmatmul.bf16.gmra.mxu0 %v6929
    %v7108 = vpop.f32.mrf.mxu0
    %v7109 = vadd.f32 %v6568, %v7108
    %v7110 = vpop.f32.mrf.mxu0
    %v7111 = vadd.f32 %v6570, %v7110
    %7112 = vdwg.mxu0
    %7113 = vmatpush.bf16.msra.mxu0 %v3325
    %7114 = vmatpush.bf16.msra.mxu0 %v3317
    %7115 = vmatpush.bf16.msra.mxu0 %v3309
    %7116 = vmatpush.bf16.msra.mxu0 %v3301
    %7117 = vmatpush.bf16.msra.mxu0 %v3293
    %7118 = vmatpush.bf16.msra.mxu0 %v3285
    %7119 = vmatpush.bf16.msra.mxu0 %v3277
    %7120 = vmatpush.bf16.msra.mxu0 %v3269
    %7121 = vmatmul.bf16.gmra.mxu0 %v6930
    %v7122 = vpop.f32.mrf.mxu0
    %v7123 = vadd.f32 %v7109, %v7122
    %v7124 = vpop.f32.mrf.mxu0
    %v7125 = vadd.f32 %v7111, %v7124
    %7126 = vdwg.mxu0
    %7127 = vmatpush.bf16.msra.mxu0 %v3262
    %7128 = vmatpush.bf16.msra.mxu0 %v3254
    %7129 = vmatpush.bf16.msra.mxu0 %v3246
    %7130 = vmatpush.bf16.msra.mxu0 %v3238
    %7131 = vmatpush.bf16.msra.mxu0 %v3230
    %7132 = vmatpush.bf16.msra.mxu0 %v3222
    %7133 = vmatpush.bf16.msra.mxu0 %v3214
    %7134 = vmatpush.bf16.msra.mxu0 %v3206
    %7135 = vmatmul.bf16.gmra.mxu0 %v6929
    %v7136 = vpop.f32.mrf.mxu0
    %v7137 = vadd.f32 %v6596, %v7136
    %v7138 = vpop.f32.mrf.mxu0
    %v7139 = vadd.f32 %v6598, %v7138
    %7140 = vdwg.mxu0
    %7141 = vmatpush.bf16.msra.mxu0 %v3326
    %7142 = vmatpush.bf16.msra.mxu0 %v3318
    %7143 = vmatpush.bf16.msra.mxu0 %v3310
    %7144 = vmatpush.bf16.msra.mxu0 %v3302
    %7145 = vmatpush.bf16.msra.mxu0 %v3294
    %7146 = vmatpush.bf16.msra.mxu0 %v3286
    %7147 = vmatpush.bf16.msra.mxu0 %v3278
    %7148 = vmatpush.bf16.msra.mxu0 %v3270
    %7149 = vmatmul.bf16.gmra.mxu0 %v6930
    %v7150 = vpop.f32.mrf.mxu0
    %v7151 = vadd.f32 %v7137, %v7150
    %v7152 = vpop.f32.mrf.mxu0
    %v7153 = vadd.f32 %v7139, %v7152
    %7154 = vdwg.mxu0
    %v7155 = vadd.f32 %v6955, %v449
    %v7156 = vadd.f32 %v6983, %v450
    %v7157 = vadd.f32 %v7011, %v451
    %v7158 = vadd.f32 %v7039, %v452
    %v7159 = vadd.f32 %v7067, %v453
    %v7160 = vadd.f32 %v7095, %v454
    %v7161 = vadd.f32 %v7123, %v455
    %v7162 = vadd.f32 %v7151, %v456
    %v7163 = vadd.f32 %v6957, %v449
    %v7164 = vadd.f32 %v6985, %v450
    %v7165 = vadd.f32 %v7013, %v451
    %v7166 = vadd.f32 %v7041, %v452
    %v7167 = vadd.f32 %v7069, %v453
    %v7168 = vadd.f32 %v7097, %v454
    %v7169 = vadd.f32 %v7125, %v455
    %v7170 = vadd.f32 %v7153, %v456
    %v7171 = vmul.f32 %v7155, 0.5
    %v7172 = vmul.f32 %v7156, 0.5
    %v7173 = vmul.f32 %v7157, 0.5
    %v7174 = vmul.f32 %v7158, 0.5
    %v7175 = vmul.f32 %v7159, 0.5
    %v7176 = vmul.f32 %v7160, 0.5
    %v7177 = vmul.f32 %v7163, 0.5
    %v7178 = vmul.f32 %v7164, 0.5
    %v7179 = vmul.f32 %v7165, 0.5
    %v7180 = vmul.f32 %v7166, 0.5
    %v7181 = vmul.f32 %v7167, 0.5
    %v7182 = vmul.f32 %v7168, 0.5
    %v7183 = vtanh.pop %v7171
    %v7184 = vtanh.pop %v7172
    %v7185 = vtanh.pop %v7173
    %v7186 = vtanh.pop %v7174
    %v7187 = vtanh.pop %v7175
    %v7188 = vtanh.pop %v7176
    %v7189 = vtanh.pop %v7177
    %v7190 = vtanh.pop %v7178
    %v7191 = vtanh.pop %v7179
    %v7192 = vtanh.pop %v7180
    %v7193 = vtanh.pop %v7181
    %v7194 = vtanh.pop %v7182
    %v7195 = vmul.f32 %v7183, 0.5
    %v7196 = vmul.f32 %v7184, 0.5
    %v7197 = vmul.f32 %v7185, 0.5
    %v7198 = vmul.f32 %v7186, 0.5
    %v7199 = vmul.f32 %v7187, 0.5
    %v7200 = vmul.f32 %v7188, 0.5
    %v7201 = vmul.f32 %v7189, 0.5
    %v7202 = vmul.f32 %v7190, 0.5
    %v7203 = vmul.f32 %v7191, 0.5
    %v7204 = vmul.f32 %v7192, 0.5
    %v7205 = vmul.f32 %v7193, 0.5
    %v7206 = vmul.f32 %v7194, 0.5
    %v7207 = vadd.f32 %v7195, 0.5
    %v7208 = vadd.f32 %v7196, 0.5
    %v7209 = vadd.f32 %v7197, 0.5
    %v7210 = vadd.f32 %v7198, 0.5
    %v7211 = vadd.f32 %v7199, 0.5
    %v7212 = vadd.f32 %v7200, 0.5
    %v7213 = vadd.f32 %v7201, 0.5
    %v7214 = vadd.f32 %v7202, 0.5
    %v7215 = vadd.f32 %v7203, 0.5
    %v7216 = vadd.f32 %v7204, 0.5
    %v7217 = vadd.f32 %v7205, 0.5
    %v7218 = vadd.f32 %v7206, 0.5
    %v7219 = vtanh.pop %v7161
    %v7220 = vtanh.pop %v7162
    %v7221 = vtanh.pop %v7169
    %v7222 = vtanh.pop %v7170
    %v7223 = vmul.f32 %v7209, %v6362
    %v7224 = vmul.f32 %v7210, %v6363
    %v7225 = vmul.f32 %v7215, %v6364
    %v7226 = vmul.f32 %v7216, %v6365
    %v7227 = vmul.f32 %v7207, %v7219
    %v7228 = vmul.f32 %v7208, %v7220
    %v7229 = vmul.f32 %v7213, %v7221
    %v7230 = vmul.f32 %v7214, %v7222
    %v7231 = vadd.f32 %v7223, %v7227
    %v7232 = vadd.f32 %v7224, %v7228
    %v7233 = vadd.f32 %v7225, %v7229
    %v7234 = vadd.f32 %v7226, %v7230
    %v7235 = vtanh.pop %v7231
    %v7236 = vtanh.pop %v7232
    %v7237 = vtanh.pop %v7233
    %v7238 = vtanh.pop %v7234
    %v7239 = vmul.f32 %v7211, %v7235
    %v7240 = vmul.f32 %v7212, %v7236
    %v7241 = vmul.f32 %v7217, %v7237
    %v7242 = vmul.f32 %v7218, %v7238
    %v7243 = vpack.c.bf16 %v7241, %v7239
    %v7244 = vpack.c.bf16 %v7242, %v7240
    %7245 = vmatpush.bf16.msra.mxu0 %v1421
    %7246 = vmatpush.bf16.msra.mxu0 %v1413
    %7247 = vmatpush.bf16.msra.mxu0 %v1405
    %7248 = vmatpush.bf16.msra.mxu0 %v1397
    %7249 = vmatpush.bf16.msra.mxu0 %v1389
    %7250 = vmatpush.bf16.msra.mxu0 %v1381
    %7251 = vmatpush.bf16.msra.mxu0 %v1373
    %7252 = vmatpush.bf16.msra.mxu0 %v1365
    %7253 = vmatmul.bf16.gmra.mxu0 %v7243
    %v7254 = vpop.f32.mrf.mxu0
    %v7255 = vadd.f32 0.0, %v7254
    %v7256 = vpop.f32.mrf.mxu0
    %v7257 = vadd.f32 0.0, %v7256
    %7258 = vdwg.mxu0
    %7259 = vmatpush.bf16.msra.mxu0 %v1485
    %7260 = vmatpush.bf16.msra.mxu0 %v1477
    %7261 = vmatpush.bf16.msra.mxu0 %v1469
    %7262 = vmatpush.bf16.msra.mxu0 %v1461
    %7263 = vmatpush.bf16.msra.mxu0 %v1453
    %7264 = vmatpush.bf16.msra.mxu0 %v1445
    %7265 = vmatpush.bf16.msra.mxu0 %v1437
    %7266 = vmatpush.bf16.msra.mxu0 %v1429
    %7267 = vmatmul.bf16.gmra.mxu0 %v7244
    %v7268 = vpop.f32.mrf.mxu0
    %v7269 = vadd.f32 %v7255, %v7268
    %v7270 = vpop.f32.mrf.mxu0
    %v7271 = vadd.f32 %v7257, %v7270
    %7272 = vdwg.mxu0
    %7273 = vmatpush.bf16.msra.mxu0 %v1422
    %7274 = vmatpush.bf16.msra.mxu0 %v1414
    %7275 = vmatpush.bf16.msra.mxu0 %v1406
    %7276 = vmatpush.bf16.msra.mxu0 %v1398
    %7277 = vmatpush.bf16.msra.mxu0 %v1390
    %7278 = vmatpush.bf16.msra.mxu0 %v1382
    %7279 = vmatpush.bf16.msra.mxu0 %v1374
    %7280 = vmatpush.bf16.msra.mxu0 %v1366
    %7281 = vmatmul.bf16.gmra.mxu0 %v7243
    %v7282 = vpop.f32.mrf.mxu0
    %v7283 = vadd.f32 0.0, %v7282
    %v7284 = vpop.f32.mrf.mxu0
    %v7285 = vadd.f32 0.0, %v7284
    %7286 = vdwg.mxu0
    %7287 = vmatpush.bf16.msra.mxu0 %v1486
    %7288 = vmatpush.bf16.msra.mxu0 %v1478
    %7289 = vmatpush.bf16.msra.mxu0 %v1470
    %7290 = vmatpush.bf16.msra.mxu0 %v1462
    %7291 = vmatpush.bf16.msra.mxu0 %v1454
    %7292 = vmatpush.bf16.msra.mxu0 %v1446
    %7293 = vmatpush.bf16.msra.mxu0 %v1438
    %7294 = vmatpush.bf16.msra.mxu0 %v1430
    %7295 = vmatmul.bf16.gmra.mxu0 %v7244
    %v7296 = vpop.f32.mrf.mxu0
    %v7297 = vadd.f32 %v7283, %v7296
    %v7298 = vpop.f32.mrf.mxu0
    %v7299 = vadd.f32 %v7285, %v7298
    %7300 = vdwg.mxu0
    %7301 = vmatpush.bf16.msra.mxu0 %v1423
    %7302 = vmatpush.bf16.msra.mxu0 %v1415
    %7303 = vmatpush.bf16.msra.mxu0 %v1407
    %7304 = vmatpush.bf16.msra.mxu0 %v1399
    %7305 = vmatpush.bf16.msra.mxu0 %v1391
    %7306 = vmatpush.bf16.msra.mxu0 %v1383
    %7307 = vmatpush.bf16.msra.mxu0 %v1375
    %7308 = vmatpush.bf16.msra.mxu0 %v1367
    %7309 = vmatmul.bf16.gmra.mxu0 %v7243
    %v7310 = vpop.f32.mrf.mxu0
    %v7311 = vadd.f32 0.0, %v7310
    %v7312 = vpop.f32.mrf.mxu0
    %v7313 = vadd.f32 0.0, %v7312
    %7314 = vdwg.mxu0
    %7315 = vmatpush.bf16.msra.mxu0 %v1487
    %7316 = vmatpush.bf16.msra.mxu0 %v1479
    %7317 = vmatpush.bf16.msra.mxu0 %v1471
    %7318 = vmatpush.bf16.msra.mxu0 %v1463
    %7319 = vmatpush.bf16.msra.mxu0 %v1455
    %7320 = vmatpush.bf16.msra.mxu0 %v1447
    %7321 = vmatpush.bf16.msra.mxu0 %v1439
    %7322 = vmatpush.bf16.msra.mxu0 %v1431
    %7323 = vmatmul.bf16.gmra.mxu0 %v7244
    %v7324 = vpop.f32.mrf.mxu0
    %v7325 = vadd.f32 %v7311, %v7324
    %v7326 = vpop.f32.mrf.mxu0
    %v7327 = vadd.f32 %v7313, %v7326
    %7328 = vdwg.mxu0
    %7329 = vmatpush.bf16.msra.mxu0 %v1424
    %7330 = vmatpush.bf16.msra.mxu0 %v1416
    %7331 = vmatpush.bf16.msra.mxu0 %v1408
    %7332 = vmatpush.bf16.msra.mxu0 %v1400
    %7333 = vmatpush.bf16.msra.mxu0 %v1392
    %7334 = vmatpush.bf16.msra.mxu0 %v1384
    %7335 = vmatpush.bf16.msra.mxu0 %v1376
    %7336 = vmatpush.bf16.msra.mxu0 %v1368
    %7337 = vmatmul.bf16.gmra.mxu0 %v7243
    %v7338 = vpop.f32.mrf.mxu0
    %v7339 = vadd.f32 0.0, %v7338
    %v7340 = vpop.f32.mrf.mxu0
    %v7341 = vadd.f32 0.0, %v7340
    %7342 = vdwg.mxu0
    %7343 = vmatpush.bf16.msra.mxu0 %v1488
    %7344 = vmatpush.bf16.msra.mxu0 %v1480
    %7345 = vmatpush.bf16.msra.mxu0 %v1472
    %7346 = vmatpush.bf16.msra.mxu0 %v1464
    %7347 = vmatpush.bf16.msra.mxu0 %v1456
    %7348 = vmatpush.bf16.msra.mxu0 %v1448
    %7349 = vmatpush.bf16.msra.mxu0 %v1440
    %7350 = vmatpush.bf16.msra.mxu0 %v1432
    %7351 = vmatmul.bf16.gmra.mxu0 %v7244
    %v7352 = vpop.f32.mrf.mxu0
    %v7353 = vadd.f32 %v7339, %v7352
    %v7354 = vpop.f32.mrf.mxu0
    %v7355 = vadd.f32 %v7341, %v7354
    %7356 = vdwg.mxu0
    %7357 = vmatpush.bf16.msra.mxu0 %v1425
    %7358 = vmatpush.bf16.msra.mxu0 %v1417
    %7359 = vmatpush.bf16.msra.mxu0 %v1409
    %7360 = vmatpush.bf16.msra.mxu0 %v1401
    %7361 = vmatpush.bf16.msra.mxu0 %v1393
    %7362 = vmatpush.bf16.msra.mxu0 %v1385
    %7363 = vmatpush.bf16.msra.mxu0 %v1377
    %7364 = vmatpush.bf16.msra.mxu0 %v1369
    %7365 = vmatmul.bf16.gmra.mxu0 %v7243
    %v7366 = vpop.f32.mrf.mxu0
    %v7367 = vadd.f32 0.0, %v7366
    %v7368 = vpop.f32.mrf.mxu0
    %v7369 = vadd.f32 0.0, %v7368
    %7370 = vdwg.mxu0
    %7371 = vmatpush.bf16.msra.mxu0 %v1489
    %7372 = vmatpush.bf16.msra.mxu0 %v1481
    %7373 = vmatpush.bf16.msra.mxu0 %v1473
    %7374 = vmatpush.bf16.msra.mxu0 %v1465
    %7375 = vmatpush.bf16.msra.mxu0 %v1457
    %7376 = vmatpush.bf16.msra.mxu0 %v1449
    %7377 = vmatpush.bf16.msra.mxu0 %v1441
    %7378 = vmatpush.bf16.msra.mxu0 %v1433
    %7379 = vmatmul.bf16.gmra.mxu0 %v7244
    %v7380 = vpop.f32.mrf.mxu0
    %v7381 = vadd.f32 %v7367, %v7380
    %v7382 = vpop.f32.mrf.mxu0
    %v7383 = vadd.f32 %v7369, %v7382
    %7384 = vdwg.mxu0
    %7385 = vmatpush.bf16.msra.mxu0 %v1426
    %7386 = vmatpush.bf16.msra.mxu0 %v1418
    %7387 = vmatpush.bf16.msra.mxu0 %v1410
    %7388 = vmatpush.bf16.msra.mxu0 %v1402
    %7389 = vmatpush.bf16.msra.mxu0 %v1394
    %7390 = vmatpush.bf16.msra.mxu0 %v1386
    %7391 = vmatpush.bf16.msra.mxu0 %v1378
    %7392 = vmatpush.bf16.msra.mxu0 %v1370
    %7393 = vmatmul.bf16.gmra.mxu0 %v7243
    %v7394 = vpop.f32.mrf.mxu0
    %v7395 = vadd.f32 0.0, %v7394
    %v7396 = vpop.f32.mrf.mxu0
    %v7397 = vadd.f32 0.0, %v7396
    %7398 = vdwg.mxu0
    %7399 = vmatpush.bf16.msra.mxu0 %v1490
    %7400 = vmatpush.bf16.msra.mxu0 %v1482
    %7401 = vmatpush.bf16.msra.mxu0 %v1474
    %7402 = vmatpush.bf16.msra.mxu0 %v1466
    %7403 = vmatpush.bf16.msra.mxu0 %v1458
    %7404 = vmatpush.bf16.msra.mxu0 %v1450
    %7405 = vmatpush.bf16.msra.mxu0 %v1442
    %7406 = vmatpush.bf16.msra.mxu0 %v1434
    %7407 = vmatmul.bf16.gmra.mxu0 %v7244
    %v7408 = vpop.f32.mrf.mxu0
    %v7409 = vadd.f32 %v7395, %v7408
    %v7410 = vpop.f32.mrf.mxu0
    %v7411 = vadd.f32 %v7397, %v7410
    %7412 = vdwg.mxu0
    %7413 = vmatpush.bf16.msra.mxu0 %v1427
    %7414 = vmatpush.bf16.msra.mxu0 %v1419
    %7415 = vmatpush.bf16.msra.mxu0 %v1411
    %7416 = vmatpush.bf16.msra.mxu0 %v1403
    %7417 = vmatpush.bf16.msra.mxu0 %v1395
    %7418 = vmatpush.bf16.msra.mxu0 %v1387
    %7419 = vmatpush.bf16.msra.mxu0 %v1379
    %7420 = vmatpush.bf16.msra.mxu0 %v1371
    %7421 = vmatmul.bf16.gmra.mxu0 %v7243
    %v7422 = vpop.f32.mrf.mxu0
    %v7423 = vadd.f32 0.0, %v7422
    %v7424 = vpop.f32.mrf.mxu0
    %v7425 = vadd.f32 0.0, %v7424
    %7426 = vdwg.mxu0
    %7427 = vmatpush.bf16.msra.mxu0 %v1491
    %7428 = vmatpush.bf16.msra.mxu0 %v1483
    %7429 = vmatpush.bf16.msra.mxu0 %v1475
    %7430 = vmatpush.bf16.msra.mxu0 %v1467
    %7431 = vmatpush.bf16.msra.mxu0 %v1459
    %7432 = vmatpush.bf16.msra.mxu0 %v1451
    %7433 = vmatpush.bf16.msra.mxu0 %v1443
    %7434 = vmatpush.bf16.msra.mxu0 %v1435
    %7435 = vmatmul.bf16.gmra.mxu0 %v7244
    %v7436 = vpop.f32.mrf.mxu0
    %v7437 = vadd.f32 %v7423, %v7436
    %v7438 = vpop.f32.mrf.mxu0
    %v7439 = vadd.f32 %v7425, %v7438
    %7440 = vdwg.mxu0
    %7441 = vmatpush.bf16.msra.mxu0 %v1428
    %7442 = vmatpush.bf16.msra.mxu0 %v1420
    %7443 = vmatpush.bf16.msra.mxu0 %v1412
    %7444 = vmatpush.bf16.msra.mxu0 %v1404
    %7445 = vmatpush.bf16.msra.mxu0 %v1396
    %7446 = vmatpush.bf16.msra.mxu0 %v1388
    %7447 = vmatpush.bf16.msra.mxu0 %v1380
    %7448 = vmatpush.bf16.msra.mxu0 %v1372
    %7449 = vmatmul.bf16.gmra.mxu0 %v7243
    %v7450 = vpop.f32.mrf.mxu0
    %v7451 = vadd.f32 0.0, %v7450
    %v7452 = vpop.f32.mrf.mxu0
    %v7453 = vadd.f32 0.0, %v7452
    %7454 = vdwg.mxu0
    %7455 = vmatpush.bf16.msra.mxu0 %v1492
    %7456 = vmatpush.bf16.msra.mxu0 %v1484
    %7457 = vmatpush.bf16.msra.mxu0 %v1476
    %7458 = vmatpush.bf16.msra.mxu0 %v1468
    %7459 = vmatpush.bf16.msra.mxu0 %v1460
    %7460 = vmatpush.bf16.msra.mxu0 %v1452
    %7461 = vmatpush.bf16.msra.mxu0 %v1444
    %7462 = vmatpush.bf16.msra.mxu0 %v1436
    %7463 = vmatmul.bf16.gmra.mxu0 %v7244
    %v7464 = vpop.f32.mrf.mxu0
    %v7465 = vadd.f32 %v7451, %v7464
    %v7466 = vpop.f32.mrf.mxu0
    %v7467 = vadd.f32 %v7453, %v7466
    %7468 = vdwg.mxu0
    %s7469 = scalar_lea.vmem [#allocation2], 640
    %v7470 = vld [vmem:[%s7469] sm:$0xff]
    %v7471 = vld [vmem:[%s7469 + $0x8] sm:$0xff]
    %v7472 = vld [vmem:[%s7469 + $0x10] sm:$0xff]
    %v7473 = vld [vmem:[%s7469 + $0x18] sm:$0xff]
    %v7474 = vld [vmem:[%s7469 + $0x20] sm:$0xff]
    %v7475 = vld [vmem:[%s7469 + $0x28] sm:$0xff]
    %v7476 = vld [vmem:[%s7469 + $0x30] sm:$0xff]
    %v7477 = vld [vmem:[%s7469 + $0x38] sm:$0xff]
    %v7478 = vld [vmem:[%s7469 + $0x40] sm:$0xff]
    %v7479 = vld [vmem:[%s7469 + $0x48] sm:$0xff]
    %v7480 = vld [vmem:[%s7469 + $0x50] sm:$0xff]
    %v7481 = vld [vmem:[%s7469 + $0x58] sm:$0xff]
    %v7482 = vld [vmem:[%s7469 + $0x60] sm:$0xff]
    %v7483 = vld [vmem:[%s7469 + $0x68] sm:$0xff]
    %v7484 = vld [vmem:[%s7469 + $0x70] sm:$0xff]
    %v7485 = vld [vmem:[%s7469 + $0x78] sm:$0xff]
    %7486 = vmatpush.bf16.msra.mxu0 %v2301
    %7487 = vmatpush.bf16.msra.mxu0 %v2293
    %7488 = vmatpush.bf16.msra.mxu0 %v2285
    %7489 = vmatpush.bf16.msra.mxu0 %v2277
    %7490 = vmatpush.bf16.msra.mxu0 %v2269
    %7491 = vmatpush.bf16.msra.mxu0 %v2261
    %7492 = vmatpush.bf16.msra.mxu0 %v2253
    %7493 = vmatpush.bf16.msra.mxu0 %v2245
    %7494 = vmatmul.bf16.gmra.mxu0 %v6929
    %v7495 = vpop.f32.mrf.mxu0
    %v7496 = vadd.f32 0.0, %v7495
    %v7497 = vpop.f32.mrf.mxu0
    %v7498 = vadd.f32 0.0, %v7497
    %7499 = vdwg.mxu0
    %7500 = vmatpush.bf16.msra.mxu0 %v2365
    %7501 = vmatpush.bf16.msra.mxu0 %v2357
    %7502 = vmatpush.bf16.msra.mxu0 %v2349
    %7503 = vmatpush.bf16.msra.mxu0 %v2341
    %7504 = vmatpush.bf16.msra.mxu0 %v2333
    %7505 = vmatpush.bf16.msra.mxu0 %v2325
    %7506 = vmatpush.bf16.msra.mxu0 %v2317
    %7507 = vmatpush.bf16.msra.mxu0 %v2309
    %7508 = vmatmul.bf16.gmra.mxu0 %v6930
    %v7509 = vpop.f32.mrf.mxu0
    %v7510 = vadd.f32 %v7496, %v7509
    %v7511 = vpop.f32.mrf.mxu0
    %v7512 = vadd.f32 %v7498, %v7511
    %7513 = vdwg.mxu0
    %7514 = vmatpush.bf16.msra.mxu0 %v2302
    %7515 = vmatpush.bf16.msra.mxu0 %v2294
    %7516 = vmatpush.bf16.msra.mxu0 %v2286
    %7517 = vmatpush.bf16.msra.mxu0 %v2278
    %7518 = vmatpush.bf16.msra.mxu0 %v2270
    %7519 = vmatpush.bf16.msra.mxu0 %v2262
    %7520 = vmatpush.bf16.msra.mxu0 %v2254
    %7521 = vmatpush.bf16.msra.mxu0 %v2246
    %7522 = vmatmul.bf16.gmra.mxu0 %v6929
    %v7523 = vpop.f32.mrf.mxu0
    %v7524 = vadd.f32 0.0, %v7523
    %v7525 = vpop.f32.mrf.mxu0
    %v7526 = vadd.f32 0.0, %v7525
    %7527 = vdwg.mxu0
    %7528 = vmatpush.bf16.msra.mxu0 %v2366
    %7529 = vmatpush.bf16.msra.mxu0 %v2358
    %7530 = vmatpush.bf16.msra.mxu0 %v2350
    %7531 = vmatpush.bf16.msra.mxu0 %v2342
    %7532 = vmatpush.bf16.msra.mxu0 %v2334
    %7533 = vmatpush.bf16.msra.mxu0 %v2326
    %7534 = vmatpush.bf16.msra.mxu0 %v2318
    %7535 = vmatpush.bf16.msra.mxu0 %v2310
    %7536 = vmatmul.bf16.gmra.mxu0 %v6930
    %v7537 = vpop.f32.mrf.mxu0
    %v7538 = vadd.f32 %v7524, %v7537
    %v7539 = vpop.f32.mrf.mxu0
    %v7540 = vadd.f32 %v7526, %v7539
    %7541 = vdwg.mxu0
    %7542 = vmatpush.bf16.msra.mxu0 %v2303
    %7543 = vmatpush.bf16.msra.mxu0 %v2295
    %7544 = vmatpush.bf16.msra.mxu0 %v2287
    %7545 = vmatpush.bf16.msra.mxu0 %v2279
    %7546 = vmatpush.bf16.msra.mxu0 %v2271
    %7547 = vmatpush.bf16.msra.mxu0 %v2263
    %7548 = vmatpush.bf16.msra.mxu0 %v2255
    %7549 = vmatpush.bf16.msra.mxu0 %v2247
    %7550 = vmatmul.bf16.gmra.mxu0 %v6929
    %v7551 = vpop.f32.mrf.mxu0
    %v7552 = vadd.f32 0.0, %v7551
    %v7553 = vpop.f32.mrf.mxu0
    %v7554 = vadd.f32 0.0, %v7553
    %7555 = vdwg.mxu0
    %7556 = vmatpush.bf16.msra.mxu0 %v2367
    %7557 = vmatpush.bf16.msra.mxu0 %v2359
    %7558 = vmatpush.bf16.msra.mxu0 %v2351
    %7559 = vmatpush.bf16.msra.mxu0 %v2343
    %7560 = vmatpush.bf16.msra.mxu0 %v2335
    %7561 = vmatpush.bf16.msra.mxu0 %v2327
    %7562 = vmatpush.bf16.msra.mxu0 %v2319
    %7563 = vmatpush.bf16.msra.mxu0 %v2311
    %7564 = vmatmul.bf16.gmra.mxu0 %v6930
    %v7565 = vpop.f32.mrf.mxu0
    %v7566 = vadd.f32 %v7552, %v7565
    %v7567 = vpop.f32.mrf.mxu0
    %v7568 = vadd.f32 %v7554, %v7567
    %7569 = vdwg.mxu0
    %7570 = vmatpush.bf16.msra.mxu0 %v2304
    %7571 = vmatpush.bf16.msra.mxu0 %v2296
    %7572 = vmatpush.bf16.msra.mxu0 %v2288
    %7573 = vmatpush.bf16.msra.mxu0 %v2280
    %7574 = vmatpush.bf16.msra.mxu0 %v2272
    %7575 = vmatpush.bf16.msra.mxu0 %v2264
    %7576 = vmatpush.bf16.msra.mxu0 %v2256
    %7577 = vmatpush.bf16.msra.mxu0 %v2248
    %7578 = vmatmul.bf16.gmra.mxu0 %v6929
    %v7579 = vpop.f32.mrf.mxu0
    %v7580 = vadd.f32 0.0, %v7579
    %v7581 = vpop.f32.mrf.mxu0
    %v7582 = vadd.f32 0.0, %v7581
    %7583 = vdwg.mxu0
    %7584 = vmatpush.bf16.msra.mxu0 %v2368
    %7585 = vmatpush.bf16.msra.mxu0 %v2360
    %7586 = vmatpush.bf16.msra.mxu0 %v2352
    %7587 = vmatpush.bf16.msra.mxu0 %v2344
    %7588 = vmatpush.bf16.msra.mxu0 %v2336
    %7589 = vmatpush.bf16.msra.mxu0 %v2328
    %7590 = vmatpush.bf16.msra.mxu0 %v2320
    %7591 = vmatpush.bf16.msra.mxu0 %v2312
    %7592 = vmatmul.bf16.gmra.mxu0 %v6930
    %v7593 = vpop.f32.mrf.mxu0
    %v7594 = vadd.f32 %v7580, %v7593
    %v7595 = vpop.f32.mrf.mxu0
    %v7596 = vadd.f32 %v7582, %v7595
    %7597 = vdwg.mxu0
    %7598 = vmatpush.bf16.msra.mxu0 %v2305
    %7599 = vmatpush.bf16.msra.mxu0 %v2297
    %7600 = vmatpush.bf16.msra.mxu0 %v2289
    %7601 = vmatpush.bf16.msra.mxu0 %v2281
    %7602 = vmatpush.bf16.msra.mxu0 %v2273
    %7603 = vmatpush.bf16.msra.mxu0 %v2265
    %7604 = vmatpush.bf16.msra.mxu0 %v2257
    %7605 = vmatpush.bf16.msra.mxu0 %v2249
    %7606 = vmatmul.bf16.gmra.mxu0 %v6929
    %v7607 = vpop.f32.mrf.mxu0
    %v7608 = vadd.f32 0.0, %v7607
    %v7609 = vpop.f32.mrf.mxu0
    %v7610 = vadd.f32 0.0, %v7609
    %7611 = vdwg.mxu0
    %7612 = vmatpush.bf16.msra.mxu0 %v2369
    %7613 = vmatpush.bf16.msra.mxu0 %v2361
    %7614 = vmatpush.bf16.msra.mxu0 %v2353
    %7615 = vmatpush.bf16.msra.mxu0 %v2345
    %7616 = vmatpush.bf16.msra.mxu0 %v2337
    %7617 = vmatpush.bf16.msra.mxu0 %v2329
    %7618 = vmatpush.bf16.msra.mxu0 %v2321
    %7619 = vmatpush.bf16.msra.mxu0 %v2313
    %7620 = vmatmul.bf16.gmra.mxu0 %v6930
    %v7621 = vpop.f32.mrf.mxu0
    %v7622 = vadd.f32 %v7608, %v7621
    %v7623 = vpop.f32.mrf.mxu0
    %v7624 = vadd.f32 %v7610, %v7623
    %7625 = vdwg.mxu0
    %7626 = vmatpush.bf16.msra.mxu0 %v2306
    %7627 = vmatpush.bf16.msra.mxu0 %v2298
    %7628 = vmatpush.bf16.msra.mxu0 %v2290
    %7629 = vmatpush.bf16.msra.mxu0 %v2282
    %7630 = vmatpush.bf16.msra.mxu0 %v2274
    %7631 = vmatpush.bf16.msra.mxu0 %v2266
    %7632 = vmatpush.bf16.msra.mxu0 %v2258
    %7633 = vmatpush.bf16.msra.mxu0 %v2250
    %7634 = vmatmul.bf16.gmra.mxu0 %v6929
    %v7635 = vpop.f32.mrf.mxu0
    %v7636 = vadd.f32 0.0, %v7635
    %v7637 = vpop.f32.mrf.mxu0
    %v7638 = vadd.f32 0.0, %v7637
    %7639 = vdwg.mxu0
    %7640 = vmatpush.bf16.msra.mxu0 %v2370
    %7641 = vmatpush.bf16.msra.mxu0 %v2362
    %7642 = vmatpush.bf16.msra.mxu0 %v2354
    %7643 = vmatpush.bf16.msra.mxu0 %v2346
    %7644 = vmatpush.bf16.msra.mxu0 %v2338
    %7645 = vmatpush.bf16.msra.mxu0 %v2330
    %7646 = vmatpush.bf16.msra.mxu0 %v2322
    %7647 = vmatpush.bf16.msra.mxu0 %v2314
    %7648 = vmatmul.bf16.gmra.mxu0 %v6930
    %v7649 = vpop.f32.mrf.mxu0
    %v7650 = vadd.f32 %v7636, %v7649
    %v7651 = vpop.f32.mrf.mxu0
    %v7652 = vadd.f32 %v7638, %v7651
    %7653 = vdwg.mxu0
    %7654 = vmatpush.bf16.msra.mxu0 %v2307
    %7655 = vmatpush.bf16.msra.mxu0 %v2299
    %7656 = vmatpush.bf16.msra.mxu0 %v2291
    %7657 = vmatpush.bf16.msra.mxu0 %v2283
    %7658 = vmatpush.bf16.msra.mxu0 %v2275
    %7659 = vmatpush.bf16.msra.mxu0 %v2267
    %7660 = vmatpush.bf16.msra.mxu0 %v2259
    %7661 = vmatpush.bf16.msra.mxu0 %v2251
    %7662 = vmatmul.bf16.gmra.mxu0 %v6929
    %v7663 = vpop.f32.mrf.mxu0
    %v7664 = vadd.f32 0.0, %v7663
    %v7665 = vpop.f32.mrf.mxu0
    %v7666 = vadd.f32 0.0, %v7665
    %7667 = vdwg.mxu0
    %7668 = vmatpush.bf16.msra.mxu0 %v2371
    %7669 = vmatpush.bf16.msra.mxu0 %v2363
    %7670 = vmatpush.bf16.msra.mxu0 %v2355
    %7671 = vmatpush.bf16.msra.mxu0 %v2347
    %7672 = vmatpush.bf16.msra.mxu0 %v2339
    %7673 = vmatpush.bf16.msra.mxu0 %v2331
    %7674 = vmatpush.bf16.msra.mxu0 %v2323
    %7675 = vmatpush.bf16.msra.mxu0 %v2315
    %7676 = vmatmul.bf16.gmra.mxu0 %v6930
    %v7677 = vpop.f32.mrf.mxu0
    %v7678 = vadd.f32 %v7664, %v7677
    %v7679 = vpop.f32.mrf.mxu0
    %v7680 = vadd.f32 %v7666, %v7679
    %7681 = vdwg.mxu0
    %7682 = vmatpush.bf16.msra.mxu0 %v2308
    %7683 = vmatpush.bf16.msra.mxu0 %v2300
    %7684 = vmatpush.bf16.msra.mxu0 %v2292
    %7685 = vmatpush.bf16.msra.mxu0 %v2284
    %7686 = vmatpush.bf16.msra.mxu0 %v2276
    %7687 = vmatpush.bf16.msra.mxu0 %v2268
    %7688 = vmatpush.bf16.msra.mxu0 %v2260
    %7689 = vmatpush.bf16.msra.mxu0 %v2252
    %7690 = vmatmul.bf16.gmra.mxu0 %v6929
    %v7691 = vpop.f32.mrf.mxu0
    %v7692 = vadd.f32 0.0, %v7691
    %v7693 = vpop.f32.mrf.mxu0
    %v7694 = vadd.f32 0.0, %v7693
    %7695 = vdwg.mxu0
    %7696 = vmatpush.bf16.msra.mxu0 %v2372
    %7697 = vmatpush.bf16.msra.mxu0 %v2364
    %7698 = vmatpush.bf16.msra.mxu0 %v2356
    %7699 = vmatpush.bf16.msra.mxu0 %v2348
    %7700 = vmatpush.bf16.msra.mxu0 %v2340
    %7701 = vmatpush.bf16.msra.mxu0 %v2332
    %7702 = vmatpush.bf16.msra.mxu0 %v2324
    %7703 = vmatpush.bf16.msra.mxu0 %v2316
    %7704 = vmatmul.bf16.gmra.mxu0 %v6930
    %v7705 = vpop.f32.mrf.mxu0
    %v7706 = vadd.f32 %v7692, %v7705
    %v7707 = vpop.f32.mrf.mxu0
    %v7708 = vadd.f32 %v7694, %v7707
    %7709 = vdwg.mxu0
    %v7710 = vadd.f32 %v7470, %v7510
    %v7711 = vadd.f32 %v7471, %v7538
    %v7712 = vadd.f32 %v7472, %v7566
    %v7713 = vadd.f32 %v7473, %v7594
    %v7714 = vadd.f32 %v7474, %v7622
    %v7715 = vadd.f32 %v7475, %v7650
    %v7716 = vadd.f32 %v7476, %v7678
    %v7717 = vadd.f32 %v7477, %v7706
    %v7718 = vadd.f32 %v7478, %v7512
    %v7719 = vadd.f32 %v7479, %v7540
    %v7720 = vadd.f32 %v7480, %v7568
    %v7721 = vadd.f32 %v7481, %v7596
    %v7722 = vadd.f32 %v7482, %v7624
    %v7723 = vadd.f32 %v7483, %v7652
    %v7724 = vadd.f32 %v7484, %v7680
    %v7725 = vadd.f32 %v7485, %v7708
    %v7726 = vmul.f32 %v7710, 0.5
    %v7727 = vmul.f32 %v7711, 0.5
    %v7728 = vmul.f32 %v7712, 0.5
    %v7729 = vmul.f32 %v7713, 0.5
    %v7730 = vmul.f32 %v7714, 0.5
    %v7731 = vmul.f32 %v7715, 0.5
    %v7732 = vmul.f32 %v7718, 0.5
    %v7733 = vmul.f32 %v7719, 0.5
    %v7734 = vmul.f32 %v7720, 0.5
    %v7735 = vmul.f32 %v7721, 0.5
    %v7736 = vmul.f32 %v7722, 0.5
    %v7737 = vmul.f32 %v7723, 0.5
    %v7738 = vtanh.pop %v7726
    %v7739 = vtanh.pop %v7727
    %v7740 = vtanh.pop %v7728
    %v7741 = vtanh.pop %v7729
    %v7742 = vtanh.pop %v7730
    %v7743 = vtanh.pop %v7731
    %v7744 = vtanh.pop %v7732
    %v7745 = vtanh.pop %v7733
    %v7746 = vtanh.pop %v7734
    %v7747 = vtanh.pop %v7735
    %v7748 = vtanh.pop %v7736
    %v7749 = vtanh.pop %v7737
    %v7750 = vmul.f32 %v7738, 0.5
    %v7751 = vmul.f32 %v7739, 0.5
    %v7752 = vmul.f32 %v7740, 0.5
    %v7753 = vmul.f32 %v7741, 0.5
    %v7754 = vmul.f32 %v7742, 0.5
    %v7755 = vmul.f32 %v7743, 0.5
    %v7756 = vmul.f32 %v7744, 0.5
    %v7757 = vmul.f32 %v7745, 0.5
    %v7758 = vmul.f32 %v7746, 0.5
    %v7759 = vmul.f32 %v7747, 0.5
    %v7760 = vmul.f32 %v7748, 0.5
    %v7761 = vmul.f32 %v7749, 0.5
    %v7762 = vadd.f32 %v7750, 0.5
    %v7763 = vadd.f32 %v7751, 0.5
    %v7764 = vadd.f32 %v7752, 0.5
    %v7765 = vadd.f32 %v7753, 0.5
    %v7766 = vadd.f32 %v7754, 0.5
    %v7767 = vadd.f32 %v7755, 0.5
    %v7768 = vadd.f32 %v7756, 0.5
    %v7769 = vadd.f32 %v7757, 0.5
    %v7770 = vadd.f32 %v7758, 0.5
    %v7771 = vadd.f32 %v7759, 0.5
    %v7772 = vadd.f32 %v7760, 0.5
    %v7773 = vadd.f32 %v7761, 0.5
    %v7774 = vtanh.pop %v7716
    %v7775 = vtanh.pop %v7717
    %v7776 = vtanh.pop %v7724
    %v7777 = vtanh.pop %v7725
    %v7778 = vmul.f32 %v7764, %v6917
    %v7779 = vmul.f32 %v7765, %v6918
    %v7780 = vmul.f32 %v7770, %v6919
    %v7781 = vmul.f32 %v7771, %v6920
    %v7782 = vmul.f32 %v7762, %v7774
    %v7783 = vmul.f32 %v7763, %v7775
    %v7784 = vmul.f32 %v7768, %v7776
    %v7785 = vmul.f32 %v7769, %v7777
    %v7786 = vadd.f32 %v7778, %v7782
    %v7787 = vadd.f32 %v7779, %v7783
    %v7788 = vadd.f32 %v7780, %v7784
    %v7789 = vadd.f32 %v7781, %v7785
    %v7790 = vtanh.pop %v7786
    %v7791 = vtanh.pop %v7787
    %v7792 = vtanh.pop %v7788
    %v7793 = vtanh.pop %v7789
    %v7794 = vmul.f32 %v7766, %v7790
    %v7795 = vmul.f32 %v7767, %v7791
    %v7796 = vmul.f32 %v7772, %v7792
    %v7797 = vmul.f32 %v7773, %v7793
    %v7798 = vpack.c.bf16 %v7796, %v7794
    %v7799 = vpack.c.bf16 %v7797, %v7795
    %7800 = vmatpush.bf16.msra.mxu0 %v3255
    %7801 = vmatpush.bf16.msra.mxu0 %v3247
    %7802 = vmatpush.bf16.msra.mxu0 %v3239
    %7803 = vmatpush.bf16.msra.mxu0 %v3231
    %7804 = vmatpush.bf16.msra.mxu0 %v3223
    %7805 = vmatpush.bf16.msra.mxu0 %v3215
    %7806 = vmatpush.bf16.msra.mxu0 %v3207
    %7807 = vmatpush.bf16.msra.mxu0 %v3199
    %7808 = vmatmul.bf16.gmra.mxu0 %v7798
    %v7809 = vpop.f32.mrf.mxu0
    %v7810 = vadd.f32 %v7269, %v7809
    %v7811 = vpop.f32.mrf.mxu0
    %v7812 = vadd.f32 %v7271, %v7811
    %7813 = vdwg.mxu0
    %7814 = vmatpush.bf16.msra.mxu0 %v3319
    %7815 = vmatpush.bf16.msra.mxu0 %v3311
    %7816 = vmatpush.bf16.msra.mxu0 %v3303
    %7817 = vmatpush.bf16.msra.mxu0 %v3295
    %7818 = vmatpush.bf16.msra.mxu0 %v3287
    %7819 = vmatpush.bf16.msra.mxu0 %v3279
    %7820 = vmatpush.bf16.msra.mxu0 %v3271
    %7821 = vmatpush.bf16.msra.mxu0 %v3263
    %7822 = vmatmul.bf16.gmra.mxu0 %v7799
    %v7823 = vpop.f32.mrf.mxu0
    %v7824 = vadd.f32 %v7810, %v7823
    %v7825 = vpop.f32.mrf.mxu0
    %v7826 = vadd.f32 %v7812, %v7825
    %7827 = vdwg.mxu0
    %7828 = vmatpush.bf16.msra.mxu0 %v3256
    %7829 = vmatpush.bf16.msra.mxu0 %v3248
    %7830 = vmatpush.bf16.msra.mxu0 %v3240
    %7831 = vmatpush.bf16.msra.mxu0 %v3232
    %7832 = vmatpush.bf16.msra.mxu0 %v3224
    %7833 = vmatpush.bf16.msra.mxu0 %v3216
    %7834 = vmatpush.bf16.msra.mxu0 %v3208
    %7835 = vmatpush.bf16.msra.mxu0 %v3200
    %7836 = vmatmul.bf16.gmra.mxu0 %v7798
    %v7837 = vpop.f32.mrf.mxu0
    %v7838 = vadd.f32 %v7297, %v7837
    %v7839 = vpop.f32.mrf.mxu0
    %v7840 = vadd.f32 %v7299, %v7839
    %7841 = vdwg.mxu0
    %7842 = vmatpush.bf16.msra.mxu0 %v3320
    %7843 = vmatpush.bf16.msra.mxu0 %v3312
    %7844 = vmatpush.bf16.msra.mxu0 %v3304
    %7845 = vmatpush.bf16.msra.mxu0 %v3296
    %7846 = vmatpush.bf16.msra.mxu0 %v3288
    %7847 = vmatpush.bf16.msra.mxu0 %v3280
    %7848 = vmatpush.bf16.msra.mxu0 %v3272
    %7849 = vmatpush.bf16.msra.mxu0 %v3264
    %7850 = vmatmul.bf16.gmra.mxu0 %v7799
    %v7851 = vpop.f32.mrf.mxu0
    %v7852 = vadd.f32 %v7838, %v7851
    %v7853 = vpop.f32.mrf.mxu0
    %v7854 = vadd.f32 %v7840, %v7853
    %7855 = vdwg.mxu0
    %7856 = vmatpush.bf16.msra.mxu0 %v3257
    %7857 = vmatpush.bf16.msra.mxu0 %v3249
    %7858 = vmatpush.bf16.msra.mxu0 %v3241
    %7859 = vmatpush.bf16.msra.mxu0 %v3233
    %7860 = vmatpush.bf16.msra.mxu0 %v3225
    %7861 = vmatpush.bf16.msra.mxu0 %v3217
    %7862 = vmatpush.bf16.msra.mxu0 %v3209
    %7863 = vmatpush.bf16.msra.mxu0 %v3201
    %7864 = vmatmul.bf16.gmra.mxu0 %v7798
    %v7865 = vpop.f32.mrf.mxu0
    %v7866 = vadd.f32 %v7325, %v7865
    %v7867 = vpop.f32.mrf.mxu0
    %v7868 = vadd.f32 %v7327, %v7867
    %7869 = vdwg.mxu0
    %7870 = vmatpush.bf16.msra.mxu0 %v3321
    %7871 = vmatpush.bf16.msra.mxu0 %v3313
    %7872 = vmatpush.bf16.msra.mxu0 %v3305
    %7873 = vmatpush.bf16.msra.mxu0 %v3297
    %7874 = vmatpush.bf16.msra.mxu0 %v3289
    %7875 = vmatpush.bf16.msra.mxu0 %v3281
    %7876 = vmatpush.bf16.msra.mxu0 %v3273
    %7877 = vmatpush.bf16.msra.mxu0 %v3265
    %7878 = vmatmul.bf16.gmra.mxu0 %v7799
    %v7879 = vpop.f32.mrf.mxu0
    %v7880 = vadd.f32 %v7866, %v7879
    %v7881 = vpop.f32.mrf.mxu0
    %v7882 = vadd.f32 %v7868, %v7881
    %7883 = vdwg.mxu0
    %7884 = vmatpush.bf16.msra.mxu0 %v3258
    %7885 = vmatpush.bf16.msra.mxu0 %v3250
    %7886 = vmatpush.bf16.msra.mxu0 %v3242
    %7887 = vmatpush.bf16.msra.mxu0 %v3234
    %7888 = vmatpush.bf16.msra.mxu0 %v3226
    %7889 = vmatpush.bf16.msra.mxu0 %v3218
    %7890 = vmatpush.bf16.msra.mxu0 %v3210
    %7891 = vmatpush.bf16.msra.mxu0 %v3202
    %7892 = vmatmul.bf16.gmra.mxu0 %v7798
    %v7893 = vpop.f32.mrf.mxu0
    %v7894 = vadd.f32 %v7353, %v7893
    %v7895 = vpop.f32.mrf.mxu0
    %v7896 = vadd.f32 %v7355, %v7895
    %7897 = vdwg.mxu0
    %7898 = vmatpush.bf16.msra.mxu0 %v3322
    %7899 = vmatpush.bf16.msra.mxu0 %v3314
    %7900 = vmatpush.bf16.msra.mxu0 %v3306
    %7901 = vmatpush.bf16.msra.mxu0 %v3298
    %7902 = vmatpush.bf16.msra.mxu0 %v3290
    %7903 = vmatpush.bf16.msra.mxu0 %v3282
    %7904 = vmatpush.bf16.msra.mxu0 %v3274
    %7905 = vmatpush.bf16.msra.mxu0 %v3266
    %7906 = vmatmul.bf16.gmra.mxu0 %v7799
    %v7907 = vpop.f32.mrf.mxu0
    %v7908 = vadd.f32 %v7894, %v7907
    %v7909 = vpop.f32.mrf.mxu0
    %v7910 = vadd.f32 %v7896, %v7909
    %7911 = vdwg.mxu0
    %7912 = vmatpush.bf16.msra.mxu0 %v3259
    %7913 = vmatpush.bf16.msra.mxu0 %v3251
    %7914 = vmatpush.bf16.msra.mxu0 %v3243
    %7915 = vmatpush.bf16.msra.mxu0 %v3235
    %7916 = vmatpush.bf16.msra.mxu0 %v3227
    %7917 = vmatpush.bf16.msra.mxu0 %v3219
    %7918 = vmatpush.bf16.msra.mxu0 %v3211
    %7919 = vmatpush.bf16.msra.mxu0 %v3203
    %7920 = vmatmul.bf16.gmra.mxu0 %v7798
    %v7921 = vpop.f32.mrf.mxu0
    %v7922 = vadd.f32 %v7381, %v7921
    %v7923 = vpop.f32.mrf.mxu0
    %v7924 = vadd.f32 %v7383, %v7923
    %7925 = vdwg.mxu0
    %7926 = vmatpush.bf16.msra.mxu0 %v3323
    %7927 = vmatpush.bf16.msra.mxu0 %v3315
    %7928 = vmatpush.bf16.msra.mxu0 %v3307
    %7929 = vmatpush.bf16.msra.mxu0 %v3299
    %7930 = vmatpush.bf16.msra.mxu0 %v3291
    %7931 = vmatpush.bf16.msra.mxu0 %v3283
    %7932 = vmatpush.bf16.msra.mxu0 %v3275
    %7933 = vmatpush.bf16.msra.mxu0 %v3267
    %7934 = vmatmul.bf16.gmra.mxu0 %v7799
    %v7935 = vpop.f32.mrf.mxu0
    %v7936 = vadd.f32 %v7922, %v7935
    %v7937 = vpop.f32.mrf.mxu0
    %v7938 = vadd.f32 %v7924, %v7937
    %7939 = vdwg.mxu0
    %7940 = vmatpush.bf16.msra.mxu0 %v3260
    %7941 = vmatpush.bf16.msra.mxu0 %v3252
    %7942 = vmatpush.bf16.msra.mxu0 %v3244
    %7943 = vmatpush.bf16.msra.mxu0 %v3236
    %7944 = vmatpush.bf16.msra.mxu0 %v3228
    %7945 = vmatpush.bf16.msra.mxu0 %v3220
    %7946 = vmatpush.bf16.msra.mxu0 %v3212
    %7947 = vmatpush.bf16.msra.mxu0 %v3204
    %7948 = vmatmul.bf16.gmra.mxu0 %v7798
    %v7949 = vpop.f32.mrf.mxu0
    %v7950 = vadd.f32 %v7409, %v7949
    %v7951 = vpop.f32.mrf.mxu0
    %v7952 = vadd.f32 %v7411, %v7951
    %7953 = vdwg.mxu0
    %7954 = vmatpush.bf16.msra.mxu0 %v3324
    %7955 = vmatpush.bf16.msra.mxu0 %v3316
    %7956 = vmatpush.bf16.msra.mxu0 %v3308
    %7957 = vmatpush.bf16.msra.mxu0 %v3300
    %7958 = vmatpush.bf16.msra.mxu0 %v3292
    %7959 = vmatpush.bf16.msra.mxu0 %v3284
    %7960 = vmatpush.bf16.msra.mxu0 %v3276
    %7961 = vmatpush.bf16.msra.mxu0 %v3268
    %7962 = vmatmul.bf16.gmra.mxu0 %v7799
    %v7963 = vpop.f32.mrf.mxu0
    %v7964 = vadd.f32 %v7950, %v7963
    %v7965 = vpop.f32.mrf.mxu0
    %v7966 = vadd.f32 %v7952, %v7965
    %7967 = vdwg.mxu0
    %7968 = vmatpush.bf16.msra.mxu0 %v3261
    %7969 = vmatpush.bf16.msra.mxu0 %v3253
    %7970 = vmatpush.bf16.msra.mxu0 %v3245
    %7971 = vmatpush.bf16.msra.mxu0 %v3237
    %7972 = vmatpush.bf16.msra.mxu0 %v3229
    %7973 = vmatpush.bf16.msra.mxu0 %v3221
    %7974 = vmatpush.bf16.msra.mxu0 %v3213
    %7975 = vmatpush.bf16.msra.mxu0 %v3205
    %7976 = vmatmul.bf16.gmra.mxu0 %v7798
    %v7977 = vpop.f32.mrf.mxu0
    %v7978 = vadd.f32 %v7437, %v7977
    %v7979 = vpop.f32.mrf.mxu0
    %v7980 = vadd.f32 %v7439, %v7979
    %7981 = vdwg.mxu0
    %7982 = vmatpush.bf16.msra.mxu0 %v3325
    %7983 = vmatpush.bf16.msra.mxu0 %v3317
    %7984 = vmatpush.bf16.msra.mxu0 %v3309
    %7985 = vmatpush.bf16.msra.mxu0 %v3301
    %7986 = vmatpush.bf16.msra.mxu0 %v3293
    %7987 = vmatpush.bf16.msra.mxu0 %v3285
    %7988 = vmatpush.bf16.msra.mxu0 %v3277
    %7989 = vmatpush.bf16.msra.mxu0 %v3269
    %7990 = vmatmul.bf16.gmra.mxu0 %v7799
    %v7991 = vpop.f32.mrf.mxu0
    %v7992 = vadd.f32 %v7978, %v7991
    %v7993 = vpop.f32.mrf.mxu0
    %v7994 = vadd.f32 %v7980, %v7993
    %7995 = vdwg.mxu0
    %7996 = vmatpush.bf16.msra.mxu0 %v3262
    %7997 = vmatpush.bf16.msra.mxu0 %v3254
    %7998 = vmatpush.bf16.msra.mxu0 %v3246
    %7999 = vmatpush.bf16.msra.mxu0 %v3238
    %8000 = vmatpush.bf16.msra.mxu0 %v3230
    %8001 = vmatpush.bf16.msra.mxu0 %v3222
    %8002 = vmatpush.bf16.msra.mxu0 %v3214
    %8003 = vmatpush.bf16.msra.mxu0 %v3206
    %8004 = vmatmul.bf16.gmra.mxu0 %v7798
    %v8005 = vpop.f32.mrf.mxu0
    %v8006 = vadd.f32 %v7465, %v8005
    %v8007 = vpop.f32.mrf.mxu0
    %v8008 = vadd.f32 %v7467, %v8007
    %8009 = vdwg.mxu0
    %8010 = vmatpush.bf16.msra.mxu0 %v3326
    %8011 = vmatpush.bf16.msra.mxu0 %v3318
    %8012 = vmatpush.bf16.msra.mxu0 %v3310
    %8013 = vmatpush.bf16.msra.mxu0 %v3302
    %8014 = vmatpush.bf16.msra.mxu0 %v3294
    %8015 = vmatpush.bf16.msra.mxu0 %v3286
    %8016 = vmatpush.bf16.msra.mxu0 %v3278
    %8017 = vmatpush.bf16.msra.mxu0 %v3270
    %8018 = vmatmul.bf16.gmra.mxu0 %v7799
    %v8019 = vpop.f32.mrf.mxu0
    %v8020 = vadd.f32 %v8006, %v8019
    %v8021 = vpop.f32.mrf.mxu0
    %v8022 = vadd.f32 %v8008, %v8021
    %8023 = vdwg.mxu0
    %v8024 = vadd.f32 %v7824, %v449
    %v8025 = vadd.f32 %v7852, %v450
    %v8026 = vadd.f32 %v7880, %v451
    %v8027 = vadd.f32 %v7908, %v452
    %v8028 = vadd.f32 %v7936, %v453
    %v8029 = vadd.f32 %v7964, %v454
    %v8030 = vadd.f32 %v7992, %v455
    %v8031 = vadd.f32 %v8020, %v456
    %v8032 = vadd.f32 %v7826, %v449
    %v8033 = vadd.f32 %v7854, %v450
    %v8034 = vadd.f32 %v7882, %v451
    %v8035 = vadd.f32 %v7910, %v452
    %v8036 = vadd.f32 %v7938, %v453
    %v8037 = vadd.f32 %v7966, %v454
    %v8038 = vadd.f32 %v7994, %v455
    %v8039 = vadd.f32 %v8022, %v456
    %v8040 = vmul.f32 %v8024, 0.5
    %v8041 = vmul.f32 %v8025, 0.5
    %v8042 = vmul.f32 %v8026, 0.5
    %v8043 = vmul.f32 %v8027, 0.5
    %v8044 = vmul.f32 %v8028, 0.5
    %v8045 = vmul.f32 %v8029, 0.5
    %v8046 = vmul.f32 %v8032, 0.5
    %v8047 = vmul.f32 %v8033, 0.5
    %v8048 = vmul.f32 %v8034, 0.5
    %v8049 = vmul.f32 %v8035, 0.5
    %v8050 = vmul.f32 %v8036, 0.5
    %v8051 = vmul.f32 %v8037, 0.5
    %v8052 = vtanh.pop %v8040
    %v8053 = vtanh.pop %v8041
    %v8054 = vtanh.pop %v8042
    %v8055 = vtanh.pop %v8043
    %v8056 = vtanh.pop %v8044
    %v8057 = vtanh.pop %v8045
    %v8058 = vtanh.pop %v8046
    %v8059 = vtanh.pop %v8047
    %v8060 = vtanh.pop %v8048
    %v8061 = vtanh.pop %v8049
    %v8062 = vtanh.pop %v8050
    %v8063 = vtanh.pop %v8051
    %v8064 = vmul.f32 %v8052, 0.5
    %v8065 = vmul.f32 %v8053, 0.5
    %v8066 = vmul.f32 %v8054, 0.5
    %v8067 = vmul.f32 %v8055, 0.5
    %v8068 = vmul.f32 %v8056, 0.5
    %v8069 = vmul.f32 %v8057, 0.5
    %v8070 = vmul.f32 %v8058, 0.5
    %v8071 = vmul.f32 %v8059, 0.5
    %v8072 = vmul.f32 %v8060, 0.5
    %v8073 = vmul.f32 %v8061, 0.5
    %v8074 = vmul.f32 %v8062, 0.5
    %v8075 = vmul.f32 %v8063, 0.5
    %v8076 = vadd.f32 %v8064, 0.5
    %v8077 = vadd.f32 %v8065, 0.5
    %v8078 = vadd.f32 %v8066, 0.5
    %v8079 = vadd.f32 %v8067, 0.5
    %v8080 = vadd.f32 %v8068, 0.5
    %v8081 = vadd.f32 %v8069, 0.5
    %v8082 = vadd.f32 %v8070, 0.5
    %v8083 = vadd.f32 %v8071, 0.5
    %v8084 = vadd.f32 %v8072, 0.5
    %v8085 = vadd.f32 %v8073, 0.5
    %v8086 = vadd.f32 %v8074, 0.5
    %v8087 = vadd.f32 %v8075, 0.5
    %v8088 = vtanh.pop %v8030
    %v8089 = vtanh.pop %v8031
    %v8090 = vtanh.pop %v8038
    %v8091 = vtanh.pop %v8039
    %v8092 = vmul.f32 %v8078, %v7231
    %v8093 = vmul.f32 %v8079, %v7232
    %v8094 = vmul.f32 %v8084, %v7233
    %v8095 = vmul.f32 %v8085, %v7234
    %v8096 = vmul.f32 %v8076, %v8088
    %v8097 = vmul.f32 %v8077, %v8089
    %v8098 = vmul.f32 %v8082, %v8090
    %v8099 = vmul.f32 %v8083, %v8091
    %v8100 = vadd.f32 %v8092, %v8096
    %v8101 = vadd.f32 %v8093, %v8097
    %v8102 = vadd.f32 %v8094, %v8098
    %v8103 = vadd.f32 %v8095, %v8099
    %v8104 = vtanh.pop %v8100
    %v8105 = vtanh.pop %v8101
    %v8106 = vtanh.pop %v8102
    %v8107 = vtanh.pop %v8103
    %v8108 = vmul.f32 %v8080, %v8104
    %v8109 = vmul.f32 %v8081, %v8105
    %v8110 = vmul.f32 %v8086, %v8106
    %v8111 = vmul.f32 %v8087, %v8107
    %v8112 = vpack.c.bf16 %v8110, %v8108
    %v8113 = vpack.c.bf16 %v8111, %v8109
    %8114 = vmatpush.bf16.msra.mxu0 %v1421
    %8115 = vmatpush.bf16.msra.mxu0 %v1413
    %8116 = vmatpush.bf16.msra.mxu0 %v1405
    %8117 = vmatpush.bf16.msra.mxu0 %v1397
    %8118 = vmatpush.bf16.msra.mxu0 %v1389
    %8119 = vmatpush.bf16.msra.mxu0 %v1381
    %8120 = vmatpush.bf16.msra.mxu0 %v1373
    %8121 = vmatpush.bf16.msra.mxu0 %v1365
    %8122 = vmatmul.bf16.gmra.mxu0 %v8112
    %v8123 = vpop.f32.mrf.mxu0
    %v8124 = vadd.f32 0.0, %v8123
    %v8125 = vpop.f32.mrf.mxu0
    %v8126 = vadd.f32 0.0, %v8125
    %8127 = vdwg.mxu0
    %8128 = vmatpush.bf16.msra.mxu0 %v1485
    %8129 = vmatpush.bf16.msra.mxu0 %v1477
    %8130 = vmatpush.bf16.msra.mxu0 %v1469
    %8131 = vmatpush.bf16.msra.mxu0 %v1461
    %8132 = vmatpush.bf16.msra.mxu0 %v1453
    %8133 = vmatpush.bf16.msra.mxu0 %v1445
    %8134 = vmatpush.bf16.msra.mxu0 %v1437
    %8135 = vmatpush.bf16.msra.mxu0 %v1429
    %8136 = vmatmul.bf16.gmra.mxu0 %v8113
    %v8137 = vpop.f32.mrf.mxu0
    %v8138 = vadd.f32 %v8124, %v8137
    %v8139 = vpop.f32.mrf.mxu0
    %v8140 = vadd.f32 %v8126, %v8139
    %8141 = vdwg.mxu0
    %8142 = vmatpush.bf16.msra.mxu0 %v1422
    %8143 = vmatpush.bf16.msra.mxu0 %v1414
    %8144 = vmatpush.bf16.msra.mxu0 %v1406
    %8145 = vmatpush.bf16.msra.mxu0 %v1398
    %8146 = vmatpush.bf16.msra.mxu0 %v1390
    %8147 = vmatpush.bf16.msra.mxu0 %v1382
    %8148 = vmatpush.bf16.msra.mxu0 %v1374
    %8149 = vmatpush.bf16.msra.mxu0 %v1366
    %8150 = vmatmul.bf16.gmra.mxu0 %v8112
    %v8151 = vpop.f32.mrf.mxu0
    %v8152 = vadd.f32 0.0, %v8151
    %v8153 = vpop.f32.mrf.mxu0
    %v8154 = vadd.f32 0.0, %v8153
    %8155 = vdwg.mxu0
    %8156 = vmatpush.bf16.msra.mxu0 %v1486
    %8157 = vmatpush.bf16.msra.mxu0 %v1478
    %8158 = vmatpush.bf16.msra.mxu0 %v1470
    %8159 = vmatpush.bf16.msra.mxu0 %v1462
    %8160 = vmatpush.bf16.msra.mxu0 %v1454
    %8161 = vmatpush.bf16.msra.mxu0 %v1446
    %8162 = vmatpush.bf16.msra.mxu0 %v1438
    %8163 = vmatpush.bf16.msra.mxu0 %v1430
    %8164 = vmatmul.bf16.gmra.mxu0 %v8113
    %v8165 = vpop.f32.mrf.mxu0
    %v8166 = vadd.f32 %v8152, %v8165
    %v8167 = vpop.f32.mrf.mxu0
    %v8168 = vadd.f32 %v8154, %v8167
    %8169 = vdwg.mxu0
    %8170 = vmatpush.bf16.msra.mxu0 %v1423
    %8171 = vmatpush.bf16.msra.mxu0 %v1415
    %8172 = vmatpush.bf16.msra.mxu0 %v1407
    %8173 = vmatpush.bf16.msra.mxu0 %v1399
    %8174 = vmatpush.bf16.msra.mxu0 %v1391
    %8175 = vmatpush.bf16.msra.mxu0 %v1383
    %8176 = vmatpush.bf16.msra.mxu0 %v1375
    %8177 = vmatpush.bf16.msra.mxu0 %v1367
    %8178 = vmatmul.bf16.gmra.mxu0 %v8112
    %v8179 = vpop.f32.mrf.mxu0
    %v8180 = vadd.f32 0.0, %v8179
    %v8181 = vpop.f32.mrf.mxu0
    %v8182 = vadd.f32 0.0, %v8181
    %8183 = vdwg.mxu0
    %8184 = vmatpush.bf16.msra.mxu0 %v1487
    %8185 = vmatpush.bf16.msra.mxu0 %v1479
    %8186 = vmatpush.bf16.msra.mxu0 %v1471
    %8187 = vmatpush.bf16.msra.mxu0 %v1463
    %8188 = vmatpush.bf16.msra.mxu0 %v1455
    %8189 = vmatpush.bf16.msra.mxu0 %v1447
    %8190 = vmatpush.bf16.msra.mxu0 %v1439
    %8191 = vmatpush.bf16.msra.mxu0 %v1431
    %8192 = vmatmul.bf16.gmra.mxu0 %v8113
    %v8193 = vpop.f32.mrf.mxu0
    %v8194 = vadd.f32 %v8180, %v8193
    %v8195 = vpop.f32.mrf.mxu0
    %v8196 = vadd.f32 %v8182, %v8195
    %8197 = vdwg.mxu0
    %8198 = vmatpush.bf16.msra.mxu0 %v1424
    %8199 = vmatpush.bf16.msra.mxu0 %v1416
    %8200 = vmatpush.bf16.msra.mxu0 %v1408
    %8201 = vmatpush.bf16.msra.mxu0 %v1400
    %8202 = vmatpush.bf16.msra.mxu0 %v1392
    %8203 = vmatpush.bf16.msra.mxu0 %v1384
    %8204 = vmatpush.bf16.msra.mxu0 %v1376
    %8205 = vmatpush.bf16.msra.mxu0 %v1368
    %8206 = vmatmul.bf16.gmra.mxu0 %v8112
    %v8207 = vpop.f32.mrf.mxu0
    %v8208 = vadd.f32 0.0, %v8207
    %v8209 = vpop.f32.mrf.mxu0
    %v8210 = vadd.f32 0.0, %v8209
    %8211 = vdwg.mxu0
    %8212 = vmatpush.bf16.msra.mxu0 %v1488
    %8213 = vmatpush.bf16.msra.mxu0 %v1480
    %8214 = vmatpush.bf16.msra.mxu0 %v1472
    %8215 = vmatpush.bf16.msra.mxu0 %v1464
    %8216 = vmatpush.bf16.msra.mxu0 %v1456
    %8217 = vmatpush.bf16.msra.mxu0 %v1448
    %8218 = vmatpush.bf16.msra.mxu0 %v1440
    %8219 = vmatpush.bf16.msra.mxu0 %v1432
    %8220 = vmatmul.bf16.gmra.mxu0 %v8113
    %v8221 = vpop.f32.mrf.mxu0
    %v8222 = vadd.f32 %v8208, %v8221
    %v8223 = vpop.f32.mrf.mxu0
    %v8224 = vadd.f32 %v8210, %v8223
    %8225 = vdwg.mxu0
    %8226 = vmatpush.bf16.msra.mxu0 %v1425
    %8227 = vmatpush.bf16.msra.mxu0 %v1417
    %8228 = vmatpush.bf16.msra.mxu0 %v1409
    %8229 = vmatpush.bf16.msra.mxu0 %v1401
    %8230 = vmatpush.bf16.msra.mxu0 %v1393
    %8231 = vmatpush.bf16.msra.mxu0 %v1385
    %8232 = vmatpush.bf16.msra.mxu0 %v1377
    %8233 = vmatpush.bf16.msra.mxu0 %v1369
    %8234 = vmatmul.bf16.gmra.mxu0 %v8112
    %v8235 = vpop.f32.mrf.mxu0
    %v8236 = vadd.f32 0.0, %v8235
    %v8237 = vpop.f32.mrf.mxu0
    %v8238 = vadd.f32 0.0, %v8237
    %8239 = vdwg.mxu0
    %8240 = vmatpush.bf16.msra.mxu0 %v1489
    %8241 = vmatpush.bf16.msra.mxu0 %v1481
    %8242 = vmatpush.bf16.msra.mxu0 %v1473
    %8243 = vmatpush.bf16.msra.mxu0 %v1465
    %8244 = vmatpush.bf16.msra.mxu0 %v1457
    %8245 = vmatpush.bf16.msra.mxu0 %v1449
    %8246 = vmatpush.bf16.msra.mxu0 %v1441
    %8247 = vmatpush.bf16.msra.mxu0 %v1433
    %8248 = vmatmul.bf16.gmra.mxu0 %v8113
    %v8249 = vpop.f32.mrf.mxu0
    %v8250 = vadd.f32 %v8236, %v8249
    %v8251 = vpop.f32.mrf.mxu0
    %v8252 = vadd.f32 %v8238, %v8251
    %8253 = vdwg.mxu0
    %8254 = vmatpush.bf16.msra.mxu0 %v1426
    %8255 = vmatpush.bf16.msra.mxu0 %v1418
    %8256 = vmatpush.bf16.msra.mxu0 %v1410
    %8257 = vmatpush.bf16.msra.mxu0 %v1402
    %8258 = vmatpush.bf16.msra.mxu0 %v1394
    %8259 = vmatpush.bf16.msra.mxu0 %v1386
    %8260 = vmatpush.bf16.msra.mxu0 %v1378
    %8261 = vmatpush.bf16.msra.mxu0 %v1370
    %8262 = vmatmul.bf16.gmra.mxu0 %v8112
    %v8263 = vpop.f32.mrf.mxu0
    %v8264 = vadd.f32 0.0, %v8263
    %v8265 = vpop.f32.mrf.mxu0
    %v8266 = vadd.f32 0.0, %v8265
    %8267 = vdwg.mxu0
    %8268 = vmatpush.bf16.msra.mxu0 %v1490
    %8269 = vmatpush.bf16.msra.mxu0 %v1482
    %8270 = vmatpush.bf16.msra.mxu0 %v1474
    %8271 = vmatpush.bf16.msra.mxu0 %v1466
    %8272 = vmatpush.bf16.msra.mxu0 %v1458
    %8273 = vmatpush.bf16.msra.mxu0 %v1450
    %8274 = vmatpush.bf16.msra.mxu0 %v1442
    %8275 = vmatpush.bf16.msra.mxu0 %v1434
    %8276 = vmatmul.bf16.gmra.mxu0 %v8113
    %v8277 = vpop.f32.mrf.mxu0
    %v8278 = vadd.f32 %v8264, %v8277
    %v8279 = vpop.f32.mrf.mxu0
    %v8280 = vadd.f32 %v8266, %v8279
    %8281 = vdwg.mxu0
    %8282 = vmatpush.bf16.msra.mxu0 %v1427
    %8283 = vmatpush.bf16.msra.mxu0 %v1419
    %8284 = vmatpush.bf16.msra.mxu0 %v1411
    %8285 = vmatpush.bf16.msra.mxu0 %v1403
    %8286 = vmatpush.bf16.msra.mxu0 %v1395
    %8287 = vmatpush.bf16.msra.mxu0 %v1387
    %8288 = vmatpush.bf16.msra.mxu0 %v1379
    %8289 = vmatpush.bf16.msra.mxu0 %v1371
    %8290 = vmatmul.bf16.gmra.mxu0 %v8112
    %v8291 = vpop.f32.mrf.mxu0
    %v8292 = vadd.f32 0.0, %v8291
    %v8293 = vpop.f32.mrf.mxu0
    %v8294 = vadd.f32 0.0, %v8293
    %8295 = vdwg.mxu0
    %8296 = vmatpush.bf16.msra.mxu0 %v1491
    %8297 = vmatpush.bf16.msra.mxu0 %v1483
    %8298 = vmatpush.bf16.msra.mxu0 %v1475
    %8299 = vmatpush.bf16.msra.mxu0 %v1467
    %8300 = vmatpush.bf16.msra.mxu0 %v1459
    %8301 = vmatpush.bf16.msra.mxu0 %v1451
    %8302 = vmatpush.bf16.msra.mxu0 %v1443
    %8303 = vmatpush.bf16.msra.mxu0 %v1435
    %8304 = vmatmul.bf16.gmra.mxu0 %v8113
    %v8305 = vpop.f32.mrf.mxu0
    %v8306 = vadd.f32 %v8292, %v8305
    %v8307 = vpop.f32.mrf.mxu0
    %v8308 = vadd.f32 %v8294, %v8307
    %8309 = vdwg.mxu0
    %8310 = vmatpush.bf16.msra.mxu0 %v1428
    %8311 = vmatpush.bf16.msra.mxu0 %v1420
    %8312 = vmatpush.bf16.msra.mxu0 %v1412
    %8313 = vmatpush.bf16.msra.mxu0 %v1404
    %8314 = vmatpush.bf16.msra.mxu0 %v1396
    %8315 = vmatpush.bf16.msra.mxu0 %v1388
    %8316 = vmatpush.bf16.msra.mxu0 %v1380
    %8317 = vmatpush.bf16.msra.mxu0 %v1372
    %8318 = vmatmul.bf16.gmra.mxu0 %v8112
    %v8319 = vpop.f32.mrf.mxu0
    %v8320 = vadd.f32 0.0, %v8319
    %v8321 = vpop.f32.mrf.mxu0
    %v8322 = vadd.f32 0.0, %v8321
    %8323 = vdwg.mxu0
    %8324 = vmatpush.bf16.msra.mxu0 %v1492
    %8325 = vmatpush.bf16.msra.mxu0 %v1484
    %8326 = vmatpush.bf16.msra.mxu0 %v1476
    %8327 = vmatpush.bf16.msra.mxu0 %v1468
    %8328 = vmatpush.bf16.msra.mxu0 %v1460
    %8329 = vmatpush.bf16.msra.mxu0 %v1452
    %8330 = vmatpush.bf16.msra.mxu0 %v1444
    %8331 = vmatpush.bf16.msra.mxu0 %v1436
    %8332 = vmatmul.bf16.gmra.mxu0 %v8113
    %v8333 = vpop.f32.mrf.mxu0
    %v8334 = vadd.f32 %v8320, %v8333
    %v8335 = vpop.f32.mrf.mxu0
    %v8336 = vadd.f32 %v8322, %v8335
    %8337 = vdwg.mxu0
    %s8338 = scalar_lea.vmem [#allocation2], 768
    %v8339 = vld [vmem:[%s8338] sm:$0xff]
    %v8340 = vld [vmem:[%s8338 + $0x8] sm:$0xff]
    %v8341 = vld [vmem:[%s8338 + $0x10] sm:$0xff]
    %v8342 = vld [vmem:[%s8338 + $0x18] sm:$0xff]
    %v8343 = vld [vmem:[%s8338 + $0x20] sm:$0xff]
    %v8344 = vld [vmem:[%s8338 + $0x28] sm:$0xff]
    %v8345 = vld [vmem:[%s8338 + $0x30] sm:$0xff]
    %v8346 = vld [vmem:[%s8338 + $0x38] sm:$0xff]
    %v8347 = vld [vmem:[%s8338 + $0x40] sm:$0xff]
    %v8348 = vld [vmem:[%s8338 + $0x48] sm:$0xff]
    %v8349 = vld [vmem:[%s8338 + $0x50] sm:$0xff]
    %v8350 = vld [vmem:[%s8338 + $0x58] sm:$0xff]
    %v8351 = vld [vmem:[%s8338 + $0x60] sm:$0xff]
    %v8352 = vld [vmem:[%s8338 + $0x68] sm:$0xff]
    %v8353 = vld [vmem:[%s8338 + $0x70] sm:$0xff]
    %v8354 = vld [vmem:[%s8338 + $0x78] sm:$0xff]
    %8355 = vmatpush.bf16.msra.mxu0 %v2301
    %8356 = vmatpush.bf16.msra.mxu0 %v2293
    %8357 = vmatpush.bf16.msra.mxu0 %v2285
    %8358 = vmatpush.bf16.msra.mxu0 %v2277
    %8359 = vmatpush.bf16.msra.mxu0 %v2269
    %8360 = vmatpush.bf16.msra.mxu0 %v2261
    %8361 = vmatpush.bf16.msra.mxu0 %v2253
    %8362 = vmatpush.bf16.msra.mxu0 %v2245
    %8363 = vmatmul.bf16.gmra.mxu0 %v7798
    %v8364 = vpop.f32.mrf.mxu0
    %v8365 = vadd.f32 0.0, %v8364
    %v8366 = vpop.f32.mrf.mxu0
    %v8367 = vadd.f32 0.0, %v8366
    %8368 = vdwg.mxu0
    %8369 = vmatpush.bf16.msra.mxu0 %v2365
    %8370 = vmatpush.bf16.msra.mxu0 %v2357
    %8371 = vmatpush.bf16.msra.mxu0 %v2349
    %8372 = vmatpush.bf16.msra.mxu0 %v2341
    %8373 = vmatpush.bf16.msra.mxu0 %v2333
    %8374 = vmatpush.bf16.msra.mxu0 %v2325
    %8375 = vmatpush.bf16.msra.mxu0 %v2317
    %8376 = vmatpush.bf16.msra.mxu0 %v2309
    %8377 = vmatmul.bf16.gmra.mxu0 %v7799
    %v8378 = vpop.f32.mrf.mxu0
    %v8379 = vadd.f32 %v8365, %v8378
    %v8380 = vpop.f32.mrf.mxu0
    %v8381 = vadd.f32 %v8367, %v8380
    %8382 = vdwg.mxu0
    %8383 = vmatpush.bf16.msra.mxu0 %v2302
    %8384 = vmatpush.bf16.msra.mxu0 %v2294
    %8385 = vmatpush.bf16.msra.mxu0 %v2286
    %8386 = vmatpush.bf16.msra.mxu0 %v2278
    %8387 = vmatpush.bf16.msra.mxu0 %v2270
    %8388 = vmatpush.bf16.msra.mxu0 %v2262
    %8389 = vmatpush.bf16.msra.mxu0 %v2254
    %8390 = vmatpush.bf16.msra.mxu0 %v2246
    %8391 = vmatmul.bf16.gmra.mxu0 %v7798
    %v8392 = vpop.f32.mrf.mxu0
    %v8393 = vadd.f32 0.0, %v8392
    %v8394 = vpop.f32.mrf.mxu0
    %v8395 = vadd.f32 0.0, %v8394
    %8396 = vdwg.mxu0
    %8397 = vmatpush.bf16.msra.mxu0 %v2366
    %8398 = vmatpush.bf16.msra.mxu0 %v2358
    %8399 = vmatpush.bf16.msra.mxu0 %v2350
    %8400 = vmatpush.bf16.msra.mxu0 %v2342
    %8401 = vmatpush.bf16.msra.mxu0 %v2334
    %8402 = vmatpush.bf16.msra.mxu0 %v2326
    %8403 = vmatpush.bf16.msra.mxu0 %v2318
    %8404 = vmatpush.bf16.msra.mxu0 %v2310
    %8405 = vmatmul.bf16.gmra.mxu0 %v7799
    %v8406 = vpop.f32.mrf.mxu0
    %v8407 = vadd.f32 %v8393, %v8406
    %v8408 = vpop.f32.mrf.mxu0
    %v8409 = vadd.f32 %v8395, %v8408
    %8410 = vdwg.mxu0
    %8411 = vmatpush.bf16.msra.mxu0 %v2303
    %8412 = vmatpush.bf16.msra.mxu0 %v2295
    %8413 = vmatpush.bf16.msra.mxu0 %v2287
    %8414 = vmatpush.bf16.msra.mxu0 %v2279
    %8415 = vmatpush.bf16.msra.mxu0 %v2271
    %8416 = vmatpush.bf16.msra.mxu0 %v2263
    %8417 = vmatpush.bf16.msra.mxu0 %v2255
    %8418 = vmatpush.bf16.msra.mxu0 %v2247
    %8419 = vmatmul.bf16.gmra.mxu0 %v7798
    %v8420 = vpop.f32.mrf.mxu0
    %v8421 = vadd.f32 0.0, %v8420
    %v8422 = vpop.f32.mrf.mxu0
    %v8423 = vadd.f32 0.0, %v8422
    %8424 = vdwg.mxu0
    %8425 = vmatpush.bf16.msra.mxu0 %v2367
    %8426 = vmatpush.bf16.msra.mxu0 %v2359
    %8427 = vmatpush.bf16.msra.mxu0 %v2351
    %8428 = vmatpush.bf16.msra.mxu0 %v2343
    %8429 = vmatpush.bf16.msra.mxu0 %v2335
    %8430 = vmatpush.bf16.msra.mxu0 %v2327
    %8431 = vmatpush.bf16.msra.mxu0 %v2319
    %8432 = vmatpush.bf16.msra.mxu0 %v2311
    %8433 = vmatmul.bf16.gmra.mxu0 %v7799
    %v8434 = vpop.f32.mrf.mxu0
    %v8435 = vadd.f32 %v8421, %v8434
    %v8436 = vpop.f32.mrf.mxu0
    %v8437 = vadd.f32 %v8423, %v8436
    %8438 = vdwg.mxu0
    %8439 = vmatpush.bf16.msra.mxu0 %v2304
    %8440 = vmatpush.bf16.msra.mxu0 %v2296
    %8441 = vmatpush.bf16.msra.mxu0 %v2288
    %8442 = vmatpush.bf16.msra.mxu0 %v2280
    %8443 = vmatpush.bf16.msra.mxu0 %v2272
    %8444 = vmatpush.bf16.msra.mxu0 %v2264
    %8445 = vmatpush.bf16.msra.mxu0 %v2256
    %8446 = vmatpush.bf16.msra.mxu0 %v2248
    %8447 = vmatmul.bf16.gmra.mxu0 %v7798
    %v8448 = vpop.f32.mrf.mxu0
    %v8449 = vadd.f32 0.0, %v8448
    %v8450 = vpop.f32.mrf.mxu0
    %v8451 = vadd.f32 0.0, %v8450
    %8452 = vdwg.mxu0
    %8453 = vmatpush.bf16.msra.mxu0 %v2368
    %8454 = vmatpush.bf16.msra.mxu0 %v2360
    %8455 = vmatpush.bf16.msra.mxu0 %v2352
    %8456 = vmatpush.bf16.msra.mxu0 %v2344
    %8457 = vmatpush.bf16.msra.mxu0 %v2336
    %8458 = vmatpush.bf16.msra.mxu0 %v2328
    %8459 = vmatpush.bf16.msra.mxu0 %v2320
    %8460 = vmatpush.bf16.msra.mxu0 %v2312
    %8461 = vmatmul.bf16.gmra.mxu0 %v7799
    %v8462 = vpop.f32.mrf.mxu0
    %v8463 = vadd.f32 %v8449, %v8462
    %v8464 = vpop.f32.mrf.mxu0
    %v8465 = vadd.f32 %v8451, %v8464
    %8466 = vdwg.mxu0
    %8467 = vmatpush.bf16.msra.mxu0 %v2305
    %8468 = vmatpush.bf16.msra.mxu0 %v2297
    %8469 = vmatpush.bf16.msra.mxu0 %v2289
    %8470 = vmatpush.bf16.msra.mxu0 %v2281
    %8471 = vmatpush.bf16.msra.mxu0 %v2273
    %8472 = vmatpush.bf16.msra.mxu0 %v2265
    %8473 = vmatpush.bf16.msra.mxu0 %v2257
    %8474 = vmatpush.bf16.msra.mxu0 %v2249
    %8475 = vmatmul.bf16.gmra.mxu0 %v7798
    %v8476 = vpop.f32.mrf.mxu0
    %v8477 = vadd.f32 0.0, %v8476
    %v8478 = vpop.f32.mrf.mxu0
    %v8479 = vadd.f32 0.0, %v8478
    %8480 = vdwg.mxu0
    %8481 = vmatpush.bf16.msra.mxu0 %v2369
    %8482 = vmatpush.bf16.msra.mxu0 %v2361
    %8483 = vmatpush.bf16.msra.mxu0 %v2353
    %8484 = vmatpush.bf16.msra.mxu0 %v2345
    %8485 = vmatpush.bf16.msra.mxu0 %v2337
    %8486 = vmatpush.bf16.msra.mxu0 %v2329
    %8487 = vmatpush.bf16.msra.mxu0 %v2321
    %8488 = vmatpush.bf16.msra.mxu0 %v2313
    %8489 = vmatmul.bf16.gmra.mxu0 %v7799
    %v8490 = vpop.f32.mrf.mxu0
    %v8491 = vadd.f32 %v8477, %v8490
    %v8492 = vpop.f32.mrf.mxu0
    %v8493 = vadd.f32 %v8479, %v8492
    %8494 = vdwg.mxu0
    %8495 = vmatpush.bf16.msra.mxu0 %v2306
    %8496 = vmatpush.bf16.msra.mxu0 %v2298
    %8497 = vmatpush.bf16.msra.mxu0 %v2290
    %8498 = vmatpush.bf16.msra.mxu0 %v2282
    %8499 = vmatpush.bf16.msra.mxu0 %v2274
    %8500 = vmatpush.bf16.msra.mxu0 %v2266
    %8501 = vmatpush.bf16.msra.mxu0 %v2258
    %8502 = vmatpush.bf16.msra.mxu0 %v2250
    %8503 = vmatmul.bf16.gmra.mxu0 %v7798
    %v8504 = vpop.f32.mrf.mxu0
    %v8505 = vadd.f32 0.0, %v8504
    %v8506 = vpop.f32.mrf.mxu0
    %v8507 = vadd.f32 0.0, %v8506
    %8508 = vdwg.mxu0
    %8509 = vmatpush.bf16.msra.mxu0 %v2370
    %8510 = vmatpush.bf16.msra.mxu0 %v2362
    %8511 = vmatpush.bf16.msra.mxu0 %v2354
    %8512 = vmatpush.bf16.msra.mxu0 %v2346
    %8513 = vmatpush.bf16.msra.mxu0 %v2338
    %8514 = vmatpush.bf16.msra.mxu0 %v2330
    %8515 = vmatpush.bf16.msra.mxu0 %v2322
    %8516 = vmatpush.bf16.msra.mxu0 %v2314
    %8517 = vmatmul.bf16.gmra.mxu0 %v7799
    %v8518 = vpop.f32.mrf.mxu0
    %v8519 = vadd.f32 %v8505, %v8518
    %v8520 = vpop.f32.mrf.mxu0
    %v8521 = vadd.f32 %v8507, %v8520
    %8522 = vdwg.mxu0
    %8523 = vmatpush.bf16.msra.mxu0 %v2307
    %8524 = vmatpush.bf16.msra.mxu0 %v2299
    %8525 = vmatpush.bf16.msra.mxu0 %v2291
    %8526 = vmatpush.bf16.msra.mxu0 %v2283
    %8527 = vmatpush.bf16.msra.mxu0 %v2275
    %8528 = vmatpush.bf16.msra.mxu0 %v2267
    %8529 = vmatpush.bf16.msra.mxu0 %v2259
    %8530 = vmatpush.bf16.msra.mxu0 %v2251
    %8531 = vmatmul.bf16.gmra.mxu0 %v7798
    %v8532 = vpop.f32.mrf.mxu0
    %v8533 = vadd.f32 0.0, %v8532
    %v8534 = vpop.f32.mrf.mxu0
    %v8535 = vadd.f32 0.0, %v8534
    %8536 = vdwg.mxu0
    %8537 = vmatpush.bf16.msra.mxu0 %v2371
    %8538 = vmatpush.bf16.msra.mxu0 %v2363
    %8539 = vmatpush.bf16.msra.mxu0 %v2355
    %8540 = vmatpush.bf16.msra.mxu0 %v2347
    %8541 = vmatpush.bf16.msra.mxu0 %v2339
    %8542 = vmatpush.bf16.msra.mxu0 %v2331
    %8543 = vmatpush.bf16.msra.mxu0 %v2323
    %8544 = vmatpush.bf16.msra.mxu0 %v2315
    %8545 = vmatmul.bf16.gmra.mxu0 %v7799
    %v8546 = vpop.f32.mrf.mxu0
    %v8547 = vadd.f32 %v8533, %v8546
    %v8548 = vpop.f32.mrf.mxu0
    %v8549 = vadd.f32 %v8535, %v8548
    %8550 = vdwg.mxu0
    %8551 = vmatpush.bf16.msra.mxu0 %v2308
    %8552 = vmatpush.bf16.msra.mxu0 %v2300
    %8553 = vmatpush.bf16.msra.mxu0 %v2292
    %8554 = vmatpush.bf16.msra.mxu0 %v2284
    %8555 = vmatpush.bf16.msra.mxu0 %v2276
    %8556 = vmatpush.bf16.msra.mxu0 %v2268
    %8557 = vmatpush.bf16.msra.mxu0 %v2260
    %8558 = vmatpush.bf16.msra.mxu0 %v2252
    %8559 = vmatmul.bf16.gmra.mxu0 %v7798
    %v8560 = vpop.f32.mrf.mxu0
    %v8561 = vadd.f32 0.0, %v8560
    %v8562 = vpop.f32.mrf.mxu0
    %v8563 = vadd.f32 0.0, %v8562
    %8564 = vdwg.mxu0
    %8565 = vmatpush.bf16.msra.mxu0 %v2372
    %8566 = vmatpush.bf16.msra.mxu0 %v2364
    %8567 = vmatpush.bf16.msra.mxu0 %v2356
    %8568 = vmatpush.bf16.msra.mxu0 %v2348
    %8569 = vmatpush.bf16.msra.mxu0 %v2340
    %8570 = vmatpush.bf16.msra.mxu0 %v2332
    %8571 = vmatpush.bf16.msra.mxu0 %v2324
    %8572 = vmatpush.bf16.msra.mxu0 %v2316
    %8573 = vmatmul.bf16.gmra.mxu0 %v7799
    %v8574 = vpop.f32.mrf.mxu0
    %v8575 = vadd.f32 %v8561, %v8574
    %v8576 = vpop.f32.mrf.mxu0
    %v8577 = vadd.f32 %v8563, %v8576
    %8578 = vdwg.mxu0
    %v8579 = vadd.f32 %v8339, %v8379
    %v8580 = vadd.f32 %v8340, %v8407
    %v8581 = vadd.f32 %v8341, %v8435
    %v8582 = vadd.f32 %v8342, %v8463
    %v8583 = vadd.f32 %v8343, %v8491
    %v8584 = vadd.f32 %v8344, %v8519
    %v8585 = vadd.f32 %v8345, %v8547
    %v8586 = vadd.f32 %v8346, %v8575
    %v8587 = vadd.f32 %v8347, %v8381
    %v8588 = vadd.f32 %v8348, %v8409
    %v8589 = vadd.f32 %v8349, %v8437
    %v8590 = vadd.f32 %v8350, %v8465
    %v8591 = vadd.f32 %v8351, %v8493
    %v8592 = vadd.f32 %v8352, %v8521
    %v8593 = vadd.f32 %v8353, %v8549
    %v8594 = vadd.f32 %v8354, %v8577
    %v8595 = vmul.f32 %v8579, 0.5
    %v8596 = vmul.f32 %v8580, 0.5
    %v8597 = vmul.f32 %v8581, 0.5
    %v8598 = vmul.f32 %v8582, 0.5
    %v8599 = vmul.f32 %v8583, 0.5
    %v8600 = vmul.f32 %v8584, 0.5
    %v8601 = vmul.f32 %v8587, 0.5
    %v8602 = vmul.f32 %v8588, 0.5
    %v8603 = vmul.f32 %v8589, 0.5
    %v8604 = vmul.f32 %v8590, 0.5
    %v8605 = vmul.f32 %v8591, 0.5
    %v8606 = vmul.f32 %v8592, 0.5
    %v8607 = vtanh.pop %v8595
    %v8608 = vtanh.pop %v8596
    %v8609 = vtanh.pop %v8597
    %v8610 = vtanh.pop %v8598
    %v8611 = vtanh.pop %v8599
    %v8612 = vtanh.pop %v8600
    %v8613 = vtanh.pop %v8601
    %v8614 = vtanh.pop %v8602
    %v8615 = vtanh.pop %v8603
    %v8616 = vtanh.pop %v8604
    %v8617 = vtanh.pop %v8605
    %v8618 = vtanh.pop %v8606
    %v8619 = vmul.f32 %v8607, 0.5
    %v8620 = vmul.f32 %v8608, 0.5
    %v8621 = vmul.f32 %v8609, 0.5
    %v8622 = vmul.f32 %v8610, 0.5
    %v8623 = vmul.f32 %v8611, 0.5
    %v8624 = vmul.f32 %v8612, 0.5
    %v8625 = vmul.f32 %v8613, 0.5
    %v8626 = vmul.f32 %v8614, 0.5
    %v8627 = vmul.f32 %v8615, 0.5
    %v8628 = vmul.f32 %v8616, 0.5
    %v8629 = vmul.f32 %v8617, 0.5
    %v8630 = vmul.f32 %v8618, 0.5
    %v8631 = vadd.f32 %v8619, 0.5
    %v8632 = vadd.f32 %v8620, 0.5
    %v8633 = vadd.f32 %v8621, 0.5
    %v8634 = vadd.f32 %v8622, 0.5
    %v8635 = vadd.f32 %v8623, 0.5
    %v8636 = vadd.f32 %v8624, 0.5
    %v8637 = vadd.f32 %v8625, 0.5
    %v8638 = vadd.f32 %v8626, 0.5
    %v8639 = vadd.f32 %v8627, 0.5
    %v8640 = vadd.f32 %v8628, 0.5
    %v8641 = vadd.f32 %v8629, 0.5
    %v8642 = vadd.f32 %v8630, 0.5
    %v8643 = vtanh.pop %v8585
    %v8644 = vtanh.pop %v8586
    %v8645 = vtanh.pop %v8593
    %v8646 = vtanh.pop %v8594
    %v8647 = vmul.f32 %v8633, %v7786
    %v8648 = vmul.f32 %v8634, %v7787
    %v8649 = vmul.f32 %v8639, %v7788
    %v8650 = vmul.f32 %v8640, %v7789
    %v8651 = vmul.f32 %v8631, %v8643
    %v8652 = vmul.f32 %v8632, %v8644
    %v8653 = vmul.f32 %v8637, %v8645
    %v8654 = vmul.f32 %v8638, %v8646
    %v8655 = vadd.f32 %v8647, %v8651
    %v8656 = vadd.f32 %v8648, %v8652
    %v8657 = vadd.f32 %v8649, %v8653
    %v8658 = vadd.f32 %v8650, %v8654
    %v8659 = vtanh.pop %v8655
    %v8660 = vtanh.pop %v8656
    %v8661 = vtanh.pop %v8657
    %v8662 = vtanh.pop %v8658
    %v8663 = vmul.f32 %v8635, %v8659
    %v8664 = vmul.f32 %v8636, %v8660
    %v8665 = vmul.f32 %v8641, %v8661
    %v8666 = vmul.f32 %v8642, %v8662
    %v8667 = vpack.c.bf16 %v8665, %v8663
    %v8668 = vpack.c.bf16 %v8666, %v8664
    %8669 = vmatpush.bf16.msra.mxu0 %v3255
    %8670 = vmatpush.bf16.msra.mxu0 %v3247
    %8671 = vmatpush.bf16.msra.mxu0 %v3239
    %8672 = vmatpush.bf16.msra.mxu0 %v3231
    %8673 = vmatpush.bf16.msra.mxu0 %v3223
    %8674 = vmatpush.bf16.msra.mxu0 %v3215
    %8675 = vmatpush.bf16.msra.mxu0 %v3207
    %8676 = vmatpush.bf16.msra.mxu0 %v3199
    %8677 = vmatmul.bf16.gmra.mxu0 %v8667
    %v8678 = vpop.f32.mrf.mxu0
    %v8679 = vadd.f32 %v8138, %v8678
    %v8680 = vpop.f32.mrf.mxu0
    %v8681 = vadd.f32 %v8140, %v8680
    %8682 = vdwg.mxu0
    %8683 = vmatpush.bf16.msra.mxu0 %v3319
    %8684 = vmatpush.bf16.msra.mxu0 %v3311
    %8685 = vmatpush.bf16.msra.mxu0 %v3303
    %8686 = vmatpush.bf16.msra.mxu0 %v3295
    %8687 = vmatpush.bf16.msra.mxu0 %v3287
    %8688 = vmatpush.bf16.msra.mxu0 %v3279
    %8689 = vmatpush.bf16.msra.mxu0 %v3271
    %8690 = vmatpush.bf16.msra.mxu0 %v3263
    %8691 = vmatmul.bf16.gmra.mxu0 %v8668
    %v8692 = vpop.f32.mrf.mxu0
    %v8693 = vadd.f32 %v8679, %v8692
    %v8694 = vpop.f32.mrf.mxu0
    %v8695 = vadd.f32 %v8681, %v8694
    %8696 = vdwg.mxu0
    %8697 = vmatpush.bf16.msra.mxu0 %v3256
    %8698 = vmatpush.bf16.msra.mxu0 %v3248
    %8699 = vmatpush.bf16.msra.mxu0 %v3240
    %8700 = vmatpush.bf16.msra.mxu0 %v3232
    %8701 = vmatpush.bf16.msra.mxu0 %v3224
    %8702 = vmatpush.bf16.msra.mxu0 %v3216
    %8703 = vmatpush.bf16.msra.mxu0 %v3208
    %8704 = vmatpush.bf16.msra.mxu0 %v3200
    %8705 = vmatmul.bf16.gmra.mxu0 %v8667
    %v8706 = vpop.f32.mrf.mxu0
    %v8707 = vadd.f32 %v8166, %v8706
    %v8708 = vpop.f32.mrf.mxu0
    %v8709 = vadd.f32 %v8168, %v8708
    %8710 = vdwg.mxu0
    %8711 = vmatpush.bf16.msra.mxu0 %v3320
    %8712 = vmatpush.bf16.msra.mxu0 %v3312
    %8713 = vmatpush.bf16.msra.mxu0 %v3304
    %8714 = vmatpush.bf16.msra.mxu0 %v3296
    %8715 = vmatpush.bf16.msra.mxu0 %v3288
    %8716 = vmatpush.bf16.msra.mxu0 %v3280
    %8717 = vmatpush.bf16.msra.mxu0 %v3272
    %8718 = vmatpush.bf16.msra.mxu0 %v3264
    %8719 = vmatmul.bf16.gmra.mxu0 %v8668
    %v8720 = vpop.f32.mrf.mxu0
    %v8721 = vadd.f32 %v8707, %v8720
    %v8722 = vpop.f32.mrf.mxu0
    %v8723 = vadd.f32 %v8709, %v8722
    %8724 = vdwg.mxu0
    %8725 = vmatpush.bf16.msra.mxu0 %v3257
    %8726 = vmatpush.bf16.msra.mxu0 %v3249
    %8727 = vmatpush.bf16.msra.mxu0 %v3241
    %8728 = vmatpush.bf16.msra.mxu0 %v3233
    %8729 = vmatpush.bf16.msra.mxu0 %v3225
    %8730 = vmatpush.bf16.msra.mxu0 %v3217
    %8731 = vmatpush.bf16.msra.mxu0 %v3209
    %8732 = vmatpush.bf16.msra.mxu0 %v3201
    %8733 = vmatmul.bf16.gmra.mxu0 %v8667
    %v8734 = vpop.f32.mrf.mxu0
    %v8735 = vadd.f32 %v8194, %v8734
    %v8736 = vpop.f32.mrf.mxu0
    %v8737 = vadd.f32 %v8196, %v8736
    %8738 = vdwg.mxu0
    %8739 = vmatpush.bf16.msra.mxu0 %v3321
    %8740 = vmatpush.bf16.msra.mxu0 %v3313
    %8741 = vmatpush.bf16.msra.mxu0 %v3305
    %8742 = vmatpush.bf16.msra.mxu0 %v3297
    %8743 = vmatpush.bf16.msra.mxu0 %v3289
    %8744 = vmatpush.bf16.msra.mxu0 %v3281
    %8745 = vmatpush.bf16.msra.mxu0 %v3273
    %8746 = vmatpush.bf16.msra.mxu0 %v3265
    %8747 = vmatmul.bf16.gmra.mxu0 %v8668
    %v8748 = vpop.f32.mrf.mxu0
    %v8749 = vadd.f32 %v8735, %v8748
    %v8750 = vpop.f32.mrf.mxu0
    %v8751 = vadd.f32 %v8737, %v8750
    %8752 = vdwg.mxu0
    %8753 = vmatpush.bf16.msra.mxu0 %v3258
    %8754 = vmatpush.bf16.msra.mxu0 %v3250
    %8755 = vmatpush.bf16.msra.mxu0 %v3242
    %8756 = vmatpush.bf16.msra.mxu0 %v3234
    %8757 = vmatpush.bf16.msra.mxu0 %v3226
    %8758 = vmatpush.bf16.msra.mxu0 %v3218
    %8759 = vmatpush.bf16.msra.mxu0 %v3210
    %8760 = vmatpush.bf16.msra.mxu0 %v3202
    %8761 = vmatmul.bf16.gmra.mxu0 %v8667
    %v8762 = vpop.f32.mrf.mxu0
    %v8763 = vadd.f32 %v8222, %v8762
    %v8764 = vpop.f32.mrf.mxu0
    %v8765 = vadd.f32 %v8224, %v8764
    %8766 = vdwg.mxu0
    %8767 = vmatpush.bf16.msra.mxu0 %v3322
    %8768 = vmatpush.bf16.msra.mxu0 %v3314
    %8769 = vmatpush.bf16.msra.mxu0 %v3306
    %8770 = vmatpush.bf16.msra.mxu0 %v3298
    %8771 = vmatpush.bf16.msra.mxu0 %v3290
    %8772 = vmatpush.bf16.msra.mxu0 %v3282
    %8773 = vmatpush.bf16.msra.mxu0 %v3274
    %8774 = vmatpush.bf16.msra.mxu0 %v3266
    %8775 = vmatmul.bf16.gmra.mxu0 %v8668
    %v8776 = vpop.f32.mrf.mxu0
    %v8777 = vadd.f32 %v8763, %v8776
    %v8778 = vpop.f32.mrf.mxu0
    %v8779 = vadd.f32 %v8765, %v8778
    %8780 = vdwg.mxu0
    %8781 = vmatpush.bf16.msra.mxu0 %v3259
    %8782 = vmatpush.bf16.msra.mxu0 %v3251
    %8783 = vmatpush.bf16.msra.mxu0 %v3243
    %8784 = vmatpush.bf16.msra.mxu0 %v3235
    %8785 = vmatpush.bf16.msra.mxu0 %v3227
    %8786 = vmatpush.bf16.msra.mxu0 %v3219
    %8787 = vmatpush.bf16.msra.mxu0 %v3211
    %8788 = vmatpush.bf16.msra.mxu0 %v3203
    %8789 = vmatmul.bf16.gmra.mxu0 %v8667
    %v8790 = vpop.f32.mrf.mxu0
    %v8791 = vadd.f32 %v8250, %v8790
    %v8792 = vpop.f32.mrf.mxu0
    %v8793 = vadd.f32 %v8252, %v8792
    %8794 = vdwg.mxu0
    %8795 = vmatpush.bf16.msra.mxu0 %v3323
    %8796 = vmatpush.bf16.msra.mxu0 %v3315
    %8797 = vmatpush.bf16.msra.mxu0 %v3307
    %8798 = vmatpush.bf16.msra.mxu0 %v3299
    %8799 = vmatpush.bf16.msra.mxu0 %v3291
    %8800 = vmatpush.bf16.msra.mxu0 %v3283
    %8801 = vmatpush.bf16.msra.mxu0 %v3275
    %8802 = vmatpush.bf16.msra.mxu0 %v3267
    %8803 = vmatmul.bf16.gmra.mxu0 %v8668
    %v8804 = vpop.f32.mrf.mxu0
    %v8805 = vadd.f32 %v8791, %v8804
    %v8806 = vpop.f32.mrf.mxu0
    %v8807 = vadd.f32 %v8793, %v8806
    %8808 = vdwg.mxu0
    %8809 = vmatpush.bf16.msra.mxu0 %v3260
    %8810 = vmatpush.bf16.msra.mxu0 %v3252
    %8811 = vmatpush.bf16.msra.mxu0 %v3244
    %8812 = vmatpush.bf16.msra.mxu0 %v3236
    %8813 = vmatpush.bf16.msra.mxu0 %v3228
    %8814 = vmatpush.bf16.msra.mxu0 %v3220
    %8815 = vmatpush.bf16.msra.mxu0 %v3212
    %8816 = vmatpush.bf16.msra.mxu0 %v3204
    %8817 = vmatmul.bf16.gmra.mxu0 %v8667
    %v8818 = vpop.f32.mrf.mxu0
    %v8819 = vadd.f32 %v8278, %v8818
    %v8820 = vpop.f32.mrf.mxu0
    %v8821 = vadd.f32 %v8280, %v8820
    %8822 = vdwg.mxu0
    %8823 = vmatpush.bf16.msra.mxu0 %v3324
    %8824 = vmatpush.bf16.msra.mxu0 %v3316
    %8825 = vmatpush.bf16.msra.mxu0 %v3308
    %8826 = vmatpush.bf16.msra.mxu0 %v3300
    %8827 = vmatpush.bf16.msra.mxu0 %v3292
    %8828 = vmatpush.bf16.msra.mxu0 %v3284
    %8829 = vmatpush.bf16.msra.mxu0 %v3276
    %8830 = vmatpush.bf16.msra.mxu0 %v3268
    %8831 = vmatmul.bf16.gmra.mxu0 %v8668
    %v8832 = vpop.f32.mrf.mxu0
    %v8833 = vadd.f32 %v8819, %v8832
    %v8834 = vpop.f32.mrf.mxu0
    %v8835 = vadd.f32 %v8821, %v8834
    %8836 = vdwg.mxu0
    %8837 = vmatpush.bf16.msra.mxu0 %v3261
    %8838 = vmatpush.bf16.msra.mxu0 %v3253
    %8839 = vmatpush.bf16.msra.mxu0 %v3245
    %8840 = vmatpush.bf16.msra.mxu0 %v3237
    %8841 = vmatpush.bf16.msra.mxu0 %v3229
    %8842 = vmatpush.bf16.msra.mxu0 %v3221
    %8843 = vmatpush.bf16.msra.mxu0 %v3213
    %8844 = vmatpush.bf16.msra.mxu0 %v3205
    %8845 = vmatmul.bf16.gmra.mxu0 %v8667
    %v8846 = vpop.f32.mrf.mxu0
    %v8847 = vadd.f32 %v8306, %v8846
    %v8848 = vpop.f32.mrf.mxu0
    %v8849 = vadd.f32 %v8308, %v8848
    %8850 = vdwg.mxu0
    %8851 = vmatpush.bf16.msra.mxu0 %v3325
    %8852 = vmatpush.bf16.msra.mxu0 %v3317
    %8853 = vmatpush.bf16.msra.mxu0 %v3309
    %8854 = vmatpush.bf16.msra.mxu0 %v3301
    %8855 = vmatpush.bf16.msra.mxu0 %v3293
    %8856 = vmatpush.bf16.msra.mxu0 %v3285
    %8857 = vmatpush.bf16.msra.mxu0 %v3277
    %8858 = vmatpush.bf16.msra.mxu0 %v3269
    %8859 = vmatmul.bf16.gmra.mxu0 %v8668
    %v8860 = vpop.f32.mrf.mxu0
    %v8861 = vadd.f32 %v8847, %v8860
    %v8862 = vpop.f32.mrf.mxu0
    %v8863 = vadd.f32 %v8849, %v8862
    %8864 = vdwg.mxu0
    %8865 = vmatpush.bf16.msra.mxu0 %v3262
    %8866 = vmatpush.bf16.msra.mxu0 %v3254
    %8867 = vmatpush.bf16.msra.mxu0 %v3246
    %8868 = vmatpush.bf16.msra.mxu0 %v3238
    %8869 = vmatpush.bf16.msra.mxu0 %v3230
    %8870 = vmatpush.bf16.msra.mxu0 %v3222
    %8871 = vmatpush.bf16.msra.mxu0 %v3214
    %8872 = vmatpush.bf16.msra.mxu0 %v3206
    %8873 = vmatmul.bf16.gmra.mxu0 %v8667
    %v8874 = vpop.f32.mrf.mxu0
    %v8875 = vadd.f32 %v8334, %v8874
    %v8876 = vpop.f32.mrf.mxu0
    %v8877 = vadd.f32 %v8336, %v8876
    %8878 = vdwg.mxu0
    %8879 = vmatpush.bf16.msra.mxu0 %v3326
    %8880 = vmatpush.bf16.msra.mxu0 %v3318
    %8881 = vmatpush.bf16.msra.mxu0 %v3310
    %8882 = vmatpush.bf16.msra.mxu0 %v3302
    %8883 = vmatpush.bf16.msra.mxu0 %v3294
    %8884 = vmatpush.bf16.msra.mxu0 %v3286
    %8885 = vmatpush.bf16.msra.mxu0 %v3278
    %8886 = vmatpush.bf16.msra.mxu0 %v3270
    %8887 = vmatmul.bf16.gmra.mxu0 %v8668
    %v8888 = vpop.f32.mrf.mxu0
    %v8889 = vadd.f32 %v8875, %v8888
    %v8890 = vpop.f32.mrf.mxu0
    %v8891 = vadd.f32 %v8877, %v8890
    %8892 = vdwg.mxu0
    %v8893 = vadd.f32 %v8693, %v449
    %v8894 = vadd.f32 %v8721, %v450
    %v8895 = vadd.f32 %v8749, %v451
    %v8896 = vadd.f32 %v8777, %v452
    %v8897 = vadd.f32 %v8805, %v453
    %v8898 = vadd.f32 %v8833, %v454
    %v8899 = vadd.f32 %v8861, %v455
    %v8900 = vadd.f32 %v8889, %v456
    %v8901 = vadd.f32 %v8695, %v449
    %v8902 = vadd.f32 %v8723, %v450
    %v8903 = vadd.f32 %v8751, %v451
    %v8904 = vadd.f32 %v8779, %v452
    %v8905 = vadd.f32 %v8807, %v453
    %v8906 = vadd.f32 %v8835, %v454
    %v8907 = vadd.f32 %v8863, %v455
    %v8908 = vadd.f32 %v8891, %v456
    %v8909 = vmul.f32 %v8893, 0.5
    %v8910 = vmul.f32 %v8894, 0.5
    %v8911 = vmul.f32 %v8895, 0.5
    %v8912 = vmul.f32 %v8896, 0.5
    %v8913 = vmul.f32 %v8897, 0.5
    %v8914 = vmul.f32 %v8898, 0.5
    %v8915 = vmul.f32 %v8901, 0.5
    %v8916 = vmul.f32 %v8902, 0.5
    %v8917 = vmul.f32 %v8903, 0.5
    %v8918 = vmul.f32 %v8904, 0.5
    %v8919 = vmul.f32 %v8905, 0.5
    %v8920 = vmul.f32 %v8906, 0.5
    %v8921 = vtanh.pop %v8909
    %v8922 = vtanh.pop %v8910
    %v8923 = vtanh.pop %v8911
    %v8924 = vtanh.pop %v8912
    %v8925 = vtanh.pop %v8913
    %v8926 = vtanh.pop %v8914
    %v8927 = vtanh.pop %v8915
    %v8928 = vtanh.pop %v8916
    %v8929 = vtanh.pop %v8917
    %v8930 = vtanh.pop %v8918
    %v8931 = vtanh.pop %v8919
    %v8932 = vtanh.pop %v8920
    %v8933 = vmul.f32 %v8921, 0.5
    %v8934 = vmul.f32 %v8922, 0.5
    %v8935 = vmul.f32 %v8923, 0.5
    %v8936 = vmul.f32 %v8924, 0.5
    %v8937 = vmul.f32 %v8925, 0.5
    %v8938 = vmul.f32 %v8926, 0.5
    %v8939 = vmul.f32 %v8927, 0.5
    %v8940 = vmul.f32 %v8928, 0.5
    %v8941 = vmul.f32 %v8929, 0.5
    %v8942 = vmul.f32 %v8930, 0.5
    %v8943 = vmul.f32 %v8931, 0.5
    %v8944 = vmul.f32 %v8932, 0.5
    %v8945 = vadd.f32 %v8933, 0.5
    %v8946 = vadd.f32 %v8934, 0.5
    %v8947 = vadd.f32 %v8935, 0.5
    %v8948 = vadd.f32 %v8936, 0.5
    %v8949 = vadd.f32 %v8937, 0.5
    %v8950 = vadd.f32 %v8938, 0.5
    %v8951 = vadd.f32 %v8939, 0.5
    %v8952 = vadd.f32 %v8940, 0.5
    %v8953 = vadd.f32 %v8941, 0.5
    %v8954 = vadd.f32 %v8942, 0.5
    %v8955 = vadd.f32 %v8943, 0.5
    %v8956 = vadd.f32 %v8944, 0.5
    %v8957 = vtanh.pop %v8899
    %v8958 = vtanh.pop %v8900
    %v8959 = vtanh.pop %v8907
    %v8960 = vtanh.pop %v8908
    %v8961 = vmul.f32 %v8947, %v8100
    %v8962 = vmul.f32 %v8948, %v8101
    %v8963 = vmul.f32 %v8953, %v8102
    %v8964 = vmul.f32 %v8954, %v8103
    %v8965 = vmul.f32 %v8945, %v8957
    %v8966 = vmul.f32 %v8946, %v8958
    %v8967 = vmul.f32 %v8951, %v8959
    %v8968 = vmul.f32 %v8952, %v8960
    %v8969 = vadd.f32 %v8961, %v8965
    %v8970 = vadd.f32 %v8962, %v8966
    %v8971 = vadd.f32 %v8963, %v8967
    %v8972 = vadd.f32 %v8964, %v8968
    %v8973 = vtanh.pop %v8969
    %v8974 = vtanh.pop %v8970
    %v8975 = vtanh.pop %v8971
    %v8976 = vtanh.pop %v8972
    %v8977 = vmul.f32 %v8949, %v8973
    %v8978 = vmul.f32 %v8950, %v8974
    %v8979 = vmul.f32 %v8955, %v8975
    %v8980 = vmul.f32 %v8956, %v8976
    %v8981 = vpack.c.bf16 %v8979, %v8977
    %v8982 = vpack.c.bf16 %v8980, %v8978
    %8983 = vmatpush.bf16.msra.mxu0 %v1421
    %8984 = vmatpush.bf16.msra.mxu0 %v1413
    %8985 = vmatpush.bf16.msra.mxu0 %v1405
    %8986 = vmatpush.bf16.msra.mxu0 %v1397
    %8987 = vmatpush.bf16.msra.mxu0 %v1389
    %8988 = vmatpush.bf16.msra.mxu0 %v1381
    %8989 = vmatpush.bf16.msra.mxu0 %v1373
    %8990 = vmatpush.bf16.msra.mxu0 %v1365
    %8991 = vmatmul.bf16.gmra.mxu0 %v8981
    %v8992 = vpop.f32.mrf.mxu0
    %v8993 = vadd.f32 0.0, %v8992
    %v8994 = vpop.f32.mrf.mxu0
    %v8995 = vadd.f32 0.0, %v8994
    %8996 = vdwg.mxu0
    %8997 = vmatpush.bf16.msra.mxu0 %v1485
    %8998 = vmatpush.bf16.msra.mxu0 %v1477
    %8999 = vmatpush.bf16.msra.mxu0 %v1469
    %9000 = vmatpush.bf16.msra.mxu0 %v1461
    %9001 = vmatpush.bf16.msra.mxu0 %v1453
    %9002 = vmatpush.bf16.msra.mxu0 %v1445
    %9003 = vmatpush.bf16.msra.mxu0 %v1437
    %9004 = vmatpush.bf16.msra.mxu0 %v1429
    %9005 = vmatmul.bf16.gmra.mxu0 %v8982
    %v9006 = vpop.f32.mrf.mxu0
    %v9007 = vadd.f32 %v8993, %v9006
    %v9008 = vpop.f32.mrf.mxu0
    %v9009 = vadd.f32 %v8995, %v9008
    %9010 = vdwg.mxu0
    %9011 = vmatpush.bf16.msra.mxu0 %v1422
    %9012 = vmatpush.bf16.msra.mxu0 %v1414
    %9013 = vmatpush.bf16.msra.mxu0 %v1406
    %9014 = vmatpush.bf16.msra.mxu0 %v1398
    %9015 = vmatpush.bf16.msra.mxu0 %v1390
    %9016 = vmatpush.bf16.msra.mxu0 %v1382
    %9017 = vmatpush.bf16.msra.mxu0 %v1374
    %9018 = vmatpush.bf16.msra.mxu0 %v1366
    %9019 = vmatmul.bf16.gmra.mxu0 %v8981
    %v9020 = vpop.f32.mrf.mxu0
    %v9021 = vadd.f32 0.0, %v9020
    %v9022 = vpop.f32.mrf.mxu0
    %v9023 = vadd.f32 0.0, %v9022
    %9024 = vdwg.mxu0
    %9025 = vmatpush.bf16.msra.mxu0 %v1486
    %9026 = vmatpush.bf16.msra.mxu0 %v1478
    %9027 = vmatpush.bf16.msra.mxu0 %v1470
    %9028 = vmatpush.bf16.msra.mxu0 %v1462
    %9029 = vmatpush.bf16.msra.mxu0 %v1454
    %9030 = vmatpush.bf16.msra.mxu0 %v1446
    %9031 = vmatpush.bf16.msra.mxu0 %v1438
    %9032 = vmatpush.bf16.msra.mxu0 %v1430
    %9033 = vmatmul.bf16.gmra.mxu0 %v8982
    %v9034 = vpop.f32.mrf.mxu0
    %v9035 = vadd.f32 %v9021, %v9034
    %v9036 = vpop.f32.mrf.mxu0
    %v9037 = vadd.f32 %v9023, %v9036
    %9038 = vdwg.mxu0
    %9039 = vmatpush.bf16.msra.mxu0 %v1423
    %9040 = vmatpush.bf16.msra.mxu0 %v1415
    %9041 = vmatpush.bf16.msra.mxu0 %v1407
    %9042 = vmatpush.bf16.msra.mxu0 %v1399
    %9043 = vmatpush.bf16.msra.mxu0 %v1391
    %9044 = vmatpush.bf16.msra.mxu0 %v1383
    %9045 = vmatpush.bf16.msra.mxu0 %v1375
    %9046 = vmatpush.bf16.msra.mxu0 %v1367
    %9047 = vmatmul.bf16.gmra.mxu0 %v8981
    %v9048 = vpop.f32.mrf.mxu0
    %v9049 = vadd.f32 0.0, %v9048
    %v9050 = vpop.f32.mrf.mxu0
    %v9051 = vadd.f32 0.0, %v9050
    %9052 = vdwg.mxu0
    %9053 = vmatpush.bf16.msra.mxu0 %v1487
    %9054 = vmatpush.bf16.msra.mxu0 %v1479
    %9055 = vmatpush.bf16.msra.mxu0 %v1471
    %9056 = vmatpush.bf16.msra.mxu0 %v1463
    %9057 = vmatpush.bf16.msra.mxu0 %v1455
    %9058 = vmatpush.bf16.msra.mxu0 %v1447
    %9059 = vmatpush.bf16.msra.mxu0 %v1439
    %9060 = vmatpush.bf16.msra.mxu0 %v1431
    %9061 = vmatmul.bf16.gmra.mxu0 %v8982
    %v9062 = vpop.f32.mrf.mxu0
    %v9063 = vadd.f32 %v9049, %v9062
    %v9064 = vpop.f32.mrf.mxu0
    %v9065 = vadd.f32 %v9051, %v9064
    %9066 = vdwg.mxu0
    %9067 = vmatpush.bf16.msra.mxu0 %v1424
    %9068 = vmatpush.bf16.msra.mxu0 %v1416
    %9069 = vmatpush.bf16.msra.mxu0 %v1408
    %9070 = vmatpush.bf16.msra.mxu0 %v1400
    %9071 = vmatpush.bf16.msra.mxu0 %v1392
    %9072 = vmatpush.bf16.msra.mxu0 %v1384
    %9073 = vmatpush.bf16.msra.mxu0 %v1376
    %9074 = vmatpush.bf16.msra.mxu0 %v1368
    %9075 = vmatmul.bf16.gmra.mxu0 %v8981
    %v9076 = vpop.f32.mrf.mxu0
    %v9077 = vadd.f32 0.0, %v9076
    %v9078 = vpop.f32.mrf.mxu0
    %v9079 = vadd.f32 0.0, %v9078
    %9080 = vdwg.mxu0
    %9081 = vmatpush.bf16.msra.mxu0 %v1488
    %9082 = vmatpush.bf16.msra.mxu0 %v1480
    %9083 = vmatpush.bf16.msra.mxu0 %v1472
    %9084 = vmatpush.bf16.msra.mxu0 %v1464
    %9085 = vmatpush.bf16.msra.mxu0 %v1456
    %9086 = vmatpush.bf16.msra.mxu0 %v1448
    %9087 = vmatpush.bf16.msra.mxu0 %v1440
    %9088 = vmatpush.bf16.msra.mxu0 %v1432
    %9089 = vmatmul.bf16.gmra.mxu0 %v8982
    %v9090 = vpop.f32.mrf.mxu0
    %v9091 = vadd.f32 %v9077, %v9090
    %v9092 = vpop.f32.mrf.mxu0
    %v9093 = vadd.f32 %v9079, %v9092
    %9094 = vdwg.mxu0
    %9095 = vmatpush.bf16.msra.mxu0 %v1425
    %9096 = vmatpush.bf16.msra.mxu0 %v1417
    %9097 = vmatpush.bf16.msra.mxu0 %v1409
    %9098 = vmatpush.bf16.msra.mxu0 %v1401
    %9099 = vmatpush.bf16.msra.mxu0 %v1393
    %9100 = vmatpush.bf16.msra.mxu0 %v1385
    %9101 = vmatpush.bf16.msra.mxu0 %v1377
    %9102 = vmatpush.bf16.msra.mxu0 %v1369
    %9103 = vmatmul.bf16.gmra.mxu0 %v8981
    %v9104 = vpop.f32.mrf.mxu0
    %v9105 = vadd.f32 0.0, %v9104
    %v9106 = vpop.f32.mrf.mxu0
    %v9107 = vadd.f32 0.0, %v9106
    %9108 = vdwg.mxu0
    %9109 = vmatpush.bf16.msra.mxu0 %v1489
    %9110 = vmatpush.bf16.msra.mxu0 %v1481
    %9111 = vmatpush.bf16.msra.mxu0 %v1473
    %9112 = vmatpush.bf16.msra.mxu0 %v1465
    %9113 = vmatpush.bf16.msra.mxu0 %v1457
    %9114 = vmatpush.bf16.msra.mxu0 %v1449
    %9115 = vmatpush.bf16.msra.mxu0 %v1441
    %9116 = vmatpush.bf16.msra.mxu0 %v1433
    %9117 = vmatmul.bf16.gmra.mxu0 %v8982
    %v9118 = vpop.f32.mrf.mxu0
    %v9119 = vadd.f32 %v9105, %v9118
    %v9120 = vpop.f32.mrf.mxu0
    %v9121 = vadd.f32 %v9107, %v9120
    %9122 = vdwg.mxu0
    %9123 = vmatpush.bf16.msra.mxu0 %v1426
    %9124 = vmatpush.bf16.msra.mxu0 %v1418
    %9125 = vmatpush.bf16.msra.mxu0 %v1410
    %9126 = vmatpush.bf16.msra.mxu0 %v1402
    %9127 = vmatpush.bf16.msra.mxu0 %v1394
    %9128 = vmatpush.bf16.msra.mxu0 %v1386
    %9129 = vmatpush.bf16.msra.mxu0 %v1378
    %9130 = vmatpush.bf16.msra.mxu0 %v1370
    %9131 = vmatmul.bf16.gmra.mxu0 %v8981
    %v9132 = vpop.f32.mrf.mxu0
    %v9133 = vadd.f32 0.0, %v9132
    %v9134 = vpop.f32.mrf.mxu0
    %v9135 = vadd.f32 0.0, %v9134
    %9136 = vdwg.mxu0
    %9137 = vmatpush.bf16.msra.mxu0 %v1490
    %9138 = vmatpush.bf16.msra.mxu0 %v1482
    %9139 = vmatpush.bf16.msra.mxu0 %v1474
    %9140 = vmatpush.bf16.msra.mxu0 %v1466
    %9141 = vmatpush.bf16.msra.mxu0 %v1458
    %9142 = vmatpush.bf16.msra.mxu0 %v1450
    %9143 = vmatpush.bf16.msra.mxu0 %v1442
    %9144 = vmatpush.bf16.msra.mxu0 %v1434
    %9145 = vmatmul.bf16.gmra.mxu0 %v8982
    %v9146 = vpop.f32.mrf.mxu0
    %v9147 = vadd.f32 %v9133, %v9146
    %v9148 = vpop.f32.mrf.mxu0
    %v9149 = vadd.f32 %v9135, %v9148
    %9150 = vdwg.mxu0
    %9151 = vmatpush.bf16.msra.mxu0 %v1427
    %9152 = vmatpush.bf16.msra.mxu0 %v1419
    %9153 = vmatpush.bf16.msra.mxu0 %v1411
    %9154 = vmatpush.bf16.msra.mxu0 %v1403
    %9155 = vmatpush.bf16.msra.mxu0 %v1395
    %9156 = vmatpush.bf16.msra.mxu0 %v1387
    %9157 = vmatpush.bf16.msra.mxu0 %v1379
    %9158 = vmatpush.bf16.msra.mxu0 %v1371
    %9159 = vmatmul.bf16.gmra.mxu0 %v8981
    %v9160 = vpop.f32.mrf.mxu0
    %v9161 = vadd.f32 0.0, %v9160
    %v9162 = vpop.f32.mrf.mxu0
    %v9163 = vadd.f32 0.0, %v9162
    %9164 = vdwg.mxu0
    %9165 = vmatpush.bf16.msra.mxu0 %v1491
    %9166 = vmatpush.bf16.msra.mxu0 %v1483
    %9167 = vmatpush.bf16.msra.mxu0 %v1475
    %9168 = vmatpush.bf16.msra.mxu0 %v1467
    %9169 = vmatpush.bf16.msra.mxu0 %v1459
    %9170 = vmatpush.bf16.msra.mxu0 %v1451
    %9171 = vmatpush.bf16.msra.mxu0 %v1443
    %9172 = vmatpush.bf16.msra.mxu0 %v1435
    %9173 = vmatmul.bf16.gmra.mxu0 %v8982
    %v9174 = vpop.f32.mrf.mxu0
    %v9175 = vadd.f32 %v9161, %v9174
    %v9176 = vpop.f32.mrf.mxu0
    %v9177 = vadd.f32 %v9163, %v9176
    %9178 = vdwg.mxu0
    %9179 = vmatpush.bf16.msra.mxu0 %v1428
    %9180 = vmatpush.bf16.msra.mxu0 %v1420
    %9181 = vmatpush.bf16.msra.mxu0 %v1412
    %9182 = vmatpush.bf16.msra.mxu0 %v1404
    %9183 = vmatpush.bf16.msra.mxu0 %v1396
    %9184 = vmatpush.bf16.msra.mxu0 %v1388
    %9185 = vmatpush.bf16.msra.mxu0 %v1380
    %9186 = vmatpush.bf16.msra.mxu0 %v1372
    %9187 = vmatmul.bf16.gmra.mxu0 %v8981
    %v9188 = vpop.f32.mrf.mxu0
    %v9189 = vadd.f32 0.0, %v9188
    %v9190 = vpop.f32.mrf.mxu0
    %v9191 = vadd.f32 0.0, %v9190
    %9192 = vdwg.mxu0
    %9193 = vmatpush.bf16.msra.mxu0 %v1492
    %9194 = vmatpush.bf16.msra.mxu0 %v1484
    %9195 = vmatpush.bf16.msra.mxu0 %v1476
    %9196 = vmatpush.bf16.msra.mxu0 %v1468
    %9197 = vmatpush.bf16.msra.mxu0 %v1460
    %9198 = vmatpush.bf16.msra.mxu0 %v1452
    %9199 = vmatpush.bf16.msra.mxu0 %v1444
    %9200 = vmatpush.bf16.msra.mxu0 %v1436
    %9201 = vmatmul.bf16.gmra.mxu0 %v8982
    %v9202 = vpop.f32.mrf.mxu0
    %v9203 = vadd.f32 %v9189, %v9202
    %v9204 = vpop.f32.mrf.mxu0
    %v9205 = vadd.f32 %v9191, %v9204
    %9206 = vdwg.mxu0
    %s9207 = scalar_lea.vmem [#allocation2], 896
    %v9208 = vld [vmem:[%s9207] sm:$0xff]
    %v9209 = vld [vmem:[%s9207 + $0x8] sm:$0xff]
    %v9210 = vld [vmem:[%s9207 + $0x10] sm:$0xff]
    %v9211 = vld [vmem:[%s9207 + $0x18] sm:$0xff]
    %v9212 = vld [vmem:[%s9207 + $0x20] sm:$0xff]
    %v9213 = vld [vmem:[%s9207 + $0x28] sm:$0xff]
    %v9214 = vld [vmem:[%s9207 + $0x30] sm:$0xff]
    %v9215 = vld [vmem:[%s9207 + $0x38] sm:$0xff]
    %v9216 = vld [vmem:[%s9207 + $0x40] sm:$0xff]
    %v9217 = vld [vmem:[%s9207 + $0x48] sm:$0xff]
    %v9218 = vld [vmem:[%s9207 + $0x50] sm:$0xff]
    %v9219 = vld [vmem:[%s9207 + $0x58] sm:$0xff]
    %v9220 = vld [vmem:[%s9207 + $0x60] sm:$0xff]
    %v9221 = vld [vmem:[%s9207 + $0x68] sm:$0xff]
    %v9222 = vld [vmem:[%s9207 + $0x70] sm:$0xff]
    %v9223 = vld [vmem:[%s9207 + $0x78] sm:$0xff]
    %9224 = vmatpush.bf16.msra.mxu0 %v2301
    %9225 = vmatpush.bf16.msra.mxu0 %v2293
    %9226 = vmatpush.bf16.msra.mxu0 %v2285
    %9227 = vmatpush.bf16.msra.mxu0 %v2277
    %9228 = vmatpush.bf16.msra.mxu0 %v2269
    %9229 = vmatpush.bf16.msra.mxu0 %v2261
    %9230 = vmatpush.bf16.msra.mxu0 %v2253
    %9231 = vmatpush.bf16.msra.mxu0 %v2245
    %9232 = vmatmul.bf16.gmra.mxu0 %v8667
    %v9233 = vpop.f32.mrf.mxu0
    %v9234 = vadd.f32 0.0, %v9233
    %v9235 = vpop.f32.mrf.mxu0
    %v9236 = vadd.f32 0.0, %v9235
    %9237 = vdwg.mxu0
    %9238 = vmatpush.bf16.msra.mxu0 %v2365
    %9239 = vmatpush.bf16.msra.mxu0 %v2357
    %9240 = vmatpush.bf16.msra.mxu0 %v2349
    %9241 = vmatpush.bf16.msra.mxu0 %v2341
    %9242 = vmatpush.bf16.msra.mxu0 %v2333
    %9243 = vmatpush.bf16.msra.mxu0 %v2325
    %9244 = vmatpush.bf16.msra.mxu0 %v2317
    %9245 = vmatpush.bf16.msra.mxu0 %v2309
    %9246 = vmatmul.bf16.gmra.mxu0 %v8668
    %v9247 = vpop.f32.mrf.mxu0
    %v9248 = vadd.f32 %v9234, %v9247
    %v9249 = vpop.f32.mrf.mxu0
    %v9250 = vadd.f32 %v9236, %v9249
    %9251 = vdwg.mxu0
    %9252 = vmatpush.bf16.msra.mxu0 %v2302
    %9253 = vmatpush.bf16.msra.mxu0 %v2294
    %9254 = vmatpush.bf16.msra.mxu0 %v2286
    %9255 = vmatpush.bf16.msra.mxu0 %v2278
    %9256 = vmatpush.bf16.msra.mxu0 %v2270
    %9257 = vmatpush.bf16.msra.mxu0 %v2262
    %9258 = vmatpush.bf16.msra.mxu0 %v2254
    %9259 = vmatpush.bf16.msra.mxu0 %v2246
    %9260 = vmatmul.bf16.gmra.mxu0 %v8667
    %v9261 = vpop.f32.mrf.mxu0
    %v9262 = vadd.f32 0.0, %v9261
    %v9263 = vpop.f32.mrf.mxu0
    %v9264 = vadd.f32 0.0, %v9263
    %9265 = vdwg.mxu0
    %9266 = vmatpush.bf16.msra.mxu0 %v2366
    %9267 = vmatpush.bf16.msra.mxu0 %v2358
    %9268 = vmatpush.bf16.msra.mxu0 %v2350
    %9269 = vmatpush.bf16.msra.mxu0 %v2342
    %9270 = vmatpush.bf16.msra.mxu0 %v2334
    %9271 = vmatpush.bf16.msra.mxu0 %v2326
    %9272 = vmatpush.bf16.msra.mxu0 %v2318
    %9273 = vmatpush.bf16.msra.mxu0 %v2310
    %9274 = vmatmul.bf16.gmra.mxu0 %v8668
    %v9275 = vpop.f32.mrf.mxu0
    %v9276 = vadd.f32 %v9262, %v9275
    %v9277 = vpop.f32.mrf.mxu0
    %v9278 = vadd.f32 %v9264, %v9277
    %9279 = vdwg.mxu0
    %9280 = vmatpush.bf16.msra.mxu0 %v2303
    %9281 = vmatpush.bf16.msra.mxu0 %v2295
    %9282 = vmatpush.bf16.msra.mxu0 %v2287
    %9283 = vmatpush.bf16.msra.mxu0 %v2279
    %9284 = vmatpush.bf16.msra.mxu0 %v2271
    %9285 = vmatpush.bf16.msra.mxu0 %v2263
    %9286 = vmatpush.bf16.msra.mxu0 %v2255
    %9287 = vmatpush.bf16.msra.mxu0 %v2247
    %9288 = vmatmul.bf16.gmra.mxu0 %v8667
    %v9289 = vpop.f32.mrf.mxu0
    %v9290 = vadd.f32 0.0, %v9289
    %v9291 = vpop.f32.mrf.mxu0
    %v9292 = vadd.f32 0.0, %v9291
    %9293 = vdwg.mxu0
    %9294 = vmatpush.bf16.msra.mxu0 %v2367
    %9295 = vmatpush.bf16.msra.mxu0 %v2359
    %9296 = vmatpush.bf16.msra.mxu0 %v2351
    %9297 = vmatpush.bf16.msra.mxu0 %v2343
    %9298 = vmatpush.bf16.msra.mxu0 %v2335
    %9299 = vmatpush.bf16.msra.mxu0 %v2327
    %9300 = vmatpush.bf16.msra.mxu0 %v2319
    %9301 = vmatpush.bf16.msra.mxu0 %v2311
    %9302 = vmatmul.bf16.gmra.mxu0 %v8668
    %v9303 = vpop.f32.mrf.mxu0
    %v9304 = vadd.f32 %v9290, %v9303
    %v9305 = vpop.f32.mrf.mxu0
    %v9306 = vadd.f32 %v9292, %v9305
    %9307 = vdwg.mxu0
    %9308 = vmatpush.bf16.msra.mxu0 %v2304
    %9309 = vmatpush.bf16.msra.mxu0 %v2296
    %9310 = vmatpush.bf16.msra.mxu0 %v2288
    %9311 = vmatpush.bf16.msra.mxu0 %v2280
    %9312 = vmatpush.bf16.msra.mxu0 %v2272
    %9313 = vmatpush.bf16.msra.mxu0 %v2264
    %9314 = vmatpush.bf16.msra.mxu0 %v2256
    %9315 = vmatpush.bf16.msra.mxu0 %v2248
    %9316 = vmatmul.bf16.gmra.mxu0 %v8667
    %v9317 = vpop.f32.mrf.mxu0
    %v9318 = vadd.f32 0.0, %v9317
    %v9319 = vpop.f32.mrf.mxu0
    %v9320 = vadd.f32 0.0, %v9319
    %9321 = vdwg.mxu0
    %9322 = vmatpush.bf16.msra.mxu0 %v2368
    %9323 = vmatpush.bf16.msra.mxu0 %v2360
    %9324 = vmatpush.bf16.msra.mxu0 %v2352
    %9325 = vmatpush.bf16.msra.mxu0 %v2344
    %9326 = vmatpush.bf16.msra.mxu0 %v2336
    %9327 = vmatpush.bf16.msra.mxu0 %v2328
    %9328 = vmatpush.bf16.msra.mxu0 %v2320
    %9329 = vmatpush.bf16.msra.mxu0 %v2312
    %9330 = vmatmul.bf16.gmra.mxu0 %v8668
    %v9331 = vpop.f32.mrf.mxu0
    %v9332 = vadd.f32 %v9318, %v9331
    %v9333 = vpop.f32.mrf.mxu0
    %v9334 = vadd.f32 %v9320, %v9333
    %9335 = vdwg.mxu0
    %9336 = vmatpush.bf16.msra.mxu0 %v2305
    %9337 = vmatpush.bf16.msra.mxu0 %v2297
    %9338 = vmatpush.bf16.msra.mxu0 %v2289
    %9339 = vmatpush.bf16.msra.mxu0 %v2281
    %9340 = vmatpush.bf16.msra.mxu0 %v2273
    %9341 = vmatpush.bf16.msra.mxu0 %v2265
    %9342 = vmatpush.bf16.msra.mxu0 %v2257
    %9343 = vmatpush.bf16.msra.mxu0 %v2249
    %9344 = vmatmul.bf16.gmra.mxu0 %v8667
    %v9345 = vpop.f32.mrf.mxu0
    %v9346 = vadd.f32 0.0, %v9345
    %v9347 = vpop.f32.mrf.mxu0
    %v9348 = vadd.f32 0.0, %v9347
    %9349 = vdwg.mxu0
    %9350 = vmatpush.bf16.msra.mxu0 %v2369
    %9351 = vmatpush.bf16.msra.mxu0 %v2361
    %9352 = vmatpush.bf16.msra.mxu0 %v2353
    %9353 = vmatpush.bf16.msra.mxu0 %v2345
    %9354 = vmatpush.bf16.msra.mxu0 %v2337
    %9355 = vmatpush.bf16.msra.mxu0 %v2329
    %9356 = vmatpush.bf16.msra.mxu0 %v2321
    %9357 = vmatpush.bf16.msra.mxu0 %v2313
    %9358 = vmatmul.bf16.gmra.mxu0 %v8668
    %v9359 = vpop.f32.mrf.mxu0
    %v9360 = vadd.f32 %v9346, %v9359
    %v9361 = vpop.f32.mrf.mxu0
    %v9362 = vadd.f32 %v9348, %v9361
    %9363 = vdwg.mxu0
    %9364 = vmatpush.bf16.msra.mxu0 %v2306
    %9365 = vmatpush.bf16.msra.mxu0 %v2298
    %9366 = vmatpush.bf16.msra.mxu0 %v2290
    %9367 = vmatpush.bf16.msra.mxu0 %v2282
    %9368 = vmatpush.bf16.msra.mxu0 %v2274
    %9369 = vmatpush.bf16.msra.mxu0 %v2266
    %9370 = vmatpush.bf16.msra.mxu0 %v2258
    %9371 = vmatpush.bf16.msra.mxu0 %v2250
    %9372 = vmatmul.bf16.gmra.mxu0 %v8667
    %v9373 = vpop.f32.mrf.mxu0
    %v9374 = vadd.f32 0.0, %v9373
    %v9375 = vpop.f32.mrf.mxu0
    %v9376 = vadd.f32 0.0, %v9375
    %9377 = vdwg.mxu0
    %9378 = vmatpush.bf16.msra.mxu0 %v2370
    %9379 = vmatpush.bf16.msra.mxu0 %v2362
    %9380 = vmatpush.bf16.msra.mxu0 %v2354
    %9381 = vmatpush.bf16.msra.mxu0 %v2346
    %9382 = vmatpush.bf16.msra.mxu0 %v2338
    %9383 = vmatpush.bf16.msra.mxu0 %v2330
    %9384 = vmatpush.bf16.msra.mxu0 %v2322
    %9385 = vmatpush.bf16.msra.mxu0 %v2314
    %9386 = vmatmul.bf16.gmra.mxu0 %v8668
    %v9387 = vpop.f32.mrf.mxu0
    %v9388 = vadd.f32 %v9374, %v9387
    %v9389 = vpop.f32.mrf.mxu0
    %v9390 = vadd.f32 %v9376, %v9389
    %9391 = vdwg.mxu0
    %9392 = vmatpush.bf16.msra.mxu0 %v2307
    %9393 = vmatpush.bf16.msra.mxu0 %v2299
    %9394 = vmatpush.bf16.msra.mxu0 %v2291
    %9395 = vmatpush.bf16.msra.mxu0 %v2283
    %9396 = vmatpush.bf16.msra.mxu0 %v2275
    %9397 = vmatpush.bf16.msra.mxu0 %v2267
    %9398 = vmatpush.bf16.msra.mxu0 %v2259
    %9399 = vmatpush.bf16.msra.mxu0 %v2251
    %9400 = vmatmul.bf16.gmra.mxu0 %v8667
    %v9401 = vpop.f32.mrf.mxu0
    %v9402 = vadd.f32 0.0, %v9401
    %v9403 = vpop.f32.mrf.mxu0
    %v9404 = vadd.f32 0.0, %v9403
    %9405 = vdwg.mxu0
    %9406 = vmatpush.bf16.msra.mxu0 %v2371
    %9407 = vmatpush.bf16.msra.mxu0 %v2363
    %9408 = vmatpush.bf16.msra.mxu0 %v2355
    %9409 = vmatpush.bf16.msra.mxu0 %v2347
    %9410 = vmatpush.bf16.msra.mxu0 %v2339
    %9411 = vmatpush.bf16.msra.mxu0 %v2331
    %9412 = vmatpush.bf16.msra.mxu0 %v2323
    %9413 = vmatpush.bf16.msra.mxu0 %v2315
    %9414 = vmatmul.bf16.gmra.mxu0 %v8668
    %v9415 = vpop.f32.mrf.mxu0
    %v9416 = vadd.f32 %v9402, %v9415
    %v9417 = vpop.f32.mrf.mxu0
    %v9418 = vadd.f32 %v9404, %v9417
    %9419 = vdwg.mxu0
    %9420 = vmatpush.bf16.msra.mxu0 %v2308
    %9421 = vmatpush.bf16.msra.mxu0 %v2300
    %9422 = vmatpush.bf16.msra.mxu0 %v2292
    %9423 = vmatpush.bf16.msra.mxu0 %v2284
    %9424 = vmatpush.bf16.msra.mxu0 %v2276
    %9425 = vmatpush.bf16.msra.mxu0 %v2268
    %9426 = vmatpush.bf16.msra.mxu0 %v2260
    %9427 = vmatpush.bf16.msra.mxu0 %v2252
    %9428 = vmatmul.bf16.gmra.mxu0 %v8667
    %v9429 = vpop.f32.mrf.mxu0
    %v9430 = vadd.f32 0.0, %v9429
    %v9431 = vpop.f32.mrf.mxu0
    %v9432 = vadd.f32 0.0, %v9431
    %9433 = vdwg.mxu0
    %9434 = vmatpush.bf16.msra.mxu0 %v2372
    %9435 = vmatpush.bf16.msra.mxu0 %v2364
    %9436 = vmatpush.bf16.msra.mxu0 %v2356
    %9437 = vmatpush.bf16.msra.mxu0 %v2348
    %9438 = vmatpush.bf16.msra.mxu0 %v2340
    %9439 = vmatpush.bf16.msra.mxu0 %v2332
    %9440 = vmatpush.bf16.msra.mxu0 %v2324
    %9441 = vmatpush.bf16.msra.mxu0 %v2316
    %9442 = vmatmul.bf16.gmra.mxu0 %v8668
    %v9443 = vpop.f32.mrf.mxu0
    %v9444 = vadd.f32 %v9430, %v9443
    %v9445 = vpop.f32.mrf.mxu0
    %v9446 = vadd.f32 %v9432, %v9445
    %9447 = vdwg.mxu0
    %v9448 = vadd.f32 %v9208, %v9248
    %v9449 = vadd.f32 %v9209, %v9276
    %v9450 = vadd.f32 %v9210, %v9304
    %v9451 = vadd.f32 %v9211, %v9332
    %v9452 = vadd.f32 %v9212, %v9360
    %v9453 = vadd.f32 %v9213, %v9388
    %v9454 = vadd.f32 %v9214, %v9416
    %v9455 = vadd.f32 %v9215, %v9444
    %v9456 = vadd.f32 %v9216, %v9250
    %v9457 = vadd.f32 %v9217, %v9278
    %v9458 = vadd.f32 %v9218, %v9306
    %v9459 = vadd.f32 %v9219, %v9334
    %v9460 = vadd.f32 %v9220, %v9362
    %v9461 = vadd.f32 %v9221, %v9390
    %v9462 = vadd.f32 %v9222, %v9418
    %v9463 = vadd.f32 %v9223, %v9446
    %v9464 = vmul.f32 %v9448, 0.5
    %v9465 = vmul.f32 %v9449, 0.5
    %v9466 = vmul.f32 %v9450, 0.5
    %v9467 = vmul.f32 %v9451, 0.5
    %v9468 = vmul.f32 %v9452, 0.5
    %v9469 = vmul.f32 %v9453, 0.5
    %v9470 = vmul.f32 %v9456, 0.5
    %v9471 = vmul.f32 %v9457, 0.5
    %v9472 = vmul.f32 %v9458, 0.5
    %v9473 = vmul.f32 %v9459, 0.5
    %v9474 = vmul.f32 %v9460, 0.5
    %v9475 = vmul.f32 %v9461, 0.5
    %v9476 = vtanh.pop %v9464
    %v9477 = vtanh.pop %v9465
    %v9478 = vtanh.pop %v9466
    %v9479 = vtanh.pop %v9467
    %v9480 = vtanh.pop %v9468
    %v9481 = vtanh.pop %v9469
    %v9482 = vtanh.pop %v9470
    %v9483 = vtanh.pop %v9471
    %v9484 = vtanh.pop %v9472
    %v9485 = vtanh.pop %v9473
    %v9486 = vtanh.pop %v9474
    %v9487 = vtanh.pop %v9475
    %v9488 = vmul.f32 %v9476, 0.5
    %v9489 = vmul.f32 %v9477, 0.5
    %v9490 = vmul.f32 %v9478, 0.5
    %v9491 = vmul.f32 %v9479, 0.5
    %v9492 = vmul.f32 %v9480, 0.5
    %v9493 = vmul.f32 %v9481, 0.5
    %v9494 = vmul.f32 %v9482, 0.5
    %v9495 = vmul.f32 %v9483, 0.5
    %v9496 = vmul.f32 %v9484, 0.5
    %v9497 = vmul.f32 %v9485, 0.5
    %v9498 = vmul.f32 %v9486, 0.5
    %v9499 = vmul.f32 %v9487, 0.5
    %v9500 = vadd.f32 %v9488, 0.5
    %v9501 = vadd.f32 %v9489, 0.5
    %v9502 = vadd.f32 %v9490, 0.5
    %v9503 = vadd.f32 %v9491, 0.5
    %v9504 = vadd.f32 %v9492, 0.5
    %v9505 = vadd.f32 %v9493, 0.5
    %v9506 = vadd.f32 %v9494, 0.5
    %v9507 = vadd.f32 %v9495, 0.5
    %v9508 = vadd.f32 %v9496, 0.5
    %v9509 = vadd.f32 %v9497, 0.5
    %v9510 = vadd.f32 %v9498, 0.5
    %v9511 = vadd.f32 %v9499, 0.5
    %v9512 = vtanh.pop %v9454
    %v9513 = vtanh.pop %v9455
    %v9514 = vtanh.pop %v9462
    %v9515 = vtanh.pop %v9463
    %v9516 = vmul.f32 %v9502, %v8655
    %v9517 = vmul.f32 %v9503, %v8656
    %v9518 = vmul.f32 %v9508, %v8657
    %v9519 = vmul.f32 %v9509, %v8658
    %v9520 = vmul.f32 %v9500, %v9512
    %v9521 = vmul.f32 %v9501, %v9513
    %v9522 = vmul.f32 %v9506, %v9514
    %v9523 = vmul.f32 %v9507, %v9515
    %v9524 = vadd.f32 %v9516, %v9520
    %v9525 = vadd.f32 %v9517, %v9521
    %v9526 = vadd.f32 %v9518, %v9522
    %v9527 = vadd.f32 %v9519, %v9523
    %v9528 = vtanh.pop %v9524
    %v9529 = vtanh.pop %v9525
    %v9530 = vtanh.pop %v9526
    %v9531 = vtanh.pop %v9527
    %v9532 = vmul.f32 %v9504, %v9528
    %v9533 = vmul.f32 %v9505, %v9529
    %v9534 = vmul.f32 %v9510, %v9530
    %v9535 = vmul.f32 %v9511, %v9531
    %v9536 = vpack.c.bf16 %v9534, %v9532
    %v9537 = vpack.c.bf16 %v9535, %v9533
    %9538 = vmatpush.bf16.msra.mxu0 %v3255
    %9539 = vmatpush.bf16.msra.mxu0 %v3247
    %9540 = vmatpush.bf16.msra.mxu0 %v3239
    %9541 = vmatpush.bf16.msra.mxu0 %v3231
    %9542 = vmatpush.bf16.msra.mxu0 %v3223
    %9543 = vmatpush.bf16.msra.mxu0 %v3215
    %9544 = vmatpush.bf16.msra.mxu0 %v3207
    %9545 = vmatpush.bf16.msra.mxu0 %v3199
    %9546 = vmatmul.bf16.gmra.mxu0 %v9536
    %v9547 = vpop.f32.mrf.mxu0
    %v9548 = vadd.f32 %v9007, %v9547
    %v9549 = vpop.f32.mrf.mxu0
    %v9550 = vadd.f32 %v9009, %v9549
    %9551 = vdwg.mxu0
    %9552 = vmatpush.bf16.msra.mxu0 %v3319
    %9553 = vmatpush.bf16.msra.mxu0 %v3311
    %9554 = vmatpush.bf16.msra.mxu0 %v3303
    %9555 = vmatpush.bf16.msra.mxu0 %v3295
    %9556 = vmatpush.bf16.msra.mxu0 %v3287
    %9557 = vmatpush.bf16.msra.mxu0 %v3279
    %9558 = vmatpush.bf16.msra.mxu0 %v3271
    %9559 = vmatpush.bf16.msra.mxu0 %v3263
    %9560 = vmatmul.bf16.gmra.mxu0 %v9537
    %v9561 = vpop.f32.mrf.mxu0
    %v9562 = vadd.f32 %v9548, %v9561
    %v9563 = vpop.f32.mrf.mxu0
    %v9564 = vadd.f32 %v9550, %v9563
    %9565 = vdwg.mxu0
    %9566 = vmatpush.bf16.msra.mxu0 %v3256
    %9567 = vmatpush.bf16.msra.mxu0 %v3248
    %9568 = vmatpush.bf16.msra.mxu0 %v3240
    %9569 = vmatpush.bf16.msra.mxu0 %v3232
    %9570 = vmatpush.bf16.msra.mxu0 %v3224
    %9571 = vmatpush.bf16.msra.mxu0 %v3216
    %9572 = vmatpush.bf16.msra.mxu0 %v3208
    %9573 = vmatpush.bf16.msra.mxu0 %v3200
    %9574 = vmatmul.bf16.gmra.mxu0 %v9536
    %v9575 = vpop.f32.mrf.mxu0
    %v9576 = vadd.f32 %v9035, %v9575
    %v9577 = vpop.f32.mrf.mxu0
    %v9578 = vadd.f32 %v9037, %v9577
    %9579 = vdwg.mxu0
    %9580 = vmatpush.bf16.msra.mxu0 %v3320
    %9581 = vmatpush.bf16.msra.mxu0 %v3312
    %9582 = vmatpush.bf16.msra.mxu0 %v3304
    %9583 = vmatpush.bf16.msra.mxu0 %v3296
    %9584 = vmatpush.bf16.msra.mxu0 %v3288
    %9585 = vmatpush.bf16.msra.mxu0 %v3280
    %9586 = vmatpush.bf16.msra.mxu0 %v3272
    %9587 = vmatpush.bf16.msra.mxu0 %v3264
    %9588 = vmatmul.bf16.gmra.mxu0 %v9537
    %v9589 = vpop.f32.mrf.mxu0
    %v9590 = vadd.f32 %v9576, %v9589
    %v9591 = vpop.f32.mrf.mxu0
    %v9592 = vadd.f32 %v9578, %v9591
    %9593 = vdwg.mxu0
    %9594 = vmatpush.bf16.msra.mxu0 %v3257
    %9595 = vmatpush.bf16.msra.mxu0 %v3249
    %9596 = vmatpush.bf16.msra.mxu0 %v3241
    %9597 = vmatpush.bf16.msra.mxu0 %v3233
    %9598 = vmatpush.bf16.msra.mxu0 %v3225
    %9599 = vmatpush.bf16.msra.mxu0 %v3217
    %9600 = vmatpush.bf16.msra.mxu0 %v3209
    %9601 = vmatpush.bf16.msra.mxu0 %v3201
    %9602 = vmatmul.bf16.gmra.mxu0 %v9536
    %v9603 = vpop.f32.mrf.mxu0
    %v9604 = vadd.f32 %v9063, %v9603
    %v9605 = vpop.f32.mrf.mxu0
    %v9606 = vadd.f32 %v9065, %v9605
    %9607 = vdwg.mxu0
    %9608 = vmatpush.bf16.msra.mxu0 %v3321
    %9609 = vmatpush.bf16.msra.mxu0 %v3313
    %9610 = vmatpush.bf16.msra.mxu0 %v3305
    %9611 = vmatpush.bf16.msra.mxu0 %v3297
    %9612 = vmatpush.bf16.msra.mxu0 %v3289
    %9613 = vmatpush.bf16.msra.mxu0 %v3281
    %9614 = vmatpush.bf16.msra.mxu0 %v3273
    %9615 = vmatpush.bf16.msra.mxu0 %v3265
    %9616 = vmatmul.bf16.gmra.mxu0 %v9537
    %v9617 = vpop.f32.mrf.mxu0
    %v9618 = vadd.f32 %v9604, %v9617
    %v9619 = vpop.f32.mrf.mxu0
    %v9620 = vadd.f32 %v9606, %v9619
    %9621 = vdwg.mxu0
    %9622 = vmatpush.bf16.msra.mxu0 %v3258
    %9623 = vmatpush.bf16.msra.mxu0 %v3250
    %9624 = vmatpush.bf16.msra.mxu0 %v3242
    %9625 = vmatpush.bf16.msra.mxu0 %v3234
    %9626 = vmatpush.bf16.msra.mxu0 %v3226
    %9627 = vmatpush.bf16.msra.mxu0 %v3218
    %9628 = vmatpush.bf16.msra.mxu0 %v3210
    %9629 = vmatpush.bf16.msra.mxu0 %v3202
    %9630 = vmatmul.bf16.gmra.mxu0 %v9536
    %v9631 = vpop.f32.mrf.mxu0
    %v9632 = vadd.f32 %v9091, %v9631
    %v9633 = vpop.f32.mrf.mxu0
    %v9634 = vadd.f32 %v9093, %v9633
    %9635 = vdwg.mxu0
    %9636 = vmatpush.bf16.msra.mxu0 %v3322
    %9637 = vmatpush.bf16.msra.mxu0 %v3314
    %9638 = vmatpush.bf16.msra.mxu0 %v3306
    %9639 = vmatpush.bf16.msra.mxu0 %v3298
    %9640 = vmatpush.bf16.msra.mxu0 %v3290
    %9641 = vmatpush.bf16.msra.mxu0 %v3282
    %9642 = vmatpush.bf16.msra.mxu0 %v3274
    %9643 = vmatpush.bf16.msra.mxu0 %v3266
    %9644 = vmatmul.bf16.gmra.mxu0 %v9537
    %v9645 = vpop.f32.mrf.mxu0
    %v9646 = vadd.f32 %v9632, %v9645
    %v9647 = vpop.f32.mrf.mxu0
    %v9648 = vadd.f32 %v9634, %v9647
    %9649 = vdwg.mxu0
    %9650 = vmatpush.bf16.msra.mxu0 %v3259
    %9651 = vmatpush.bf16.msra.mxu0 %v3251
    %9652 = vmatpush.bf16.msra.mxu0 %v3243
    %9653 = vmatpush.bf16.msra.mxu0 %v3235
    %9654 = vmatpush.bf16.msra.mxu0 %v3227
    %9655 = vmatpush.bf16.msra.mxu0 %v3219
    %9656 = vmatpush.bf16.msra.mxu0 %v3211
    %9657 = vmatpush.bf16.msra.mxu0 %v3203
    %9658 = vmatmul.bf16.gmra.mxu0 %v9536
    %v9659 = vpop.f32.mrf.mxu0
    %v9660 = vadd.f32 %v9119, %v9659
    %v9661 = vpop.f32.mrf.mxu0
    %v9662 = vadd.f32 %v9121, %v9661
    %9663 = vdwg.mxu0
    %9664 = vmatpush.bf16.msra.mxu0 %v3323
    %9665 = vmatpush.bf16.msra.mxu0 %v3315
    %9666 = vmatpush.bf16.msra.mxu0 %v3307
    %9667 = vmatpush.bf16.msra.mxu0 %v3299
    %9668 = vmatpush.bf16.msra.mxu0 %v3291
    %9669 = vmatpush.bf16.msra.mxu0 %v3283
    %9670 = vmatpush.bf16.msra.mxu0 %v3275
    %9671 = vmatpush.bf16.msra.mxu0 %v3267
    %9672 = vmatmul.bf16.gmra.mxu0 %v9537
    %v9673 = vpop.f32.mrf.mxu0
    %v9674 = vadd.f32 %v9660, %v9673
    %v9675 = vpop.f32.mrf.mxu0
    %v9676 = vadd.f32 %v9662, %v9675
    %9677 = vdwg.mxu0
    %9678 = vmatpush.bf16.msra.mxu0 %v3260
    %9679 = vmatpush.bf16.msra.mxu0 %v3252
    %9680 = vmatpush.bf16.msra.mxu0 %v3244
    %9681 = vmatpush.bf16.msra.mxu0 %v3236
    %9682 = vmatpush.bf16.msra.mxu0 %v3228
    %9683 = vmatpush.bf16.msra.mxu0 %v3220
    %9684 = vmatpush.bf16.msra.mxu0 %v3212
    %9685 = vmatpush.bf16.msra.mxu0 %v3204
    %9686 = vmatmul.bf16.gmra.mxu0 %v9536
    %v9687 = vpop.f32.mrf.mxu0
    %v9688 = vadd.f32 %v9147, %v9687
    %v9689 = vpop.f32.mrf.mxu0
    %v9690 = vadd.f32 %v9149, %v9689
    %9691 = vdwg.mxu0
    %9692 = vmatpush.bf16.msra.mxu0 %v3324
    %9693 = vmatpush.bf16.msra.mxu0 %v3316
    %9694 = vmatpush.bf16.msra.mxu0 %v3308
    %9695 = vmatpush.bf16.msra.mxu0 %v3300
    %9696 = vmatpush.bf16.msra.mxu0 %v3292
    %9697 = vmatpush.bf16.msra.mxu0 %v3284
    %9698 = vmatpush.bf16.msra.mxu0 %v3276
    %9699 = vmatpush.bf16.msra.mxu0 %v3268
    %9700 = vmatmul.bf16.gmra.mxu0 %v9537
    %v9701 = vpop.f32.mrf.mxu0
    %v9702 = vadd.f32 %v9688, %v9701
    %v9703 = vpop.f32.mrf.mxu0
    %v9704 = vadd.f32 %v9690, %v9703
    %9705 = vdwg.mxu0
    %9706 = vmatpush.bf16.msra.mxu0 %v3261
    %9707 = vmatpush.bf16.msra.mxu0 %v3253
    %9708 = vmatpush.bf16.msra.mxu0 %v3245
    %9709 = vmatpush.bf16.msra.mxu0 %v3237
    %9710 = vmatpush.bf16.msra.mxu0 %v3229
    %9711 = vmatpush.bf16.msra.mxu0 %v3221
    %9712 = vmatpush.bf16.msra.mxu0 %v3213
    %9713 = vmatpush.bf16.msra.mxu0 %v3205
    %9714 = vmatmul.bf16.gmra.mxu0 %v9536
    %v9715 = vpop.f32.mrf.mxu0
    %v9716 = vadd.f32 %v9175, %v9715
    %v9717 = vpop.f32.mrf.mxu0
    %v9718 = vadd.f32 %v9177, %v9717
    %9719 = vdwg.mxu0
    %9720 = vmatpush.bf16.msra.mxu0 %v3325
    %9721 = vmatpush.bf16.msra.mxu0 %v3317
    %9722 = vmatpush.bf16.msra.mxu0 %v3309
    %9723 = vmatpush.bf16.msra.mxu0 %v3301
    %9724 = vmatpush.bf16.msra.mxu0 %v3293
    %9725 = vmatpush.bf16.msra.mxu0 %v3285
    %9726 = vmatpush.bf16.msra.mxu0 %v3277
    %9727 = vmatpush.bf16.msra.mxu0 %v3269
    %9728 = vmatmul.bf16.gmra.mxu0 %v9537
    %v9729 = vpop.f32.mrf.mxu0
    %v9730 = vadd.f32 %v9716, %v9729
    %v9731 = vpop.f32.mrf.mxu0
    %v9732 = vadd.f32 %v9718, %v9731
    %9733 = vdwg.mxu0
    %9734 = vmatpush.bf16.msra.mxu0 %v3262
    %9735 = vmatpush.bf16.msra.mxu0 %v3254
    %9736 = vmatpush.bf16.msra.mxu0 %v3246
    %9737 = vmatpush.bf16.msra.mxu0 %v3238
    %9738 = vmatpush.bf16.msra.mxu0 %v3230
    %9739 = vmatpush.bf16.msra.mxu0 %v3222
    %9740 = vmatpush.bf16.msra.mxu0 %v3214
    %9741 = vmatpush.bf16.msra.mxu0 %v3206
    %9742 = vmatmul.bf16.gmra.mxu0 %v9536
    %v9743 = vpop.f32.mrf.mxu0
    %v9744 = vadd.f32 %v9203, %v9743
    %v9745 = vpop.f32.mrf.mxu0
    %v9746 = vadd.f32 %v9205, %v9745
    %9747 = vdwg.mxu0
    %9748 = vmatpush.bf16.msra.mxu0 %v3326
    %9749 = vmatpush.bf16.msra.mxu0 %v3318
    %9750 = vmatpush.bf16.msra.mxu0 %v3310
    %9751 = vmatpush.bf16.msra.mxu0 %v3302
    %9752 = vmatpush.bf16.msra.mxu0 %v3294
    %9753 = vmatpush.bf16.msra.mxu0 %v3286
    %9754 = vmatpush.bf16.msra.mxu0 %v3278
    %9755 = vmatpush.bf16.msra.mxu0 %v3270
    %9756 = vmatmul.bf16.gmra.mxu0 %v9537
    %v9757 = vpop.f32.mrf.mxu0
    %v9758 = vadd.f32 %v9744, %v9757
    %v9759 = vpop.f32.mrf.mxu0
    %v9760 = vadd.f32 %v9746, %v9759
    %9761 = vdwg.mxu0
    %v9762 = vadd.f32 %v9562, %v449
    %v9763 = vadd.f32 %v9590, %v450
    %v9764 = vadd.f32 %v9618, %v451
    %v9765 = vadd.f32 %v9646, %v452
    %v9766 = vadd.f32 %v9674, %v453
    %v9767 = vadd.f32 %v9702, %v454
    %v9768 = vadd.f32 %v9730, %v455
    %v9769 = vadd.f32 %v9758, %v456
    %v9770 = vadd.f32 %v9564, %v449
    %v9771 = vadd.f32 %v9592, %v450
    %v9772 = vadd.f32 %v9620, %v451
    %v9773 = vadd.f32 %v9648, %v452
    %v9774 = vadd.f32 %v9676, %v453
    %v9775 = vadd.f32 %v9704, %v454
    %v9776 = vadd.f32 %v9732, %v455
    %v9777 = vadd.f32 %v9760, %v456
    %v9778 = vmul.f32 %v9762, 0.5
    %v9779 = vmul.f32 %v9763, 0.5
    %v9780 = vmul.f32 %v9764, 0.5
    %v9781 = vmul.f32 %v9765, 0.5
    %v9782 = vmul.f32 %v9766, 0.5
    %v9783 = vmul.f32 %v9767, 0.5
    %v9784 = vmul.f32 %v9770, 0.5
    %v9785 = vmul.f32 %v9771, 0.5
    %v9786 = vmul.f32 %v9772, 0.5
    %v9787 = vmul.f32 %v9773, 0.5
    %v9788 = vmul.f32 %v9774, 0.5
    %v9789 = vmul.f32 %v9775, 0.5
    %v9790 = vtanh.pop %v9778
    %v9791 = vtanh.pop %v9779
    %v9792 = vtanh.pop %v9780
    %v9793 = vtanh.pop %v9781
    %v9794 = vtanh.pop %v9782
    %v9795 = vtanh.pop %v9783
    %v9796 = vtanh.pop %v9784
    %v9797 = vtanh.pop %v9785
    %v9798 = vtanh.pop %v9786
    %v9799 = vtanh.pop %v9787
    %v9800 = vtanh.pop %v9788
    %v9801 = vtanh.pop %v9789
    %v9802 = vmul.f32 %v9790, 0.5
    %v9803 = vmul.f32 %v9791, 0.5
    %v9804 = vmul.f32 %v9792, 0.5
    %v9805 = vmul.f32 %v9793, 0.5
    %v9806 = vmul.f32 %v9794, 0.5
    %v9807 = vmul.f32 %v9795, 0.5
    %v9808 = vmul.f32 %v9796, 0.5
    %v9809 = vmul.f32 %v9797, 0.5
    %v9810 = vmul.f32 %v9798, 0.5
    %v9811 = vmul.f32 %v9799, 0.5
    %v9812 = vmul.f32 %v9800, 0.5
    %v9813 = vmul.f32 %v9801, 0.5
    %v9814 = vadd.f32 %v9802, 0.5
    %v9815 = vadd.f32 %v9803, 0.5
    %v9816 = vadd.f32 %v9804, 0.5
    %v9817 = vadd.f32 %v9805, 0.5
    %v9818 = vadd.f32 %v9806, 0.5
    %v9819 = vadd.f32 %v9807, 0.5
    %v9820 = vadd.f32 %v9808, 0.5
    %v9821 = vadd.f32 %v9809, 0.5
    %v9822 = vadd.f32 %v9810, 0.5
    %v9823 = vadd.f32 %v9811, 0.5
    %v9824 = vadd.f32 %v9812, 0.5
    %v9825 = vadd.f32 %v9813, 0.5
    %v9826 = vtanh.pop %v9768
    %v9827 = vtanh.pop %v9769
    %v9828 = vtanh.pop %v9776
    %v9829 = vtanh.pop %v9777
    %v9830 = vmul.f32 %v9816, %v8969
    %v9831 = vmul.f32 %v9817, %v8970
    %v9832 = vmul.f32 %v9822, %v8971
    %v9833 = vmul.f32 %v9823, %v8972
    %v9834 = vmul.f32 %v9814, %v9826
    %v9835 = vmul.f32 %v9815, %v9827
    %v9836 = vmul.f32 %v9820, %v9828
    %v9837 = vmul.f32 %v9821, %v9829
    %v9838 = vadd.f32 %v9830, %v9834
    %v9839 = vadd.f32 %v9831, %v9835
    %v9840 = vadd.f32 %v9832, %v9836
    %v9841 = vadd.f32 %v9833, %v9837
    %v9842 = vtanh.pop %v9838
    %v9843 = vtanh.pop %v9839
    %v9844 = vtanh.pop %v9840
    %v9845 = vtanh.pop %v9841
    %v9846 = vmul.f32 %v9818, %v9842
    %v9847 = vmul.f32 %v9819, %v9843
    %v9848 = vmul.f32 %v9824, %v9844
    %v9849 = vmul.f32 %v9825, %v9845
    %v9850 = vpack.c.bf16 %v9848, %v9846
    %v9851 = vpack.c.bf16 %v9849, %v9847
    %v9852 = vld [vmem:[%s6] sm:$0xff]
    %v9853 = vld [vmem:[%s6 + $0x8] sm:$0xff]
    %v9854 = vld [vmem:[%s6 + $0x10] sm:$0xff]
    %v9855 = vld [vmem:[%s6 + $0x18] sm:$0xff]
    %v9856 = vld [vmem:[%s6 + $0x20] sm:$0xff]
    %v9857 = vld [vmem:[%s6 + $0x28] sm:$0xff]
    %v9858 = vld [vmem:[%s6 + $0x30] sm:$0xff]
    %v9859 = vld [vmem:[%s6 + $0x38] sm:$0xff]
    %v9860 = vld [vmem:[%s6 + $0x40] sm:$0xff]
    %v9861 = vld [vmem:[%s6 + $0x48] sm:$0xff]
    %v9862 = vld [vmem:[%s6 + $0x50] sm:$0xff]
    %v9863 = vld [vmem:[%s6 + $0x58] sm:$0xff]
    %v9864 = vld [vmem:[%s6 + $0x60] sm:$0xff]
    %v9865 = vld [vmem:[%s6 + $0x68] sm:$0xff]
    %v9866 = vld [vmem:[%s6 + $0x70] sm:$0xff]
    %v9867 = vld [vmem:[%s6 + $0x78] sm:$0xff]
    %v9868 = vld [vmem:[%s6 + $0x80] sm:$0xff]
    %v9869 = vld [vmem:[%s6 + $0x88] sm:$0xff]
    %v9870 = vld [vmem:[%s6 + $0x90] sm:$0xff]
    %v9871 = vld [vmem:[%s6 + $0x98] sm:$0xff]
    %v9872 = vld [vmem:[%s6 + $0xa0] sm:$0xff]
    %v9873 = vld [vmem:[%s6 + $0xa8] sm:$0xff]
    %v9874 = vld [vmem:[%s6 + $0xb0] sm:$0xff]
    %v9875 = vld [vmem:[%s6 + $0xb8] sm:$0xff]
    %v9876 = vld [vmem:[%s6 + $0xc0] sm:$0xff]
    %v9877 = vld [vmem:[%s6 + $0xc8] sm:$0xff]
    %v9878 = vld [vmem:[%s6 + $0xd0] sm:$0xff]
    %v9879 = vld [vmem:[%s6 + $0xd8] sm:$0xff]
    %v9880 = vld [vmem:[%s6 + $0xe0] sm:$0xff]
    %v9881 = vld [vmem:[%s6 + $0xe8] sm:$0xff]
    %v9882 = vld [vmem:[%s6 + $0xf0] sm:$0xff]
    %v9883 = vld [vmem:[%s6 + $0xf8] sm:$0xff]
    %v9884 = vld [vmem:[%s7] sm:$0x3]
    %v9886 = vperm.slane %v9884, 0
    %v9887 = vperm.slane %v9884, 1
    %v9922 = vunpack.c.l.b16 %v9852
    %v9923 = vunpack.c.h.b16 %v9852
    %v9924 = vunpack.c.l.b16 %v9853
    %v9925 = vunpack.c.h.b16 %v9853
    %v9926 = vunpack.c.l.b16 %v9854
    %v9927 = vunpack.c.h.b16 %v9854
    %v9928 = vunpack.c.l.b16 %v9855
    %v9929 = vunpack.c.h.b16 %v9855
    %v9930 = vunpack.c.l.b16 %v9856
    %v9931 = vunpack.c.h.b16 %v9856
    %v9932 = vunpack.c.l.b16 %v9857
    %v9933 = vunpack.c.h.b16 %v9857
    %v9934 = vunpack.c.l.b16 %v9858
    %v9935 = vunpack.c.h.b16 %v9858
    %v9936 = vunpack.c.l.b16 %v9859
    %v9937 = vunpack.c.h.b16 %v9859
    %v9938 = vunpack.c.l.b16 %v9860
    %v9939 = vunpack.c.h.b16 %v9860
    %v9940 = vunpack.c.l.b16 %v9861
    %v9941 = vunpack.c.h.b16 %v9861
    %v9942 = vunpack.c.l.b16 %v9862
    %v9943 = vunpack.c.h.b16 %v9862
    %v9944 = vunpack.c.l.b16 %v9863
    %v9945 = vunpack.c.h.b16 %v9863
    %v9946 = vunpack.c.l.b16 %v9864
    %v9947 = vunpack.c.h.b16 %v9864
    %v9948 = vunpack.c.l.b16 %v9865
    %v9949 = vunpack.c.h.b16 %v9865
    %v9950 = vunpack.c.l.b16 %v9866
    %v9951 = vunpack.c.h.b16 %v9866
    %v9952 = vunpack.c.l.b16 %v9867
    %v9953 = vunpack.c.h.b16 %v9867
    %v9954 = vunpack.c.l.b16 %v9868
    %v9955 = vunpack.c.h.b16 %v9868
    %v9956 = vunpack.c.l.b16 %v9869
    %v9957 = vunpack.c.h.b16 %v9869
    %v9958 = vunpack.c.l.b16 %v9870
    %v9959 = vunpack.c.h.b16 %v9870
    %v9960 = vunpack.c.l.b16 %v9871
    %v9961 = vunpack.c.h.b16 %v9871
    %v9962 = vunpack.c.l.b16 %v9872
    %v9963 = vunpack.c.h.b16 %v9872
    %v9964 = vunpack.c.l.b16 %v9873
    %v9965 = vunpack.c.h.b16 %v9873
    %v9966 = vunpack.c.l.b16 %v9874
    %v9967 = vunpack.c.h.b16 %v9874
    %v9968 = vunpack.c.l.b16 %v9875
    %v9969 = vunpack.c.h.b16 %v9875
    %v9970 = vunpack.c.l.b16 %v9876
    %v9971 = vunpack.c.h.b16 %v9876
    %v9972 = vunpack.c.l.b16 %v9877
    %v9973 = vunpack.c.h.b16 %v9877
    %v9974 = vunpack.c.l.b16 %v9878
    %v9975 = vunpack.c.h.b16 %v9878
    %v9976 = vunpack.c.l.b16 %v9879
    %v9977 = vunpack.c.h.b16 %v9879
    %v9978 = vunpack.c.l.b16 %v9880
    %v9979 = vunpack.c.h.b16 %v9880
    %v9980 = vunpack.c.l.b16 %v9881
    %v9981 = vunpack.c.h.b16 %v9881
    %v9982 = vunpack.c.l.b16 %v9882
    %v9983 = vunpack.c.h.b16 %v9882
    %v9984 = vunpack.c.l.b16 %v9883
    %v9985 = vunpack.c.h.b16 %v9883
    %v9986 = vpack.c.b16 %v9924, %v9922
    %v9987 = vpack.c.b16 %v9925, %v9923
    %v9988 = vpack.c.b16 %v9928, %v9926
    %v9989 = vpack.c.b16 %v9929, %v9927
    %v9990 = vpack.c.b16 %v9932, %v9930
    %v9991 = vpack.c.b16 %v9933, %v9931
    %v9992 = vpack.c.b16 %v9936, %v9934
    %v9993 = vpack.c.b16 %v9937, %v9935
    %v9994 = vpack.c.b16 %v9940, %v9938
    %v9995 = vpack.c.b16 %v9941, %v9939
    %v9996 = vpack.c.b16 %v9944, %v9942
    %v9997 = vpack.c.b16 %v9945, %v9943
    %v9998 = vpack.c.b16 %v9948, %v9946
    %v9999 = vpack.c.b16 %v9949, %v9947
    %v10000 = vpack.c.b16 %v9952, %v9950
    %v10001 = vpack.c.b16 %v9953, %v9951
    %v10002 = vpack.c.b16 %v9956, %v9954
    %v10003 = vpack.c.b16 %v9957, %v9955
    %v10004 = vpack.c.b16 %v9960, %v9958
    %v10005 = vpack.c.b16 %v9961, %v9959
    %v10006 = vpack.c.b16 %v9964, %v9962
    %v10007 = vpack.c.b16 %v9965, %v9963
    %v10008 = vpack.c.b16 %v9968, %v9966
    %v10009 = vpack.c.b16 %v9969, %v9967
    %v10010 = vpack.c.b16 %v9972, %v9970
    %v10011 = vpack.c.b16 %v9973, %v9971
    %v10012 = vpack.c.b16 %v9976, %v9974
    %v10013 = vpack.c.b16 %v9977, %v9975
    %v10014 = vpack.c.b16 %v9980, %v9978
    %v10015 = vpack.c.b16 %v9981, %v9979
    %v10016 = vpack.c.b16 %v9984, %v9982
    %v10017 = vpack.c.b16 %v9985, %v9983
    %10050 = vmatpush.bf16.msra.mxu0 %v10000
    %10051 = vmatpush.bf16.msra.mxu0 %v9998
    %10052 = vmatpush.bf16.msra.mxu0 %v9996
    %10053 = vmatpush.bf16.msra.mxu0 %v9994
    %10054 = vmatpush.bf16.msra.mxu0 %v9992
    %10055 = vmatpush.bf16.msra.mxu0 %v9990
    %10056 = vmatpush.bf16.msra.mxu0 %v9988
    %10057 = vmatpush.bf16.msra.mxu0 %v9986
    %10058 = vmatmul.bf16.gmra.mxu0 %v9850
    %v10059 = vpop.f32.mrf.mxu0
    %v10060 = vadd.f32 %v9886, %v10059
    %v10061 = vpop.f32.mrf.mxu0
    %v10062 = vadd.f32 %v9886, %v10061
    %10063 = vdwg.mxu0
    %10064 = vmatpush.bf16.msra.mxu0 %v10016
    %10065 = vmatpush.bf16.msra.mxu0 %v10014
    %10066 = vmatpush.bf16.msra.mxu0 %v10012
    %10067 = vmatpush.bf16.msra.mxu0 %v10010
    %10068 = vmatpush.bf16.msra.mxu0 %v10008
    %10069 = vmatpush.bf16.msra.mxu0 %v10006
    %10070 = vmatpush.bf16.msra.mxu0 %v10004
    %10071 = vmatpush.bf16.msra.mxu0 %v10002
    %10072 = vmatmul.bf16.gmra.mxu0 %v9851
    %v10073 = vpop.f32.mrf.mxu0
    %v10074 = vadd.f32 %v10060, %v10073
    %v10075 = vpop.f32.mrf.mxu0
    %v10076 = vadd.f32 %v10062, %v10075
    %10077 = vdwg.mxu0
    %10078 = vmatpush.bf16.msra.mxu0 %v10001
    %10079 = vmatpush.bf16.msra.mxu0 %v9999
    %10080 = vmatpush.bf16.msra.mxu0 %v9997
    %10081 = vmatpush.bf16.msra.mxu0 %v9995
    %10082 = vmatpush.bf16.msra.mxu0 %v9993
    %10083 = vmatpush.bf16.msra.mxu0 %v9991
    %10084 = vmatpush.bf16.msra.mxu0 %v9989
    %10085 = vmatpush.bf16.msra.mxu0 %v9987
    %10086 = vmatmul.bf16.gmra.mxu0 %v9850
    %v10087 = vpop.f32.mrf.mxu0
    %v10088 = vadd.f32 %v9887, %v10087
    %v10089 = vpop.f32.mrf.mxu0
    %v10090 = vadd.f32 %v9887, %v10089
    %10091 = vdwg.mxu0
    %10092 = vmatpush.bf16.msra.mxu0 %v10017
    %10093 = vmatpush.bf16.msra.mxu0 %v10015
    %10094 = vmatpush.bf16.msra.mxu0 %v10013
    %10095 = vmatpush.bf16.msra.mxu0 %v10011
    %10096 = vmatpush.bf16.msra.mxu0 %v10009
    %10097 = vmatpush.bf16.msra.mxu0 %v10007
    %10098 = vmatpush.bf16.msra.mxu0 %v10005
    %10099 = vmatpush.bf16.msra.mxu0 %v10003
    %10100 = vmatmul.bf16.gmra.mxu0 %v9851
    %v10101 = vpop.f32.mrf.mxu0
    %v10102 = vadd.f32 %v10088, %v10101
    %v10103 = vpop.f32.mrf.mxu0
    %v10104 = vadd.f32 %v10090, %v10103
    %10105 = vdwg.mxu0
    %10106 = vst [vmem:[#allocation8] sm:$0xff] %v10074
    %vm10107 = vcmask 261120
    %10108 = vst.msk [vmem:[#allocation8 + $0x8] sm:$0xff] %vm10107, %v10102
    %10109 = vst [vmem:[#allocation8 + $0x10] sm:$0xff] %v10076
    %10110 = vst.msk [vmem:[#allocation8 + $0x18] sm:$0xff] %vm10107, %v10104
    // Predicated region
    $region42: #{tpu_custom_call.1} parent=1 // pred_check
      _
    $region43: #{tpu_custom_call.1} parent=1 // pred_check_branch
      %10112 = sbr.rel (0) target = $region45
    $region44: #{tpu_custom_call.1} parent=1 // pred_region
      %10114 = vsyncadd [#allocation5], 0
      %s10115 = sshll.u32 [#allocation8], 4
      %s10116 = int_to_ptr.vmem [resolvable:$true] %s10115
      %s10117 = sshll.u32 %s8, 4
      %s10118 = int_to_ptr.hbm [resolvable:$true] %s10117
      %10123 = dma.vmem_to_hbm [thread:$0]  %s10116, 512, %s10118, [#allocation5], 256, 256, 16
    $region45: #{tpu_custom_call.1} parent=1 // pred_fallthru
      _
    // Predicated region
    $region46: #{tpu_custom_call.1} parent=1 // pred_check
      _
    $region47: #{tpu_custom_call.1} parent=1 // pred_check_branch
      %10125 = sbr.rel (0) target = $region49
    $region48: #{tpu_custom_call.1} parent=1 // pred_region
      %10127 = dma.done [#allocation5], 512
    $region49: #{tpu_custom_call.1} parent=1 // pred_fallthru
      _
    %10128 = vsyncpa [#allocation4], 1
    %10129 = vsyncpa [#allocation7], 1
    %10130 = vsyncpa [#allocation5], 1

</llo_original>
